<compile_context>
chip_gen: v7x
topology: tpu7x:2x2x1
jax: 0.10.0
libtpu: 0.0.40
codegen_flags: <defaults>
</compile_context>

<pallas_src>
import functools

import jax
import jax.numpy as jnp
from jax import lax
from jax.experimental import pallas as pl
from jax.experimental.pallas import tpu as pltpu


def _round_up(x, m):
    return (x + m - 1) // m * m


# ----------------------------------------------------------------------------
# Fused kernel:  conv3x3(+bn0,+bn1) -> relu -> fc(+bn2) -> relu
#   wconv_ref   : (9, 32)     folded conv weights   (SMEM scalars)
#   bconv_ref   : (32,)       folded conv bias      (SMEM scalars)
#   patches_ref : (9, TB, P)  tap-major im2col planes (VMEM, batch-tiled)
#   wfc_ref     : (32, P, D)  folded fc weights, channel-major (VMEM, resident)
#   bfc_ref     : (1, D)      folded fc bias
#   h_ref       : (TB, D)     output
# Per output channel c: 9 scalar-broadcast VPU FMAs build the (TB, P) feature
# plane, then its fc contribution is a (TB,P)x(P,D) MXU matmul (K = P),
# accumulated over the 32 channels.  No reshapes / relayouts in-kernel.
# ----------------------------------------------------------------------------
def conv_fc_kernel(wconv_ref, bconv_ref, patches_ref, wfc_ref, bfc_ref, h_ref):
    n_tap = wconv_ref.shape[0]     # 9
    n_ch = wconv_ref.shape[1]      # 32
    acc = jnp.zeros(h_ref.shape, jnp.float32)
    for c in range(n_ch):
        f = patches_ref[0] * wconv_ref[0, c]
        for k in range(1, n_tap):
            f = f + patches_ref[k] * wconv_ref[k, c]
        f = jnp.maximum(f + bconv_ref[c], 0.0)                    # (TB, P)
        acc = acc + jnp.dot(f, wfc_ref[c],
                            preferred_element_type=jnp.float32)
    h_ref[...] = jnp.maximum(acc + bfc_ref[...], 0.0)


# ----------------------------------------------------------------------------
# Classifier kernel: logits tile + sigmoid, tiled (lane-dense) over E.
# ----------------------------------------------------------------------------
def classifier_kernel(h_ref, wcls_ref, bcls_ref, out_ref):
    w = wcls_ref[...]
    logits = jnp.dot(h_ref[...].astype(w.dtype), w,
                     preferred_element_type=jnp.float32) + bcls_ref[...]
    # sigmoid(x) = 0.5*(tanh(x/2)+1): single EUP op, no exp overflow to inf.
    out_ref[...] = 0.5 * (jnp.tanh(0.5 * logits) + 1.0)


# ----------------------------------------------------------------------------
# One-time weight preparation (hoisted out of the per-call jit):
#   * bn0 + conv bias + bn1 folded into (9,32) conv weights / (32,) bias
#   * bn2 folded into fc; fc permuted to channel-major (32, P, D)
#   * classifier weight transposed to (D, E) and padded to a multiple of the
#     E tile; optionally cast (bf16 roughly halves the dominant HBM weight
#     stream on v5e/v6e -- loosen the fp32 tolerance if used).
# ----------------------------------------------------------------------------
def prepare_conve_params(params, emb_dim1, block_e=1024,
                         classifier_dtype=jnp.float32):
    f32 = jnp.float32
    eps = 1e-5
    D = params["emb_e"].shape[1]
    d1, d2 = emb_dim1, D // emb_dim1
    H, W = 2 * d1, d2
    OH, OW = H - 2, W - 2
    P = OH * OW
    E = params["cls_w"].shape[0]

    s0 = params["bn0_g"][0] / jnp.sqrt(params["bn0_v"][0] + eps)
    b0 = params["bn0_b"][0] - params["bn0_m"][0] * s0
    s1 = params["bn1_g"] / jnp.sqrt(params["bn1_v"] + eps)            # (32,)
    t1 = params["bn1_b"] - params["bn1_m"] * s1
    wconv = params["conv_w"].reshape(32, 9).T.astype(f32)             # (9,32)
    wconv_f = wconv * s0 * s1[None, :]
    bconv_f = (b0 * wconv.sum(axis=0) + params["conv_b"]) * s1 + t1   # (32,)

    s2 = params["bn2_g"] / jnp.sqrt(params["bn2_v"] + eps)            # (D,)
    t2 = params["bn2_b"] - params["bn2_m"] * s2
    # fc_w is (D, 32*P) with channel-major flatten (PyTorch view order);
    # permute to (32, P, D) so the kernel's per-channel (P, D) slice is free.
    wfc3 = (params["fc_w"].reshape(D, 32, P).transpose(1, 2, 0)
            * s2[None, None, :]).astype(f32)                          # (32,P,D)
    bfc_f = (params["fc_b"] * s2 + t2).reshape(1, D).astype(f32)

    TN = _round_up(min(int(block_e), _round_up(E, 128)), 128)
    E_pad = _round_up(E, TN)
    wcls = params["cls_w"].T.astype(classifier_dtype)                 # (D, E)
    bcls = params["cls_b"].reshape(1, E).astype(f32)
    if E_pad != E:
        wcls = jnp.pad(wcls, ((0, 0), (0, E_pad - E)))
        bcls = jnp.pad(bcls, ((0, 0), (0, E_pad - E)))

    return {
        "emb_e": params["emb_e"].astype(f32),
        "emb_rel": params["emb_rel"].astype(f32),
        "wconv": wconv_f.astype(f32),
        "bconv": bconv_f.astype(f32),
        "wfc": wfc3,
        "bfc": bfc_f,
        "wcls": wcls,
        "bcls": bcls,
    }


@functools.partial(jax.jit,
                   static_argnames=("emb_dim1", "num_entities",
                                    "block_b", "block_e"))
def conve_forward(e1, rel, prep, emb_dim1, num_entities,
                  block_b=64, block_e=1024):
    """ConvE forward (eval mode). e1, rel: int32 (B,). Returns (B, E)."""
    f32 = jnp.float32
    emb_e, emb_rel = prep["emb_e"], prep["emb_rel"]
    D = emb_e.shape[1]
    d1, d2 = emb_dim1, D // emb_dim1
    H, W = 2 * d1, d2
    OH, OW = H - 2, W - 2
    P = OH * OW
    E = num_entities
    E_pad = prep["wcls"].shape[1]
    B = e1.shape[0]

    # batch tile (multiple of 8 sublanes) and padded batch
    TB = max(8, _round_up(min(int(block_b), _round_up(B, 8)), 8))
    B_pad = _round_up(max(B, TB), TB)
    if B_pad != B:
        pad = B_pad - B
        e1 = jnp.concatenate([e1, jnp.zeros((pad,), e1.dtype)])
        rel = jnp.concatenate([rel, jnp.zeros((pad,), rel.dtype)])

    # XLA glue: embedding gather + tap-major im2col (9, B_pad, P).
    # TODO(synk): im2col could move fully in-kernel (lane shifts on the
    # (TB, H*W) rows) to also remove this 9x-duplicated HBM intermediate.
    stacked = jnp.concatenate([emb_e[e1], emb_rel[rel]],
                              axis=1).reshape(B_pad, H, W).astype(f32)
    patches_t = jnp.stack(
        [stacked[:, dy:dy + OH, dx:dx + OW].reshape(B_pad, P)
         for dy in range(3) for dx in range(3)], axis=0)           # (9,B_pad,P)

    # ---- fused kernel: conv(+bn0,bn1)+relu+fc(+bn2)+relu, batch-tiled -------
    cost1 = pl.CostEstimate(
        flops=2 * B_pad * P * 32 * (9 + D),
        transcendentals=0,
        bytes_accessed=4 * (9 * B_pad * P + 9 * 32 + 32
                            + 32 * P * D + D + B_pad * D))
    h = pl.pallas_call(
        conv_fc_kernel,
        out_shape=jax.ShapeDtypeStruct((B_pad, D), f32),
        grid=(B_pad // TB,),
        in_specs=[
            pl.BlockSpec(memory_space=pltpu.MemorySpace.SMEM),     # wconv (9,32)
            pl.BlockSpec(memory_space=pltpu.MemorySpace.SMEM),     # bconv (32,)
            pl.BlockSpec((9, TB, P), lambda i: (0, i, 0)),         # patches tile
            pl.BlockSpec((32, P, D), lambda i: (0, 0, 0)),         # wfc resident
            pl.BlockSpec((1, D), lambda i: (0, 0)),                # bfc resident
        ],
        out_specs=pl.BlockSpec((TB, D), lambda i: (i, 0)),
        compiler_params=pltpu.CompilerParams(
            dimension_semantics=("parallel",),
            vmem_limit_bytes=48 * 1024 * 1024),
        cost_estimate=cost1,
    )(prep["wconv"], prep["bconv"], patches_t, prep["wfc"], prep["bfc"])

    # ---- classifier + sigmoid, tiled (lane-dense) over E --------------------
    TN = _round_up(min(int(block_e), _round_up(E, 128)), 128)
    assert E_pad % TN == 0
    wbytes = prep["wcls"].dtype.itemsize
    cost2 = pl.CostEstimate(
        flops=2 * B_pad * D * E_pad,
        transcendentals=B_pad * E_pad,
        bytes_accessed=(4 * B_pad * D + wbytes * D * E_pad
                        + 4 * E_pad + 4 * B_pad * E_pad))
    pred = pl.pallas_call(
        classifier_kernel,
        out_shape=jax.ShapeDtypeStruct((B_pad, E_pad), f32),
        grid=(E_pad // TN,),
        in_specs=[
            pl.BlockSpec((B_pad, D), lambda j: (0, 0)),            # h (resident)
            pl.BlockSpec((D, TN), lambda j: (0, j)),               # wcls tile
            pl.BlockSpec((1, TN), lambda j: (0, j)),               # bcls tile
        ],
        out_specs=pl.BlockSpec((B_pad, TN), lambda j: (0, j)),
        compiler_params=pltpu.CompilerParams(
            dimension_semantics=("parallel",),
            vmem_limit_bytes=32 * 1024 * 1024),
        cost_estimate=cost2,
    )(h, prep["wcls"], prep["bcls"])

    return pred[:B, :E]


# ----------------------------------------------------------------------------
# Pure-JAX reference (mirrors the PyTorch forward in eval mode, no folding)
# ----------------------------------------------------------------------------
def conve_reference(e1, rel, params, emb_dim1):
    emb_e, emb_rel = params["emb_e"], params["emb_rel"]
    D = emb_e.shape[1]
    d1, d2 = emb_dim1, D // emb_dim1
    B = e1.shape[0]
    eps = 1e-5

    e1_emb = emb_e[e1].reshape(B, 1, d1, d2)
    rel_emb = emb_rel[rel].reshape(B, 1, d1, d2)
    x = jnp.concatenate([e1_emb, rel_emb], axis=2)                 # (B,1,2*d1,d2)
    x = (x - params["bn0_m"]) / jnp.sqrt(params["bn0_v"] + eps) \
        * params["bn0_g"] + params["bn0_b"]
    # inp_drop: identity (eval)
    y = lax.conv_general_dilated(x, params["conv_w"], (1, 1), "VALID",
                                 dimension_numbers=("NCHW", "OIHW", "NCHW"))
    y = y + params["conv_b"].reshape(1, 32, 1, 1)
    y = (y - params["bn1_m"].reshape(1, 32, 1, 1)) / \
        jnp.sqrt(params["bn1_v"].reshape(1, 32, 1, 1) + eps) * \
        params["bn1_g"].reshape(1, 32, 1, 1) + params["bn1_b"].reshape(1, 32, 1, 1)
    y = jnp.maximum(y, 0.0)
    flat = y.reshape(B, -1)
    h = flat @ params["fc_w"].T + params["fc_b"]
    # grad_reverse / hidden_drop: identity in forward
    h = (h - params["bn2_m"]) / jnp.sqrt(params["bn2_v"] + eps) \
        * params["bn2_g"] + params["bn2_b"]
    h = jnp.maximum(h, 0.0)
    logits = h @ params["cls_w"].T + params["cls_b"]
    return jax.nn.sigmoid(logits)


def init_params(key, num_entities, num_relations, embedding_dim, hidden_size):
    ks = jax.random.split(key, 16)
    f32 = jnp.float32
    emb_e = 0.1 * jax.random.normal(ks[0], (num_entities, embedding_dim), f32)
    emb_e = emb_e.at[0].set(0.0)                                   # padding_idx=0
    emb_rel = 0.1 * jax.random.normal(ks[1], (num_relations, embedding_dim), f32)
    emb_rel = emb_rel.at[0].set(0.0)
    params = {
        "emb_e": emb_e,
        "emb_rel": emb_rel,
        "conv_w": 0.1 * jax.random.normal(ks[2], (32, 1, 3, 3), f32),
        "conv_b": 0.1 * jax.random.normal(ks[3], (32,), f32),      # use_bias=True
        "fc_w": 0.05 * jax.random.normal(ks[4], (embedding_dim, hidden_size), f32),
        "fc_b": 0.05 * jax.random.normal(ks[5], (embedding_dim,), f32),
        "cls_w": 0.1 * jax.random.normal(ks[6], (num_entities, embedding_dim), f32),
        "cls_b": 0.1 * jax.random.normal(ks[7], (num_entities,), f32),
        # BatchNorm2d(1)
        "bn0_g": 1.0 + 0.1 * jax.random.normal(ks[8], (1,), f32),
        "bn0_b": 0.1 * jax.random.normal(ks[9], (1,), f32),
        "bn0_m": 0.1 * jax.random.normal(ks[10], (1,), f32),
        "bn0_v": 1.0 + 0.1 * jnp.abs(jax.random.normal(ks[11], (1,), f32)),
        # BatchNorm2d(32)
        "bn1_g": jnp.ones((32,), f32),
        "bn1_b": jnp.zeros((32,), f32),
        "bn1_m": 0.1 * jax.random.normal(ks[12], (32,), f32),
        "bn1_v": 1.0 + 0.1 * jnp.abs(jax.random.normal(ks[13], (32,), f32)),
        # BatchNorm1d(embedding_dim)
        "bn2_g": jnp.ones((embedding_dim,), f32),
        "bn2_b": jnp.zeros((embedding_dim,), f32),
        "bn2_m": 0.1 * jax.random.normal(ks[14], (embedding_dim,), f32),
        "bn2_v": 1.0 + 0.1 * jnp.abs(jax.random.normal(ks[15], (embedding_dim,), f32)),
    }
    # TODO(synk): parameters `b`, `w0`, `w1` exist in __init__ but are unused
    # in the PyTorch forward, so they are omitted here.
    return params


if __name__ == "__main__":
    # Small ConvE config: embedding_dim=32, embedding_shape1=4 -> emb_dim2=8
    # stacked input (B,1,8,8), conv out (B,32,6,6), hidden_size = 32*6*6 = 1152
    # num_entities=300 exercises the E-tiled grid (3 tiles of 128 + padding).
    num_entities, num_relations = 300, 16
    embedding_dim, emb_dim1 = 32, 4
    hidden_size = 32 * (2 * emb_dim1 - 2) * (embedding_dim // emb_dim1 - 2)
    B = 2

    key = jax.random.PRNGKey(0)
    kp, ke, kr = jax.random.split(key, 3)
    params = init_params(kp, num_entities, num_relations, embedding_dim, hidden_size)
    e1 = jax.random.randint(ke, (B,), 1, num_entities).astype(jnp.int32)
    rel = jax.random.randint(kr, (B,), 1, num_relations).astype(jnp.int32)

    # one-time weight preparation (outside the jitted per-call path)
    prep = prepare_conve_params(params, emb_dim1, block_e=128,
                                classifier_dtype=jnp.float32)

    pred = conve_forward(e1, rel, prep, emb_dim1=emb_dim1,
                         num_entities=num_entities, block_b=8, block_e=128)
    pred = jax.block_until_ready(pred)

    ref = conve_reference(e1, rel, params, emb_dim1)
    assert pred.shape == (B, num_entities)
    # tolerance slightly above 2e-5: per-channel fc matmuls change f32
    # accumulation order relative to the single-matmul reference.
    assert jnp.allclose(pred, ref, atol=3e-5, rtol=3e-5), (
        f"max abs diff = {jnp.max(jnp.abs(pred - ref))}")

    print("KERNEL_OK")
</pallas_src>

<mosaic_0001>
module attributes {stable_mosaic.version = 11 : i64} {
  func.func @classifier_kernel(%arg0: i32, %arg1: memref<8x32xf32, #tpu.memory_space<vmem>>, %arg2: memref<32x128xf32, #tpu.memory_space<vmem>>, %arg3: memref<1x128xf32, #tpu.memory_space<vmem>>, %arg4: memref<8x128xf32, #tpu.memory_space<vmem>>) attributes {dimension_semantics = [#tpu.dimension_semantics<parallel>], iteration_bounds = array<i64: 3>, scalar_prefetch = 0 : i64, scratch_operands = 0 : i64, tpu.core_type = #tpu.core_type<tc>, window_params = [{pipeline_mode = #tpu.pipeline_mode<synchronous>, transform_indices = @transform_0, window_bounds = array<i64: 8, 32>}, {transform_indices = @transform_1, window_bounds = array<i64: 32, 128>}, {transform_indices = @transform_2, window_bounds = array<i64: 1, 128>}, {transform_indices = @transform_3, window_bounds = array<i64: 8, 128>}]} {
    %c0 = arith.constant 0 : index
    %c0_0 = arith.constant 0 : index
    %0 = vector.load %arg2[%c0, %c0_0] : memref<32x128xf32, #tpu.memory_space<vmem>>, vector<32x128xf32>
    %c0_1 = arith.constant 0 : index
    %c0_2 = arith.constant 0 : index
    %1 = vector.load %arg1[%c0_1, %c0_2] : memref<8x32xf32, #tpu.memory_space<vmem>>, vector<8x32xf32>
    %cst = arith.constant dense<0.000000e+00> : vector<8x128xf32>
    %2 = tpu.matmul %1, %0, %cst {dimension_numbers = #tpu.dot_dimension_numbers<[1], [0], [0], [1], [0, 0, 1, 1], [], []>} : vector<8x32xf32>, vector<32x128xf32>, vector<8x128xf32> -> vector<8x128xf32>
    %c0_3 = arith.constant 0 : index
    %c0_4 = arith.constant 0 : index
    %3 = vector.load %arg3[%c0_3, %c0_4] : memref<1x128xf32, #tpu.memory_space<vmem>>, vector<1x128xf32>
    %4 = vector.broadcast %3 : vector<1x128xf32> to vector<8x128xf32>
    %5 = arith.addf %2, %4 : vector<8x128xf32>
    %cst_5 = arith.constant 5.000000e-01 : f32
    %6 = vector.broadcast %cst_5 : f32 to vector<8x128xf32>
    %7 = arith.mulf %6, %5 : vector<8x128xf32>
    %8 = math.tanh %7 : vector<8x128xf32>
    %cst_6 = arith.constant 1.000000e+00 : f32
    %9 = vector.broadcast %cst_6 : f32 to vector<8x128xf32>
    %10 = arith.addf %8, %9 : vector<8x128xf32>
    %cst_7 = arith.constant 5.000000e-01 : f32
    %11 = vector.broadcast %cst_7 : f32 to vector<8x128xf32>
    %12 = arith.mulf %11, %10 : vector<8x128xf32>
    %c0_8 = arith.constant 0 : index
    %c0_9 = arith.constant 0 : index
    %13 = vector.load %arg4[%c0_8, %c0_9] : memref<8x128xf32, #tpu.memory_space<vmem>>, vector<8x128xf32>
    tpu.vector_store %arg4[%c0_8, %c0_9], %12 {strides = array<i32>} : memref<8x128xf32, #tpu.memory_space<vmem>>, vector<8x128xf32>,
    return
  }
  func.func @transform_0(%arg0: i32) -> (i32, i32) {
    %c0_i32 = arith.constant 0 : i32
    %c0_i32_0 = arith.constant 0 : i32
    %c0_i32_1 = arith.constant 0 : i32
    return %c0_i32, %c0_i32_0 : i32, i32
  }
  func.func @transform_1(%arg0: i32) -> (i32, i32) {
    %c0_i32 = arith.constant 0 : i32
    %c0_i32_0 = arith.constant 0 : i32
    return %c0_i32, %arg0 : i32, i32
  }
  func.func @transform_2(%arg0: i32) -> (i32, i32) {
    %c0_i32 = arith.constant 0 : i32
    %c0_i32_0 = arith.constant 0 : i32
    return %c0_i32, %arg0 : i32, i32
  }
  func.func @transform_3(%arg0: i32) -> (i32, i32) {
    %c0_i32 = arith.constant 0 : i32
    %c0_i32_0 = arith.constant 0 : i32
    return %c0_i32, %arg0 : i32, i32
  }
}

module attributes {stable_mosaic.version = 11 : i64} {
  func.func @conv_fc_kernel(%arg0: i32, %arg1: memref<9x32xf32, #tpu.memory_space<smem>>, %arg2: memref<32xf32, #tpu.memory_space<smem>>, %arg3: memref<9x8x36xf32, #tpu.memory_space<vmem>>, %arg4: memref<32x36x32xf32, #tpu.memory_space<vmem>>, %arg5: memref<1x32xf32, #tpu.memory_space<vmem>>, %arg6: memref<8x32xf32, #tpu.memory_space<vmem>>) attributes {dimension_semantics = [#tpu.dimension_semantics<parallel>], iteration_bounds = array<i64: 1>, scalar_prefetch = 0 : i64, scratch_operands = 0 : i64, tpu.core_type = #tpu.core_type<tc>, window_params = [{transform_indices = @transform_0, window_bounds = array<i64: 9, 32>}, {transform_indices = @transform_1, window_bounds = array<i64: 32>}, {transform_indices = @transform_2, window_bounds = array<i64: 9, 8, 36>}, {pipeline_mode = #tpu.pipeline_mode<synchronous>, transform_indices = @transform_3, window_bounds = array<i64: 32, 36, 32>}, {pipeline_mode = #tpu.pipeline_mode<synchronous>, transform_indices = @transform_4, window_bounds = array<i64: 1, 32>}, {transform_indices = @transform_5, window_bounds = array<i64: 8, 32>}]} {
    %cst = arith.constant 0.000000e+00 : f32
    %0 = vector.broadcast %cst : f32 to vector<8x32xf32>
    %c0 = arith.constant 0 : index
    %c0_0 = arith.constant 0 : index
    %c0_1 = arith.constant 0 : index
    %1 = vector.load %arg3[%c0, %c0_0, %c0_1] : memref<9x8x36xf32, #tpu.memory_space<vmem>>, vector<1x8x36xf32>
    %2 = vector.shape_cast %1 : vector<1x8x36xf32> to vector<8x36xf32>
    %c0_2 = arith.constant 0 : index
    %c0_3 = arith.constant 0 : index
    %3 = memref.load %arg1[%c0_2, %c0_3] : memref<9x32xf32, #tpu.memory_space<smem>>
    %4 = vector.broadcast %3 : f32 to vector<8x36xf32>
    %5 = arith.mulf %2, %4 : vector<8x36xf32>
    %c1 = arith.constant 1 : index
    %c0_4 = arith.constant 0 : index
    %c0_5 = arith.constant 0 : index
    %6 = vector.load %arg3[%c1, %c0_4, %c0_5] : memref<9x8x36xf32, #tpu.memory_space<vmem>>, vector<1x8x36xf32>
    %7 = vector.shape_cast %6 : vector<1x8x36xf32> to vector<8x36xf32>
    %c1_6 = arith.constant 1 : index
    %c0_7 = arith.constant 0 : index
    %8 = memref.load %arg1[%c1_6, %c0_7] : memref<9x32xf32, #tpu.memory_space<smem>>
    %9 = vector.broadcast %8 : f32 to vector<8x36xf32>
    %10 = arith.mulf %7, %9 : vector<8x36xf32>
    %11 = arith.addf %5, %10 : vector<8x36xf32>
    %c2 = arith.constant 2 : index
    %c0_8 = arith.constant 0 : index
    %c0_9 = arith.constant 0 : index
    %12 = vector.load %arg3[%c2, %c0_8, %c0_9] : memref<9x8x36xf32, #tpu.memory_space<vmem>>, vector<1x8x36xf32>
    %13 = vector.shape_cast %12 : vector<1x8x36xf32> to vector<8x36xf32>
    %c2_10 = arith.constant 2 : index
    %c0_11 = arith.constant 0 : index
    %14 = memref.load %arg1[%c2_10, %c0_11] : memref<9x32xf32, #tpu.memory_space<smem>>
    %15 = vector.broadcast %14 : f32 to vector<8x36xf32>
    %16 = arith.mulf %13, %15 : vector<8x36xf32>
    %17 = arith.addf %11, %16 : vector<8x36xf32>
    %c3 = arith.constant 3 : index
    %c0_12 = arith.constant 0 : index
    %c0_13 = arith.constant 0 : index
    %18 = vector.load %arg3[%c3, %c0_12, %c0_13] : memref<9x8x36xf32, #tpu.memory_space<vmem>>, vector<1x8x36xf32>
    %19 = vector.shape_cast %18 : vector<1x8x36xf32> to vector<8x36xf32>
    %c3_14 = arith.constant 3 : index
    %c0_15 = arith.constant 0 : index
    %20 = memref.load %arg1[%c3_14, %c0_15] : memref<9x32xf32, #tpu.memory_space<smem>>
    %21 = vector.broadcast %20 : f32 to vector<8x36xf32>
    %22 = arith.mulf %19, %21 : vector<8x36xf32>
    %23 = arith.addf %17, %22 : vector<8x36xf32>
    %c4 = arith.constant 4 : index
    %c0_16 = arith.constant 0 : index
    %c0_17 = arith.constant 0 : index
    %24 = vector.load %arg3[%c4, %c0_16, %c0_17] : memref<9x8x36xf32, #tpu.memory_space<vmem>>, vector<1x8x36xf32>
    %25 = vector.shape_cast %24 : vector<1x8x36xf32> to vector<8x36xf32>
    %c4_18 = arith.constant 4 : index
    %c0_19 = arith.constant 0 : index
    %26 = memref.load %arg1[%c4_18, %c0_19] : memref<9x32xf32, #tpu.memory_space<smem>>
    %27 = vector.broadcast %26 : f32 to vector<8x36xf32>
    %28 = arith.mulf %25, %27 : vector<8x36xf32>
    %29 = arith.addf %23, %28 : vector<8x36xf32>
    %c5 = arith.constant 5 : index
    %c0_20 = arith.constant 0 : index
    %c0_21 = arith.constant 0 : index
    %30 = vector.load %arg3[%c5, %c0_20, %c0_21] : memref<9x8x36xf32, #tpu.memory_space<vmem>>, vector<1x8x36xf32>
    %31 = vector.shape_cast %30 : vector<1x8x36xf32> to vector<8x36xf32>
    %c5_22 = arith.constant 5 : index
    %c0_23 = arith.constant 0 : index
    %32 = memref.load %arg1[%c5_22, %c0_23] : memref<9x32xf32, #tpu.memory_space<smem>>
    %33 = vector.broadcast %32 : f32 to vector<8x36xf32>
    %34 = arith.mulf %31, %33 : vector<8x36xf32>
    %35 = arith.addf %29, %34 : vector<8x36xf32>
    %c6 = arith.constant 6 : index
    %c0_24 = arith.constant 0 : index
    %c0_25 = arith.constant 0 : index
    %36 = vector.load %arg3[%c6, %c0_24, %c0_25] : memref<9x8x36xf32, #tpu.memory_space<vmem>>, vector<1x8x36xf32>
    %37 = vector.shape_cast %36 : vector<1x8x36xf32> to vector<8x36xf32>
    %c6_26 = arith.constant 6 : index
    %c0_27 = arith.constant 0 : index
    %38 = memref.load %arg1[%c6_26, %c0_27] : memref<9x32xf32, #tpu.memory_space<smem>>
    %39 = vector.broadcast %38 : f32 to vector<8x36xf32>
    %40 = arith.mulf %37, %39 : vector<8x36xf32>
    %41 = arith.addf %35, %40 : vector<8x36xf32>
    %c7 = arith.constant 7 : index
    %c0_28 = arith.constant 0 : index
    %c0_29 = arith.constant 0 : index
    %42 = vector.load %arg3[%c7, %c0_28, %c0_29] : memref<9x8x36xf32, #tpu.memory_space<vmem>>, vector<1x8x36xf32>
    %43 = vector.shape_cast %42 : vector<1x8x36xf32> to vector<8x36xf32>
    %c7_30 = arith.constant 7 : index
    %c0_31 = arith.constant 0 : index
    %44 = memref.load %arg1[%c7_30, %c0_31] : memref<9x32xf32, #tpu.memory_space<smem>>
    %45 = vector.broadcast %44 : f32 to vector<8x36xf32>
    %46 = arith.mulf %43, %45 : vector<8x36xf32>
    %47 = arith.addf %41, %46 : vector<8x36xf32>
    %c8 = arith.constant 8 : index
    %c0_32 = arith.constant 0 : index
    %c0_33 = arith.constant 0 : index
    %48 = vector.load %arg3[%c8, %c0_32, %c0_33] : memref<9x8x36xf32, #tpu.memory_space<vmem>>, vector<1x8x36xf32>
    %49 = vector.shape_cast %48 : vector<1x8x36xf32> to vector<8x36xf32>
    %c8_34 = arith.constant 8 : index
    %c0_35 = arith.constant 0 : index
    %50 = memref.load %arg1[%c8_34, %c0_35] : memref<9x32xf32, #tpu.memory_space<smem>>
    %51 = vector.broadcast %50 : f32 to vector<8x36xf32>
    %52 = arith.mulf %49, %51 : vector<8x36xf32>
    %53 = arith.addf %47, %52 : vector<8x36xf32>
    %c0_36 = arith.constant 0 : index
    %54 = memref.load %arg2[%c0_36] : memref<32xf32, #tpu.memory_space<smem>>
    %55 = vector.broadcast %54 : f32 to vector<8x36xf32>
    %56 = arith.addf %53, %55 : vector<8x36xf32>
    %cst_37 = arith.constant 0.000000e+00 : f32
    %57 = vector.broadcast %cst_37 : f32 to vector<8x36xf32>
    %58 = arith.maximumf %56, %57 : vector<8x36xf32>
    %c0_38 = arith.constant 0 : index
    %c0_39 = arith.constant 0 : index
    %c0_40 = arith.constant 0 : index
    %59 = vector.load %arg4[%c0_38, %c0_39, %c0_40] : memref<32x36x32xf32, #tpu.memory_space<vmem>>, vector<1x36x32xf32>
    %60 = vector.shape_cast %59 : vector<1x36x32xf32> to vector<36x32xf32>
    %cst_41 = arith.constant dense<0.000000e+00> : vector<8x32xf32>
    %61 = tpu.matmul %58, %60, %cst_41 {dimension_numbers = #tpu.dot_dimension_numbers<[1], [0], [0], [1], [0, 0, 1, 1], [], []>} : vector<8x36xf32>, vector<36x32xf32>, vector<8x32xf32> -> vector<8x32xf32>
    %62 = arith.addf %0, %61 : vector<8x32xf32>
    %c0_42 = arith.constant 0 : index
    %c0_43 = arith.constant 0 : index
    %c0_44 = arith.constant 0 : index
    %63 = vector.load %arg3[%c0_42, %c0_43, %c0_44] : memref<9x8x36xf32, #tpu.memory_space<vmem>>, vector<1x8x36xf32>
    %64 = vector.shape_cast %63 : vector<1x8x36xf32> to vector<8x36xf32>
    %c0_45 = arith.constant 0 : index
    %c1_46 = arith.constant 1 : index
    %65 = memref.load %arg1[%c0_45, %c1_46] : memref<9x32xf32, #tpu.memory_space<smem>>
    %66 = vector.broadcast %65 : f32 to vector<8x36xf32>
    %67 = arith.mulf %64, %66 : vector<8x36xf32>
    %c1_47 = arith.constant 1 : index
    %c0_48 = arith.constant 0 : index
    %c0_49 = arith.constant 0 : index
    %68 = vector.load %arg3[%c1_47, %c0_48, %c0_49] : memref<9x8x36xf32, #tpu.memory_space<vmem>>, vector<1x8x36xf32>
    %69 = vector.shape_cast %68 : vector<1x8x36xf32> to vector<8x36xf32>
    %c1_50 = arith.constant 1 : index
    %c1_51 = arith.constant 1 : index
    %70 = memref.load %arg1[%c1_50, %c1_51] : memref<9x32xf32, #tpu.memory_space<smem>>
    %71 = vector.broadcast %70 : f32 to vector<8x36xf32>
    %72 = arith.mulf %69, %71 : vector<8x36xf32>
    %73 = arith.addf %67, %72 : vector<8x36xf32>
    %c2_52 = arith.constant 2 : index
    %c0_53 = arith.constant 0 : index
    %c0_54 = arith.constant 0 : index
    %74 = vector.load %arg3[%c2_52, %c0_53, %c0_54] : memref<9x8x36xf32, #tpu.memory_space<vmem>>, vector<1x8x36xf32>
    %75 = vector.shape_cast %74 : vector<1x8x36xf32> to vector<8x36xf32>
    %c2_55 = arith.constant 2 : index
    %c1_56 = arith.constant 1 : index
    %76 = memref.load %arg1[%c2_55, %c1_56] : memref<9x32xf32, #tpu.memory_space<smem>>
    %77 = vector.broadcast %76 : f32 to vector<8x36xf32>
    %78 = arith.mulf %75, %77 : vector<8x36xf32>
    %79 = arith.addf %73, %78 : vector<8x36xf32>
    %c3_57 = arith.constant 3 : index
    %c0_58 = arith.constant 0 : index
    %c0_59 = arith.constant 0 : index
    %80 = vector.load %arg3[%c3_57, %c0_58, %c0_59] : memref<9x8x36xf32, #tpu.memory_space<vmem>>, vector<1x8x36xf32>
    %81 = vector.shape_cast %80 : vector<1x8x36xf32> to vector<8x36xf32>
    %c3_60 = arith.constant 3 : index
    %c1_61 = arith.constant 1 : index
    %82 = memref.load %arg1[%c3_60, %c1_61] : memref<9x32xf32, #tpu.memory_space<smem>>
    %83 = vector.broadcast %82 : f32 to vector<8x36xf32>
    %84 = arith.mulf %81, %83 : vector<8x36xf32>
    %85 = arith.addf %79, %84 : vector<8x36xf32>
    %c4_62 = arith.constant 4 : index
    %c0_63 = arith.constant 0 : index
    %c0_64 = arith.constant 0 : index
    %86 = vector.load %arg3[%c4_62, %c0_63, %c0_64] : memref<9x8x36xf32, #tpu.memory_space<vmem>>, vector<1x8x36xf32>
    %87 = vector.shape_cast %86 : vector<1x8x36xf32> to vector<8x36xf32>
    %c4_65 = arith.constant 4 : index
    %c1_66 = arith.constant 1 : index
    %88 = memref.load %arg1[%c4_65, %c1_66] : memref<9x32xf32, #tpu.memory_space<smem>>
    %89 = vector.broadcast %88 : f32 to vector<8x36xf32>
    %90 = arith.mulf %87, %89 : vector<8x36xf32>
    %91 = arith.addf %85, %90 : vector<8x36xf32>
    %c5_67 = arith.constant 5 : index
    %c0_68 = arith.constant 0 : index
    %c0_69 = arith.constant 0 : index
    %92 = vector.load %arg3[%c5_67, %c0_68, %c0_69] : memref<9x8x36xf32, #tpu.memory_space<vmem>>, vector<1x8x36xf32>
    %93 = vector.shape_cast %92 : vector<1x8x36xf32> to vector<8x36xf32>
    %c5_70 = arith.constant 5 : index
    %c1_71 = arith.constant 1 : index
    %94 = memref.load %arg1[%c5_70, %c1_71] : memref<9x32xf32, #tpu.memory_space<smem>>
    %95 = vector.broadcast %94 : f32 to vector<8x36xf32>
    %96 = arith.mulf %93, %95 : vector<8x36xf32>
    %97 = arith.addf %91, %96 : vector<8x36xf32>
    %c6_72 = arith.constant 6 : index
    %c0_73 = arith.constant 0 : index
    %c0_74 = arith.constant 0 : index
    %98 = vector.load %arg3[%c6_72, %c0_73, %c0_74] : memref<9x8x36xf32, #tpu.memory_space<vmem>>, vector<1x8x36xf32>
    %99 = vector.shape_cast %98 : vector<1x8x36xf32> to vector<8x36xf32>
    %c6_75 = arith.constant 6 : index
    %c1_76 = arith.constant 1 : index
    %100 = memref.load %arg1[%c6_75, %c1_76] : memref<9x32xf32, #tpu.memory_space<smem>>
    %101 = vector.broadcast %100 : f32 to vector<8x36xf32>
    %102 = arith.mulf %99, %101 : vector<8x36xf32>
    %103 = arith.addf %97, %102 : vector<8x36xf32>
    %c7_77 = arith.constant 7 : index
    %c0_78 = arith.constant 0 : index
    %c0_79 = arith.constant 0 : index
    %104 = vector.load %arg3[%c7_77, %c0_78, %c0_79] : memref<9x8x36xf32, #tpu.memory_space<vmem>>, vector<1x8x36xf32>
    %105 = vector.shape_cast %104 : vector<1x8x36xf32> to vector<8x36xf32>
    %c7_80 = arith.constant 7 : index
    %c1_81 = arith.constant 1 : index
    %106 = memref.load %arg1[%c7_80, %c1_81] : memref<9x32xf32, #tpu.memory_space<smem>>
    %107 = vector.broadcast %106 : f32 to vector<8x36xf32>
    %108 = arith.mulf %105, %107 : vector<8x36xf32>
    %109 = arith.addf %103, %108 : vector<8x36xf32>
    %c8_82 = arith.constant 8 : index
    %c0_83 = arith.constant 0 : index
    %c0_84 = arith.constant 0 : index
    %110 = vector.load %arg3[%c8_82, %c0_83, %c0_84] : memref<9x8x36xf32, #tpu.memory_space<vmem>>, vector<1x8x36xf32>
    %111 = vector.shape_cast %110 : vector<1x8x36xf32> to vector<8x36xf32>
    %c8_85 = arith.constant 8 : index
    %c1_86 = arith.constant 1 : index
    %112 = memref.load %arg1[%c8_85, %c1_86] : memref<9x32xf32, #tpu.memory_space<smem>>
    %113 = vector.broadcast %112 : f32 to vector<8x36xf32>
    %114 = arith.mulf %111, %113 : vector<8x36xf32>
    %115 = arith.addf %109, %114 : vector<8x36xf32>
    %c1_87 = arith.constant 1 : index
    %116 = memref.load %arg2[%c1_87] : memref<32xf32, #tpu.memory_space<smem>>
    %117 = vector.broadcast %116 : f32 to vector<8x36xf32>
    %118 = arith.addf %115, %117 : vector<8x36xf32>
    %cst_88 = arith.constant 0.000000e+00 : f32
    %119 = vector.broadcast %cst_88 : f32 to vector<8x36xf32>
    %120 = arith.maximumf %118, %119 : vector<8x36xf32>
    %c1_89 = arith.constant 1 : index
    %c0_90 = arith.constant 0 : index
    %c0_91 = arith.constant 0 : index
    %121 = vector.load %arg4[%c1_89, %c0_90, %c0_91] : memref<32x36x32xf32, #tpu.memory_space<vmem>>, vector<1x36x32xf32>
    %122 = vector.shape_cast %121 : vector<1x36x32xf32> to vector<36x32xf32>
    %cst_92 = arith.constant dense<0.000000e+00> : vector<8x32xf32>
    %123 = tpu.matmul %120, %122, %cst_92 {dimension_numbers = #tpu.dot_dimension_numbers<[1], [0], [0], [1], [0, 0, 1, 1], [], []>} : vector<8x36xf32>, vector<36x32xf32>, vector<8x32xf32> -> vector<8x32xf32>
    %124 = arith.addf %62, %123 : vector<8x32xf32>
    %c0_93 = arith.constant 0 : index
    %c0_94 = arith.constant 0 : index
    %c0_95 = arith.constant 0 : index
    %125 = vector.load %arg3[%c0_93, %c0_94, %c0_95] : memref<9x8x36xf32, #tpu.memory_space<vmem>>, vector<1x8x36xf32>
    %126 = vector.shape_cast %125 : vector<1x8x36xf32> to vector<8x36xf32>
    %c0_96 = arith.constant 0 : index
    %c2_97 = arith.constant 2 : index
    %127 = memref.load %arg1[%c0_96, %c2_97] : memref<9x32xf32, #tpu.memory_space<smem>>
    %128 = vector.broadcast %127 : f32 to vector<8x36xf32>
    %129 = arith.mulf %126, %128 : vector<8x36xf32>
    %c1_98 = arith.constant 1 : index
    %c0_99 = arith.constant 0 : index
    %c0_100 = arith.constant 0 : index
    %130 = vector.load %arg3[%c1_98, %c0_99, %c0_100] : memref<9x8x36xf32, #tpu.memory_space<vmem>>, vector<1x8x36xf32>
    %131 = vector.shape_cast %130 : vector<1x8x36xf32> to vector<8x36xf32>
    %c1_101 = arith.constant 1 : index
    %c2_102 = arith.constant 2 : index
    %132 = memref.load %arg1[%c1_101, %c2_102] : memref<9x32xf32, #tpu.memory_space<smem>>
    %133 = vector.broadcast %132 : f32 to vector<8x36xf32>
    %134 = arith.mulf %131, %133 : vector<8x36xf32>
    %135 = arith.addf %129, %134 : vector<8x36xf32>
    %c2_103 = arith.constant 2 : index
    %c0_104 = arith.constant 0 : index
    %c0_105 = arith.constant 0 : index
    %136 = vector.load %arg3[%c2_103, %c0_104, %c0_105] : memref<9x8x36xf32, #tpu.memory_space<vmem>>, vector<1x8x36xf32>
    %137 = vector.shape_cast %136 : vector<1x8x36xf32> to vector<8x36xf32>
    %c2_106 = arith.constant 2 : index
    %c2_107 = arith.constant 2 : index
    %138 = memref.load %arg1[%c2_106, %c2_107] : memref<9x32xf32, #tpu.memory_space<smem>>
    %139 = vector.broadcast %138 : f32 to vector<8x36xf32>
    %140 = arith.mulf %137, %139 : vector<8x36xf32>
    %141 = arith.addf %135, %140 : vector<8x36xf32>
    %c3_108 = arith.constant 3 : index
    %c0_109 = arith.constant 0 : index
    %c0_110 = arith.constant 0 : index
    %142 = vector.load %arg3[%c3_108, %c0_109, %c0_110] : memref<9x8x36xf32, #tpu.memory_space<vmem>>, vector<1x8x36xf32>
    %143 = vector.shape_cast %142 : vector<1x8x36xf32> to vector<8x36xf32>
    %c3_111 = arith.constant 3 : index
    %c2_112 = arith.constant 2 : index
    %144 = memref.load %arg1[%c3_111, %c2_112] : memref<9x32xf32, #tpu.memory_space<smem>>
    %145 = vector.broadcast %144 : f32 to vector<8x36xf32>
    %146 = arith.mulf %143, %145 : vector<8x36xf32>
    %147 = arith.addf %141, %146 : vector<8x36xf32>
    %c4_113 = arith.constant 4 : index
    %c0_114 = arith.constant 0 : index
    %c0_115 = arith.constant 0 : index
    %148 = vector.load %arg3[%c4_113, %c0_114, %c0_115] : memref<9x8x36xf32, #tpu.memory_space<vmem>>, vector<1x8x36xf32>
    %149 = vector.shape_cast %148 : vector<1x8x36xf32> to vector<8x36xf32>
    %c4_116 = arith.constant 4 : index
    %c2_117 = arith.constant 2 : index
    %150 = memref.load %arg1[%c4_116, %c2_117] : memref<9x32xf32, #tpu.memory_space<smem>>
    %151 = vector.broadcast %150 : f32 to vector<8x36xf32>
    %152 = arith.mulf %149, %151 : vector<8x36xf32>
    %153 = arith.addf %147, %152 : vector<8x36xf32>
    %c5_118 = arith.constant 5 : index
    %c0_119 = arith.constant 0 : index
    %c0_120 = arith.constant 0 : index
    %154 = vector.load %arg3[%c5_118, %c0_119, %c0_120] : memref<9x8x36xf32, #tpu.memory_space<vmem>>, vector<1x8x36xf32>
    %155 = vector.shape_cast %154 : vector<1x8x36xf32> to vector<8x36xf32>
    %c5_121 = arith.constant 5 : index
    %c2_122 = arith.constant 2 : index
    %156 = memref.load %arg1[%c5_121, %c2_122] : memref<9x32xf32, #tpu.memory_space<smem>>
    %157 = vector.broadcast %156 : f32 to vector<8x36xf32>
    %158 = arith.mulf %155, %157 : vector<8x36xf32>
    %159 = arith.addf %153, %158 : vector<8x36xf32>
    %c6_123 = arith.constant 6 : index
    %c0_124 = arith.constant 0 : index
    %c0_125 = arith.constant 0 : index
    %160 = vector.load %arg3[%c6_123, %c0_124, %c0_125] : memref<9x8x36xf32, #tpu.memory_space<vmem>>, vector<1x8x36xf32>
    %161 = vector.shape_cast %160 : vector<1x8x36xf32> to vector<8x36xf32>
    %c6_126 = arith.constant 6 : index
    %c2_127 = arith.constant 2 : index
    %162 = memref.load %arg1[%c6_126, %c2_127] : memref<9x32xf32, #tpu.memory_space<smem>>
    %163 = vector.broadcast %162 : f32 to vector<8x36xf32>
    %164 = arith.mulf %161, %163 : vector<8x36xf32>
    %165 = arith.addf %159, %164 : vector<8x36xf32>
    %c7_128 = arith.constant 7 : index
    %c0_129 = arith.constant 0 : index
    %c0_130 = arith.constant 0 : index
    %166 = vector.load %arg3[%c7_128, %c0_129, %c0_130] : memref<9x8x36xf32, #tpu.memory_space<vmem>>, vector<1x8x36xf32>
    %167 = vector.shape_cast %166 : vector<1x8x36xf32> to vector<8x36xf32>
    %c7_131 = arith.constant 7 : index
    %c2_132 = arith.constant 2 : index
    %168 = memref.load %arg1[%c7_131, %c2_132] : memref<9x32xf32, #tpu.memory_space<smem>>
    %169 = vector.broadcast %168 : f32 to vector<8x36xf32>
    %170 = arith.mulf %167, %169 : vector<8x36xf32>
    %171 = arith.addf %165, %170 : vector<8x36xf32>
    %c8_133 = arith.constant 8 : index
    %c0_134 = arith.constant 0 : index
    %c0_135 = arith.constant 0 : index
    %172 = vector.load %arg3[%c8_133, %c0_134, %c0_135] : memref<9x8x36xf32, #tpu.memory_space<vmem>>, vector<1x8x36xf32>
    %173 = vector.shape_cast %172 : vector<1x8x36xf32> to vector<8x36xf32>
    %c8_136 = arith.constant 8 : index
    %c2_137 = arith.constant 2 : index
    %174 = memref.load %arg1[%c8_136, %c2_137] : memref<9x32xf32, #tpu.memory_space<smem>>
    %175 = vector.broadcast %174 : f32 to vector<8x36xf32>
    %176 = arith.mulf %173, %175 : vector<8x36xf32>
    %177 = arith.addf %171, %176 : vector<8x36xf32>
    %c2_138 = arith.constant 2 : index
    %178 = memref.load %arg2[%c2_138] : memref<32xf32, #tpu.memory_space<smem>>
    %179 = vector.broadcast %178 : f32 to vector<8x36xf32>
    %180 = arith.addf %177, %179 : vector<8x36xf32>
    %cst_139 = arith.constant 0.000000e+00 : f32
    %181 = vector.broadcast %cst_139 : f32 to vector<8x36xf32>
    %182 = arith.maximumf %180, %181 : vector<8x36xf32>
    %c2_140 = arith.constant 2 : index
    %c0_141 = arith.constant 0 : index
    %c0_142 = arith.constant 0 : index
    %183 = vector.load %arg4[%c2_140, %c0_141, %c0_142] : memref<32x36x32xf32, #tpu.memory_space<vmem>>, vector<1x36x32xf32>
    %184 = vector.shape_cast %183 : vector<1x36x32xf32> to vector<36x32xf32>
    %cst_143 = arith.constant dense<0.000000e+00> : vector<8x32xf32>
    %185 = tpu.matmul %182, %184, %cst_143 {dimension_numbers = #tpu.dot_dimension_numbers<[1], [0], [0], [1], [0, 0, 1, 1], [], []>} : vector<8x36xf32>, vector<36x32xf32>, vector<8x32xf32> -> vector<8x32xf32>
    %186 = arith.addf %124, %185 : vector<8x32xf32>
    %c0_144 = arith.constant 0 : index
    %c0_145 = arith.constant 0 : index
    %c0_146 = arith.constant 0 : index
    %187 = vector.load %arg3[%c0_144, %c0_145, %c0_146] : memref<9x8x36xf32, #tpu.memory_space<vmem>>, vector<1x8x36xf32>
    %188 = vector.shape_cast %187 : vector<1x8x36xf32> to vector<8x36xf32>
    %c0_147 = arith.constant 0 : index
    %c3_148 = arith.constant 3 : index
    %189 = memref.load %arg1[%c0_147, %c3_148] : memref<9x32xf32, #tpu.memory_space<smem>>
    %190 = vector.broadcast %189 : f32 to vector<8x36xf32>
    %191 = arith.mulf %188, %190 : vector<8x36xf32>
    %c1_149 = arith.constant 1 : index
    %c0_150 = arith.constant 0 : index
    %c0_151 = arith.constant 0 : index
    %192 = vector.load %arg3[%c1_149, %c0_150, %c0_151] : memref<9x8x36xf32, #tpu.memory_space<vmem>>, vector<1x8x36xf32>
    %193 = vector.shape_cast %192 : vector<1x8x36xf32> to vector<8x36xf32>
    %c1_152 = arith.constant 1 : index
    %c3_153 = arith.constant 3 : index
    %194 = memref.load %arg1[%c1_152, %c3_153] : memref<9x32xf32, #tpu.memory_space<smem>>
    %195 = vector.broadcast %194 : f32 to vector<8x36xf32>
    %196 = arith.mulf %193, %195 : vector<8x36xf32>
    %197 = arith.addf %191, %196 : vector<8x36xf32>
    %c2_154 = arith.constant 2 : index
    %c0_155 = arith.constant 0 : index
    %c0_156 = arith.constant 0 : index
    %198 = vector.load %arg3[%c2_154, %c0_155, %c0_156] : memref<9x8x36xf32, #tpu.memory_space<vmem>>, vector<1x8x36xf32>
    %199 = vector.shape_cast %198 : vector<1x8x36xf32> to vector<8x36xf32>
    %c2_157 = arith.constant 2 : index
    %c3_158 = arith.constant 3 : index
    %200 = memref.load %arg1[%c2_157, %c3_158] : memref<9x32xf32, #tpu.memory_space<smem>>
    %201 = vector.broadcast %200 : f32 to vector<8x36xf32>
    %202 = arith.mulf %199, %201 : vector<8x36xf32>
    %203 = arith.addf %197, %202 : vector<8x36xf32>
    %c3_159 = arith.constant 3 : index
    %c0_160 = arith.constant 0 : index
    %c0_161 = arith.constant 0 : index
    %204 = vector.load %arg3[%c3_159, %c0_160, %c0_161] : memref<9x8x36xf32, #tpu.memory_space<vmem>>, vector<1x8x36xf32>
    %205 = vector.shape_cast %204 : vector<1x8x36xf32> to vector<8x36xf32>
    %c3_162 = arith.constant 3 : index
    %c3_163 = arith.constant 3 : index
    %206 = memref.load %arg1[%c3_162, %c3_163] : memref<9x32xf32, #tpu.memory_space<smem>>
    %207 = vector.broadcast %206 : f32 to vector<8x36xf32>
    %208 = arith.mulf %205, %207 : vector<8x36xf32>
    %209 = arith.addf %203, %208 : vector<8x36xf32>
    %c4_164 = arith.constant 4 : index
    %c0_165 = arith.constant 0 : index
    %c0_166 = arith.constant 0 : index
    %210 = vector.load %arg3[%c4_164, %c0_165, %c0_166] : memref<9x8x36xf32, #tpu.memory_space<vmem>>, vector<1x8x36xf32>
    %211 = vector.shape_cast %210 : vector<1x8x36xf32> to vector<8x36xf32>
    %c4_167 = arith.constant 4 : index
    %c3_168 = arith.constant 3 : index
    %212 = memref.load %arg1[%c4_167, %c3_168] : memref<9x32xf32, #tpu.memory_space<smem>>
    %213 = vector.broadcast %212 : f32 to vector<8x36xf32>
    %214 = arith.mulf %211, %213 : vector<8x36xf32>
    %215 = arith.addf %209, %214 : vector<8x36xf32>
    %c5_169 = arith.constant 5 : index
    %c0_170 = arith.constant 0 : index
    %c0_171 = arith.constant 0 : index
    %216 = vector.load %arg3[%c5_169, %c0_170, %c0_171] : memref<9x8x36xf32, #tpu.memory_space<vmem>>, vector<1x8x36xf32>
    %217 = vector.shape_cast %216 : vector<1x8x36xf32> to vector<8x36xf32>
    %c5_172 = arith.constant 5 : index
    %c3_173 = arith.constant 3 : index
    %218 = memref.load %arg1[%c5_172, %c3_173] : memref<9x32xf32, #tpu.memory_space<smem>>
    %219 = vector.broadcast %218 : f32 to vector<8x36xf32>
    %220 = arith.mulf %217, %219 : vector<8x36xf32>
    %221 = arith.addf %215, %220 : vector<8x36xf32>
    %c6_174 = arith.constant 6 : index
    %c0_175 = arith.constant 0 : index
    %c0_176 = arith.constant 0 : index
    %222 = vector.load %arg3[%c6_174, %c0_175, %c0_176] : memref<9x8x36xf32, #tpu.memory_space<vmem>>, vector<1x8x36xf32>
    %223 = vector.shape_cast %222 : vector<1x8x36xf32> to vector<8x36xf32>
    %c6_177 = arith.constant 6 : index
    %c3_178 = arith.constant 3 : index
    %224 = memref.load %arg1[%c6_177, %c3_178] : memref<9x32xf32, #tpu.memory_space<smem>>
    %225 = vector.broadcast %224 : f32 to vector<8x36xf32>
    %226 = arith.mulf %223, %225 : vector<8x36xf32>
    %227 = arith.addf %221, %226 : vector<8x36xf32>
    %c7_179 = arith.constant 7 : index
    %c0_180 = arith.constant 0 : index
    %c0_181 = arith.constant 0 : index
    %228 = vector.load %arg3[%c7_179, %c0_180, %c0_181] : memref<9x8x36xf32, #tpu.memory_space<vmem>>, vector<1x8x36xf32>
    %229 = vector.shape_cast %228 : vector<1x8x36xf32> to vector<8x36xf32>
    %c7_182 = arith.constant 7 : index
    %c3_183 = arith.constant 3 : index
    %230 = memref.load %arg1[%c7_182, %c3_183] : memref<9x32xf32, #tpu.memory_space<smem>>
    %231 = vector.broadcast %230 : f32 to vector<8x36xf32>
    %232 = arith.mulf %229, %231 : vector<8x36xf32>
    %233 = arith.addf %227, %232 : vector<8x36xf32>
    %c8_184 = arith.constant 8 : index
    %c0_185 = arith.constant 0 : index
    %c0_186 = arith.constant 0 : index
    %234 = vector.load %arg3[%c8_184, %c0_185, %c0_186] : memref<9x8x36xf32, #tpu.memory_space<vmem>>, vector<1x8x36xf32>
    %235 = vector.shape_cast %234 : vector<1x8x36xf32> to vector<8x36xf32>
    %c8_187 = arith.constant 8 : index
    %c3_188 = arith.constant 3 : index
    %236 = memref.load %arg1[%c8_187, %c3_188] : memref<9x32xf32, #tpu.memory_space<smem>>
    %237 = vector.broadcast %236 : f32 to vector<8x36xf32>
    %238 = arith.mulf %235, %237 : vector<8x36xf32>
    %239 = arith.addf %233, %238 : vector<8x36xf32>
    %c3_189 = arith.constant 3 : index
    %240 = memref.load %arg2[%c3_189] : memref<32xf32, #tpu.memory_space<smem>>
    %241 = vector.broadcast %240 : f32 to vector<8x36xf32>
    %242 = arith.addf %239, %241 : vector<8x36xf32>
    %cst_190 = arith.constant 0.000000e+00 : f32
    %243 = vector.broadcast %cst_190 : f32 to vector<8x36xf32>
    %244 = arith.maximumf %242, %243 : vector<8x36xf32>
    %c3_191 = arith.constant 3 : index
    %c0_192 = arith.constant 0 : index
    %c0_193 = arith.constant 0 : index
    %245 = vector.load %arg4[%c3_191, %c0_192, %c0_193] : memref<32x36x32xf32, #tpu.memory_space<vmem>>, vector<1x36x32xf32>
    %246 = vector.shape_cast %245 : vector<1x36x32xf32> to vector<36x32xf32>
    %cst_194 = arith.constant dense<0.000000e+00> : vector<8x32xf32>
    %247 = tpu.matmul %244, %246, %cst_194 {dimension_numbers = #tpu.dot_dimension_numbers<[1], [0], [0], [1], [0, 0, 1, 1], [], []>} : vector<8x36xf32>, vector<36x32xf32>, vector<8x32xf32> -> vector<8x32xf32>
    %248 = arith.addf %186, %247 : vector<8x32xf32>
    %c0_195 = arith.constant 0 : index
    %c0_196 = arith.constant 0 : index
    %c0_197 = arith.constant 0 : index
    %249 = vector.load %arg3[%c0_195, %c0_196, %c0_197] : memref<9x8x36xf32, #tpu.memory_space<vmem>>, vector<1x8x36xf32>
    %250 = vector.shape_cast %249 : vector<1x8x36xf32> to vector<8x36xf32>
    %c0_198 = arith.constant 0 : index
    %c4_199 = arith.constant 4 : index
    %251 = memref.load %arg1[%c0_198, %c4_199] : memref<9x32xf32, #tpu.memory_space<smem>>
    %252 = vector.broadcast %251 : f32 to vector<8x36xf32>
    %253 = arith.mulf %250, %252 : vector<8x36xf32>
    %c1_200 = arith.constant 1 : index
    %c0_201 = arith.constant 0 : index
    %c0_202 = arith.constant 0 : index
    %254 = vector.load %arg3[%c1_200, %c0_201, %c0_202] : memref<9x8x36xf32, #tpu.memory_space<vmem>>, vector<1x8x36xf32>
    %255 = vector.shape_cast %254 : vector<1x8x36xf32> to vector<8x36xf32>
    %c1_203 = arith.constant 1 : index
    %c4_204 = arith.constant 4 : index
    %256 = memref.load %arg1[%c1_203, %c4_204] : memref<9x32xf32, #tpu.memory_space<smem>>
    %257 = vector.broadcast %256 : f32 to vector<8x36xf32>
    %258 = arith.mulf %255, %257 : vector<8x36xf32>
    %259 = arith.addf %253, %258 : vector<8x36xf32>
    %c2_205 = arith.constant 2 : index
    %c0_206 = arith.constant 0 : index
    %c0_207 = arith.constant 0 : index
    %260 = vector.load %arg3[%c2_205, %c0_206, %c0_207] : memref<9x8x36xf32, #tpu.memory_space<vmem>>, vector<1x8x36xf32>
    %261 = vector.shape_cast %260 : vector<1x8x36xf32> to vector<8x36xf32>
    %c2_208 = arith.constant 2 : index
    %c4_209 = arith.constant 4 : index
    %262 = memref.load %arg1[%c2_208, %c4_209] : memref<9x32xf32, #tpu.memory_space<smem>>
    %263 = vector.broadcast %262 : f32 to vector<8x36xf32>
    %264 = arith.mulf %261, %263 : vector<8x36xf32>
    %265 = arith.addf %259, %264 : vector<8x36xf32>
    %c3_210 = arith.constant 3 : index
    %c0_211 = arith.constant 0 : index
    %c0_212 = arith.constant 0 : index
    %266 = vector.load %arg3[%c3_210, %c0_211, %c0_212] : memref<9x8x36xf32, #tpu.memory_space<vmem>>, vector<1x8x36xf32>
    %267 = vector.shape_cast %266 : vector<1x8x36xf32> to vector<8x36xf32>
    %c3_213 = arith.constant 3 : index
    %c4_214 = arith.constant 4 : index
    %268 = memref.load %arg1[%c3_213, %c4_214] : memref<9x32xf32, #tpu.memory_space<smem>>
    %269 = vector.broadcast %268 : f32 to vector<8x36xf32>
    %270 = arith.mulf %267, %269 : vector<8x36xf32>
    %271 = arith.addf %265, %270 : vector<8x36xf32>
    %c4_215 = arith.constant 4 : index
    %c0_216 = arith.constant 0 : index
    %c0_217 = arith.constant 0 : index
    %272 = vector.load %arg3[%c4_215, %c0_216, %c0_217] : memref<9x8x36xf32, #tpu.memory_space<vmem>>, vector<1x8x36xf32>
    %273 = vector.shape_cast %272 : vector<1x8x36xf32> to vector<8x36xf32>
    %c4_218 = arith.constant 4 : index
    %c4_219 = arith.constant 4 : index
    %274 = memref.load %arg1[%c4_218, %c4_219] : memref<9x32xf32, #tpu.memory_space<smem>>
    %275 = vector.broadcast %274 : f32 to vector<8x36xf32>
    %276 = arith.mulf %273, %275 : vector<8x36xf32>
    %277 = arith.addf %271, %276 : vector<8x36xf32>
    %c5_220 = arith.constant 5 : index
    %c0_221 = arith.constant 0 : index
    %c0_222 = arith.constant 0 : index
    %278 = vector.load %arg3[%c5_220, %c0_221, %c0_222] : memref<9x8x36xf32, #tpu.memory_space<vmem>>, vector<1x8x36xf32>
    %279 = vector.shape_cast %278 : vector<1x8x36xf32> to vector<8x36xf32>
    %c5_223 = arith.constant 5 : index
    %c4_224 = arith.constant 4 : index
    %280 = memref.load %arg1[%c5_223, %c4_224] : memref<9x32xf32, #tpu.memory_space<smem>>
    %281 = vector.broadcast %280 : f32 to vector<8x36xf32>
    %282 = arith.mulf %279, %281 : vector<8x36xf32>
    %283 = arith.addf %277, %282 : vector<8x36xf32>
    %c6_225 = arith.constant 6 : index
    %c0_226 = arith.constant 0 : index
    %c0_227 = arith.constant 0 : index
    %284 = vector.load %arg3[%c6_225, %c0_226, %c0_227] : memref<9x8x36xf32, #tpu.memory_space<vmem>>, vector<1x8x36xf32>
    %285 = vector.shape_cast %284 : vector<1x8x36xf32> to vector<8x36xf32>
    %c6_228 = arith.constant 6 : index
    %c4_229 = arith.constant 4 : index
    %286 = memref.load %arg1[%c6_228, %c4_229] : memref<9x32xf32, #tpu.memory_space<smem>>
    %287 = vector.broadcast %286 : f32 to vector<8x36xf32>
    %288 = arith.mulf %285, %287 : vector<8x36xf32>
    %289 = arith.addf %283, %288 : vector<8x36xf32>
    %c7_230 = arith.constant 7 : index
    %c0_231 = arith.constant 0 : index
    %c0_232 = arith.constant 0 : index
    %290 = vector.load %arg3[%c7_230, %c0_231, %c0_232] : memref<9x8x36xf32, #tpu.memory_space<vmem>>, vector<1x8x36xf32>
    %291 = vector.shape_cast %290 : vector<1x8x36xf32> to vector<8x36xf32>
    %c7_233 = arith.constant 7 : index
    %c4_234 = arith.constant 4 : index
    %292 = memref.load %arg1[%c7_233, %c4_234] : memref<9x32xf32, #tpu.memory_space<smem>>
    %293 = vector.broadcast %292 : f32 to vector<8x36xf32>
    %294 = arith.mulf %291, %293 : vector<8x36xf32>
    %295 = arith.addf %289, %294 : vector<8x36xf32>
    %c8_235 = arith.constant 8 : index
    %c0_236 = arith.constant 0 : index
    %c0_237 = arith.constant 0 : index
    %296 = vector.load %arg3[%c8_235, %c0_236, %c0_237] : memref<9x8x36xf32, #tpu.memory_space<vmem>>, vector<1x8x36xf32>
    %297 = vector.shape_cast %296 : vector<1x8x36xf32> to vector<8x36xf32>
    %c8_238 = arith.constant 8 : index
    %c4_239 = arith.constant 4 : index
    %298 = memref.load %arg1[%c8_238, %c4_239] : memref<9x32xf32, #tpu.memory_space<smem>>
    %299 = vector.broadcast %298 : f32 to vector<8x36xf32>
    %300 = arith.mulf %297, %299 : vector<8x36xf32>
    %301 = arith.addf %295, %300 : vector<8x36xf32>
    %c4_240 = arith.constant 4 : index
    %302 = memref.load %arg2[%c4_240] : memref<32xf32, #tpu.memory_space<smem>>
    %303 = vector.broadcast %302 : f32 to vector<8x36xf32>
    %304 = arith.addf %301, %303 : vector<8x36xf32>
    %cst_241 = arith.constant 0.000000e+00 : f32
    %305 = vector.broadcast %cst_241 : f32 to vector<8x36xf32>
    %306 = arith.maximumf %304, %305 : vector<8x36xf32>
    %c4_242 = arith.constant 4 : index
    %c0_243 = arith.constant 0 : index
    %c0_244 = arith.constant 0 : index
    %307 = vector.load %arg4[%c4_242, %c0_243, %c0_244] : memref<32x36x32xf32, #tpu.memory_space<vmem>>, vector<1x36x32xf32>
    %308 = vector.shape_cast %307 : vector<1x36x32xf32> to vector<36x32xf32>
    %cst_245 = arith.constant dense<0.000000e+00> : vector<8x32xf32>
    %309 = tpu.matmul %306, %308, %cst_245 {dimension_numbers = #tpu.dot_dimension_numbers<[1], [0], [0], [1], [0, 0, 1, 1], [], []>} : vector<8x36xf32>, vector<36x32xf32>, vector<8x32xf32> -> vector<8x32xf32>
    %310 = arith.addf %248, %309 : vector<8x32xf32>
    %c0_246 = arith.constant 0 : index
    %c0_247 = arith.constant 0 : index
    %c0_248 = arith.constant 0 : index
    %311 = vector.load %arg3[%c0_246, %c0_247, %c0_248] : memref<9x8x36xf32, #tpu.memory_space<vmem>>, vector<1x8x36xf32>
    %312 = vector.shape_cast %311 : vector<1x8x36xf32> to vector<8x36xf32>
    %c0_249 = arith.constant 0 : index
    %c5_250 = arith.constant 5 : index
    %313 = memref.load %arg1[%c0_249, %c5_250] : memref<9x32xf32, #tpu.memory_space<smem>>
    %314 = vector.broadcast %313 : f32 to vector<8x36xf32>
    %315 = arith.mulf %312, %314 : vector<8x36xf32>
    %c1_251 = arith.constant 1 : index
    %c0_252 = arith.constant 0 : index
    %c0_253 = arith.constant 0 : index
    %316 = vector.load %arg3[%c1_251, %c0_252, %c0_253] : memref<9x8x36xf32, #tpu.memory_space<vmem>>, vector<1x8x36xf32>
    %317 = vector.shape_cast %316 : vector<1x8x36xf32> to vector<8x36xf32>
    %c1_254 = arith.constant 1 : index
    %c5_255 = arith.constant 5 : index
    %318 = memref.load %arg1[%c1_254, %c5_255] : memref<9x32xf32, #tpu.memory_space<smem>>
    %319 = vector.broadcast %318 : f32 to vector<8x36xf32>
    %320 = arith.mulf %317, %319 : vector<8x36xf32>
    %321 = arith.addf %315, %320 : vector<8x36xf32>
    %c2_256 = arith.constant 2 : index
    %c0_257 = arith.constant 0 : index
    %c0_258 = arith.constant 0 : index
    %322 = vector.load %arg3[%c2_256, %c0_257, %c0_258] : memref<9x8x36xf32, #tpu.memory_space<vmem>>, vector<1x8x36xf32>
    %323 = vector.shape_cast %322 : vector<1x8x36xf32> to vector<8x36xf32>
    %c2_259 = arith.constant 2 : index
    %c5_260 = arith.constant 5 : index
    %324 = memref.load %arg1[%c2_259, %c5_260] : memref<9x32xf32, #tpu.memory_space<smem>>
    %325 = vector.broadcast %324 : f32 to vector<8x36xf32>
    %326 = arith.mulf %323, %325 : vector<8x36xf32>
    %327 = arith.addf %321, %326 : vector<8x36xf32>
    %c3_261 = arith.constant 3 : index
    %c0_262 = arith.constant 0 : index
    %c0_263 = arith.constant 0 : index
    %328 = vector.load %arg3[%c3_261, %c0_262, %c0_263] : memref<9x8x36xf32, #tpu.memory_space<vmem>>, vector<1x8x36xf32>
    %329 = vector.shape_cast %328 : vector<1x8x36xf32> to vector<8x36xf32>
    %c3_264 = arith.constant 3 : index
    %c5_265 = arith.constant 5 : index
    %330 = memref.load %arg1[%c3_264, %c5_265] : memref<9x32xf32, #tpu.memory_space<smem>>
    %331 = vector.broadcast %330 : f32 to vector<8x36xf32>
    %332 = arith.mulf %329, %331 : vector<8x36xf32>
    %333 = arith.addf %327, %332 : vector<8x36xf32>
    %c4_266 = arith.constant 4 : index
    %c0_267 = arith.constant 0 : index
    %c0_268 = arith.constant 0 : index
    %334 = vector.load %arg3[%c4_266, %c0_267, %c0_268] : memref<9x8x36xf32, #tpu.memory_space<vmem>>, vector<1x8x36xf32>
    %335 = vector.shape_cast %334 : vector<1x8x36xf32> to vector<8x36xf32>
    %c4_269 = arith.constant 4 : index
    %c5_270 = arith.constant 5 : index
    %336 = memref.load %arg1[%c4_269, %c5_270] : memref<9x32xf32, #tpu.memory_space<smem>>
    %337 = vector.broadcast %336 : f32 to vector<8x36xf32>
    %338 = arith.mulf %335, %337 : vector<8x36xf32>
    %339 = arith.addf %333, %338 : vector<8x36xf32>
    %c5_271 = arith.constant 5 : index
    %c0_272 = arith.constant 0 : index
    %c0_273 = arith.constant 0 : index
    %340 = vector.load %arg3[%c5_271, %c0_272, %c0_273] : memref<9x8x36xf32, #tpu.memory_space<vmem>>, vector<1x8x36xf32>
    %341 = vector.shape_cast %340 : vector<1x8x36xf32> to vector<8x36xf32>
    %c5_274 = arith.constant 5 : index
    %c5_275 = arith.constant 5 : index
    %342 = memref.load %arg1[%c5_274, %c5_275] : memref<9x32xf32, #tpu.memory_space<smem>>
    %343 = vector.broadcast %342 : f32 to vector<8x36xf32>
    %344 = arith.mulf %341, %343 : vector<8x36xf32>
    %345 = arith.addf %339, %344 : vector<8x36xf32>
    %c6_276 = arith.constant 6 : index
    %c0_277 = arith.constant 0 : index
    %c0_278 = arith.constant 0 : index
    %346 = vector.load %arg3[%c6_276, %c0_277, %c0_278] : memref<9x8x36xf32, #tpu.memory_space<vmem>>, vector<1x8x36xf32>
    %347 = vector.shape_cast %346 : vector<1x8x36xf32> to vector<8x36xf32>
    %c6_279 = arith.constant 6 : index
    %c5_280 = arith.constant 5 : index
    %348 = memref.load %arg1[%c6_279, %c5_280] : memref<9x32xf32, #tpu.memory_space<smem>>
    %349 = vector.broadcast %348 : f32 to vector<8x36xf32>
    %350 = arith.mulf %347, %349 : vector<8x36xf32>
    %351 = arith.addf %345, %350 : vector<8x36xf32>
    %c7_281 = arith.constant 7 : index
    %c0_282 = arith.constant 0 : index
    %c0_283 = arith.constant 0 : index
    %352 = vector.load %arg3[%c7_281, %c0_282, %c0_283] : memref<9x8x36xf32, #tpu.memory_space<vmem>>, vector<1x8x36xf32>
    %353 = vector.shape_cast %352 : vector<1x8x36xf32> to vector<8x36xf32>
    %c7_284 = arith.constant 7 : index
    %c5_285 = arith.constant 5 : index
    %354 = memref.load %arg1[%c7_284, %c5_285] : memref<9x32xf32, #tpu.memory_space<smem>>
    %355 = vector.broadcast %354 : f32 to vector<8x36xf32>
    %356 = arith.mulf %353, %355 : vector<8x36xf32>
    %357 = arith.addf %351, %356 : vector<8x36xf32>
    %c8_286 = arith.constant 8 : index
    %c0_287 = arith.constant 0 : index
    %c0_288 = arith.constant 0 : index
    %358 = vector.load %arg3[%c8_286, %c0_287, %c0_288] : memref<9x8x36xf32, #tpu.memory_space<vmem>>, vector<1x8x36xf32>
    %359 = vector.shape_cast %358 : vector<1x8x36xf32> to vector<8x36xf32>
    %c8_289 = arith.constant 8 : index
    %c5_290 = arith.constant 5 : index
    %360 = memref.load %arg1[%c8_289, %c5_290] : memref<9x32xf32, #tpu.memory_space<smem>>
    %361 = vector.broadcast %360 : f32 to vector<8x36xf32>
    %362 = arith.mulf %359, %361 : vector<8x36xf32>
    %363 = arith.addf %357, %362 : vector<8x36xf32>
    %c5_291 = arith.constant 5 : index
    %364 = memref.load %arg2[%c5_291] : memref<32xf32, #tpu.memory_space<smem>>
    %365 = vector.broadcast %364 : f32 to vector<8x36xf32>
    %366 = arith.addf %363, %365 : vector<8x36xf32>
    %cst_292 = arith.constant 0.000000e+00 : f32
    %367 = vector.broadcast %cst_292 : f32 to vector<8x36xf32>
    %368 = arith.maximumf %366, %367 : vector<8x36xf32>
    %c5_293 = arith.constant 5 : index
    %c0_294 = arith.constant 0 : index
    %c0_295 = arith.constant 0 : index
    %369 = vector.load %arg4[%c5_293, %c0_294, %c0_295] : memref<32x36x32xf32, #tpu.memory_space<vmem>>, vector<1x36x32xf32>
    %370 = vector.shape_cast %369 : vector<1x36x32xf32> to vector<36x32xf32>
    %cst_296 = arith.constant dense<0.000000e+00> : vector<8x32xf32>
    %371 = tpu.matmul %368, %370, %cst_296 {dimension_numbers = #tpu.dot_dimension_numbers<[1], [0], [0], [1], [0, 0, 1, 1], [], []>} : vector<8x36xf32>, vector<36x32xf32>, vector<8x32xf32> -> vector<8x32xf32>
    %372 = arith.addf %310, %371 : vector<8x32xf32>
    %c0_297 = arith.constant 0 : index
    %c0_298 = arith.constant 0 : index
    %c0_299 = arith.constant 0 : index
    %373 = vector.load %arg3[%c0_297, %c0_298, %c0_299] : memref<9x8x36xf32, #tpu.memory_space<vmem>>, vector<1x8x36xf32>
    %374 = vector.shape_cast %373 : vector<1x8x36xf32> to vector<8x36xf32>
    %c0_300 = arith.constant 0 : index
    %c6_301 = arith.constant 6 : index
    %375 = memref.load %arg1[%c0_300, %c6_301] : memref<9x32xf32, #tpu.memory_space<smem>>
    %376 = vector.broadcast %375 : f32 to vector<8x36xf32>
    %377 = arith.mulf %374, %376 : vector<8x36xf32>
    %c1_302 = arith.constant 1 : index
    %c0_303 = arith.constant 0 : index
    %c0_304 = arith.constant 0 : index
    %378 = vector.load %arg3[%c1_302, %c0_303, %c0_304] : memref<9x8x36xf32, #tpu.memory_space<vmem>>, vector<1x8x36xf32>
    %379 = vector.shape_cast %378 : vector<1x8x36xf32> to vector<8x36xf32>
    %c1_305 = arith.constant 1 : index
    %c6_306 = arith.constant 6 : index
    %380 = memref.load %arg1[%c1_305, %c6_306] : memref<9x32xf32, #tpu.memory_space<smem>>
    %381 = vector.broadcast %380 : f32 to vector<8x36xf32>
    %382 = arith.mulf %379, %381 : vector<8x36xf32>
    %383 = arith.addf %377, %382 : vector<8x36xf32>
    %c2_307 = arith.constant 2 : index
    %c0_308 = arith.constant 0 : index
    %c0_309 = arith.constant 0 : index
    %384 = vector.load %arg3[%c2_307, %c0_308, %c0_309] : memref<9x8x36xf32, #tpu.memory_space<vmem>>, vector<1x8x36xf32>
    %385 = vector.shape_cast %384 : vector<1x8x36xf32> to vector<8x36xf32>
    %c2_310 = arith.constant 2 : index
    %c6_311 = arith.constant 6 : index
    %386 = memref.load %arg1[%c2_310, %c6_311] : memref<9x32xf32, #tpu.memory_space<smem>>
    %387 = vector.broadcast %386 : f32 to vector<8x36xf32>
    %388 = arith.mulf %385, %387 : vector<8x36xf32>
    %389 = arith.addf %383, %388 : vector<8x36xf32>
    %c3_312 = arith.constant 3 : index
    %c0_313 = arith.constant 0 : index
    %c0_314 = arith.constant 0 : index
    %390 = vector.load %arg3[%c3_312, %c0_313, %c0_314] : memref<9x8x36xf32, #tpu.memory_space<vmem>>, vector<1x8x36xf32>
    %391 = vector.shape_cast %390 : vector<1x8x36xf32> to vector<8x36xf32>
    %c3_315 = arith.constant 3 : index
    %c6_316 = arith.constant 6 : index
    %392 = memref.load %arg1[%c3_315, %c6_316] : memref<9x32xf32, #tpu.memory_space<smem>>
    %393 = vector.broadcast %392 : f32 to vector<8x36xf32>
    %394 = arith.mulf %391, %393 : vector<8x36xf32>
    %395 = arith.addf %389, %394 : vector<8x36xf32>
    %c4_317 = arith.constant 4 : index
    %c0_318 = arith.constant 0 : index
    %c0_319 = arith.constant 0 : index
    %396 = vector.load %arg3[%c4_317, %c0_318, %c0_319] : memref<9x8x36xf32, #tpu.memory_space<vmem>>, vector<1x8x36xf32>
    %397 = vector.shape_cast %396 : vector<1x8x36xf32> to vector<8x36xf32>
    %c4_320 = arith.constant 4 : index
    %c6_321 = arith.constant 6 : index
    %398 = memref.load %arg1[%c4_320, %c6_321] : memref<9x32xf32, #tpu.memory_space<smem>>
    %399 = vector.broadcast %398 : f32 to vector<8x36xf32>
    %400 = arith.mulf %397, %399 : vector<8x36xf32>
    %401 = arith.addf %395, %400 : vector<8x36xf32>
    %c5_322 = arith.constant 5 : index
    %c0_323 = arith.constant 0 : index
    %c0_324 = arith.constant 0 : index
    %402 = vector.load %arg3[%c5_322, %c0_323, %c0_324] : memref<9x8x36xf32, #tpu.memory_space<vmem>>, vector<1x8x36xf32>
    %403 = vector.shape_cast %402 : vector<1x8x36xf32> to vector<8x36xf32>
    %c5_325 = arith.constant 5 : index
    %c6_326 = arith.constant 6 : index
    %404 = memref.load %arg1[%c5_325, %c6_326] : memref<9x32xf32, #tpu.memory_space<smem>>
    %405 = vector.broadcast %404 : f32 to vector<8x36xf32>
    %406 = arith.mulf %403, %405 : vector<8x36xf32>
    %407 = arith.addf %401, %406 : vector<8x36xf32>
    %c6_327 = arith.constant 6 : index
    %c0_328 = arith.constant 0 : index
    %c0_329 = arith.constant 0 : index
    %408 = vector.load %arg3[%c6_327, %c0_328, %c0_329] : memref<9x8x36xf32, #tpu.memory_space<vmem>>, vector<1x8x36xf32>
    %409 = vector.shape_cast %408 : vector<1x8x36xf32> to vector<8x36xf32>
    %c6_330 = arith.constant 6 : index
    %c6_331 = arith.constant 6 : index
    %410 = memref.load %arg1[%c6_330, %c6_331] : memref<9x32xf32, #tpu.memory_space<smem>>
    %411 = vector.broadcast %410 : f32 to vector<8x36xf32>
    %412 = arith.mulf %409, %411 : vector<8x36xf32>
    %413 = arith.addf %407, %412 : vector<8x36xf32>
    %c7_332 = arith.constant 7 : index
    %c0_333 = arith.constant 0 : index
    %c0_334 = arith.constant 0 : index
    %414 = vector.load %arg3[%c7_332, %c0_333, %c0_334] : memref<9x8x36xf32, #tpu.memory_space<vmem>>, vector<1x8x36xf32>
    %415 = vector.shape_cast %414 : vector<1x8x36xf32> to vector<8x36xf32>
    %c7_335 = arith.constant 7 : index
    %c6_336 = arith.constant 6 : index
    %416 = memref.load %arg1[%c7_335, %c6_336] : memref<9x32xf32, #tpu.memory_space<smem>>
    %417 = vector.broadcast %416 : f32 to vector<8x36xf32>
    %418 = arith.mulf %415, %417 : vector<8x36xf32>
    %419 = arith.addf %413, %418 : vector<8x36xf32>
    %c8_337 = arith.constant 8 : index
    %c0_338 = arith.constant 0 : index
    %c0_339 = arith.constant 0 : index
    %420 = vector.load %arg3[%c8_337, %c0_338, %c0_339] : memref<9x8x36xf32, #tpu.memory_space<vmem>>, vector<1x8x36xf32>
    %421 = vector.shape_cast %420 : vector<1x8x36xf32> to vector<8x36xf32>
    %c8_340 = arith.constant 8 : index
    %c6_341 = arith.constant 6 : index
    %422 = memref.load %arg1[%c8_340, %c6_341] : memref<9x32xf32, #tpu.memory_space<smem>>
    %423 = vector.broadcast %422 : f32 to vector<8x36xf32>
    %424 = arith.mulf %421, %423 : vector<8x36xf32>
    %425 = arith.addf %419, %424 : vector<8x36xf32>
    %c6_342 = arith.constant 6 : index
    %426 = memref.load %arg2[%c6_342] : memref<32xf32, #tpu.memory_space<smem>>
    %427 = vector.broadcast %426 : f32 to vector<8x36xf32>
    %428 = arith.addf %425, %427 : vector<8x36xf32>
    %cst_343 = arith.constant 0.000000e+00 : f32
    %429 = vector.broadcast %cst_343 : f32 to vector<8x36xf32>
    %430 = arith.maximumf %428, %429 : vector<8x36xf32>
    %c6_344 = arith.constant 6 : index
    %c0_345 = arith.constant 0 : index
    %c0_346 = arith.constant 0 : index
    %431 = vector.load %arg4[%c6_344, %c0_345, %c0_346] : memref<32x36x32xf32, #tpu.memory_space<vmem>>, vector<1x36x32xf32>
    %432 = vector.shape_cast %431 : vector<1x36x32xf32> to vector<36x32xf32>
    %cst_347 = arith.constant dense<0.000000e+00> : vector<8x32xf32>
    %433 = tpu.matmul %430, %432, %cst_347 {dimension_numbers = #tpu.dot_dimension_numbers<[1], [0], [0], [1], [0, 0, 1, 1], [], []>} : vector<8x36xf32>, vector<36x32xf32>, vector<8x32xf32> -> vector<8x32xf32>
    %434 = arith.addf %372, %433 : vector<8x32xf32>
    %c0_348 = arith.constant 0 : index
    %c0_349 = arith.constant 0 : index
    %c0_350 = arith.constant 0 : index
    %435 = vector.load %arg3[%c0_348, %c0_349, %c0_350] : memref<9x8x36xf32, #tpu.memory_space<vmem>>, vector<1x8x36xf32>
    %436 = vector.shape_cast %435 : vector<1x8x36xf32> to vector<8x36xf32>
    %c0_351 = arith.constant 0 : index
    %c7_352 = arith.constant 7 : index
    %437 = memref.load %arg1[%c0_351, %c7_352] : memref<9x32xf32, #tpu.memory_space<smem>>
    %438 = vector.broadcast %437 : f32 to vector<8x36xf32>
    %439 = arith.mulf %436, %438 : vector<8x36xf32>
    %c1_353 = arith.constant 1 : index
    %c0_354 = arith.constant 0 : index
    %c0_355 = arith.constant 0 : index
    %440 = vector.load %arg3[%c1_353, %c0_354, %c0_355] : memref<9x8x36xf32, #tpu.memory_space<vmem>>, vector<1x8x36xf32>
    %441 = vector.shape_cast %440 : vector<1x8x36xf32> to vector<8x36xf32>
    %c1_356 = arith.constant 1 : index
    %c7_357 = arith.constant 7 : index
    %442 = memref.load %arg1[%c1_356, %c7_357] : memref<9x32xf32, #tpu.memory_space<smem>>
    %443 = vector.broadcast %442 : f32 to vector<8x36xf32>
    %444 = arith.mulf %441, %443 : vector<8x36xf32>
    %445 = arith.addf %439, %444 : vector<8x36xf32>
    %c2_358 = arith.constant 2 : index
    %c0_359 = arith.constant 0 : index
    %c0_360 = arith.constant 0 : index
    %446 = vector.load %arg3[%c2_358, %c0_359, %c0_360] : memref<9x8x36xf32, #tpu.memory_space<vmem>>, vector<1x8x36xf32>
    %447 = vector.shape_cast %446 : vector<1x8x36xf32> to vector<8x36xf32>
    %c2_361 = arith.constant 2 : index
    %c7_362 = arith.constant 7 : index
    %448 = memref.load %arg1[%c2_361, %c7_362] : memref<9x32xf32, #tpu.memory_space<smem>>
    %449 = vector.broadcast %448 : f32 to vector<8x36xf32>
    %450 = arith.mulf %447, %449 : vector<8x36xf32>
    %451 = arith.addf %445, %450 : vector<8x36xf32>
    %c3_363 = arith.constant 3 : index
    %c0_364 = arith.constant 0 : index
    %c0_365 = arith.constant 0 : index
    %452 = vector.load %arg3[%c3_363, %c0_364, %c0_365] : memref<9x8x36xf32, #tpu.memory_space<vmem>>, vector<1x8x36xf32>
    %453 = vector.shape_cast %452 : vector<1x8x36xf32> to vector<8x36xf32>
    %c3_366 = arith.constant 3 : index
    %c7_367 = arith.constant 7 : index
    %454 = memref.load %arg1[%c3_366, %c7_367] : memref<9x32xf32, #tpu.memory_space<smem>>
    %455 = vector.broadcast %454 : f32 to vector<8x36xf32>
    %456 = arith.mulf %453, %455 : vector<8x36xf32>
    %457 = arith.addf %451, %456 : vector<8x36xf32>
    %c4_368 = arith.constant 4 : index
    %c0_369 = arith.constant 0 : index
    %c0_370 = arith.constant 0 : index
    %458 = vector.load %arg3[%c4_368, %c0_369, %c0_370] : memref<9x8x36xf32, #tpu.memory_space<vmem>>, vector<1x8x36xf32>
    %459 = vector.shape_cast %458 : vector<1x8x36xf32> to vector<8x36xf32>
    %c4_371 = arith.constant 4 : index
    %c7_372 = arith.constant 7 : index
    %460 = memref.load %arg1[%c4_371, %c7_372] : memref<9x32xf32, #tpu.memory_space<smem>>
    %461 = vector.broadcast %460 : f32 to vector<8x36xf32>
    %462 = arith.mulf %459, %461 : vector<8x36xf32>
    %463 = arith.addf %457, %462 : vector<8x36xf32>
    %c5_373 = arith.constant 5 : index
    %c0_374 = arith.constant 0 : index
    %c0_375 = arith.constant 0 : index
    %464 = vector.load %arg3[%c5_373, %c0_374, %c0_375] : memref<9x8x36xf32, #tpu.memory_space<vmem>>, vector<1x8x36xf32>
    %465 = vector.shape_cast %464 : vector<1x8x36xf32> to vector<8x36xf32>
    %c5_376 = arith.constant 5 : index
    %c7_377 = arith.constant 7 : index
    %466 = memref.load %arg1[%c5_376, %c7_377] : memref<9x32xf32, #tpu.memory_space<smem>>
    %467 = vector.broadcast %466 : f32 to vector<8x36xf32>
    %468 = arith.mulf %465, %467 : vector<8x36xf32>
    %469 = arith.addf %463, %468 : vector<8x36xf32>
    %c6_378 = arith.constant 6 : index
    %c0_379 = arith.constant 0 : index
    %c0_380 = arith.constant 0 : index
    %470 = vector.load %arg3[%c6_378, %c0_379, %c0_380] : memref<9x8x36xf32, #tpu.memory_space<vmem>>, vector<1x8x36xf32>
    %471 = vector.shape_cast %470 : vector<1x8x36xf32> to vector<8x36xf32>
    %c6_381 = arith.constant 6 : index
    %c7_382 = arith.constant 7 : index
    %472 = memref.load %arg1[%c6_381, %c7_382] : memref<9x32xf32, #tpu.memory_space<smem>>
    %473 = vector.broadcast %472 : f32 to vector<8x36xf32>
    %474 = arith.mulf %471, %473 : vector<8x36xf32>
    %475 = arith.addf %469, %474 : vector<8x36xf32>
    %c7_383 = arith.constant 7 : index
    %c0_384 = arith.constant 0 : index
    %c0_385 = arith.constant 0 : index
    %476 = vector.load %arg3[%c7_383, %c0_384, %c0_385] : memref<9x8x36xf32, #tpu.memory_space<vmem>>, vector<1x8x36xf32>
    %477 = vector.shape_cast %476 : vector<1x8x36xf32> to vector<8x36xf32>
    %c7_386 = arith.constant 7 : index
    %c7_387 = arith.constant 7 : index
    %478 = memref.load %arg1[%c7_386, %c7_387] : memref<9x32xf32, #tpu.memory_space<smem>>
    %479 = vector.broadcast %478 : f32 to vector<8x36xf32>
    %480 = arith.mulf %477, %479 : vector<8x36xf32>
    %481 = arith.addf %475, %480 : vector<8x36xf32>
    %c8_388 = arith.constant 8 : index
    %c0_389 = arith.constant 0 : index
    %c0_390 = arith.constant 0 : index
    %482 = vector.load %arg3[%c8_388, %c0_389, %c0_390] : memref<9x8x36xf32, #tpu.memory_space<vmem>>, vector<1x8x36xf32>
    %483 = vector.shape_cast %482 : vector<1x8x36xf32> to vector<8x36xf32>
    %c8_391 = arith.constant 8 : index
    %c7_392 = arith.constant 7 : index
    %484 = memref.load %arg1[%c8_391, %c7_392] : memref<9x32xf32, #tpu.memory_space<smem>>
    %485 = vector.broadcast %484 : f32 to vector<8x36xf32>
    %486 = arith.mulf %483, %485 : vector<8x36xf32>
    %487 = arith.addf %481, %486 : vector<8x36xf32>
    %c7_393 = arith.constant 7 : index
    %488 = memref.load %arg2[%c7_393] : memref<32xf32, #tpu.memory_space<smem>>
    %489 = vector.broadcast %488 : f32 to vector<8x36xf32>
    %490 = arith.addf %487, %489 : vector<8x36xf32>
    %cst_394 = arith.constant 0.000000e+00 : f32
    %491 = vector.broadcast %cst_394 : f32 to vector<8x36xf32>
    %492 = arith.maximumf %490, %491 : vector<8x36xf32>
    %c7_395 = arith.constant 7 : index
    %c0_396 = arith.constant 0 : index
    %c0_397 = arith.constant 0 : index
    %493 = vector.load %arg4[%c7_395, %c0_396, %c0_397] : memref<32x36x32xf32, #tpu.memory_space<vmem>>, vector<1x36x32xf32>
    %494 = vector.shape_cast %493 : vector<1x36x32xf32> to vector<36x32xf32>
    %cst_398 = arith.constant dense<0.000000e+00> : vector<8x32xf32>
    %495 = tpu.matmul %492, %494, %cst_398 {dimension_numbers = #tpu.dot_dimension_numbers<[1], [0], [0], [1], [0, 0, 1, 1], [], []>} : vector<8x36xf32>, vector<36x32xf32>, vector<8x32xf32> -> vector<8x32xf32>
    %496 = arith.addf %434, %495 : vector<8x32xf32>
    %c0_399 = arith.constant 0 : index
    %c0_400 = arith.constant 0 : index
    %c0_401 = arith.constant 0 : index
    %497 = vector.load %arg3[%c0_399, %c0_400, %c0_401] : memref<9x8x36xf32, #tpu.memory_space<vmem>>, vector<1x8x36xf32>
    %498 = vector.shape_cast %497 : vector<1x8x36xf32> to vector<8x36xf32>
    %c0_402 = arith.constant 0 : index
    %c8_403 = arith.constant 8 : index
    %499 = memref.load %arg1[%c0_402, %c8_403] : memref<9x32xf32, #tpu.memory_space<smem>>
    %500 = vector.broadcast %499 : f32 to vector<8x36xf32>
    %501 = arith.mulf %498, %500 : vector<8x36xf32>
    %c1_404 = arith.constant 1 : index
    %c0_405 = arith.constant 0 : index
    %c0_406 = arith.constant 0 : index
    %502 = vector.load %arg3[%c1_404, %c0_405, %c0_406] : memref<9x8x36xf32, #tpu.memory_space<vmem>>, vector<1x8x36xf32>
    %503 = vector.shape_cast %502 : vector<1x8x36xf32> to vector<8x36xf32>
    %c1_407 = arith.constant 1 : index
    %c8_408 = arith.constant 8 : index
    %504 = memref.load %arg1[%c1_407, %c8_408] : memref<9x32xf32, #tpu.memory_space<smem>>
    %505 = vector.broadcast %504 : f32 to vector<8x36xf32>
    %506 = arith.mulf %503, %505 : vector<8x36xf32>
    %507 = arith.addf %501, %506 : vector<8x36xf32>
    %c2_409 = arith.constant 2 : index
    %c0_410 = arith.constant 0 : index
    %c0_411 = arith.constant 0 : index
    %508 = vector.load %arg3[%c2_409, %c0_410, %c0_411] : memref<9x8x36xf32, #tpu.memory_space<vmem>>, vector<1x8x36xf32>
    %509 = vector.shape_cast %508 : vector<1x8x36xf32> to vector<8x36xf32>
    %c2_412 = arith.constant 2 : index
    %c8_413 = arith.constant 8 : index
    %510 = memref.load %arg1[%c2_412, %c8_413] : memref<9x32xf32, #tpu.memory_space<smem>>
    %511 = vector.broadcast %510 : f32 to vector<8x36xf32>
    %512 = arith.mulf %509, %511 : vector<8x36xf32>
    %513 = arith.addf %507, %512 : vector<8x36xf32>
    %c3_414 = arith.constant 3 : index
    %c0_415 = arith.constant 0 : index
    %c0_416 = arith.constant 0 : index
    %514 = vector.load %arg3[%c3_414, %c0_415, %c0_416] : memref<9x8x36xf32, #tpu.memory_space<vmem>>, vector<1x8x36xf32>
    %515 = vector.shape_cast %514 : vector<1x8x36xf32> to vector<8x36xf32>
    %c3_417 = arith.constant 3 : index
    %c8_418 = arith.constant 8 : index
    %516 = memref.load %arg1[%c3_417, %c8_418] : memref<9x32xf32, #tpu.memory_space<smem>>
    %517 = vector.broadcast %516 : f32 to vector<8x36xf32>
    %518 = arith.mulf %515, %517 : vector<8x36xf32>
    %519 = arith.addf %513, %518 : vector<8x36xf32>
    %c4_419 = arith.constant 4 : index
    %c0_420 = arith.constant 0 : index
    %c0_421 = arith.constant 0 : index
    %520 = vector.load %arg3[%c4_419, %c0_420, %c0_421] : memref<9x8x36xf32, #tpu.memory_space<vmem>>, vector<1x8x36xf32>
    %521 = vector.shape_cast %520 : vector<1x8x36xf32> to vector<8x36xf32>
    %c4_422 = arith.constant 4 : index
    %c8_423 = arith.constant 8 : index
    %522 = memref.load %arg1[%c4_422, %c8_423] : memref<9x32xf32, #tpu.memory_space<smem>>
    %523 = vector.broadcast %522 : f32 to vector<8x36xf32>
    %524 = arith.mulf %521, %523 : vector<8x36xf32>
    %525 = arith.addf %519, %524 : vector<8x36xf32>
    %c5_424 = arith.constant 5 : index
    %c0_425 = arith.constant 0 : index
    %c0_426 = arith.constant 0 : index
    %526 = vector.load %arg3[%c5_424, %c0_425, %c0_426] : memref<9x8x36xf32, #tpu.memory_space<vmem>>, vector<1x8x36xf32>
    %527 = vector.shape_cast %526 : vector<1x8x36xf32> to vector<8x36xf32>
    %c5_427 = arith.constant 5 : index
    %c8_428 = arith.constant 8 : index
    %528 = memref.load %arg1[%c5_427, %c8_428] : memref<9x32xf32, #tpu.memory_space<smem>>
    %529 = vector.broadcast %528 : f32 to vector<8x36xf32>
    %530 = arith.mulf %527, %529 : vector<8x36xf32>
    %531 = arith.addf %525, %530 : vector<8x36xf32>
    %c6_429 = arith.constant 6 : index
    %c0_430 = arith.constant 0 : index
    %c0_431 = arith.constant 0 : index
    %532 = vector.load %arg3[%c6_429, %c0_430, %c0_431] : memref<9x8x36xf32, #tpu.memory_space<vmem>>, vector<1x8x36xf32>
    %533 = vector.shape_cast %532 : vector<1x8x36xf32> to vector<8x36xf32>
    %c6_432 = arith.constant 6 : index
    %c8_433 = arith.constant 8 : index
    %534 = memref.load %arg1[%c6_432, %c8_433] : memref<9x32xf32, #tpu.memory_space<smem>>
    %535 = vector.broadcast %534 : f32 to vector<8x36xf32>
    %536 = arith.mulf %533, %535 : vector<8x36xf32>
    %537 = arith.addf %531, %536 : vector<8x36xf32>
    %c7_434 = arith.constant 7 : index
    %c0_435 = arith.constant 0 : index
    %c0_436 = arith.constant 0 : index
    %538 = vector.load %arg3[%c7_434, %c0_435, %c0_436] : memref<9x8x36xf32, #tpu.memory_space<vmem>>, vector<1x8x36xf32>
    %539 = vector.shape_cast %538 : vector<1x8x36xf32> to vector<8x36xf32>
    %c7_437 = arith.constant 7 : index
    %c8_438 = arith.constant 8 : index
    %540 = memref.load %arg1[%c7_437, %c8_438] : memref<9x32xf32, #tpu.memory_space<smem>>
    %541 = vector.broadcast %540 : f32 to vector<8x36xf32>
    %542 = arith.mulf %539, %541 : vector<8x36xf32>
    %543 = arith.addf %537, %542 : vector<8x36xf32>
    %c8_439 = arith.constant 8 : index
    %c0_440 = arith.constant 0 : index
    %c0_441 = arith.constant 0 : index
    %544 = vector.load %arg3[%c8_439, %c0_440, %c0_441] : memref<9x8x36xf32, #tpu.memory_space<vmem>>, vector<1x8x36xf32>
    %545 = vector.shape_cast %544 : vector<1x8x36xf32> to vector<8x36xf32>
    %c8_442 = arith.constant 8 : index
    %c8_443 = arith.constant 8 : index
    %546 = memref.load %arg1[%c8_442, %c8_443] : memref<9x32xf32, #tpu.memory_space<smem>>
    %547 = vector.broadcast %546 : f32 to vector<8x36xf32>
    %548 = arith.mulf %545, %547 : vector<8x36xf32>
    %549 = arith.addf %543, %548 : vector<8x36xf32>
    %c8_444 = arith.constant 8 : index
    %550 = memref.load %arg2[%c8_444] : memref<32xf32, #tpu.memory_space<smem>>
    %551 = vector.broadcast %550 : f32 to vector<8x36xf32>
    %552 = arith.addf %549, %551 : vector<8x36xf32>
    %cst_445 = arith.constant 0.000000e+00 : f32
    %553 = vector.broadcast %cst_445 : f32 to vector<8x36xf32>
    %554 = arith.maximumf %552, %553 : vector<8x36xf32>
    %c8_446 = arith.constant 8 : index
    %c0_447 = arith.constant 0 : index
    %c0_448 = arith.constant 0 : index
    %555 = vector.load %arg4[%c8_446, %c0_447, %c0_448] : memref<32x36x32xf32, #tpu.memory_space<vmem>>, vector<1x36x32xf32>
    %556 = vector.shape_cast %555 : vector<1x36x32xf32> to vector<36x32xf32>
    %cst_449 = arith.constant dense<0.000000e+00> : vector<8x32xf32>
    %557 = tpu.matmul %554, %556, %cst_449 {dimension_numbers = #tpu.dot_dimension_numbers<[1], [0], [0], [1], [0, 0, 1, 1], [], []>} : vector<8x36xf32>, vector<36x32xf32>, vector<8x32xf32> -> vector<8x32xf32>
    %558 = arith.addf %496, %557 : vector<8x32xf32>
    %c0_450 = arith.constant 0 : index
    %c0_451 = arith.constant 0 : index
    %c0_452 = arith.constant 0 : index
    %559 = vector.load %arg3[%c0_450, %c0_451, %c0_452] : memref<9x8x36xf32, #tpu.memory_space<vmem>>, vector<1x8x36xf32>
    %560 = vector.shape_cast %559 : vector<1x8x36xf32> to vector<8x36xf32>
    %c0_453 = arith.constant 0 : index
    %c9 = arith.constant 9 : index
    %561 = memref.load %arg1[%c0_453, %c9] : memref<9x32xf32, #tpu.memory_space<smem>>
    %562 = vector.broadcast %561 : f32 to vector<8x36xf32>
    %563 = arith.mulf %560, %562 : vector<8x36xf32>
    %c1_454 = arith.constant 1 : index
    %c0_455 = arith.constant 0 : index
    %c0_456 = arith.constant 0 : index
    %564 = vector.load %arg3[%c1_454, %c0_455, %c0_456] : memref<9x8x36xf32, #tpu.memory_space<vmem>>, vector<1x8x36xf32>
    %565 = vector.shape_cast %564 : vector<1x8x36xf32> to vector<8x36xf32>
    %c1_457 = arith.constant 1 : index
    %c9_458 = arith.constant 9 : index
    %566 = memref.load %arg1[%c1_457, %c9_458] : memref<9x32xf32, #tpu.memory_space<smem>>
    %567 = vector.broadcast %566 : f32 to vector<8x36xf32>
    %568 = arith.mulf %565, %567 : vector<8x36xf32>
    %569 = arith.addf %563, %568 : vector<8x36xf32>
    %c2_459 = arith.constant 2 : index
    %c0_460 = arith.constant 0 : index
    %c0_461 = arith.constant 0 : index
    %570 = vector.load %arg3[%c2_459, %c0_460, %c0_461] : memref<9x8x36xf32, #tpu.memory_space<vmem>>, vector<1x8x36xf32>
    %571 = vector.shape_cast %570 : vector<1x8x36xf32> to vector<8x36xf32>
    %c2_462 = arith.constant 2 : index
    %c9_463 = arith.constant 9 : index
    %572 = memref.load %arg1[%c2_462, %c9_463] : memref<9x32xf32, #tpu.memory_space<smem>>
    %573 = vector.broadcast %572 : f32 to vector<8x36xf32>
    %574 = arith.mulf %571, %573 : vector<8x36xf32>
    %575 = arith.addf %569, %574 : vector<8x36xf32>
    %c3_464 = arith.constant 3 : index
    %c0_465 = arith.constant 0 : index
    %c0_466 = arith.constant 0 : index
    %576 = vector.load %arg3[%c3_464, %c0_465, %c0_466] : memref<9x8x36xf32, #tpu.memory_space<vmem>>, vector<1x8x36xf32>
    %577 = vector.shape_cast %576 : vector<1x8x36xf32> to vector<8x36xf32>
    %c3_467 = arith.constant 3 : index
    %c9_468 = arith.constant 9 : index
    %578 = memref.load %arg1[%c3_467, %c9_468] : memref<9x32xf32, #tpu.memory_space<smem>>
    %579 = vector.broadcast %578 : f32 to vector<8x36xf32>
    %580 = arith.mulf %577, %579 : vector<8x36xf32>
    %581 = arith.addf %575, %580 : vector<8x36xf32>
    %c4_469 = arith.constant 4 : index
    %c0_470 = arith.constant 0 : index
    %c0_471 = arith.constant 0 : index
    %582 = vector.load %arg3[%c4_469, %c0_470, %c0_471] : memref<9x8x36xf32, #tpu.memory_space<vmem>>, vector<1x8x36xf32>
    %583 = vector.shape_cast %582 : vector<1x8x36xf32> to vector<8x36xf32>
    %c4_472 = arith.constant 4 : index
    %c9_473 = arith.constant 9 : index
    %584 = memref.load %arg1[%c4_472, %c9_473] : memref<9x32xf32, #tpu.memory_space<smem>>
    %585 = vector.broadcast %584 : f32 to vector<8x36xf32>
    %586 = arith.mulf %583, %585 : vector<8x36xf32>
    %587 = arith.addf %581, %586 : vector<8x36xf32>
    %c5_474 = arith.constant 5 : index
    %c0_475 = arith.constant 0 : index
    %c0_476 = arith.constant 0 : index
    %588 = vector.load %arg3[%c5_474, %c0_475, %c0_476] : memref<9x8x36xf32, #tpu.memory_space<vmem>>, vector<1x8x36xf32>
    %589 = vector.shape_cast %588 : vector<1x8x36xf32> to vector<8x36xf32>
    %c5_477 = arith.constant 5 : index
    %c9_478 = arith.constant 9 : index
    %590 = memref.load %arg1[%c5_477, %c9_478] : memref<9x32xf32, #tpu.memory_space<smem>>
    %591 = vector.broadcast %590 : f32 to vector<8x36xf32>
    %592 = arith.mulf %589, %591 : vector<8x36xf32>
    %593 = arith.addf %587, %592 : vector<8x36xf32>
    %c6_479 = arith.constant 6 : index
    %c0_480 = arith.constant 0 : index
    %c0_481 = arith.constant 0 : index
    %594 = vector.load %arg3[%c6_479, %c0_480, %c0_481] : memref<9x8x36xf32, #tpu.memory_space<vmem>>, vector<1x8x36xf32>
    %595 = vector.shape_cast %594 : vector<1x8x36xf32> to vector<8x36xf32>
    %c6_482 = arith.constant 6 : index
    %c9_483 = arith.constant 9 : index
    %596 = memref.load %arg1[%c6_482, %c9_483] : memref<9x32xf32, #tpu.memory_space<smem>>
    %597 = vector.broadcast %596 : f32 to vector<8x36xf32>
    %598 = arith.mulf %595, %597 : vector<8x36xf32>
    %599 = arith.addf %593, %598 : vector<8x36xf32>
    %c7_484 = arith.constant 7 : index
    %c0_485 = arith.constant 0 : index
    %c0_486 = arith.constant 0 : index
    %600 = vector.load %arg3[%c7_484, %c0_485, %c0_486] : memref<9x8x36xf32, #tpu.memory_space<vmem>>, vector<1x8x36xf32>
    %601 = vector.shape_cast %600 : vector<1x8x36xf32> to vector<8x36xf32>
    %c7_487 = arith.constant 7 : index
    %c9_488 = arith.constant 9 : index
    %602 = memref.load %arg1[%c7_487, %c9_488] : memref<9x32xf32, #tpu.memory_space<smem>>
    %603 = vector.broadcast %602 : f32 to vector<8x36xf32>
    %604 = arith.mulf %601, %603 : vector<8x36xf32>
    %605 = arith.addf %599, %604 : vector<8x36xf32>
    %c8_489 = arith.constant 8 : index
    %c0_490 = arith.constant 0 : index
    %c0_491 = arith.constant 0 : index
    %606 = vector.load %arg3[%c8_489, %c0_490, %c0_491] : memref<9x8x36xf32, #tpu.memory_space<vmem>>, vector<1x8x36xf32>
    %607 = vector.shape_cast %606 : vector<1x8x36xf32> to vector<8x36xf32>
    %c8_492 = arith.constant 8 : index
    %c9_493 = arith.constant 9 : index
    %608 = memref.load %arg1[%c8_492, %c9_493] : memref<9x32xf32, #tpu.memory_space<smem>>
    %609 = vector.broadcast %608 : f32 to vector<8x36xf32>
    %610 = arith.mulf %607, %609 : vector<8x36xf32>
    %611 = arith.addf %605, %610 : vector<8x36xf32>
    %c9_494 = arith.constant 9 : index
    %612 = memref.load %arg2[%c9_494] : memref<32xf32, #tpu.memory_space<smem>>
    %613 = vector.broadcast %612 : f32 to vector<8x36xf32>
    %614 = arith.addf %611, %613 : vector<8x36xf32>
    %cst_495 = arith.constant 0.000000e+00 : f32
    %615 = vector.broadcast %cst_495 : f32 to vector<8x36xf32>
    %616 = arith.maximumf %614, %615 : vector<8x36xf32>
    %c9_496 = arith.constant 9 : index
    %c0_497 = arith.constant 0 : index
    %c0_498 = arith.constant 0 : index
    %617 = vector.load %arg4[%c9_496, %c0_497, %c0_498] : memref<32x36x32xf32, #tpu.memory_space<vmem>>, vector<1x36x32xf32>
    %618 = vector.shape_cast %617 : vector<1x36x32xf32> to vector<36x32xf32>
    %cst_499 = arith.constant dense<0.000000e+00> : vector<8x32xf32>
    %619 = tpu.matmul %616, %618, %cst_499 {dimension_numbers = #tpu.dot_dimension_numbers<[1], [0], [0], [1], [0, 0, 1, 1], [], []>} : vector<8x36xf32>, vector<36x32xf32>, vector<8x32xf32> -> vector<8x32xf32>
    %620 = arith.addf %558, %619 : vector<8x32xf32>
    %c0_500 = arith.constant 0 : index
    %c0_501 = arith.constant 0 : index
    %c0_502 = arith.constant 0 : index
    %621 = vector.load %arg3[%c0_500, %c0_501, %c0_502] : memref<9x8x36xf32, #tpu.memory_space<vmem>>, vector<1x8x36xf32>
    %622 = vector.shape_cast %621 : vector<1x8x36xf32> to vector<8x36xf32>
    %c0_503 = arith.constant 0 : index
    %c10 = arith.constant 10 : index
    %623 = memref.load %arg1[%c0_503, %c10] : memref<9x32xf32, #tpu.memory_space<smem>>
    %624 = vector.broadcast %623 : f32 to vector<8x36xf32>
    %625 = arith.mulf %622, %624 : vector<8x36xf32>
    %c1_504 = arith.constant 1 : index
    %c0_505 = arith.constant 0 : index
    %c0_506 = arith.constant 0 : index
    %626 = vector.load %arg3[%c1_504, %c0_505, %c0_506] : memref<9x8x36xf32, #tpu.memory_space<vmem>>, vector<1x8x36xf32>
    %627 = vector.shape_cast %626 : vector<1x8x36xf32> to vector<8x36xf32>
    %c1_507 = arith.constant 1 : index
    %c10_508 = arith.constant 10 : index
    %628 = memref.load %arg1[%c1_507, %c10_508] : memref<9x32xf32, #tpu.memory_space<smem>>
    %629 = vector.broadcast %628 : f32 to vector<8x36xf32>
    %630 = arith.mulf %627, %629 : vector<8x36xf32>
    %631 = arith.addf %625, %630 : vector<8x36xf32>
    %c2_509 = arith.constant 2 : index
    %c0_510 = arith.constant 0 : index
    %c0_511 = arith.constant 0 : index
    %632 = vector.load %arg3[%c2_509, %c0_510, %c0_511] : memref<9x8x36xf32, #tpu.memory_space<vmem>>, vector<1x8x36xf32>
    %633 = vector.shape_cast %632 : vector<1x8x36xf32> to vector<8x36xf32>
    %c2_512 = arith.constant 2 : index
    %c10_513 = arith.constant 10 : index
    %634 = memref.load %arg1[%c2_512, %c10_513] : memref<9x32xf32, #tpu.memory_space<smem>>
    %635 = vector.broadcast %634 : f32 to vector<8x36xf32>
    %636 = arith.mulf %633, %635 : vector<8x36xf32>
    %637 = arith.addf %631, %636 : vector<8x36xf32>
    %c3_514 = arith.constant 3 : index
    %c0_515 = arith.constant 0 : index
    %c0_516 = arith.constant 0 : index
    %638 = vector.load %arg3[%c3_514, %c0_515, %c0_516] : memref<9x8x36xf32, #tpu.memory_space<vmem>>, vector<1x8x36xf32>
    %639 = vector.shape_cast %638 : vector<1x8x36xf32> to vector<8x36xf32>
    %c3_517 = arith.constant 3 : index
    %c10_518 = arith.constant 10 : index
    %640 = memref.load %arg1[%c3_517, %c10_518] : memref<9x32xf32, #tpu.memory_space<smem>>
    %641 = vector.broadcast %640 : f32 to vector<8x36xf32>
    %642 = arith.mulf %639, %641 : vector<8x36xf32>
    %643 = arith.addf %637, %642 : vector<8x36xf32>
    %c4_519 = arith.constant 4 : index
    %c0_520 = arith.constant 0 : index
    %c0_521 = arith.constant 0 : index
    %644 = vector.load %arg3[%c4_519, %c0_520, %c0_521] : memref<9x8x36xf32, #tpu.memory_space<vmem>>, vector<1x8x36xf32>
    %645 = vector.shape_cast %644 : vector<1x8x36xf32> to vector<8x36xf32>
    %c4_522 = arith.constant 4 : index
    %c10_523 = arith.constant 10 : index
    %646 = memref.load %arg1[%c4_522, %c10_523] : memref<9x32xf32, #tpu.memory_space<smem>>
    %647 = vector.broadcast %646 : f32 to vector<8x36xf32>
    %648 = arith.mulf %645, %647 : vector<8x36xf32>
    %649 = arith.addf %643, %648 : vector<8x36xf32>
    %c5_524 = arith.constant 5 : index
    %c0_525 = arith.constant 0 : index
    %c0_526 = arith.constant 0 : index
    %650 = vector.load %arg3[%c5_524, %c0_525, %c0_526] : memref<9x8x36xf32, #tpu.memory_space<vmem>>, vector<1x8x36xf32>
    %651 = vector.shape_cast %650 : vector<1x8x36xf32> to vector<8x36xf32>
    %c5_527 = arith.constant 5 : index
    %c10_528 = arith.constant 10 : index
    %652 = memref.load %arg1[%c5_527, %c10_528] : memref<9x32xf32, #tpu.memory_space<smem>>
    %653 = vector.broadcast %652 : f32 to vector<8x36xf32>
    %654 = arith.mulf %651, %653 : vector<8x36xf32>
    %655 = arith.addf %649, %654 : vector<8x36xf32>
    %c6_529 = arith.constant 6 : index
    %c0_530 = arith.constant 0 : index
    %c0_531 = arith.constant 0 : index
    %656 = vector.load %arg3[%c6_529, %c0_530, %c0_531] : memref<9x8x36xf32, #tpu.memory_space<vmem>>, vector<1x8x36xf32>
    %657 = vector.shape_cast %656 : vector<1x8x36xf32> to vector<8x36xf32>
    %c6_532 = arith.constant 6 : index
    %c10_533 = arith.constant 10 : index
    %658 = memref.load %arg1[%c6_532, %c10_533] : memref<9x32xf32, #tpu.memory_space<smem>>
    %659 = vector.broadcast %658 : f32 to vector<8x36xf32>
    %660 = arith.mulf %657, %659 : vector<8x36xf32>
    %661 = arith.addf %655, %660 : vector<8x36xf32>
    %c7_534 = arith.constant 7 : index
    %c0_535 = arith.constant 0 : index
    %c0_536 = arith.constant 0 : index
    %662 = vector.load %arg3[%c7_534, %c0_535, %c0_536] : memref<9x8x36xf32, #tpu.memory_space<vmem>>, vector<1x8x36xf32>
    %663 = vector.shape_cast %662 : vector<1x8x36xf32> to vector<8x36xf32>
    %c7_537 = arith.constant 7 : index
    %c10_538 = arith.constant 10 : index
    %664 = memref.load %arg1[%c7_537, %c10_538] : memref<9x32xf32, #tpu.memory_space<smem>>
    %665 = vector.broadcast %664 : f32 to vector<8x36xf32>
    %666 = arith.mulf %663, %665 : vector<8x36xf32>
    %667 = arith.addf %661, %666 : vector<8x36xf32>
    %c8_539 = arith.constant 8 : index
    %c0_540 = arith.constant 0 : index
    %c0_541 = arith.constant 0 : index
    %668 = vector.load %arg3[%c8_539, %c0_540, %c0_541] : memref<9x8x36xf32, #tpu.memory_space<vmem>>, vector<1x8x36xf32>
    %669 = vector.shape_cast %668 : vector<1x8x36xf32> to vector<8x36xf32>
    %c8_542 = arith.constant 8 : index
    %c10_543 = arith.constant 10 : index
    %670 = memref.load %arg1[%c8_542, %c10_543] : memref<9x32xf32, #tpu.memory_space<smem>>
    %671 = vector.broadcast %670 : f32 to vector<8x36xf32>
    %672 = arith.mulf %669, %671 : vector<8x36xf32>
    %673 = arith.addf %667, %672 : vector<8x36xf32>
    %c10_544 = arith.constant 10 : index
    %674 = memref.load %arg2[%c10_544] : memref<32xf32, #tpu.memory_space<smem>>
    %675 = vector.broadcast %674 : f32 to vector<8x36xf32>
    %676 = arith.addf %673, %675 : vector<8x36xf32>
    %cst_545 = arith.constant 0.000000e+00 : f32
    %677 = vector.broadcast %cst_545 : f32 to vector<8x36xf32>
    %678 = arith.maximumf %676, %677 : vector<8x36xf32>
    %c10_546 = arith.constant 10 : index
    %c0_547 = arith.constant 0 : index
    %c0_548 = arith.constant 0 : index
    %679 = vector.load %arg4[%c10_546, %c0_547, %c0_548] : memref<32x36x32xf32, #tpu.memory_space<vmem>>, vector<1x36x32xf32>
    %680 = vector.shape_cast %679 : vector<1x36x32xf32> to vector<36x32xf32>
    %cst_549 = arith.constant dense<0.000000e+00> : vector<8x32xf32>
    %681 = tpu.matmul %678, %680, %cst_549 {dimension_numbers = #tpu.dot_dimension_numbers<[1], [0], [0], [1], [0, 0, 1, 1], [], []>} : vector<8x36xf32>, vector<36x32xf32>, vector<8x32xf32> -> vector<8x32xf32>
    %682 = arith.addf %620, %681 : vector<8x32xf32>
    %c0_550 = arith.constant 0 : index
    %c0_551 = arith.constant 0 : index
    %c0_552 = arith.constant 0 : index
    %683 = vector.load %arg3[%c0_550, %c0_551, %c0_552] : memref<9x8x36xf32, #tpu.memory_space<vmem>>, vector<1x8x36xf32>
    %684 = vector.shape_cast %683 : vector<1x8x36xf32> to vector<8x36xf32>
    %c0_553 = arith.constant 0 : index
    %c11 = arith.constant 11 : index
    %685 = memref.load %arg1[%c0_553, %c11] : memref<9x32xf32, #tpu.memory_space<smem>>
    %686 = vector.broadcast %685 : f32 to vector<8x36xf32>
    %687 = arith.mulf %684, %686 : vector<8x36xf32>
    %c1_554 = arith.constant 1 : index
    %c0_555 = arith.constant 0 : index
    %c0_556 = arith.constant 0 : index
    %688 = vector.load %arg3[%c1_554, %c0_555, %c0_556] : memref<9x8x36xf32, #tpu.memory_space<vmem>>, vector<1x8x36xf32>
    %689 = vector.shape_cast %688 : vector<1x8x36xf32> to vector<8x36xf32>
    %c1_557 = arith.constant 1 : index
    %c11_558 = arith.constant 11 : index
    %690 = memref.load %arg1[%c1_557, %c11_558] : memref<9x32xf32, #tpu.memory_space<smem>>
    %691 = vector.broadcast %690 : f32 to vector<8x36xf32>
    %692 = arith.mulf %689, %691 : vector<8x36xf32>
    %693 = arith.addf %687, %692 : vector<8x36xf32>
    %c2_559 = arith.constant 2 : index
    %c0_560 = arith.constant 0 : index
    %c0_561 = arith.constant 0 : index
    %694 = vector.load %arg3[%c2_559, %c0_560, %c0_561] : memref<9x8x36xf32, #tpu.memory_space<vmem>>, vector<1x8x36xf32>
    %695 = vector.shape_cast %694 : vector<1x8x36xf32> to vector<8x36xf32>
    %c2_562 = arith.constant 2 : index
    %c11_563 = arith.constant 11 : index
    %696 = memref.load %arg1[%c2_562, %c11_563] : memref<9x32xf32, #tpu.memory_space<smem>>
    %697 = vector.broadcast %696 : f32 to vector<8x36xf32>
    %698 = arith.mulf %695, %697 : vector<8x36xf32>
    %699 = arith.addf %693, %698 : vector<8x36xf32>
    %c3_564 = arith.constant 3 : index
    %c0_565 = arith.constant 0 : index
    %c0_566 = arith.constant 0 : index
    %700 = vector.load %arg3[%c3_564, %c0_565, %c0_566] : memref<9x8x36xf32, #tpu.memory_space<vmem>>, vector<1x8x36xf32>
    %701 = vector.shape_cast %700 : vector<1x8x36xf32> to vector<8x36xf32>
    %c3_567 = arith.constant 3 : index
    %c11_568 = arith.constant 11 : index
    %702 = memref.load %arg1[%c3_567, %c11_568] : memref<9x32xf32, #tpu.memory_space<smem>>
    %703 = vector.broadcast %702 : f32 to vector<8x36xf32>
    %704 = arith.mulf %701, %703 : vector<8x36xf32>
    %705 = arith.addf %699, %704 : vector<8x36xf32>
    %c4_569 = arith.constant 4 : index
    %c0_570 = arith.constant 0 : index
    %c0_571 = arith.constant 0 : index
    %706 = vector.load %arg3[%c4_569, %c0_570, %c0_571] : memref<9x8x36xf32, #tpu.memory_space<vmem>>, vector<1x8x36xf32>
    %707 = vector.shape_cast %706 : vector<1x8x36xf32> to vector<8x36xf32>
    %c4_572 = arith.constant 4 : index
    %c11_573 = arith.constant 11 : index
    %708 = memref.load %arg1[%c4_572, %c11_573] : memref<9x32xf32, #tpu.memory_space<smem>>
    %709 = vector.broadcast %708 : f32 to vector<8x36xf32>
    %710 = arith.mulf %707, %709 : vector<8x36xf32>
    %711 = arith.addf %705, %710 : vector<8x36xf32>
    %c5_574 = arith.constant 5 : index
    %c0_575 = arith.constant 0 : index
    %c0_576 = arith.constant 0 : index
    %712 = vector.load %arg3[%c5_574, %c0_575, %c0_576] : memref<9x8x36xf32, #tpu.memory_space<vmem>>, vector<1x8x36xf32>
    %713 = vector.shape_cast %712 : vector<1x8x36xf32> to vector<8x36xf32>
    %c5_577 = arith.constant 5 : index
    %c11_578 = arith.constant 11 : index
    %714 = memref.load %arg1[%c5_577, %c11_578] : memref<9x32xf32, #tpu.memory_space<smem>>
    %715 = vector.broadcast %714 : f32 to vector<8x36xf32>
    %716 = arith.mulf %713, %715 : vector<8x36xf32>
    %717 = arith.addf %711, %716 : vector<8x36xf32>
    %c6_579 = arith.constant 6 : index
    %c0_580 = arith.constant 0 : index
    %c0_581 = arith.constant 0 : index
    %718 = vector.load %arg3[%c6_579, %c0_580, %c0_581] : memref<9x8x36xf32, #tpu.memory_space<vmem>>, vector<1x8x36xf32>
    %719 = vector.shape_cast %718 : vector<1x8x36xf32> to vector<8x36xf32>
    %c6_582 = arith.constant 6 : index
    %c11_583 = arith.constant 11 : index
    %720 = memref.load %arg1[%c6_582, %c11_583] : memref<9x32xf32, #tpu.memory_space<smem>>
    %721 = vector.broadcast %720 : f32 to vector<8x36xf32>
    %722 = arith.mulf %719, %721 : vector<8x36xf32>
    %723 = arith.addf %717, %722 : vector<8x36xf32>
    %c7_584 = arith.constant 7 : index
    %c0_585 = arith.constant 0 : index
    %c0_586 = arith.constant 0 : index
    %724 = vector.load %arg3[%c7_584, %c0_585, %c0_586] : memref<9x8x36xf32, #tpu.memory_space<vmem>>, vector<1x8x36xf32>
    %725 = vector.shape_cast %724 : vector<1x8x36xf32> to vector<8x36xf32>
    %c7_587 = arith.constant 7 : index
    %c11_588 = arith.constant 11 : index
    %726 = memref.load %arg1[%c7_587, %c11_588] : memref<9x32xf32, #tpu.memory_space<smem>>
    %727 = vector.broadcast %726 : f32 to vector<8x36xf32>
    %728 = arith.mulf %725, %727 : vector<8x36xf32>
    %729 = arith.addf %723, %728 : vector<8x36xf32>
    %c8_589 = arith.constant 8 : index
    %c0_590 = arith.constant 0 : index
    %c0_591 = arith.constant 0 : index
    %730 = vector.load %arg3[%c8_589, %c0_590, %c0_591] : memref<9x8x36xf32, #tpu.memory_space<vmem>>, vector<1x8x36xf32>
    %731 = vector.shape_cast %730 : vector<1x8x36xf32> to vector<8x36xf32>
    %c8_592 = arith.constant 8 : index
    %c11_593 = arith.constant 11 : index
    %732 = memref.load %arg1[%c8_592, %c11_593] : memref<9x32xf32, #tpu.memory_space<smem>>
    %733 = vector.broadcast %732 : f32 to vector<8x36xf32>
    %734 = arith.mulf %731, %733 : vector<8x36xf32>
    %735 = arith.addf %729, %734 : vector<8x36xf32>
    %c11_594 = arith.constant 11 : index
    %736 = memref.load %arg2[%c11_594] : memref<32xf32, #tpu.memory_space<smem>>
    %737 = vector.broadcast %736 : f32 to vector<8x36xf32>
    %738 = arith.addf %735, %737 : vector<8x36xf32>
    %cst_595 = arith.constant 0.000000e+00 : f32
    %739 = vector.broadcast %cst_595 : f32 to vector<8x36xf32>
    %740 = arith.maximumf %738, %739 : vector<8x36xf32>
    %c11_596 = arith.constant 11 : index
    %c0_597 = arith.constant 0 : index
    %c0_598 = arith.constant 0 : index
    %741 = vector.load %arg4[%c11_596, %c0_597, %c0_598] : memref<32x36x32xf32, #tpu.memory_space<vmem>>, vector<1x36x32xf32>
    %742 = vector.shape_cast %741 : vector<1x36x32xf32> to vector<36x32xf32>
    %cst_599 = arith.constant dense<0.000000e+00> : vector<8x32xf32>
    %743 = tpu.matmul %740, %742, %cst_599 {dimension_numbers = #tpu.dot_dimension_numbers<[1], [0], [0], [1], [0, 0, 1, 1], [], []>} : vector<8x36xf32>, vector<36x32xf32>, vector<8x32xf32> -> vector<8x32xf32>
    %744 = arith.addf %682, %743 : vector<8x32xf32>
    %c0_600 = arith.constant 0 : index
    %c0_601 = arith.constant 0 : index
    %c0_602 = arith.constant 0 : index
    %745 = vector.load %arg3[%c0_600, %c0_601, %c0_602] : memref<9x8x36xf32, #tpu.memory_space<vmem>>, vector<1x8x36xf32>
    %746 = vector.shape_cast %745 : vector<1x8x36xf32> to vector<8x36xf32>
    %c0_603 = arith.constant 0 : index
    %c12 = arith.constant 12 : index
    %747 = memref.load %arg1[%c0_603, %c12] : memref<9x32xf32, #tpu.memory_space<smem>>
    %748 = vector.broadcast %747 : f32 to vector<8x36xf32>
    %749 = arith.mulf %746, %748 : vector<8x36xf32>
    %c1_604 = arith.constant 1 : index
    %c0_605 = arith.constant 0 : index
    %c0_606 = arith.constant 0 : index
    %750 = vector.load %arg3[%c1_604, %c0_605, %c0_606] : memref<9x8x36xf32, #tpu.memory_space<vmem>>, vector<1x8x36xf32>
    %751 = vector.shape_cast %750 : vector<1x8x36xf32> to vector<8x36xf32>
    %c1_607 = arith.constant 1 : index
    %c12_608 = arith.constant 12 : index
    %752 = memref.load %arg1[%c1_607, %c12_608] : memref<9x32xf32, #tpu.memory_space<smem>>
    %753 = vector.broadcast %752 : f32 to vector<8x36xf32>
    %754 = arith.mulf %751, %753 : vector<8x36xf32>
    %755 = arith.addf %749, %754 : vector<8x36xf32>
    %c2_609 = arith.constant 2 : index
    %c0_610 = arith.constant 0 : index
    %c0_611 = arith.constant 0 : index
    %756 = vector.load %arg3[%c2_609, %c0_610, %c0_611] : memref<9x8x36xf32, #tpu.memory_space<vmem>>, vector<1x8x36xf32>
    %757 = vector.shape_cast %756 : vector<1x8x36xf32> to vector<8x36xf32>
    %c2_612 = arith.constant 2 : index
    %c12_613 = arith.constant 12 : index
    %758 = memref.load %arg1[%c2_612, %c12_613] : memref<9x32xf32, #tpu.memory_space<smem>>
    %759 = vector.broadcast %758 : f32 to vector<8x36xf32>
    %760 = arith.mulf %757, %759 : vector<8x36xf32>
    %761 = arith.addf %755, %760 : vector<8x36xf32>
    %c3_614 = arith.constant 3 : index
    %c0_615 = arith.constant 0 : index
    %c0_616 = arith.constant 0 : index
    %762 = vector.load %arg3[%c3_614, %c0_615, %c0_616] : memref<9x8x36xf32, #tpu.memory_space<vmem>>, vector<1x8x36xf32>
    %763 = vector.shape_cast %762 : vector<1x8x36xf32> to vector<8x36xf32>
    %c3_617 = arith.constant 3 : index
    %c12_618 = arith.constant 12 : index
    %764 = memref.load %arg1[%c3_617, %c12_618] : memref<9x32xf32, #tpu.memory_space<smem>>
    %765 = vector.broadcast %764 : f32 to vector<8x36xf32>
    %766 = arith.mulf %763, %765 : vector<8x36xf32>
    %767 = arith.addf %761, %766 : vector<8x36xf32>
    %c4_619 = arith.constant 4 : index
    %c0_620 = arith.constant 0 : index
    %c0_621 = arith.constant 0 : index
    %768 = vector.load %arg3[%c4_619, %c0_620, %c0_621] : memref<9x8x36xf32, #tpu.memory_space<vmem>>, vector<1x8x36xf32>
    %769 = vector.shape_cast %768 : vector<1x8x36xf32> to vector<8x36xf32>
    %c4_622 = arith.constant 4 : index
    %c12_623 = arith.constant 12 : index
    %770 = memref.load %arg1[%c4_622, %c12_623] : memref<9x32xf32, #tpu.memory_space<smem>>
    %771 = vector.broadcast %770 : f32 to vector<8x36xf32>
    %772 = arith.mulf %769, %771 : vector<8x36xf32>
    %773 = arith.addf %767, %772 : vector<8x36xf32>
    %c5_624 = arith.constant 5 : index
    %c0_625 = arith.constant 0 : index
    %c0_626 = arith.constant 0 : index
    %774 = vector.load %arg3[%c5_624, %c0_625, %c0_626] : memref<9x8x36xf32, #tpu.memory_space<vmem>>, vector<1x8x36xf32>
    %775 = vector.shape_cast %774 : vector<1x8x36xf32> to vector<8x36xf32>
    %c5_627 = arith.constant 5 : index
    %c12_628 = arith.constant 12 : index
    %776 = memref.load %arg1[%c5_627, %c12_628] : memref<9x32xf32, #tpu.memory_space<smem>>
    %777 = vector.broadcast %776 : f32 to vector<8x36xf32>
    %778 = arith.mulf %775, %777 : vector<8x36xf32>
    %779 = arith.addf %773, %778 : vector<8x36xf32>
    %c6_629 = arith.constant 6 : index
    %c0_630 = arith.constant 0 : index
    %c0_631 = arith.constant 0 : index
    %780 = vector.load %arg3[%c6_629, %c0_630, %c0_631] : memref<9x8x36xf32, #tpu.memory_space<vmem>>, vector<1x8x36xf32>
    %781 = vector.shape_cast %780 : vector<1x8x36xf32> to vector<8x36xf32>
    %c6_632 = arith.constant 6 : index
    %c12_633 = arith.constant 12 : index
    %782 = memref.load %arg1[%c6_632, %c12_633] : memref<9x32xf32, #tpu.memory_space<smem>>
    %783 = vector.broadcast %782 : f32 to vector<8x36xf32>
    %784 = arith.mulf %781, %783 : vector<8x36xf32>
    %785 = arith.addf %779, %784 : vector<8x36xf32>
    %c7_634 = arith.constant 7 : index
    %c0_635 = arith.constant 0 : index
    %c0_636 = arith.constant 0 : index
    %786 = vector.load %arg3[%c7_634, %c0_635, %c0_636] : memref<9x8x36xf32, #tpu.memory_space<vmem>>, vector<1x8x36xf32>
    %787 = vector.shape_cast %786 : vector<1x8x36xf32> to vector<8x36xf32>
    %c7_637 = arith.constant 7 : index
    %c12_638 = arith.constant 12 : index
    %788 = memref.load %arg1[%c7_637, %c12_638] : memref<9x32xf32, #tpu.memory_space<smem>>
    %789 = vector.broadcast %788 : f32 to vector<8x36xf32>
    %790 = arith.mulf %787, %789 : vector<8x36xf32>
    %791 = arith.addf %785, %790 : vector<8x36xf32>
    %c8_639 = arith.constant 8 : index
    %c0_640 = arith.constant 0 : index
    %c0_641 = arith.constant 0 : index
    %792 = vector.load %arg3[%c8_639, %c0_640, %c0_641] : memref<9x8x36xf32, #tpu.memory_space<vmem>>, vector<1x8x36xf32>
    %793 = vector.shape_cast %792 : vector<1x8x36xf32> to vector<8x36xf32>
    %c8_642 = arith.constant 8 : index
    %c12_643 = arith.constant 12 : index
    %794 = memref.load %arg1[%c8_642, %c12_643] : memref<9x32xf32, #tpu.memory_space<smem>>
    %795 = vector.broadcast %794 : f32 to vector<8x36xf32>
    %796 = arith.mulf %793, %795 : vector<8x36xf32>
    %797 = arith.addf %791, %796 : vector<8x36xf32>
    %c12_644 = arith.constant 12 : index
    %798 = memref.load %arg2[%c12_644] : memref<32xf32, #tpu.memory_space<smem>>
    %799 = vector.broadcast %798 : f32 to vector<8x36xf32>
    %800 = arith.addf %797, %799 : vector<8x36xf32>
    %cst_645 = arith.constant 0.000000e+00 : f32
    %801 = vector.broadcast %cst_645 : f32 to vector<8x36xf32>
    %802 = arith.maximumf %800, %801 : vector<8x36xf32>
    %c12_646 = arith.constant 12 : index
    %c0_647 = arith.constant 0 : index
    %c0_648 = arith.constant 0 : index
    %803 = vector.load %arg4[%c12_646, %c0_647, %c0_648] : memref<32x36x32xf32, #tpu.memory_space<vmem>>, vector<1x36x32xf32>
    %804 = vector.shape_cast %803 : vector<1x36x32xf32> to vector<36x32xf32>
    %cst_649 = arith.constant dense<0.000000e+00> : vector<8x32xf32>
    %805 = tpu.matmul %802, %804, %cst_649 {dimension_numbers = #tpu.dot_dimension_numbers<[1], [0], [0], [1], [0, 0, 1, 1], [], []>} : vector<8x36xf32>, vector<36x32xf32>, vector<8x32xf32> -> vector<8x32xf32>
    %806 = arith.addf %744, %805 : vector<8x32xf32>
    %c0_650 = arith.constant 0 : index
    %c0_651 = arith.constant 0 : index
    %c0_652 = arith.constant 0 : index
    %807 = vector.load %arg3[%c0_650, %c0_651, %c0_652] : memref<9x8x36xf32, #tpu.memory_space<vmem>>, vector<1x8x36xf32>
    %808 = vector.shape_cast %807 : vector<1x8x36xf32> to vector<8x36xf32>
    %c0_653 = arith.constant 0 : index
    %c13 = arith.constant 13 : index
    %809 = memref.load %arg1[%c0_653, %c13] : memref<9x32xf32, #tpu.memory_space<smem>>
    %810 = vector.broadcast %809 : f32 to vector<8x36xf32>
    %811 = arith.mulf %808, %810 : vector<8x36xf32>
    %c1_654 = arith.constant 1 : index
    %c0_655 = arith.constant 0 : index
    %c0_656 = arith.constant 0 : index
    %812 = vector.load %arg3[%c1_654, %c0_655, %c0_656] : memref<9x8x36xf32, #tpu.memory_space<vmem>>, vector<1x8x36xf32>
    %813 = vector.shape_cast %812 : vector<1x8x36xf32> to vector<8x36xf32>
    %c1_657 = arith.constant 1 : index
    %c13_658 = arith.constant 13 : index
    %814 = memref.load %arg1[%c1_657, %c13_658] : memref<9x32xf32, #tpu.memory_space<smem>>
    %815 = vector.broadcast %814 : f32 to vector<8x36xf32>
    %816 = arith.mulf %813, %815 : vector<8x36xf32>
    %817 = arith.addf %811, %816 : vector<8x36xf32>
    %c2_659 = arith.constant 2 : index
    %c0_660 = arith.constant 0 : index
    %c0_661 = arith.constant 0 : index
    %818 = vector.load %arg3[%c2_659, %c0_660, %c0_661] : memref<9x8x36xf32, #tpu.memory_space<vmem>>, vector<1x8x36xf32>
    %819 = vector.shape_cast %818 : vector<1x8x36xf32> to vector<8x36xf32>
    %c2_662 = arith.constant 2 : index
    %c13_663 = arith.constant 13 : index
    %820 = memref.load %arg1[%c2_662, %c13_663] : memref<9x32xf32, #tpu.memory_space<smem>>
    %821 = vector.broadcast %820 : f32 to vector<8x36xf32>
    %822 = arith.mulf %819, %821 : vector<8x36xf32>
    %823 = arith.addf %817, %822 : vector<8x36xf32>
    %c3_664 = arith.constant 3 : index
    %c0_665 = arith.constant 0 : index
    %c0_666 = arith.constant 0 : index
    %824 = vector.load %arg3[%c3_664, %c0_665, %c0_666] : memref<9x8x36xf32, #tpu.memory_space<vmem>>, vector<1x8x36xf32>
    %825 = vector.shape_cast %824 : vector<1x8x36xf32> to vector<8x36xf32>
    %c3_667 = arith.constant 3 : index
    %c13_668 = arith.constant 13 : index
    %826 = memref.load %arg1[%c3_667, %c13_668] : memref<9x32xf32, #tpu.memory_space<smem>>
    %827 = vector.broadcast %826 : f32 to vector<8x36xf32>
    %828 = arith.mulf %825, %827 : vector<8x36xf32>
    %829 = arith.addf %823, %828 : vector<8x36xf32>
    %c4_669 = arith.constant 4 : index
    %c0_670 = arith.constant 0 : index
    %c0_671 = arith.constant 0 : index
    %830 = vector.load %arg3[%c4_669, %c0_670, %c0_671] : memref<9x8x36xf32, #tpu.memory_space<vmem>>, vector<1x8x36xf32>
    %831 = vector.shape_cast %830 : vector<1x8x36xf32> to vector<8x36xf32>
    %c4_672 = arith.constant 4 : index
    %c13_673 = arith.constant 13 : index
    %832 = memref.load %arg1[%c4_672, %c13_673] : memref<9x32xf32, #tpu.memory_space<smem>>
    %833 = vector.broadcast %832 : f32 to vector<8x36xf32>
    %834 = arith.mulf %831, %833 : vector<8x36xf32>
    %835 = arith.addf %829, %834 : vector<8x36xf32>
    %c5_674 = arith.constant 5 : index
    %c0_675 = arith.constant 0 : index
    %c0_676 = arith.constant 0 : index
    %836 = vector.load %arg3[%c5_674, %c0_675, %c0_676] : memref<9x8x36xf32, #tpu.memory_space<vmem>>, vector<1x8x36xf32>
    %837 = vector.shape_cast %836 : vector<1x8x36xf32> to vector<8x36xf32>
    %c5_677 = arith.constant 5 : index
    %c13_678 = arith.constant 13 : index
    %838 = memref.load %arg1[%c5_677, %c13_678] : memref<9x32xf32, #tpu.memory_space<smem>>
    %839 = vector.broadcast %838 : f32 to vector<8x36xf32>
    %840 = arith.mulf %837, %839 : vector<8x36xf32>
    %841 = arith.addf %835, %840 : vector<8x36xf32>
    %c6_679 = arith.constant 6 : index
    %c0_680 = arith.constant 0 : index
    %c0_681 = arith.constant 0 : index
    %842 = vector.load %arg3[%c6_679, %c0_680, %c0_681] : memref<9x8x36xf32, #tpu.memory_space<vmem>>, vector<1x8x36xf32>
    %843 = vector.shape_cast %842 : vector<1x8x36xf32> to vector<8x36xf32>
    %c6_682 = arith.constant 6 : index
    %c13_683 = arith.constant 13 : index
    %844 = memref.load %arg1[%c6_682, %c13_683] : memref<9x32xf32, #tpu.memory_space<smem>>
    %845 = vector.broadcast %844 : f32 to vector<8x36xf32>
    %846 = arith.mulf %843, %845 : vector<8x36xf32>
    %847 = arith.addf %841, %846 : vector<8x36xf32>
    %c7_684 = arith.constant 7 : index
    %c0_685 = arith.constant 0 : index
    %c0_686 = arith.constant 0 : index
    %848 = vector.load %arg3[%c7_684, %c0_685, %c0_686] : memref<9x8x36xf32, #tpu.memory_space<vmem>>, vector<1x8x36xf32>
    %849 = vector.shape_cast %848 : vector<1x8x36xf32> to vector<8x36xf32>
    %c7_687 = arith.constant 7 : index
    %c13_688 = arith.constant 13 : index
    %850 = memref.load %arg1[%c7_687, %c13_688] : memref<9x32xf32, #tpu.memory_space<smem>>
    %851 = vector.broadcast %850 : f32 to vector<8x36xf32>
    %852 = arith.mulf %849, %851 : vector<8x36xf32>
    %853 = arith.addf %847, %852 : vector<8x36xf32>
    %c8_689 = arith.constant 8 : index
    %c0_690 = arith.constant 0 : index
    %c0_691 = arith.constant 0 : index
    %854 = vector.load %arg3[%c8_689, %c0_690, %c0_691] : memref<9x8x36xf32, #tpu.memory_space<vmem>>, vector<1x8x36xf32>
    %855 = vector.shape_cast %854 : vector<1x8x36xf32> to vector<8x36xf32>
    %c8_692 = arith.constant 8 : index
    %c13_693 = arith.constant 13 : index
    %856 = memref.load %arg1[%c8_692, %c13_693] : memref<9x32xf32, #tpu.memory_space<smem>>
    %857 = vector.broadcast %856 : f32 to vector<8x36xf32>
    %858 = arith.mulf %855, %857 : vector<8x36xf32>
    %859 = arith.addf %853, %858 : vector<8x36xf32>
    %c13_694 = arith.constant 13 : index
    %860 = memref.load %arg2[%c13_694] : memref<32xf32, #tpu.memory_space<smem>>
    %861 = vector.broadcast %860 : f32 to vector<8x36xf32>
    %862 = arith.addf %859, %861 : vector<8x36xf32>
    %cst_695 = arith.constant 0.000000e+00 : f32
    %863 = vector.broadcast %cst_695 : f32 to vector<8x36xf32>
    %864 = arith.maximumf %862, %863 : vector<8x36xf32>
    %c13_696 = arith.constant 13 : index
    %c0_697 = arith.constant 0 : index
    %c0_698 = arith.constant 0 : index
    %865 = vector.load %arg4[%c13_696, %c0_697, %c0_698] : memref<32x36x32xf32, #tpu.memory_space<vmem>>, vector<1x36x32xf32>
    %866 = vector.shape_cast %865 : vector<1x36x32xf32> to vector<36x32xf32>
    %cst_699 = arith.constant dense<0.000000e+00> : vector<8x32xf32>
    %867 = tpu.matmul %864, %866, %cst_699 {dimension_numbers = #tpu.dot_dimension_numbers<[1], [0], [0], [1], [0, 0, 1, 1], [], []>} : vector<8x36xf32>, vector<36x32xf32>, vector<8x32xf32> -> vector<8x32xf32>
    %868 = arith.addf %806, %867 : vector<8x32xf32>
    %c0_700 = arith.constant 0 : index
    %c0_701 = arith.constant 0 : index
    %c0_702 = arith.constant 0 : index
    %869 = vector.load %arg3[%c0_700, %c0_701, %c0_702] : memref<9x8x36xf32, #tpu.memory_space<vmem>>, vector<1x8x36xf32>
    %870 = vector.shape_cast %869 : vector<1x8x36xf32> to vector<8x36xf32>
    %c0_703 = arith.constant 0 : index
    %c14 = arith.constant 14 : index
    %871 = memref.load %arg1[%c0_703, %c14] : memref<9x32xf32, #tpu.memory_space<smem>>
    %872 = vector.broadcast %871 : f32 to vector<8x36xf32>
    %873 = arith.mulf %870, %872 : vector<8x36xf32>
    %c1_704 = arith.constant 1 : index
    %c0_705 = arith.constant 0 : index
    %c0_706 = arith.constant 0 : index
    %874 = vector.load %arg3[%c1_704, %c0_705, %c0_706] : memref<9x8x36xf32, #tpu.memory_space<vmem>>, vector<1x8x36xf32>
    %875 = vector.shape_cast %874 : vector<1x8x36xf32> to vector<8x36xf32>
    %c1_707 = arith.constant 1 : index
    %c14_708 = arith.constant 14 : index
    %876 = memref.load %arg1[%c1_707, %c14_708] : memref<9x32xf32, #tpu.memory_space<smem>>
    %877 = vector.broadcast %876 : f32 to vector<8x36xf32>
    %878 = arith.mulf %875, %877 : vector<8x36xf32>
    %879 = arith.addf %873, %878 : vector<8x36xf32>
    %c2_709 = arith.constant 2 : index
    %c0_710 = arith.constant 0 : index
    %c0_711 = arith.constant 0 : index
    %880 = vector.load %arg3[%c2_709, %c0_710, %c0_711] : memref<9x8x36xf32, #tpu.memory_space<vmem>>, vector<1x8x36xf32>
    %881 = vector.shape_cast %880 : vector<1x8x36xf32> to vector<8x36xf32>
    %c2_712 = arith.constant 2 : index
    %c14_713 = arith.constant 14 : index
    %882 = memref.load %arg1[%c2_712, %c14_713] : memref<9x32xf32, #tpu.memory_space<smem>>
    %883 = vector.broadcast %882 : f32 to vector<8x36xf32>
    %884 = arith.mulf %881, %883 : vector<8x36xf32>
    %885 = arith.addf %879, %884 : vector<8x36xf32>
    %c3_714 = arith.constant 3 : index
    %c0_715 = arith.constant 0 : index
    %c0_716 = arith.constant 0 : index
    %886 = vector.load %arg3[%c3_714, %c0_715, %c0_716] : memref<9x8x36xf32, #tpu.memory_space<vmem>>, vector<1x8x36xf32>
    %887 = vector.shape_cast %886 : vector<1x8x36xf32> to vector<8x36xf32>
    %c3_717 = arith.constant 3 : index
    %c14_718 = arith.constant 14 : index
    %888 = memref.load %arg1[%c3_717, %c14_718] : memref<9x32xf32, #tpu.memory_space<smem>>
    %889 = vector.broadcast %888 : f32 to vector<8x36xf32>
    %890 = arith.mulf %887, %889 : vector<8x36xf32>
    %891 = arith.addf %885, %890 : vector<8x36xf32>
    %c4_719 = arith.constant 4 : index
    %c0_720 = arith.constant 0 : index
    %c0_721 = arith.constant 0 : index
    %892 = vector.load %arg3[%c4_719, %c0_720, %c0_721] : memref<9x8x36xf32, #tpu.memory_space<vmem>>, vector<1x8x36xf32>
    %893 = vector.shape_cast %892 : vector<1x8x36xf32> to vector<8x36xf32>
    %c4_722 = arith.constant 4 : index
    %c14_723 = arith.constant 14 : index
    %894 = memref.load %arg1[%c4_722, %c14_723] : memref<9x32xf32, #tpu.memory_space<smem>>
    %895 = vector.broadcast %894 : f32 to vector<8x36xf32>
    %896 = arith.mulf %893, %895 : vector<8x36xf32>
    %897 = arith.addf %891, %896 : vector<8x36xf32>
    %c5_724 = arith.constant 5 : index
    %c0_725 = arith.constant 0 : index
    %c0_726 = arith.constant 0 : index
    %898 = vector.load %arg3[%c5_724, %c0_725, %c0_726] : memref<9x8x36xf32, #tpu.memory_space<vmem>>, vector<1x8x36xf32>
    %899 = vector.shape_cast %898 : vector<1x8x36xf32> to vector<8x36xf32>
    %c5_727 = arith.constant 5 : index
    %c14_728 = arith.constant 14 : index
    %900 = memref.load %arg1[%c5_727, %c14_728] : memref<9x32xf32, #tpu.memory_space<smem>>
    %901 = vector.broadcast %900 : f32 to vector<8x36xf32>
    %902 = arith.mulf %899, %901 : vector<8x36xf32>
    %903 = arith.addf %897, %902 : vector<8x36xf32>
    %c6_729 = arith.constant 6 : index
    %c0_730 = arith.constant 0 : index
    %c0_731 = arith.constant 0 : index
    %904 = vector.load %arg3[%c6_729, %c0_730, %c0_731] : memref<9x8x36xf32, #tpu.memory_space<vmem>>, vector<1x8x36xf32>
    %905 = vector.shape_cast %904 : vector<1x8x36xf32> to vector<8x36xf32>
    %c6_732 = arith.constant 6 : index
    %c14_733 = arith.constant 14 : index
    %906 = memref.load %arg1[%c6_732, %c14_733] : memref<9x32xf32, #tpu.memory_space<smem>>
    %907 = vector.broadcast %906 : f32 to vector<8x36xf32>
    %908 = arith.mulf %905, %907 : vector<8x36xf32>
    %909 = arith.addf %903, %908 : vector<8x36xf32>
    %c7_734 = arith.constant 7 : index
    %c0_735 = arith.constant 0 : index
    %c0_736 = arith.constant 0 : index
    %910 = vector.load %arg3[%c7_734, %c0_735, %c0_736] : memref<9x8x36xf32, #tpu.memory_space<vmem>>, vector<1x8x36xf32>
    %911 = vector.shape_cast %910 : vector<1x8x36xf32> to vector<8x36xf32>
    %c7_737 = arith.constant 7 : index
    %c14_738 = arith.constant 14 : index
    %912 = memref.load %arg1[%c7_737, %c14_738] : memref<9x32xf32, #tpu.memory_space<smem>>
    %913 = vector.broadcast %912 : f32 to vector<8x36xf32>
    %914 = arith.mulf %911, %913 : vector<8x36xf32>
    %915 = arith.addf %909, %914 : vector<8x36xf32>
    %c8_739 = arith.constant 8 : index
    %c0_740 = arith.constant 0 : index
    %c0_741 = arith.constant 0 : index
    %916 = vector.load %arg3[%c8_739, %c0_740, %c0_741] : memref<9x8x36xf32, #tpu.memory_space<vmem>>, vector<1x8x36xf32>
    %917 = vector.shape_cast %916 : vector<1x8x36xf32> to vector<8x36xf32>
    %c8_742 = arith.constant 8 : index
    %c14_743 = arith.constant 14 : index
    %918 = memref.load %arg1[%c8_742, %c14_743] : memref<9x32xf32, #tpu.memory_space<smem>>
    %919 = vector.broadcast %918 : f32 to vector<8x36xf32>
    %920 = arith.mulf %917, %919 : vector<8x36xf32>
    %921 = arith.addf %915, %920 : vector<8x36xf32>
    %c14_744 = arith.constant 14 : index
    %922 = memref.load %arg2[%c14_744] : memref<32xf32, #tpu.memory_space<smem>>
    %923 = vector.broadcast %922 : f32 to vector<8x36xf32>
    %924 = arith.addf %921, %923 : vector<8x36xf32>
    %cst_745 = arith.constant 0.000000e+00 : f32
    %925 = vector.broadcast %cst_745 : f32 to vector<8x36xf32>
    %926 = arith.maximumf %924, %925 : vector<8x36xf32>
    %c14_746 = arith.constant 14 : index
    %c0_747 = arith.constant 0 : index
    %c0_748 = arith.constant 0 : index
    %927 = vector.load %arg4[%c14_746, %c0_747, %c0_748] : memref<32x36x32xf32, #tpu.memory_space<vmem>>, vector<1x36x32xf32>
    %928 = vector.shape_cast %927 : vector<1x36x32xf32> to vector<36x32xf32>
    %cst_749 = arith.constant dense<0.000000e+00> : vector<8x32xf32>
    %929 = tpu.matmul %926, %928, %cst_749 {dimension_numbers = #tpu.dot_dimension_numbers<[1], [0], [0], [1], [0, 0, 1, 1], [], []>} : vector<8x36xf32>, vector<36x32xf32>, vector<8x32xf32> -> vector<8x32xf32>
    %930 = arith.addf %868, %929 : vector<8x32xf32>
    %c0_750 = arith.constant 0 : index
    %c0_751 = arith.constant 0 : index
    %c0_752 = arith.constant 0 : index
    %931 = vector.load %arg3[%c0_750, %c0_751, %c0_752] : memref<9x8x36xf32, #tpu.memory_space<vmem>>, vector<1x8x36xf32>
    %932 = vector.shape_cast %931 : vector<1x8x36xf32> to vector<8x36xf32>
    %c0_753 = arith.constant 0 : index
    %c15 = arith.constant 15 : index
    %933 = memref.load %arg1[%c0_753, %c15] : memref<9x32xf32, #tpu.memory_space<smem>>
    %934 = vector.broadcast %933 : f32 to vector<8x36xf32>
    %935 = arith.mulf %932, %934 : vector<8x36xf32>
    %c1_754 = arith.constant 1 : index
    %c0_755 = arith.constant 0 : index
    %c0_756 = arith.constant 0 : index
    %936 = vector.load %arg3[%c1_754, %c0_755, %c0_756] : memref<9x8x36xf32, #tpu.memory_space<vmem>>, vector<1x8x36xf32>
    %937 = vector.shape_cast %936 : vector<1x8x36xf32> to vector<8x36xf32>
    %c1_757 = arith.constant 1 : index
    %c15_758 = arith.constant 15 : index
    %938 = memref.load %arg1[%c1_757, %c15_758] : memref<9x32xf32, #tpu.memory_space<smem>>
    %939 = vector.broadcast %938 : f32 to vector<8x36xf32>
    %940 = arith.mulf %937, %939 : vector<8x36xf32>
    %941 = arith.addf %935, %940 : vector<8x36xf32>
    %c2_759 = arith.constant 2 : index
    %c0_760 = arith.constant 0 : index
    %c0_761 = arith.constant 0 : index
    %942 = vector.load %arg3[%c2_759, %c0_760, %c0_761] : memref<9x8x36xf32, #tpu.memory_space<vmem>>, vector<1x8x36xf32>
    %943 = vector.shape_cast %942 : vector<1x8x36xf32> to vector<8x36xf32>
    %c2_762 = arith.constant 2 : index
    %c15_763 = arith.constant 15 : index
    %944 = memref.load %arg1[%c2_762, %c15_763] : memref<9x32xf32, #tpu.memory_space<smem>>
    %945 = vector.broadcast %944 : f32 to vector<8x36xf32>
    %946 = arith.mulf %943, %945 : vector<8x36xf32>
    %947 = arith.addf %941, %946 : vector<8x36xf32>
    %c3_764 = arith.constant 3 : index
    %c0_765 = arith.constant 0 : index
    %c0_766 = arith.constant 0 : index
    %948 = vector.load %arg3[%c3_764, %c0_765, %c0_766] : memref<9x8x36xf32, #tpu.memory_space<vmem>>, vector<1x8x36xf32>
    %949 = vector.shape_cast %948 : vector<1x8x36xf32> to vector<8x36xf32>
    %c3_767 = arith.constant 3 : index
    %c15_768 = arith.constant 15 : index
    %950 = memref.load %arg1[%c3_767, %c15_768] : memref<9x32xf32, #tpu.memory_space<smem>>
    %951 = vector.broadcast %950 : f32 to vector<8x36xf32>
    %952 = arith.mulf %949, %951 : vector<8x36xf32>
    %953 = arith.addf %947, %952 : vector<8x36xf32>
    %c4_769 = arith.constant 4 : index
    %c0_770 = arith.constant 0 : index
    %c0_771 = arith.constant 0 : index
    %954 = vector.load %arg3[%c4_769, %c0_770, %c0_771] : memref<9x8x36xf32, #tpu.memory_space<vmem>>, vector<1x8x36xf32>
    %955 = vector.shape_cast %954 : vector<1x8x36xf32> to vector<8x36xf32>
    %c4_772 = arith.constant 4 : index
    %c15_773 = arith.constant 15 : index
    %956 = memref.load %arg1[%c4_772, %c15_773] : memref<9x32xf32, #tpu.memory_space<smem>>
    %957 = vector.broadcast %956 : f32 to vector<8x36xf32>
    %958 = arith.mulf %955, %957 : vector<8x36xf32>
    %959 = arith.addf %953, %958 : vector<8x36xf32>
    %c5_774 = arith.constant 5 : index
    %c0_775 = arith.constant 0 : index
    %c0_776 = arith.constant 0 : index
    %960 = vector.load %arg3[%c5_774, %c0_775, %c0_776] : memref<9x8x36xf32, #tpu.memory_space<vmem>>, vector<1x8x36xf32>
    %961 = vector.shape_cast %960 : vector<1x8x36xf32> to vector<8x36xf32>
    %c5_777 = arith.constant 5 : index
    %c15_778 = arith.constant 15 : index
    %962 = memref.load %arg1[%c5_777, %c15_778] : memref<9x32xf32, #tpu.memory_space<smem>>
    %963 = vector.broadcast %962 : f32 to vector<8x36xf32>
    %964 = arith.mulf %961, %963 : vector<8x36xf32>
    %965 = arith.addf %959, %964 : vector<8x36xf32>
    %c6_779 = arith.constant 6 : index
    %c0_780 = arith.constant 0 : index
    %c0_781 = arith.constant 0 : index
    %966 = vector.load %arg3[%c6_779, %c0_780, %c0_781] : memref<9x8x36xf32, #tpu.memory_space<vmem>>, vector<1x8x36xf32>
    %967 = vector.shape_cast %966 : vector<1x8x36xf32> to vector<8x36xf32>
    %c6_782 = arith.constant 6 : index
    %c15_783 = arith.constant 15 : index
    %968 = memref.load %arg1[%c6_782, %c15_783] : memref<9x32xf32, #tpu.memory_space<smem>>
    %969 = vector.broadcast %968 : f32 to vector<8x36xf32>
    %970 = arith.mulf %967, %969 : vector<8x36xf32>
    %971 = arith.addf %965, %970 : vector<8x36xf32>
    %c7_784 = arith.constant 7 : index
    %c0_785 = arith.constant 0 : index
    %c0_786 = arith.constant 0 : index
    %972 = vector.load %arg3[%c7_784, %c0_785, %c0_786] : memref<9x8x36xf32, #tpu.memory_space<vmem>>, vector<1x8x36xf32>
    %973 = vector.shape_cast %972 : vector<1x8x36xf32> to vector<8x36xf32>
    %c7_787 = arith.constant 7 : index
    %c15_788 = arith.constant 15 : index
    %974 = memref.load %arg1[%c7_787, %c15_788] : memref<9x32xf32, #tpu.memory_space<smem>>
    %975 = vector.broadcast %974 : f32 to vector<8x36xf32>
    %976 = arith.mulf %973, %975 : vector<8x36xf32>
    %977 = arith.addf %971, %976 : vector<8x36xf32>
    %c8_789 = arith.constant 8 : index
    %c0_790 = arith.constant 0 : index
    %c0_791 = arith.constant 0 : index
    %978 = vector.load %arg3[%c8_789, %c0_790, %c0_791] : memref<9x8x36xf32, #tpu.memory_space<vmem>>, vector<1x8x36xf32>
    %979 = vector.shape_cast %978 : vector<1x8x36xf32> to vector<8x36xf32>
    %c8_792 = arith.constant 8 : index
    %c15_793 = arith.constant 15 : index
    %980 = memref.load %arg1[%c8_792, %c15_793] : memref<9x32xf32, #tpu.memory_space<smem>>
    %981 = vector.broadcast %980 : f32 to vector<8x36xf32>
    %982 = arith.mulf %979, %981 : vector<8x36xf32>
    %983 = arith.addf %977, %982 : vector<8x36xf32>
    %c15_794 = arith.constant 15 : index
    %984 = memref.load %arg2[%c15_794] : memref<32xf32, #tpu.memory_space<smem>>
    %985 = vector.broadcast %984 : f32 to vector<8x36xf32>
    %986 = arith.addf %983, %985 : vector<8x36xf32>
    %cst_795 = arith.constant 0.000000e+00 : f32
    %987 = vector.broadcast %cst_795 : f32 to vector<8x36xf32>
    %988 = arith.maximumf %986, %987 : vector<8x36xf32>
    %c15_796 = arith.constant 15 : index
    %c0_797 = arith.constant 0 : index
    %c0_798 = arith.constant 0 : index
    %989 = vector.load %arg4[%c15_796, %c0_797, %c0_798] : memref<32x36x32xf32, #tpu.memory_space<vmem>>, vector<1x36x32xf32>
    %990 = vector.shape_cast %989 : vector<1x36x32xf32> to vector<36x32xf32>
    %cst_799 = arith.constant dense<0.000000e+00> : vector<8x32xf32>
    %991 = tpu.matmul %988, %990, %cst_799 {dimension_numbers = #tpu.dot_dimension_numbers<[1], [0], [0], [1], [0, 0, 1, 1], [], []>} : vector<8x36xf32>, vector<36x32xf32>, vector<8x32xf32> -> vector<8x32xf32>
    %992 = arith.addf %930, %991 : vector<8x32xf32>
    %c0_800 = arith.constant 0 : index
    %c0_801 = arith.constant 0 : index
    %c0_802 = arith.constant 0 : index
    %993 = vector.load %arg3[%c0_800, %c0_801, %c0_802] : memref<9x8x36xf32, #tpu.memory_space<vmem>>, vector<1x8x36xf32>
    %994 = vector.shape_cast %993 : vector<1x8x36xf32> to vector<8x36xf32>
    %c0_803 = arith.constant 0 : index
    %c16 = arith.constant 16 : index
    %995 = memref.load %arg1[%c0_803, %c16] : memref<9x32xf32, #tpu.memory_space<smem>>
    %996 = vector.broadcast %995 : f32 to vector<8x36xf32>
    %997 = arith.mulf %994, %996 : vector<8x36xf32>
    %c1_804 = arith.constant 1 : index
    %c0_805 = arith.constant 0 : index
    %c0_806 = arith.constant 0 : index
    %998 = vector.load %arg3[%c1_804, %c0_805, %c0_806] : memref<9x8x36xf32, #tpu.memory_space<vmem>>, vector<1x8x36xf32>
    %999 = vector.shape_cast %998 : vector<1x8x36xf32> to vector<8x36xf32>
    %c1_807 = arith.constant 1 : index
    %c16_808 = arith.constant 16 : index
    %1000 = memref.load %arg1[%c1_807, %c16_808] : memref<9x32xf32, #tpu.memory_space<smem>>
    %1001 = vector.broadcast %1000 : f32 to vector<8x36xf32>
    %1002 = arith.mulf %999, %1001 : vector<8x36xf32>
    %1003 = arith.addf %997, %1002 : vector<8x36xf32>
    %c2_809 = arith.constant 2 : index
    %c0_810 = arith.constant 0 : index
    %c0_811 = arith.constant 0 : index
    %1004 = vector.load %arg3[%c2_809, %c0_810, %c0_811] : memref<9x8x36xf32, #tpu.memory_space<vmem>>, vector<1x8x36xf32>
    %1005 = vector.shape_cast %1004 : vector<1x8x36xf32> to vector<8x36xf32>
    %c2_812 = arith.constant 2 : index
    %c16_813 = arith.constant 16 : index
    %1006 = memref.load %arg1[%c2_812, %c16_813] : memref<9x32xf32, #tpu.memory_space<smem>>
    %1007 = vector.broadcast %1006 : f32 to vector<8x36xf32>
    %1008 = arith.mulf %1005, %1007 : vector<8x36xf32>
    %1009 = arith.addf %1003, %1008 : vector<8x36xf32>
    %c3_814 = arith.constant 3 : index
    %c0_815 = arith.constant 0 : index
    %c0_816 = arith.constant 0 : index
    %1010 = vector.load %arg3[%c3_814, %c0_815, %c0_816] : memref<9x8x36xf32, #tpu.memory_space<vmem>>, vector<1x8x36xf32>
    %1011 = vector.shape_cast %1010 : vector<1x8x36xf32> to vector<8x36xf32>
    %c3_817 = arith.constant 3 : index
    %c16_818 = arith.constant 16 : index
    %1012 = memref.load %arg1[%c3_817, %c16_818] : memref<9x32xf32, #tpu.memory_space<smem>>
    %1013 = vector.broadcast %1012 : f32 to vector<8x36xf32>
    %1014 = arith.mulf %1011, %1013 : vector<8x36xf32>
    %1015 = arith.addf %1009, %1014 : vector<8x36xf32>
    %c4_819 = arith.constant 4 : index
    %c0_820 = arith.constant 0 : index
    %c0_821 = arith.constant 0 : index
    %1016 = vector.load %arg3[%c4_819, %c0_820, %c0_821] : memref<9x8x36xf32, #tpu.memory_space<vmem>>, vector<1x8x36xf32>
    %1017 = vector.shape_cast %1016 : vector<1x8x36xf32> to vector<8x36xf32>
    %c4_822 = arith.constant 4 : index
    %c16_823 = arith.constant 16 : index
    %1018 = memref.load %arg1[%c4_822, %c16_823] : memref<9x32xf32, #tpu.memory_space<smem>>
    %1019 = vector.broadcast %1018 : f32 to vector<8x36xf32>
    %1020 = arith.mulf %1017, %1019 : vector<8x36xf32>
    %1021 = arith.addf %1015, %1020 : vector<8x36xf32>
    %c5_824 = arith.constant 5 : index
    %c0_825 = arith.constant 0 : index
    %c0_826 = arith.constant 0 : index
    %1022 = vector.load %arg3[%c5_824, %c0_825, %c0_826] : memref<9x8x36xf32, #tpu.memory_space<vmem>>, vector<1x8x36xf32>
    %1023 = vector.shape_cast %1022 : vector<1x8x36xf32> to vector<8x36xf32>
    %c5_827 = arith.constant 5 : index
    %c16_828 = arith.constant 16 : index
    %1024 = memref.load %arg1[%c5_827, %c16_828] : memref<9x32xf32, #tpu.memory_space<smem>>
    %1025 = vector.broadcast %1024 : f32 to vector<8x36xf32>
    %1026 = arith.mulf %1023, %1025 : vector<8x36xf32>
    %1027 = arith.addf %1021, %1026 : vector<8x36xf32>
    %c6_829 = arith.constant 6 : index
    %c0_830 = arith.constant 0 : index
    %c0_831 = arith.constant 0 : index
    %1028 = vector.load %arg3[%c6_829, %c0_830, %c0_831] : memref<9x8x36xf32, #tpu.memory_space<vmem>>, vector<1x8x36xf32>
    %1029 = vector.shape_cast %1028 : vector<1x8x36xf32> to vector<8x36xf32>
    %c6_832 = arith.constant 6 : index
    %c16_833 = arith.constant 16 : index
    %1030 = memref.load %arg1[%c6_832, %c16_833] : memref<9x32xf32, #tpu.memory_space<smem>>
    %1031 = vector.broadcast %1030 : f32 to vector<8x36xf32>
    %1032 = arith.mulf %1029, %1031 : vector<8x36xf32>
    %1033 = arith.addf %1027, %1032 : vector<8x36xf32>
    %c7_834 = arith.constant 7 : index
    %c0_835 = arith.constant 0 : index
    %c0_836 = arith.constant 0 : index
    %1034 = vector.load %arg3[%c7_834, %c0_835, %c0_836] : memref<9x8x36xf32, #tpu.memory_space<vmem>>, vector<1x8x36xf32>
    %1035 = vector.shape_cast %1034 : vector<1x8x36xf32> to vector<8x36xf32>
    %c7_837 = arith.constant 7 : index
    %c16_838 = arith.constant 16 : index
    %1036 = memref.load %arg1[%c7_837, %c16_838] : memref<9x32xf32, #tpu.memory_space<smem>>
    %1037 = vector.broadcast %1036 : f32 to vector<8x36xf32>
    %1038 = arith.mulf %1035, %1037 : vector<8x36xf32>
    %1039 = arith.addf %1033, %1038 : vector<8x36xf32>
    %c8_839 = arith.constant 8 : index
    %c0_840 = arith.constant 0 : index
    %c0_841 = arith.constant 0 : index
    %1040 = vector.load %arg3[%c8_839, %c0_840, %c0_841] : memref<9x8x36xf32, #tpu.memory_space<vmem>>, vector<1x8x36xf32>
    %1041 = vector.shape_cast %1040 : vector<1x8x36xf32> to vector<8x36xf32>
    %c8_842 = arith.constant 8 : index
    %c16_843 = arith.constant 16 : index
    %1042 = memref.load %arg1[%c8_842, %c16_843] : memref<9x32xf32, #tpu.memory_space<smem>>
    %1043 = vector.broadcast %1042 : f32 to vector<8x36xf32>
    %1044 = arith.mulf %1041, %1043 : vector<8x36xf32>
    %1045 = arith.addf %1039, %1044 : vector<8x36xf32>
    %c16_844 = arith.constant 16 : index
    %1046 = memref.load %arg2[%c16_844] : memref<32xf32, #tpu.memory_space<smem>>
    %1047 = vector.broadcast %1046 : f32 to vector<8x36xf32>
    %1048 = arith.addf %1045, %1047 : vector<8x36xf32>
    %cst_845 = arith.constant 0.000000e+00 : f32
    %1049 = vector.broadcast %cst_845 : f32 to vector<8x36xf32>
    %1050 = arith.maximumf %1048, %1049 : vector<8x36xf32>
    %c16_846 = arith.constant 16 : index
    %c0_847 = arith.constant 0 : index
    %c0_848 = arith.constant 0 : index
    %1051 = vector.load %arg4[%c16_846, %c0_847, %c0_848] : memref<32x36x32xf32, #tpu.memory_space<vmem>>, vector<1x36x32xf32>
    %1052 = vector.shape_cast %1051 : vector<1x36x32xf32> to vector<36x32xf32>
    %cst_849 = arith.constant dense<0.000000e+00> : vector<8x32xf32>
    %1053 = tpu.matmul %1050, %1052, %cst_849 {dimension_numbers = #tpu.dot_dimension_numbers<[1], [0], [0], [1], [0, 0, 1, 1], [], []>} : vector<8x36xf32>, vector<36x32xf32>, vector<8x32xf32> -> vector<8x32xf32>
    %1054 = arith.addf %992, %1053 : vector<8x32xf32>
    %c0_850 = arith.constant 0 : index
    %c0_851 = arith.constant 0 : index
    %c0_852 = arith.constant 0 : index
    %1055 = vector.load %arg3[%c0_850, %c0_851, %c0_852] : memref<9x8x36xf32, #tpu.memory_space<vmem>>, vector<1x8x36xf32>
    %1056 = vector.shape_cast %1055 : vector<1x8x36xf32> to vector<8x36xf32>
    %c0_853 = arith.constant 0 : index
    %c17 = arith.constant 17 : index
    %1057 = memref.load %arg1[%c0_853, %c17] : memref<9x32xf32, #tpu.memory_space<smem>>
    %1058 = vector.broadcast %1057 : f32 to vector<8x36xf32>
    %1059 = arith.mulf %1056, %1058 : vector<8x36xf32>
    %c1_854 = arith.constant 1 : index
    %c0_855 = arith.constant 0 : index
    %c0_856 = arith.constant 0 : index
    %1060 = vector.load %arg3[%c1_854, %c0_855, %c0_856] : memref<9x8x36xf32, #tpu.memory_space<vmem>>, vector<1x8x36xf32>
    %1061 = vector.shape_cast %1060 : vector<1x8x36xf32> to vector<8x36xf32>
    %c1_857 = arith.constant 1 : index
    %c17_858 = arith.constant 17 : index
    %1062 = memref.load %arg1[%c1_857, %c17_858] : memref<9x32xf32, #tpu.memory_space<smem>>
    %1063 = vector.broadcast %1062 : f32 to vector<8x36xf32>
    %1064 = arith.mulf %1061, %1063 : vector<8x36xf32>
    %1065 = arith.addf %1059, %1064 : vector<8x36xf32>
    %c2_859 = arith.constant 2 : index
    %c0_860 = arith.constant 0 : index
    %c0_861 = arith.constant 0 : index
    %1066 = vector.load %arg3[%c2_859, %c0_860, %c0_861] : memref<9x8x36xf32, #tpu.memory_space<vmem>>, vector<1x8x36xf32>
    %1067 = vector.shape_cast %1066 : vector<1x8x36xf32> to vector<8x36xf32>
    %c2_862 = arith.constant 2 : index
    %c17_863 = arith.constant 17 : index
    %1068 = memref.load %arg1[%c2_862, %c17_863] : memref<9x32xf32, #tpu.memory_space<smem>>
    %1069 = vector.broadcast %1068 : f32 to vector<8x36xf32>
    %1070 = arith.mulf %1067, %1069 : vector<8x36xf32>
    %1071 = arith.addf %1065, %1070 : vector<8x36xf32>
    %c3_864 = arith.constant 3 : index
    %c0_865 = arith.constant 0 : index
    %c0_866 = arith.constant 0 : index
    %1072 = vector.load %arg3[%c3_864, %c0_865, %c0_866] : memref<9x8x36xf32, #tpu.memory_space<vmem>>, vector<1x8x36xf32>
    %1073 = vector.shape_cast %1072 : vector<1x8x36xf32> to vector<8x36xf32>
    %c3_867 = arith.constant 3 : index
    %c17_868 = arith.constant 17 : index
    %1074 = memref.load %arg1[%c3_867, %c17_868] : memref<9x32xf32, #tpu.memory_space<smem>>
    %1075 = vector.broadcast %1074 : f32 to vector<8x36xf32>
    %1076 = arith.mulf %1073, %1075 : vector<8x36xf32>
    %1077 = arith.addf %1071, %1076 : vector<8x36xf32>
    %c4_869 = arith.constant 4 : index
    %c0_870 = arith.constant 0 : index
    %c0_871 = arith.constant 0 : index
    %1078 = vector.load %arg3[%c4_869, %c0_870, %c0_871] : memref<9x8x36xf32, #tpu.memory_space<vmem>>, vector<1x8x36xf32>
    %1079 = vector.shape_cast %1078 : vector<1x8x36xf32> to vector<8x36xf32>
    %c4_872 = arith.constant 4 : index
    %c17_873 = arith.constant 17 : index
    %1080 = memref.load %arg1[%c4_872, %c17_873] : memref<9x32xf32, #tpu.memory_space<smem>>
    %1081 = vector.broadcast %1080 : f32 to vector<8x36xf32>
    %1082 = arith.mulf %1079, %1081 : vector<8x36xf32>
    %1083 = arith.addf %1077, %1082 : vector<8x36xf32>
    %c5_874 = arith.constant 5 : index
    %c0_875 = arith.constant 0 : index
    %c0_876 = arith.constant 0 : index
    %1084 = vector.load %arg3[%c5_874, %c0_875, %c0_876] : memref<9x8x36xf32, #tpu.memory_space<vmem>>, vector<1x8x36xf32>
    %1085 = vector.shape_cast %1084 : vector<1x8x36xf32> to vector<8x36xf32>
    %c5_877 = arith.constant 5 : index
    %c17_878 = arith.constant 17 : index
    %1086 = memref.load %arg1[%c5_877, %c17_878] : memref<9x32xf32, #tpu.memory_space<smem>>
    %1087 = vector.broadcast %1086 : f32 to vector<8x36xf32>
    %1088 = arith.mulf %1085, %1087 : vector<8x36xf32>
    %1089 = arith.addf %1083, %1088 : vector<8x36xf32>
    %c6_879 = arith.constant 6 : index
    %c0_880 = arith.constant 0 : index
    %c0_881 = arith.constant 0 : index
    %1090 = vector.load %arg3[%c6_879, %c0_880, %c0_881] : memref<9x8x36xf32, #tpu.memory_space<vmem>>, vector<1x8x36xf32>
    %1091 = vector.shape_cast %1090 : vector<1x8x36xf32> to vector<8x36xf32>
    %c6_882 = arith.constant 6 : index
    %c17_883 = arith.constant 17 : index
    %1092 = memref.load %arg1[%c6_882, %c17_883] : memref<9x32xf32, #tpu.memory_space<smem>>
    %1093 = vector.broadcast %1092 : f32 to vector<8x36xf32>
    %1094 = arith.mulf %1091, %1093 : vector<8x36xf32>
    %1095 = arith.addf %1089, %1094 : vector<8x36xf32>
    %c7_884 = arith.constant 7 : index
    %c0_885 = arith.constant 0 : index
    %c0_886 = arith.constant 0 : index
    %1096 = vector.load %arg3[%c7_884, %c0_885, %c0_886] : memref<9x8x36xf32, #tpu.memory_space<vmem>>, vector<1x8x36xf32>
    %1097 = vector.shape_cast %1096 : vector<1x8x36xf32> to vector<8x36xf32>
    %c7_887 = arith.constant 7 : index
    %c17_888 = arith.constant 17 : index
    %1098 = memref.load %arg1[%c7_887, %c17_888] : memref<9x32xf32, #tpu.memory_space<smem>>
    %1099 = vector.broadcast %1098 : f32 to vector<8x36xf32>
    %1100 = arith.mulf %1097, %1099 : vector<8x36xf32>
    %1101 = arith.addf %1095, %1100 : vector<8x36xf32>
    %c8_889 = arith.constant 8 : index
    %c0_890 = arith.constant 0 : index
    %c0_891 = arith.constant 0 : index
    %1102 = vector.load %arg3[%c8_889, %c0_890, %c0_891] : memref<9x8x36xf32, #tpu.memory_space<vmem>>, vector<1x8x36xf32>
    %1103 = vector.shape_cast %1102 : vector<1x8x36xf32> to vector<8x36xf32>
    %c8_892 = arith.constant 8 : index
    %c17_893 = arith.constant 17 : index
    %1104 = memref.load %arg1[%c8_892, %c17_893] : memref<9x32xf32, #tpu.memory_space<smem>>
    %1105 = vector.broadcast %1104 : f32 to vector<8x36xf32>
    %1106 = arith.mulf %1103, %1105 : vector<8x36xf32>
    %1107 = arith.addf %1101, %1106 : vector<8x36xf32>
    %c17_894 = arith.constant 17 : index
    %1108 = memref.load %arg2[%c17_894] : memref<32xf32, #tpu.memory_space<smem>>
    %1109 = vector.broadcast %1108 : f32 to vector<8x36xf32>
    %1110 = arith.addf %1107, %1109 : vector<8x36xf32>
    %cst_895 = arith.constant 0.000000e+00 : f32
    %1111 = vector.broadcast %cst_895 : f32 to vector<8x36xf32>
    %1112 = arith.maximumf %1110, %1111 : vector<8x36xf32>
    %c17_896 = arith.constant 17 : index
    %c0_897 = arith.constant 0 : index
    %c0_898 = arith.constant 0 : index
    %1113 = vector.load %arg4[%c17_896, %c0_897, %c0_898] : memref<32x36x32xf32, #tpu.memory_space<vmem>>, vector<1x36x32xf32>
    %1114 = vector.shape_cast %1113 : vector<1x36x32xf32> to vector<36x32xf32>
    %cst_899 = arith.constant dense<0.000000e+00> : vector<8x32xf32>
    %1115 = tpu.matmul %1112, %1114, %cst_899 {dimension_numbers = #tpu.dot_dimension_numbers<[1], [0], [0], [1], [0, 0, 1, 1], [], []>} : vector<8x36xf32>, vector<36x32xf32>, vector<8x32xf32> -> vector<8x32xf32>
    %1116 = arith.addf %1054, %1115 : vector<8x32xf32>
    %c0_900 = arith.constant 0 : index
    %c0_901 = arith.constant 0 : index
    %c0_902 = arith.constant 0 : index
    %1117 = vector.load %arg3[%c0_900, %c0_901, %c0_902] : memref<9x8x36xf32, #tpu.memory_space<vmem>>, vector<1x8x36xf32>
    %1118 = vector.shape_cast %1117 : vector<1x8x36xf32> to vector<8x36xf32>
    %c0_903 = arith.constant 0 : index
    %c18 = arith.constant 18 : index
    %1119 = memref.load %arg1[%c0_903, %c18] : memref<9x32xf32, #tpu.memory_space<smem>>
    %1120 = vector.broadcast %1119 : f32 to vector<8x36xf32>
    %1121 = arith.mulf %1118, %1120 : vector<8x36xf32>
    %c1_904 = arith.constant 1 : index
    %c0_905 = arith.constant 0 : index
    %c0_906 = arith.constant 0 : index
    %1122 = vector.load %arg3[%c1_904, %c0_905, %c0_906] : memref<9x8x36xf32, #tpu.memory_space<vmem>>, vector<1x8x36xf32>
    %1123 = vector.shape_cast %1122 : vector<1x8x36xf32> to vector<8x36xf32>
    %c1_907 = arith.constant 1 : index
    %c18_908 = arith.constant 18 : index
    %1124 = memref.load %arg1[%c1_907, %c18_908] : memref<9x32xf32, #tpu.memory_space<smem>>
    %1125 = vector.broadcast %1124 : f32 to vector<8x36xf32>
    %1126 = arith.mulf %1123, %1125 : vector<8x36xf32>
    %1127 = arith.addf %1121, %1126 : vector<8x36xf32>
    %c2_909 = arith.constant 2 : index
    %c0_910 = arith.constant 0 : index
    %c0_911 = arith.constant 0 : index
    %1128 = vector.load %arg3[%c2_909, %c0_910, %c0_911] : memref<9x8x36xf32, #tpu.memory_space<vmem>>, vector<1x8x36xf32>
    %1129 = vector.shape_cast %1128 : vector<1x8x36xf32> to vector<8x36xf32>
    %c2_912 = arith.constant 2 : index
    %c18_913 = arith.constant 18 : index
    %1130 = memref.load %arg1[%c2_912, %c18_913] : memref<9x32xf32, #tpu.memory_space<smem>>
    %1131 = vector.broadcast %1130 : f32 to vector<8x36xf32>
    %1132 = arith.mulf %1129, %1131 : vector<8x36xf32>
    %1133 = arith.addf %1127, %1132 : vector<8x36xf32>
    %c3_914 = arith.constant 3 : index
    %c0_915 = arith.constant 0 : index
    %c0_916 = arith.constant 0 : index
    %1134 = vector.load %arg3[%c3_914, %c0_915, %c0_916] : memref<9x8x36xf32, #tpu.memory_space<vmem>>, vector<1x8x36xf32>
    %1135 = vector.shape_cast %1134 : vector<1x8x36xf32> to vector<8x36xf32>
    %c3_917 = arith.constant 3 : index
    %c18_918 = arith.constant 18 : index
    %1136 = memref.load %arg1[%c3_917, %c18_918] : memref<9x32xf32, #tpu.memory_space<smem>>
    %1137 = vector.broadcast %1136 : f32 to vector<8x36xf32>
    %1138 = arith.mulf %1135, %1137 : vector<8x36xf32>
    %1139 = arith.addf %1133, %1138 : vector<8x36xf32>
    %c4_919 = arith.constant 4 : index
    %c0_920 = arith.constant 0 : index
    %c0_921 = arith.constant 0 : index
    %1140 = vector.load %arg3[%c4_919, %c0_920, %c0_921] : memref<9x8x36xf32, #tpu.memory_space<vmem>>, vector<1x8x36xf32>
    %1141 = vector.shape_cast %1140 : vector<1x8x36xf32> to vector<8x36xf32>
    %c4_922 = arith.constant 4 : index
    %c18_923 = arith.constant 18 : index
    %1142 = memref.load %arg1[%c4_922, %c18_923] : memref<9x32xf32, #tpu.memory_space<smem>>
    %1143 = vector.broadcast %1142 : f32 to vector<8x36xf32>
    %1144 = arith.mulf %1141, %1143 : vector<8x36xf32>
    %1145 = arith.addf %1139, %1144 : vector<8x36xf32>
    %c5_924 = arith.constant 5 : index
    %c0_925 = arith.constant 0 : index
    %c0_926 = arith.constant 0 : index
    %1146 = vector.load %arg3[%c5_924, %c0_925, %c0_926] : memref<9x8x36xf32, #tpu.memory_space<vmem>>, vector<1x8x36xf32>
    %1147 = vector.shape_cast %1146 : vector<1x8x36xf32> to vector<8x36xf32>
    %c5_927 = arith.constant 5 : index
    %c18_928 = arith.constant 18 : index
    %1148 = memref.load %arg1[%c5_927, %c18_928] : memref<9x32xf32, #tpu.memory_space<smem>>
    %1149 = vector.broadcast %1148 : f32 to vector<8x36xf32>
    %1150 = arith.mulf %1147, %1149 : vector<8x36xf32>
    %1151 = arith.addf %1145, %1150 : vector<8x36xf32>
    %c6_929 = arith.constant 6 : index
    %c0_930 = arith.constant 0 : index
    %c0_931 = arith.constant 0 : index
    %1152 = vector.load %arg3[%c6_929, %c0_930, %c0_931] : memref<9x8x36xf32, #tpu.memory_space<vmem>>, vector<1x8x36xf32>
    %1153 = vector.shape_cast %1152 : vector<1x8x36xf32> to vector<8x36xf32>
    %c6_932 = arith.constant 6 : index
    %c18_933 = arith.constant 18 : index
    %1154 = memref.load %arg1[%c6_932, %c18_933] : memref<9x32xf32, #tpu.memory_space<smem>>
    %1155 = vector.broadcast %1154 : f32 to vector<8x36xf32>
    %1156 = arith.mulf %1153, %1155 : vector<8x36xf32>
    %1157 = arith.addf %1151, %1156 : vector<8x36xf32>
    %c7_934 = arith.constant 7 : index
    %c0_935 = arith.constant 0 : index
    %c0_936 = arith.constant 0 : index
    %1158 = vector.load %arg3[%c7_934, %c0_935, %c0_936] : memref<9x8x36xf32, #tpu.memory_space<vmem>>, vector<1x8x36xf32>
    %1159 = vector.shape_cast %1158 : vector<1x8x36xf32> to vector<8x36xf32>
    %c7_937 = arith.constant 7 : index
    %c18_938 = arith.constant 18 : index
    %1160 = memref.load %arg1[%c7_937, %c18_938] : memref<9x32xf32, #tpu.memory_space<smem>>
    %1161 = vector.broadcast %1160 : f32 to vector<8x36xf32>
    %1162 = arith.mulf %1159, %1161 : vector<8x36xf32>
    %1163 = arith.addf %1157, %1162 : vector<8x36xf32>
    %c8_939 = arith.constant 8 : index
    %c0_940 = arith.constant 0 : index
    %c0_941 = arith.constant 0 : index
    %1164 = vector.load %arg3[%c8_939, %c0_940, %c0_941] : memref<9x8x36xf32, #tpu.memory_space<vmem>>, vector<1x8x36xf32>
    %1165 = vector.shape_cast %1164 : vector<1x8x36xf32> to vector<8x36xf32>
    %c8_942 = arith.constant 8 : index
    %c18_943 = arith.constant 18 : index
    %1166 = memref.load %arg1[%c8_942, %c18_943] : memref<9x32xf32, #tpu.memory_space<smem>>
    %1167 = vector.broadcast %1166 : f32 to vector<8x36xf32>
    %1168 = arith.mulf %1165, %1167 : vector<8x36xf32>
    %1169 = arith.addf %1163, %1168 : vector<8x36xf32>
    %c18_944 = arith.constant 18 : index
    %1170 = memref.load %arg2[%c18_944] : memref<32xf32, #tpu.memory_space<smem>>
    %1171 = vector.broadcast %1170 : f32 to vector<8x36xf32>
    %1172 = arith.addf %1169, %1171 : vector<8x36xf32>
    %cst_945 = arith.constant 0.000000e+00 : f32
    %1173 = vector.broadcast %cst_945 : f32 to vector<8x36xf32>
    %1174 = arith.maximumf %1172, %1173 : vector<8x36xf32>
    %c18_946 = arith.constant 18 : index
    %c0_947 = arith.constant 0 : index
    %c0_948 = arith.constant 0 : index
    %1175 = vector.load %arg4[%c18_946, %c0_947, %c0_948] : memref<32x36x32xf32, #tpu.memory_space<vmem>>, vector<1x36x32xf32>
    %1176 = vector.shape_cast %1175 : vector<1x36x32xf32> to vector<36x32xf32>
    %cst_949 = arith.constant dense<0.000000e+00> : vector<8x32xf32>
    %1177 = tpu.matmul %1174, %1176, %cst_949 {dimension_numbers = #tpu.dot_dimension_numbers<[1], [0], [0], [1], [0, 0, 1, 1], [], []>} : vector<8x36xf32>, vector<36x32xf32>, vector<8x32xf32> -> vector<8x32xf32>
    %1178 = arith.addf %1116, %1177 : vector<8x32xf32>
    %c0_950 = arith.constant 0 : index
    %c0_951 = arith.constant 0 : index
    %c0_952 = arith.constant 0 : index
    %1179 = vector.load %arg3[%c0_950, %c0_951, %c0_952] : memref<9x8x36xf32, #tpu.memory_space<vmem>>, vector<1x8x36xf32>
    %1180 = vector.shape_cast %1179 : vector<1x8x36xf32> to vector<8x36xf32>
    %c0_953 = arith.constant 0 : index
    %c19 = arith.constant 19 : index
    %1181 = memref.load %arg1[%c0_953, %c19] : memref<9x32xf32, #tpu.memory_space<smem>>
    %1182 = vector.broadcast %1181 : f32 to vector<8x36xf32>
    %1183 = arith.mulf %1180, %1182 : vector<8x36xf32>
    %c1_954 = arith.constant 1 : index
    %c0_955 = arith.constant 0 : index
    %c0_956 = arith.constant 0 : index
    %1184 = vector.load %arg3[%c1_954, %c0_955, %c0_956] : memref<9x8x36xf32, #tpu.memory_space<vmem>>, vector<1x8x36xf32>
    %1185 = vector.shape_cast %1184 : vector<1x8x36xf32> to vector<8x36xf32>
    %c1_957 = arith.constant 1 : index
    %c19_958 = arith.constant 19 : index
    %1186 = memref.load %arg1[%c1_957, %c19_958] : memref<9x32xf32, #tpu.memory_space<smem>>
    %1187 = vector.broadcast %1186 : f32 to vector<8x36xf32>
    %1188 = arith.mulf %1185, %1187 : vector<8x36xf32>
    %1189 = arith.addf %1183, %1188 : vector<8x36xf32>
    %c2_959 = arith.constant 2 : index
    %c0_960 = arith.constant 0 : index
    %c0_961 = arith.constant 0 : index
    %1190 = vector.load %arg3[%c2_959, %c0_960, %c0_961] : memref<9x8x36xf32, #tpu.memory_space<vmem>>, vector<1x8x36xf32>
    %1191 = vector.shape_cast %1190 : vector<1x8x36xf32> to vector<8x36xf32>
    %c2_962 = arith.constant 2 : index
    %c19_963 = arith.constant 19 : index
    %1192 = memref.load %arg1[%c2_962, %c19_963] : memref<9x32xf32, #tpu.memory_space<smem>>
    %1193 = vector.broadcast %1192 : f32 to vector<8x36xf32>
    %1194 = arith.mulf %1191, %1193 : vector<8x36xf32>
    %1195 = arith.addf %1189, %1194 : vector<8x36xf32>
    %c3_964 = arith.constant 3 : index
    %c0_965 = arith.constant 0 : index
    %c0_966 = arith.constant 0 : index
    %1196 = vector.load %arg3[%c3_964, %c0_965, %c0_966] : memref<9x8x36xf32, #tpu.memory_space<vmem>>, vector<1x8x36xf32>
    %1197 = vector.shape_cast %1196 : vector<1x8x36xf32> to vector<8x36xf32>
    %c3_967 = arith.constant 3 : index
    %c19_968 = arith.constant 19 : index
    %1198 = memref.load %arg1[%c3_967, %c19_968] : memref<9x32xf32, #tpu.memory_space<smem>>
    %1199 = vector.broadcast %1198 : f32 to vector<8x36xf32>
    %1200 = arith.mulf %1197, %1199 : vector<8x36xf32>
    %1201 = arith.addf %1195, %1200 : vector<8x36xf32>
    %c4_969 = arith.constant 4 : index
    %c0_970 = arith.constant 0 : index
    %c0_971 = arith.constant 0 : index
    %1202 = vector.load %arg3[%c4_969, %c0_970, %c0_971] : memref<9x8x36xf32, #tpu.memory_space<vmem>>, vector<1x8x36xf32>
    %1203 = vector.shape_cast %1202 : vector<1x8x36xf32> to vector<8x36xf32>
    %c4_972 = arith.constant 4 : index
    %c19_973 = arith.constant 19 : index
    %1204 = memref.load %arg1[%c4_972, %c19_973] : memref<9x32xf32, #tpu.memory_space<smem>>
    %1205 = vector.broadcast %1204 : f32 to vector<8x36xf32>
    %1206 = arith.mulf %1203, %1205 : vector<8x36xf32>
    %1207 = arith.addf %1201, %1206 : vector<8x36xf32>
    %c5_974 = arith.constant 5 : index
    %c0_975 = arith.constant 0 : index
    %c0_976 = arith.constant 0 : index
    %1208 = vector.load %arg3[%c5_974, %c0_975, %c0_976] : memref<9x8x36xf32, #tpu.memory_space<vmem>>, vector<1x8x36xf32>
    %1209 = vector.shape_cast %1208 : vector<1x8x36xf32> to vector<8x36xf32>
    %c5_977 = arith.constant 5 : index
    %c19_978 = arith.constant 19 : index
    %1210 = memref.load %arg1[%c5_977, %c19_978] : memref<9x32xf32, #tpu.memory_space<smem>>
    %1211 = vector.broadcast %1210 : f32 to vector<8x36xf32>
    %1212 = arith.mulf %1209, %1211 : vector<8x36xf32>
    %1213 = arith.addf %1207, %1212 : vector<8x36xf32>
    %c6_979 = arith.constant 6 : index
    %c0_980 = arith.constant 0 : index
    %c0_981 = arith.constant 0 : index
    %1214 = vector.load %arg3[%c6_979, %c0_980, %c0_981] : memref<9x8x36xf32, #tpu.memory_space<vmem>>, vector<1x8x36xf32>
    %1215 = vector.shape_cast %1214 : vector<1x8x36xf32> to vector<8x36xf32>
    %c6_982 = arith.constant 6 : index
    %c19_983 = arith.constant 19 : index
    %1216 = memref.load %arg1[%c6_982, %c19_983] : memref<9x32xf32, #tpu.memory_space<smem>>
    %1217 = vector.broadcast %1216 : f32 to vector<8x36xf32>
    %1218 = arith.mulf %1215, %1217 : vector<8x36xf32>
    %1219 = arith.addf %1213, %1218 : vector<8x36xf32>
    %c7_984 = arith.constant 7 : index
    %c0_985 = arith.constant 0 : index
    %c0_986 = arith.constant 0 : index
    %1220 = vector.load %arg3[%c7_984, %c0_985, %c0_986] : memref<9x8x36xf32, #tpu.memory_space<vmem>>, vector<1x8x36xf32>
    %1221 = vector.shape_cast %1220 : vector<1x8x36xf32> to vector<8x36xf32>
    %c7_987 = arith.constant 7 : index
    %c19_988 = arith.constant 19 : index
    %1222 = memref.load %arg1[%c7_987, %c19_988] : memref<9x32xf32, #tpu.memory_space<smem>>
    %1223 = vector.broadcast %1222 : f32 to vector<8x36xf32>
    %1224 = arith.mulf %1221, %1223 : vector<8x36xf32>
    %1225 = arith.addf %1219, %1224 : vector<8x36xf32>
    %c8_989 = arith.constant 8 : index
    %c0_990 = arith.constant 0 : index
    %c0_991 = arith.constant 0 : index
    %1226 = vector.load %arg3[%c8_989, %c0_990, %c0_991] : memref<9x8x36xf32, #tpu.memory_space<vmem>>, vector<1x8x36xf32>
    %1227 = vector.shape_cast %1226 : vector<1x8x36xf32> to vector<8x36xf32>
    %c8_992 = arith.constant 8 : index
    %c19_993 = arith.constant 19 : index
    %1228 = memref.load %arg1[%c8_992, %c19_993] : memref<9x32xf32, #tpu.memory_space<smem>>
    %1229 = vector.broadcast %1228 : f32 to vector<8x36xf32>
    %1230 = arith.mulf %1227, %1229 : vector<8x36xf32>
    %1231 = arith.addf %1225, %1230 : vector<8x36xf32>
    %c19_994 = arith.constant 19 : index
    %1232 = memref.load %arg2[%c19_994] : memref<32xf32, #tpu.memory_space<smem>>
    %1233 = vector.broadcast %1232 : f32 to vector<8x36xf32>
    %1234 = arith.addf %1231, %1233 : vector<8x36xf32>
    %cst_995 = arith.constant 0.000000e+00 : f32
    %1235 = vector.broadcast %cst_995 : f32 to vector<8x36xf32>
    %1236 = arith.maximumf %1234, %1235 : vector<8x36xf32>
    %c19_996 = arith.constant 19 : index
    %c0_997 = arith.constant 0 : index
    %c0_998 = arith.constant 0 : index
    %1237 = vector.load %arg4[%c19_996, %c0_997, %c0_998] : memref<32x36x32xf32, #tpu.memory_space<vmem>>, vector<1x36x32xf32>
    %1238 = vector.shape_cast %1237 : vector<1x36x32xf32> to vector<36x32xf32>
    %cst_999 = arith.constant dense<0.000000e+00> : vector<8x32xf32>
    %1239 = tpu.matmul %1236, %1238, %cst_999 {dimension_numbers = #tpu.dot_dimension_numbers<[1], [0], [0], [1], [0, 0, 1, 1], [], []>} : vector<8x36xf32>, vector<36x32xf32>, vector<8x32xf32> -> vector<8x32xf32>
    %1240 = arith.addf %1178, %1239 : vector<8x32xf32>
    %c0_1000 = arith.constant 0 : index
    %c0_1001 = arith.constant 0 : index
    %c0_1002 = arith.constant 0 : index
    %1241 = vector.load %arg3[%c0_1000, %c0_1001, %c0_1002] : memref<9x8x36xf32, #tpu.memory_space<vmem>>, vector<1x8x36xf32>
    %1242 = vector.shape_cast %1241 : vector<1x8x36xf32> to vector<8x36xf32>
    %c0_1003 = arith.constant 0 : index
    %c20 = arith.constant 20 : index
    %1243 = memref.load %arg1[%c0_1003, %c20] : memref<9x32xf32, #tpu.memory_space<smem>>
    %1244 = vector.broadcast %1243 : f32 to vector<8x36xf32>
    %1245 = arith.mulf %1242, %1244 : vector<8x36xf32>
    %c1_1004 = arith.constant 1 : index
    %c0_1005 = arith.constant 0 : index
    %c0_1006 = arith.constant 0 : index
    %1246 = vector.load %arg3[%c1_1004, %c0_1005, %c0_1006] : memref<9x8x36xf32, #tpu.memory_space<vmem>>, vector<1x8x36xf32>
    %1247 = vector.shape_cast %1246 : vector<1x8x36xf32> to vector<8x36xf32>
    %c1_1007 = arith.constant 1 : index
    %c20_1008 = arith.constant 20 : index
    %1248 = memref.load %arg1[%c1_1007, %c20_1008] : memref<9x32xf32, #tpu.memory_space<smem>>
    %1249 = vector.broadcast %1248 : f32 to vector<8x36xf32>
    %1250 = arith.mulf %1247, %1249 : vector<8x36xf32>
    %1251 = arith.addf %1245, %1250 : vector<8x36xf32>
    %c2_1009 = arith.constant 2 : index
    %c0_1010 = arith.constant 0 : index
    %c0_1011 = arith.constant 0 : index
    %1252 = vector.load %arg3[%c2_1009, %c0_1010, %c0_1011] : memref<9x8x36xf32, #tpu.memory_space<vmem>>, vector<1x8x36xf32>
    %1253 = vector.shape_cast %1252 : vector<1x8x36xf32> to vector<8x36xf32>
    %c2_1012 = arith.constant 2 : index
    %c20_1013 = arith.constant 20 : index
    %1254 = memref.load %arg1[%c2_1012, %c20_1013] : memref<9x32xf32, #tpu.memory_space<smem>>
    %1255 = vector.broadcast %1254 : f32 to vector<8x36xf32>
    %1256 = arith.mulf %1253, %1255 : vector<8x36xf32>
    %1257 = arith.addf %1251, %1256 : vector<8x36xf32>
    %c3_1014 = arith.constant 3 : index
    %c0_1015 = arith.constant 0 : index
    %c0_1016 = arith.constant 0 : index
    %1258 = vector.load %arg3[%c3_1014, %c0_1015, %c0_1016] : memref<9x8x36xf32, #tpu.memory_space<vmem>>, vector<1x8x36xf32>
    %1259 = vector.shape_cast %1258 : vector<1x8x36xf32> to vector<8x36xf32>
    %c3_1017 = arith.constant 3 : index
    %c20_1018 = arith.constant 20 : index
    %1260 = memref.load %arg1[%c3_1017, %c20_1018] : memref<9x32xf32, #tpu.memory_space<smem>>
    %1261 = vector.broadcast %1260 : f32 to vector<8x36xf32>
    %1262 = arith.mulf %1259, %1261 : vector<8x36xf32>
    %1263 = arith.addf %1257, %1262 : vector<8x36xf32>
    %c4_1019 = arith.constant 4 : index
    %c0_1020 = arith.constant 0 : index
    %c0_1021 = arith.constant 0 : index
    %1264 = vector.load %arg3[%c4_1019, %c0_1020, %c0_1021] : memref<9x8x36xf32, #tpu.memory_space<vmem>>, vector<1x8x36xf32>
    %1265 = vector.shape_cast %1264 : vector<1x8x36xf32> to vector<8x36xf32>
    %c4_1022 = arith.constant 4 : index
    %c20_1023 = arith.constant 20 : index
    %1266 = memref.load %arg1[%c4_1022, %c20_1023] : memref<9x32xf32, #tpu.memory_space<smem>>
    %1267 = vector.broadcast %1266 : f32 to vector<8x36xf32>
    %1268 = arith.mulf %1265, %1267 : vector<8x36xf32>
    %1269 = arith.addf %1263, %1268 : vector<8x36xf32>
    %c5_1024 = arith.constant 5 : index
    %c0_1025 = arith.constant 0 : index
    %c0_1026 = arith.constant 0 : index
    %1270 = vector.load %arg3[%c5_1024, %c0_1025, %c0_1026] : memref<9x8x36xf32, #tpu.memory_space<vmem>>, vector<1x8x36xf32>
    %1271 = vector.shape_cast %1270 : vector<1x8x36xf32> to vector<8x36xf32>
    %c5_1027 = arith.constant 5 : index
    %c20_1028 = arith.constant 20 : index
    %1272 = memref.load %arg1[%c5_1027, %c20_1028] : memref<9x32xf32, #tpu.memory_space<smem>>
    %1273 = vector.broadcast %1272 : f32 to vector<8x36xf32>
    %1274 = arith.mulf %1271, %1273 : vector<8x36xf32>
    %1275 = arith.addf %1269, %1274 : vector<8x36xf32>
    %c6_1029 = arith.constant 6 : index
    %c0_1030 = arith.constant 0 : index
    %c0_1031 = arith.constant 0 : index
    %1276 = vector.load %arg3[%c6_1029, %c0_1030, %c0_1031] : memref<9x8x36xf32, #tpu.memory_space<vmem>>, vector<1x8x36xf32>
    %1277 = vector.shape_cast %1276 : vector<1x8x36xf32> to vector<8x36xf32>
    %c6_1032 = arith.constant 6 : index
    %c20_1033 = arith.constant 20 : index
    %1278 = memref.load %arg1[%c6_1032, %c20_1033] : memref<9x32xf32, #tpu.memory_space<smem>>
    %1279 = vector.broadcast %1278 : f32 to vector<8x36xf32>
    %1280 = arith.mulf %1277, %1279 : vector<8x36xf32>
    %1281 = arith.addf %1275, %1280 : vector<8x36xf32>
    %c7_1034 = arith.constant 7 : index
    %c0_1035 = arith.constant 0 : index
    %c0_1036 = arith.constant 0 : index
    %1282 = vector.load %arg3[%c7_1034, %c0_1035, %c0_1036] : memref<9x8x36xf32, #tpu.memory_space<vmem>>, vector<1x8x36xf32>
    %1283 = vector.shape_cast %1282 : vector<1x8x36xf32> to vector<8x36xf32>
    %c7_1037 = arith.constant 7 : index
    %c20_1038 = arith.constant 20 : index
    %1284 = memref.load %arg1[%c7_1037, %c20_1038] : memref<9x32xf32, #tpu.memory_space<smem>>
    %1285 = vector.broadcast %1284 : f32 to vector<8x36xf32>
    %1286 = arith.mulf %1283, %1285 : vector<8x36xf32>
    %1287 = arith.addf %1281, %1286 : vector<8x36xf32>
    %c8_1039 = arith.constant 8 : index
    %c0_1040 = arith.constant 0 : index
    %c0_1041 = arith.constant 0 : index
    %1288 = vector.load %arg3[%c8_1039, %c0_1040, %c0_1041] : memref<9x8x36xf32, #tpu.memory_space<vmem>>, vector<1x8x36xf32>
    %1289 = vector.shape_cast %1288 : vector<1x8x36xf32> to vector<8x36xf32>
    %c8_1042 = arith.constant 8 : index
    %c20_1043 = arith.constant 20 : index
    %1290 = memref.load %arg1[%c8_1042, %c20_1043] : memref<9x32xf32, #tpu.memory_space<smem>>
    %1291 = vector.broadcast %1290 : f32 to vector<8x36xf32>
    %1292 = arith.mulf %1289, %1291 : vector<8x36xf32>
    %1293 = arith.addf %1287, %1292 : vector<8x36xf32>
    %c20_1044 = arith.constant 20 : index
    %1294 = memref.load %arg2[%c20_1044] : memref<32xf32, #tpu.memory_space<smem>>
    %1295 = vector.broadcast %1294 : f32 to vector<8x36xf32>
    %1296 = arith.addf %1293, %1295 : vector<8x36xf32>
    %cst_1045 = arith.constant 0.000000e+00 : f32
    %1297 = vector.broadcast %cst_1045 : f32 to vector<8x36xf32>
    %1298 = arith.maximumf %1296, %1297 : vector<8x36xf32>
    %c20_1046 = arith.constant 20 : index
    %c0_1047 = arith.constant 0 : index
    %c0_1048 = arith.constant 0 : index
    %1299 = vector.load %arg4[%c20_1046, %c0_1047, %c0_1048] : memref<32x36x32xf32, #tpu.memory_space<vmem>>, vector<1x36x32xf32>
    %1300 = vector.shape_cast %1299 : vector<1x36x32xf32> to vector<36x32xf32>
    %cst_1049 = arith.constant dense<0.000000e+00> : vector<8x32xf32>
    %1301 = tpu.matmul %1298, %1300, %cst_1049 {dimension_numbers = #tpu.dot_dimension_numbers<[1], [0], [0], [1], [0, 0, 1, 1], [], []>} : vector<8x36xf32>, vector<36x32xf32>, vector<8x32xf32> -> vector<8x32xf32>
    %1302 = arith.addf %1240, %1301 : vector<8x32xf32>
    %c0_1050 = arith.constant 0 : index
    %c0_1051 = arith.constant 0 : index
    %c0_1052 = arith.constant 0 : index
    %1303 = vector.load %arg3[%c0_1050, %c0_1051, %c0_1052] : memref<9x8x36xf32, #tpu.memory_space<vmem>>, vector<1x8x36xf32>
    %1304 = vector.shape_cast %1303 : vector<1x8x36xf32> to vector<8x36xf32>
    %c0_1053 = arith.constant 0 : index
    %c21 = arith.constant 21 : index
    %1305 = memref.load %arg1[%c0_1053, %c21] : memref<9x32xf32, #tpu.memory_space<smem>>
    %1306 = vector.broadcast %1305 : f32 to vector<8x36xf32>
    %1307 = arith.mulf %1304, %1306 : vector<8x36xf32>
    %c1_1054 = arith.constant 1 : index
    %c0_1055 = arith.constant 0 : index
    %c0_1056 = arith.constant 0 : index
    %1308 = vector.load %arg3[%c1_1054, %c0_1055, %c0_1056] : memref<9x8x36xf32, #tpu.memory_space<vmem>>, vector<1x8x36xf32>
    %1309 = vector.shape_cast %1308 : vector<1x8x36xf32> to vector<8x36xf32>
    %c1_1057 = arith.constant 1 : index
    %c21_1058 = arith.constant 21 : index
    %1310 = memref.load %arg1[%c1_1057, %c21_1058] : memref<9x32xf32, #tpu.memory_space<smem>>
    %1311 = vector.broadcast %1310 : f32 to vector<8x36xf32>
    %1312 = arith.mulf %1309, %1311 : vector<8x36xf32>
    %1313 = arith.addf %1307, %1312 : vector<8x36xf32>
    %c2_1059 = arith.constant 2 : index
    %c0_1060 = arith.constant 0 : index
    %c0_1061 = arith.constant 0 : index
    %1314 = vector.load %arg3[%c2_1059, %c0_1060, %c0_1061] : memref<9x8x36xf32, #tpu.memory_space<vmem>>, vector<1x8x36xf32>
    %1315 = vector.shape_cast %1314 : vector<1x8x36xf32> to vector<8x36xf32>
    %c2_1062 = arith.constant 2 : index
    %c21_1063 = arith.constant 21 : index
    %1316 = memref.load %arg1[%c2_1062, %c21_1063] : memref<9x32xf32, #tpu.memory_space<smem>>
    %1317 = vector.broadcast %1316 : f32 to vector<8x36xf32>
    %1318 = arith.mulf %1315, %1317 : vector<8x36xf32>
    %1319 = arith.addf %1313, %1318 : vector<8x36xf32>
    %c3_1064 = arith.constant 3 : index
    %c0_1065 = arith.constant 0 : index
    %c0_1066 = arith.constant 0 : index
    %1320 = vector.load %arg3[%c3_1064, %c0_1065, %c0_1066] : memref<9x8x36xf32, #tpu.memory_space<vmem>>, vector<1x8x36xf32>
    %1321 = vector.shape_cast %1320 : vector<1x8x36xf32> to vector<8x36xf32>
    %c3_1067 = arith.constant 3 : index
    %c21_1068 = arith.constant 21 : index
    %1322 = memref.load %arg1[%c3_1067, %c21_1068] : memref<9x32xf32, #tpu.memory_space<smem>>
    %1323 = vector.broadcast %1322 : f32 to vector<8x36xf32>
    %1324 = arith.mulf %1321, %1323 : vector<8x36xf32>
    %1325 = arith.addf %1319, %1324 : vector<8x36xf32>
    %c4_1069 = arith.constant 4 : index
    %c0_1070 = arith.constant 0 : index
    %c0_1071 = arith.constant 0 : index
    %1326 = vector.load %arg3[%c4_1069, %c0_1070, %c0_1071] : memref<9x8x36xf32, #tpu.memory_space<vmem>>, vector<1x8x36xf32>
    %1327 = vector.shape_cast %1326 : vector<1x8x36xf32> to vector<8x36xf32>
    %c4_1072 = arith.constant 4 : index
    %c21_1073 = arith.constant 21 : index
    %1328 = memref.load %arg1[%c4_1072, %c21_1073] : memref<9x32xf32, #tpu.memory_space<smem>>
    %1329 = vector.broadcast %1328 : f32 to vector<8x36xf32>
    %1330 = arith.mulf %1327, %1329 : vector<8x36xf32>
    %1331 = arith.addf %1325, %1330 : vector<8x36xf32>
    %c5_1074 = arith.constant 5 : index
    %c0_1075 = arith.constant 0 : index
    %c0_1076 = arith.constant 0 : index
    %1332 = vector.load %arg3[%c5_1074, %c0_1075, %c0_1076] : memref<9x8x36xf32, #tpu.memory_space<vmem>>, vector<1x8x36xf32>
    %1333 = vector.shape_cast %1332 : vector<1x8x36xf32> to vector<8x36xf32>
    %c5_1077 = arith.constant 5 : index
    %c21_1078 = arith.constant 21 : index
    %1334 = memref.load %arg1[%c5_1077, %c21_1078] : memref<9x32xf32, #tpu.memory_space<smem>>
    %1335 = vector.broadcast %1334 : f32 to vector<8x36xf32>
    %1336 = arith.mulf %1333, %1335 : vector<8x36xf32>
    %1337 = arith.addf %1331, %1336 : vector<8x36xf32>
    %c6_1079 = arith.constant 6 : index
    %c0_1080 = arith.constant 0 : index
    %c0_1081 = arith.constant 0 : index
    %1338 = vector.load %arg3[%c6_1079, %c0_1080, %c0_1081] : memref<9x8x36xf32, #tpu.memory_space<vmem>>, vector<1x8x36xf32>
    %1339 = vector.shape_cast %1338 : vector<1x8x36xf32> to vector<8x36xf32>
    %c6_1082 = arith.constant 6 : index
    %c21_1083 = arith.constant 21 : index
    %1340 = memref.load %arg1[%c6_1082, %c21_1083] : memref<9x32xf32, #tpu.memory_space<smem>>
    %1341 = vector.broadcast %1340 : f32 to vector<8x36xf32>
    %1342 = arith.mulf %1339, %1341 : vector<8x36xf32>
    %1343 = arith.addf %1337, %1342 : vector<8x36xf32>
    %c7_1084 = arith.constant 7 : index
    %c0_1085 = arith.constant 0 : index
    %c0_1086 = arith.constant 0 : index
    %1344 = vector.load %arg3[%c7_1084, %c0_1085, %c0_1086] : memref<9x8x36xf32, #tpu.memory_space<vmem>>, vector<1x8x36xf32>
    %1345 = vector.shape_cast %1344 : vector<1x8x36xf32> to vector<8x36xf32>
    %c7_1087 = arith.constant 7 : index
    %c21_1088 = arith.constant 21 : index
    %1346 = memref.load %arg1[%c7_1087, %c21_1088] : memref<9x32xf32, #tpu.memory_space<smem>>
    %1347 = vector.broadcast %1346 : f32 to vector<8x36xf32>
    %1348 = arith.mulf %1345, %1347 : vector<8x36xf32>
    %1349 = arith.addf %1343, %1348 : vector<8x36xf32>
    %c8_1089 = arith.constant 8 : index
    %c0_1090 = arith.constant 0 : index
    %c0_1091 = arith.constant 0 : index
    %1350 = vector.load %arg3[%c8_1089, %c0_1090, %c0_1091] : memref<9x8x36xf32, #tpu.memory_space<vmem>>, vector<1x8x36xf32>
    %1351 = vector.shape_cast %1350 : vector<1x8x36xf32> to vector<8x36xf32>
    %c8_1092 = arith.constant 8 : index
    %c21_1093 = arith.constant 21 : index
    %1352 = memref.load %arg1[%c8_1092, %c21_1093] : memref<9x32xf32, #tpu.memory_space<smem>>
    %1353 = vector.broadcast %1352 : f32 to vector<8x36xf32>
    %1354 = arith.mulf %1351, %1353 : vector<8x36xf32>
    %1355 = arith.addf %1349, %1354 : vector<8x36xf32>
    %c21_1094 = arith.constant 21 : index
    %1356 = memref.load %arg2[%c21_1094] : memref<32xf32, #tpu.memory_space<smem>>
    %1357 = vector.broadcast %1356 : f32 to vector<8x36xf32>
    %1358 = arith.addf %1355, %1357 : vector<8x36xf32>
    %cst_1095 = arith.constant 0.000000e+00 : f32
    %1359 = vector.broadcast %cst_1095 : f32 to vector<8x36xf32>
    %1360 = arith.maximumf %1358, %1359 : vector<8x36xf32>
    %c21_1096 = arith.constant 21 : index
    %c0_1097 = arith.constant 0 : index
    %c0_1098 = arith.constant 0 : index
    %1361 = vector.load %arg4[%c21_1096, %c0_1097, %c0_1098] : memref<32x36x32xf32, #tpu.memory_space<vmem>>, vector<1x36x32xf32>
    %1362 = vector.shape_cast %1361 : vector<1x36x32xf32> to vector<36x32xf32>
    %cst_1099 = arith.constant dense<0.000000e+00> : vector<8x32xf32>
    %1363 = tpu.matmul %1360, %1362, %cst_1099 {dimension_numbers = #tpu.dot_dimension_numbers<[1], [0], [0], [1], [0, 0, 1, 1], [], []>} : vector<8x36xf32>, vector<36x32xf32>, vector<8x32xf32> -> vector<8x32xf32>
    %1364 = arith.addf %1302, %1363 : vector<8x32xf32>
    %c0_1100 = arith.constant 0 : index
    %c0_1101 = arith.constant 0 : index
    %c0_1102 = arith.constant 0 : index
    %1365 = vector.load %arg3[%c0_1100, %c0_1101, %c0_1102] : memref<9x8x36xf32, #tpu.memory_space<vmem>>, vector<1x8x36xf32>
    %1366 = vector.shape_cast %1365 : vector<1x8x36xf32> to vector<8x36xf32>
    %c0_1103 = arith.constant 0 : index
    %c22 = arith.constant 22 : index
    %1367 = memref.load %arg1[%c0_1103, %c22] : memref<9x32xf32, #tpu.memory_space<smem>>
    %1368 = vector.broadcast %1367 : f32 to vector<8x36xf32>
    %1369 = arith.mulf %1366, %1368 : vector<8x36xf32>
    %c1_1104 = arith.constant 1 : index
    %c0_1105 = arith.constant 0 : index
    %c0_1106 = arith.constant 0 : index
    %1370 = vector.load %arg3[%c1_1104, %c0_1105, %c0_1106] : memref<9x8x36xf32, #tpu.memory_space<vmem>>, vector<1x8x36xf32>
    %1371 = vector.shape_cast %1370 : vector<1x8x36xf32> to vector<8x36xf32>
    %c1_1107 = arith.constant 1 : index
    %c22_1108 = arith.constant 22 : index
    %1372 = memref.load %arg1[%c1_1107, %c22_1108] : memref<9x32xf32, #tpu.memory_space<smem>>
    %1373 = vector.broadcast %1372 : f32 to vector<8x36xf32>
    %1374 = arith.mulf %1371, %1373 : vector<8x36xf32>
    %1375 = arith.addf %1369, %1374 : vector<8x36xf32>
    %c2_1109 = arith.constant 2 : index
    %c0_1110 = arith.constant 0 : index
    %c0_1111 = arith.constant 0 : index
    %1376 = vector.load %arg3[%c2_1109, %c0_1110, %c0_1111] : memref<9x8x36xf32, #tpu.memory_space<vmem>>, vector<1x8x36xf32>
    %1377 = vector.shape_cast %1376 : vector<1x8x36xf32> to vector<8x36xf32>
    %c2_1112 = arith.constant 2 : index
    %c22_1113 = arith.constant 22 : index
    %1378 = memref.load %arg1[%c2_1112, %c22_1113] : memref<9x32xf32, #tpu.memory_space<smem>>
    %1379 = vector.broadcast %1378 : f32 to vector<8x36xf32>
    %1380 = arith.mulf %1377, %1379 : vector<8x36xf32>
    %1381 = arith.addf %1375, %1380 : vector<8x36xf32>
    %c3_1114 = arith.constant 3 : index
    %c0_1115 = arith.constant 0 : index
    %c0_1116 = arith.constant 0 : index
    %1382 = vector.load %arg3[%c3_1114, %c0_1115, %c0_1116] : memref<9x8x36xf32, #tpu.memory_space<vmem>>, vector<1x8x36xf32>
    %1383 = vector.shape_cast %1382 : vector<1x8x36xf32> to vector<8x36xf32>
    %c3_1117 = arith.constant 3 : index
    %c22_1118 = arith.constant 22 : index
    %1384 = memref.load %arg1[%c3_1117, %c22_1118] : memref<9x32xf32, #tpu.memory_space<smem>>
    %1385 = vector.broadcast %1384 : f32 to vector<8x36xf32>
    %1386 = arith.mulf %1383, %1385 : vector<8x36xf32>
    %1387 = arith.addf %1381, %1386 : vector<8x36xf32>
    %c4_1119 = arith.constant 4 : index
    %c0_1120 = arith.constant 0 : index
    %c0_1121 = arith.constant 0 : index
    %1388 = vector.load %arg3[%c4_1119, %c0_1120, %c0_1121] : memref<9x8x36xf32, #tpu.memory_space<vmem>>, vector<1x8x36xf32>
    %1389 = vector.shape_cast %1388 : vector<1x8x36xf32> to vector<8x36xf32>
    %c4_1122 = arith.constant 4 : index
    %c22_1123 = arith.constant 22 : index
    %1390 = memref.load %arg1[%c4_1122, %c22_1123] : memref<9x32xf32, #tpu.memory_space<smem>>
    %1391 = vector.broadcast %1390 : f32 to vector<8x36xf32>
    %1392 = arith.mulf %1389, %1391 : vector<8x36xf32>
    %1393 = arith.addf %1387, %1392 : vector<8x36xf32>
    %c5_1124 = arith.constant 5 : index
    %c0_1125 = arith.constant 0 : index
    %c0_1126 = arith.constant 0 : index
    %1394 = vector.load %arg3[%c5_1124, %c0_1125, %c0_1126] : memref<9x8x36xf32, #tpu.memory_space<vmem>>, vector<1x8x36xf32>
    %1395 = vector.shape_cast %1394 : vector<1x8x36xf32> to vector<8x36xf32>
    %c5_1127 = arith.constant 5 : index
    %c22_1128 = arith.constant 22 : index
    %1396 = memref.load %arg1[%c5_1127, %c22_1128] : memref<9x32xf32, #tpu.memory_space<smem>>
    %1397 = vector.broadcast %1396 : f32 to vector<8x36xf32>
    %1398 = arith.mulf %1395, %1397 : vector<8x36xf32>
    %1399 = arith.addf %1393, %1398 : vector<8x36xf32>
    %c6_1129 = arith.constant 6 : index
    %c0_1130 = arith.constant 0 : index
    %c0_1131 = arith.constant 0 : index
    %1400 = vector.load %arg3[%c6_1129, %c0_1130, %c0_1131] : memref<9x8x36xf32, #tpu.memory_space<vmem>>, vector<1x8x36xf32>
    %1401 = vector.shape_cast %1400 : vector<1x8x36xf32> to vector<8x36xf32>
    %c6_1132 = arith.constant 6 : index
    %c22_1133 = arith.constant 22 : index
    %1402 = memref.load %arg1[%c6_1132, %c22_1133] : memref<9x32xf32, #tpu.memory_space<smem>>
    %1403 = vector.broadcast %1402 : f32 to vector<8x36xf32>
    %1404 = arith.mulf %1401, %1403 : vector<8x36xf32>
    %1405 = arith.addf %1399, %1404 : vector<8x36xf32>
    %c7_1134 = arith.constant 7 : index
    %c0_1135 = arith.constant 0 : index
    %c0_1136 = arith.constant 0 : index
    %1406 = vector.load %arg3[%c7_1134, %c0_1135, %c0_1136] : memref<9x8x36xf32, #tpu.memory_space<vmem>>, vector<1x8x36xf32>
    %1407 = vector.shape_cast %1406 : vector<1x8x36xf32> to vector<8x36xf32>
    %c7_1137 = arith.constant 7 : index
    %c22_1138 = arith.constant 22 : index
    %1408 = memref.load %arg1[%c7_1137, %c22_1138] : memref<9x32xf32, #tpu.memory_space<smem>>
    %1409 = vector.broadcast %1408 : f32 to vector<8x36xf32>
    %1410 = arith.mulf %1407, %1409 : vector<8x36xf32>
    %1411 = arith.addf %1405, %1410 : vector<8x36xf32>
    %c8_1139 = arith.constant 8 : index
    %c0_1140 = arith.constant 0 : index
    %c0_1141 = arith.constant 0 : index
    %1412 = vector.load %arg3[%c8_1139, %c0_1140, %c0_1141] : memref<9x8x36xf32, #tpu.memory_space<vmem>>, vector<1x8x36xf32>
    %1413 = vector.shape_cast %1412 : vector<1x8x36xf32> to vector<8x36xf32>
    %c8_1142 = arith.constant 8 : index
    %c22_1143 = arith.constant 22 : index
    %1414 = memref.load %arg1[%c8_1142, %c22_1143] : memref<9x32xf32, #tpu.memory_space<smem>>
    %1415 = vector.broadcast %1414 : f32 to vector<8x36xf32>
    %1416 = arith.mulf %1413, %1415 : vector<8x36xf32>
    %1417 = arith.addf %1411, %1416 : vector<8x36xf32>
    %c22_1144 = arith.constant 22 : index
    %1418 = memref.load %arg2[%c22_1144] : memref<32xf32, #tpu.memory_space<smem>>
    %1419 = vector.broadcast %1418 : f32 to vector<8x36xf32>
    %1420 = arith.addf %1417, %1419 : vector<8x36xf32>
    %cst_1145 = arith.constant 0.000000e+00 : f32
    %1421 = vector.broadcast %cst_1145 : f32 to vector<8x36xf32>
    %1422 = arith.maximumf %1420, %1421 : vector<8x36xf32>
    %c22_1146 = arith.constant 22 : index
    %c0_1147 = arith.constant 0 : index
    %c0_1148 = arith.constant 0 : index
    %1423 = vector.load %arg4[%c22_1146, %c0_1147, %c0_1148] : memref<32x36x32xf32, #tpu.memory_space<vmem>>, vector<1x36x32xf32>
    %1424 = vector.shape_cast %1423 : vector<1x36x32xf32> to vector<36x32xf32>
    %cst_1149 = arith.constant dense<0.000000e+00> : vector<8x32xf32>
    %1425 = tpu.matmul %1422, %1424, %cst_1149 {dimension_numbers = #tpu.dot_dimension_numbers<[1], [0], [0], [1], [0, 0, 1, 1], [], []>} : vector<8x36xf32>, vector<36x32xf32>, vector<8x32xf32> -> vector<8x32xf32>
    %1426 = arith.addf %1364, %1425 : vector<8x32xf32>
    %c0_1150 = arith.constant 0 : index
    %c0_1151 = arith.constant 0 : index
    %c0_1152 = arith.constant 0 : index
    %1427 = vector.load %arg3[%c0_1150, %c0_1151, %c0_1152] : memref<9x8x36xf32, #tpu.memory_space<vmem>>, vector<1x8x36xf32>
    %1428 = vector.shape_cast %1427 : vector<1x8x36xf32> to vector<8x36xf32>
    %c0_1153 = arith.constant 0 : index
    %c23 = arith.constant 23 : index
    %1429 = memref.load %arg1[%c0_1153, %c23] : memref<9x32xf32, #tpu.memory_space<smem>>
    %1430 = vector.broadcast %1429 : f32 to vector<8x36xf32>
    %1431 = arith.mulf %1428, %1430 : vector<8x36xf32>
    %c1_1154 = arith.constant 1 : index
    %c0_1155 = arith.constant 0 : index
    %c0_1156 = arith.constant 0 : index
    %1432 = vector.load %arg3[%c1_1154, %c0_1155, %c0_1156] : memref<9x8x36xf32, #tpu.memory_space<vmem>>, vector<1x8x36xf32>
    %1433 = vector.shape_cast %1432 : vector<1x8x36xf32> to vector<8x36xf32>
    %c1_1157 = arith.constant 1 : index
    %c23_1158 = arith.constant 23 : index
    %1434 = memref.load %arg1[%c1_1157, %c23_1158] : memref<9x32xf32, #tpu.memory_space<smem>>
    %1435 = vector.broadcast %1434 : f32 to vector<8x36xf32>
    %1436 = arith.mulf %1433, %1435 : vector<8x36xf32>
    %1437 = arith.addf %1431, %1436 : vector<8x36xf32>
    %c2_1159 = arith.constant 2 : index
    %c0_1160 = arith.constant 0 : index
    %c0_1161 = arith.constant 0 : index
    %1438 = vector.load %arg3[%c2_1159, %c0_1160, %c0_1161] : memref<9x8x36xf32, #tpu.memory_space<vmem>>, vector<1x8x36xf32>
    %1439 = vector.shape_cast %1438 : vector<1x8x36xf32> to vector<8x36xf32>
    %c2_1162 = arith.constant 2 : index
    %c23_1163 = arith.constant 23 : index
    %1440 = memref.load %arg1[%c2_1162, %c23_1163] : memref<9x32xf32, #tpu.memory_space<smem>>
    %1441 = vector.broadcast %1440 : f32 to vector<8x36xf32>
    %1442 = arith.mulf %1439, %1441 : vector<8x36xf32>
    %1443 = arith.addf %1437, %1442 : vector<8x36xf32>
    %c3_1164 = arith.constant 3 : index
    %c0_1165 = arith.constant 0 : index
    %c0_1166 = arith.constant 0 : index
    %1444 = vector.load %arg3[%c3_1164, %c0_1165, %c0_1166] : memref<9x8x36xf32, #tpu.memory_space<vmem>>, vector<1x8x36xf32>
    %1445 = vector.shape_cast %1444 : vector<1x8x36xf32> to vector<8x36xf32>
    %c3_1167 = arith.constant 3 : index
    %c23_1168 = arith.constant 23 : index
    %1446 = memref.load %arg1[%c3_1167, %c23_1168] : memref<9x32xf32, #tpu.memory_space<smem>>
    %1447 = vector.broadcast %1446 : f32 to vector<8x36xf32>
    %1448 = arith.mulf %1445, %1447 : vector<8x36xf32>
    %1449 = arith.addf %1443, %1448 : vector<8x36xf32>
    %c4_1169 = arith.constant 4 : index
    %c0_1170 = arith.constant 0 : index
    %c0_1171 = arith.constant 0 : index
    %1450 = vector.load %arg3[%c4_1169, %c0_1170, %c0_1171] : memref<9x8x36xf32, #tpu.memory_space<vmem>>, vector<1x8x36xf32>
    %1451 = vector.shape_cast %1450 : vector<1x8x36xf32> to vector<8x36xf32>
    %c4_1172 = arith.constant 4 : index
    %c23_1173 = arith.constant 23 : index
    %1452 = memref.load %arg1[%c4_1172, %c23_1173] : memref<9x32xf32, #tpu.memory_space<smem>>
    %1453 = vector.broadcast %1452 : f32 to vector<8x36xf32>
    %1454 = arith.mulf %1451, %1453 : vector<8x36xf32>
    %1455 = arith.addf %1449, %1454 : vector<8x36xf32>
    %c5_1174 = arith.constant 5 : index
    %c0_1175 = arith.constant 0 : index
    %c0_1176 = arith.constant 0 : index
    %1456 = vector.load %arg3[%c5_1174, %c0_1175, %c0_1176] : memref<9x8x36xf32, #tpu.memory_space<vmem>>, vector<1x8x36xf32>
    %1457 = vector.shape_cast %1456 : vector<1x8x36xf32> to vector<8x36xf32>
    %c5_1177 = arith.constant 5 : index
    %c23_1178 = arith.constant 23 : index
    %1458 = memref.load %arg1[%c5_1177, %c23_1178] : memref<9x32xf32, #tpu.memory_space<smem>>
    %1459 = vector.broadcast %1458 : f32 to vector<8x36xf32>
    %1460 = arith.mulf %1457, %1459 : vector<8x36xf32>
    %1461 = arith.addf %1455, %1460 : vector<8x36xf32>
    %c6_1179 = arith.constant 6 : index
    %c0_1180 = arith.constant 0 : index
    %c0_1181 = arith.constant 0 : index
    %1462 = vector.load %arg3[%c6_1179, %c0_1180, %c0_1181] : memref<9x8x36xf32, #tpu.memory_space<vmem>>, vector<1x8x36xf32>
    %1463 = vector.shape_cast %1462 : vector<1x8x36xf32> to vector<8x36xf32>
    %c6_1182 = arith.constant 6 : index
    %c23_1183 = arith.constant 23 : index
    %1464 = memref.load %arg1[%c6_1182, %c23_1183] : memref<9x32xf32, #tpu.memory_space<smem>>
    %1465 = vector.broadcast %1464 : f32 to vector<8x36xf32>
    %1466 = arith.mulf %1463, %1465 : vector<8x36xf32>
    %1467 = arith.addf %1461, %1466 : vector<8x36xf32>
    %c7_1184 = arith.constant 7 : index
    %c0_1185 = arith.constant 0 : index
    %c0_1186 = arith.constant 0 : index
    %1468 = vector.load %arg3[%c7_1184, %c0_1185, %c0_1186] : memref<9x8x36xf32, #tpu.memory_space<vmem>>, vector<1x8x36xf32>
    %1469 = vector.shape_cast %1468 : vector<1x8x36xf32> to vector<8x36xf32>
    %c7_1187 = arith.constant 7 : index
    %c23_1188 = arith.constant 23 : index
    %1470 = memref.load %arg1[%c7_1187, %c23_1188] : memref<9x32xf32, #tpu.memory_space<smem>>
    %1471 = vector.broadcast %1470 : f32 to vector<8x36xf32>
    %1472 = arith.mulf %1469, %1471 : vector<8x36xf32>
    %1473 = arith.addf %1467, %1472 : vector<8x36xf32>
    %c8_1189 = arith.constant 8 : index
    %c0_1190 = arith.constant 0 : index
    %c0_1191 = arith.constant 0 : index
    %1474 = vector.load %arg3[%c8_1189, %c0_1190, %c0_1191] : memref<9x8x36xf32, #tpu.memory_space<vmem>>, vector<1x8x36xf32>
    %1475 = vector.shape_cast %1474 : vector<1x8x36xf32> to vector<8x36xf32>
    %c8_1192 = arith.constant 8 : index
    %c23_1193 = arith.constant 23 : index
    %1476 = memref.load %arg1[%c8_1192, %c23_1193] : memref<9x32xf32, #tpu.memory_space<smem>>
    %1477 = vector.broadcast %1476 : f32 to vector<8x36xf32>
    %1478 = arith.mulf %1475, %1477 : vector<8x36xf32>
    %1479 = arith.addf %1473, %1478 : vector<8x36xf32>
    %c23_1194 = arith.constant 23 : index
    %1480 = memref.load %arg2[%c23_1194] : memref<32xf32, #tpu.memory_space<smem>>
    %1481 = vector.broadcast %1480 : f32 to vector<8x36xf32>
    %1482 = arith.addf %1479, %1481 : vector<8x36xf32>
    %cst_1195 = arith.constant 0.000000e+00 : f32
    %1483 = vector.broadcast %cst_1195 : f32 to vector<8x36xf32>
    %1484 = arith.maximumf %1482, %1483 : vector<8x36xf32>
    %c23_1196 = arith.constant 23 : index
    %c0_1197 = arith.constant 0 : index
    %c0_1198 = arith.constant 0 : index
    %1485 = vector.load %arg4[%c23_1196, %c0_1197, %c0_1198] : memref<32x36x32xf32, #tpu.memory_space<vmem>>, vector<1x36x32xf32>
    %1486 = vector.shape_cast %1485 : vector<1x36x32xf32> to vector<36x32xf32>
    %cst_1199 = arith.constant dense<0.000000e+00> : vector<8x32xf32>
    %1487 = tpu.matmul %1484, %1486, %cst_1199 {dimension_numbers = #tpu.dot_dimension_numbers<[1], [0], [0], [1], [0, 0, 1, 1], [], []>} : vector<8x36xf32>, vector<36x32xf32>, vector<8x32xf32> -> vector<8x32xf32>
    %1488 = arith.addf %1426, %1487 : vector<8x32xf32>
    %c0_1200 = arith.constant 0 : index
    %c0_1201 = arith.constant 0 : index
    %c0_1202 = arith.constant 0 : index
    %1489 = vector.load %arg3[%c0_1200, %c0_1201, %c0_1202] : memref<9x8x36xf32, #tpu.memory_space<vmem>>, vector<1x8x36xf32>
    %1490 = vector.shape_cast %1489 : vector<1x8x36xf32> to vector<8x36xf32>
    %c0_1203 = arith.constant 0 : index
    %c24 = arith.constant 24 : index
    %1491 = memref.load %arg1[%c0_1203, %c24] : memref<9x32xf32, #tpu.memory_space<smem>>
    %1492 = vector.broadcast %1491 : f32 to vector<8x36xf32>
    %1493 = arith.mulf %1490, %1492 : vector<8x36xf32>
    %c1_1204 = arith.constant 1 : index
    %c0_1205 = arith.constant 0 : index
    %c0_1206 = arith.constant 0 : index
    %1494 = vector.load %arg3[%c1_1204, %c0_1205, %c0_1206] : memref<9x8x36xf32, #tpu.memory_space<vmem>>, vector<1x8x36xf32>
    %1495 = vector.shape_cast %1494 : vector<1x8x36xf32> to vector<8x36xf32>
    %c1_1207 = arith.constant 1 : index
    %c24_1208 = arith.constant 24 : index
    %1496 = memref.load %arg1[%c1_1207, %c24_1208] : memref<9x32xf32, #tpu.memory_space<smem>>
    %1497 = vector.broadcast %1496 : f32 to vector<8x36xf32>
    %1498 = arith.mulf %1495, %1497 : vector<8x36xf32>
    %1499 = arith.addf %1493, %1498 : vector<8x36xf32>
    %c2_1209 = arith.constant 2 : index
    %c0_1210 = arith.constant 0 : index
    %c0_1211 = arith.constant 0 : index
    %1500 = vector.load %arg3[%c2_1209, %c0_1210, %c0_1211] : memref<9x8x36xf32, #tpu.memory_space<vmem>>, vector<1x8x36xf32>
    %1501 = vector.shape_cast %1500 : vector<1x8x36xf32> to vector<8x36xf32>
    %c2_1212 = arith.constant 2 : index
    %c24_1213 = arith.constant 24 : index
    %1502 = memref.load %arg1[%c2_1212, %c24_1213] : memref<9x32xf32, #tpu.memory_space<smem>>
    %1503 = vector.broadcast %1502 : f32 to vector<8x36xf32>
    %1504 = arith.mulf %1501, %1503 : vector<8x36xf32>
    %1505 = arith.addf %1499, %1504 : vector<8x36xf32>
    %c3_1214 = arith.constant 3 : index
    %c0_1215 = arith.constant 0 : index
    %c0_1216 = arith.constant 0 : index
    %1506 = vector.load %arg3[%c3_1214, %c0_1215, %c0_1216] : memref<9x8x36xf32, #tpu.memory_space<vmem>>, vector<1x8x36xf32>
    %1507 = vector.shape_cast %1506 : vector<1x8x36xf32> to vector<8x36xf32>
    %c3_1217 = arith.constant 3 : index
    %c24_1218 = arith.constant 24 : index
    %1508 = memref.load %arg1[%c3_1217, %c24_1218] : memref<9x32xf32, #tpu.memory_space<smem>>
    %1509 = vector.broadcast %1508 : f32 to vector<8x36xf32>
    %1510 = arith.mulf %1507, %1509 : vector<8x36xf32>
    %1511 = arith.addf %1505, %1510 : vector<8x36xf32>
    %c4_1219 = arith.constant 4 : index
    %c0_1220 = arith.constant 0 : index
    %c0_1221 = arith.constant 0 : index
    %1512 = vector.load %arg3[%c4_1219, %c0_1220, %c0_1221] : memref<9x8x36xf32, #tpu.memory_space<vmem>>, vector<1x8x36xf32>
    %1513 = vector.shape_cast %1512 : vector<1x8x36xf32> to vector<8x36xf32>
    %c4_1222 = arith.constant 4 : index
    %c24_1223 = arith.constant 24 : index
    %1514 = memref.load %arg1[%c4_1222, %c24_1223] : memref<9x32xf32, #tpu.memory_space<smem>>
    %1515 = vector.broadcast %1514 : f32 to vector<8x36xf32>
    %1516 = arith.mulf %1513, %1515 : vector<8x36xf32>
    %1517 = arith.addf %1511, %1516 : vector<8x36xf32>
    %c5_1224 = arith.constant 5 : index
    %c0_1225 = arith.constant 0 : index
    %c0_1226 = arith.constant 0 : index
    %1518 = vector.load %arg3[%c5_1224, %c0_1225, %c0_1226] : memref<9x8x36xf32, #tpu.memory_space<vmem>>, vector<1x8x36xf32>
    %1519 = vector.shape_cast %1518 : vector<1x8x36xf32> to vector<8x36xf32>
    %c5_1227 = arith.constant 5 : index
    %c24_1228 = arith.constant 24 : index
    %1520 = memref.load %arg1[%c5_1227, %c24_1228] : memref<9x32xf32, #tpu.memory_space<smem>>
    %1521 = vector.broadcast %1520 : f32 to vector<8x36xf32>
    %1522 = arith.mulf %1519, %1521 : vector<8x36xf32>
    %1523 = arith.addf %1517, %1522 : vector<8x36xf32>
    %c6_1229 = arith.constant 6 : index
    %c0_1230 = arith.constant 0 : index
    %c0_1231 = arith.constant 0 : index
    %1524 = vector.load %arg3[%c6_1229, %c0_1230, %c0_1231] : memref<9x8x36xf32, #tpu.memory_space<vmem>>, vector<1x8x36xf32>
    %1525 = vector.shape_cast %1524 : vector<1x8x36xf32> to vector<8x36xf32>
    %c6_1232 = arith.constant 6 : index
    %c24_1233 = arith.constant 24 : index
    %1526 = memref.load %arg1[%c6_1232, %c24_1233] : memref<9x32xf32, #tpu.memory_space<smem>>
    %1527 = vector.broadcast %1526 : f32 to vector<8x36xf32>
    %1528 = arith.mulf %1525, %1527 : vector<8x36xf32>
    %1529 = arith.addf %1523, %1528 : vector<8x36xf32>
    %c7_1234 = arith.constant 7 : index
    %c0_1235 = arith.constant 0 : index
    %c0_1236 = arith.constant 0 : index
    %1530 = vector.load %arg3[%c7_1234, %c0_1235, %c0_1236] : memref<9x8x36xf32, #tpu.memory_space<vmem>>, vector<1x8x36xf32>
    %1531 = vector.shape_cast %1530 : vector<1x8x36xf32> to vector<8x36xf32>
    %c7_1237 = arith.constant 7 : index
    %c24_1238 = arith.constant 24 : index
    %1532 = memref.load %arg1[%c7_1237, %c24_1238] : memref<9x32xf32, #tpu.memory_space<smem>>
    %1533 = vector.broadcast %1532 : f32 to vector<8x36xf32>
    %1534 = arith.mulf %1531, %1533 : vector<8x36xf32>
    %1535 = arith.addf %1529, %1534 : vector<8x36xf32>
    %c8_1239 = arith.constant 8 : index
    %c0_1240 = arith.constant 0 : index
    %c0_1241 = arith.constant 0 : index
    %1536 = vector.load %arg3[%c8_1239, %c0_1240, %c0_1241] : memref<9x8x36xf32, #tpu.memory_space<vmem>>, vector<1x8x36xf32>
    %1537 = vector.shape_cast %1536 : vector<1x8x36xf32> to vector<8x36xf32>
    %c8_1242 = arith.constant 8 : index
    %c24_1243 = arith.constant 24 : index
    %1538 = memref.load %arg1[%c8_1242, %c24_1243] : memref<9x32xf32, #tpu.memory_space<smem>>
    %1539 = vector.broadcast %1538 : f32 to vector<8x36xf32>
    %1540 = arith.mulf %1537, %1539 : vector<8x36xf32>
    %1541 = arith.addf %1535, %1540 : vector<8x36xf32>
    %c24_1244 = arith.constant 24 : index
    %1542 = memref.load %arg2[%c24_1244] : memref<32xf32, #tpu.memory_space<smem>>
    %1543 = vector.broadcast %1542 : f32 to vector<8x36xf32>
    %1544 = arith.addf %1541, %1543 : vector<8x36xf32>
    %cst_1245 = arith.constant 0.000000e+00 : f32
    %1545 = vector.broadcast %cst_1245 : f32 to vector<8x36xf32>
    %1546 = arith.maximumf %1544, %1545 : vector<8x36xf32>
    %c24_1246 = arith.constant 24 : index
    %c0_1247 = arith.constant 0 : index
    %c0_1248 = arith.constant 0 : index
    %1547 = vector.load %arg4[%c24_1246, %c0_1247, %c0_1248] : memref<32x36x32xf32, #tpu.memory_space<vmem>>, vector<1x36x32xf32>
    %1548 = vector.shape_cast %1547 : vector<1x36x32xf32> to vector<36x32xf32>
    %cst_1249 = arith.constant dense<0.000000e+00> : vector<8x32xf32>
    %1549 = tpu.matmul %1546, %1548, %cst_1249 {dimension_numbers = #tpu.dot_dimension_numbers<[1], [0], [0], [1], [0, 0, 1, 1], [], []>} : vector<8x36xf32>, vector<36x32xf32>, vector<8x32xf32> -> vector<8x32xf32>
    %1550 = arith.addf %1488, %1549 : vector<8x32xf32>
    %c0_1250 = arith.constant 0 : index
    %c0_1251 = arith.constant 0 : index
    %c0_1252 = arith.constant 0 : index
    %1551 = vector.load %arg3[%c0_1250, %c0_1251, %c0_1252] : memref<9x8x36xf32, #tpu.memory_space<vmem>>, vector<1x8x36xf32>
    %1552 = vector.shape_cast %1551 : vector<1x8x36xf32> to vector<8x36xf32>
    %c0_1253 = arith.constant 0 : index
    %c25 = arith.constant 25 : index
    %1553 = memref.load %arg1[%c0_1253, %c25] : memref<9x32xf32, #tpu.memory_space<smem>>
    %1554 = vector.broadcast %1553 : f32 to vector<8x36xf32>
    %1555 = arith.mulf %1552, %1554 : vector<8x36xf32>
    %c1_1254 = arith.constant 1 : index
    %c0_1255 = arith.constant 0 : index
    %c0_1256 = arith.constant 0 : index
    %1556 = vector.load %arg3[%c1_1254, %c0_1255, %c0_1256] : memref<9x8x36xf32, #tpu.memory_space<vmem>>, vector<1x8x36xf32>
    %1557 = vector.shape_cast %1556 : vector<1x8x36xf32> to vector<8x36xf32>
    %c1_1257 = arith.constant 1 : index
    %c25_1258 = arith.constant 25 : index
    %1558 = memref.load %arg1[%c1_1257, %c25_1258] : memref<9x32xf32, #tpu.memory_space<smem>>
    %1559 = vector.broadcast %1558 : f32 to vector<8x36xf32>
    %1560 = arith.mulf %1557, %1559 : vector<8x36xf32>
    %1561 = arith.addf %1555, %1560 : vector<8x36xf32>
    %c2_1259 = arith.constant 2 : index
    %c0_1260 = arith.constant 0 : index
    %c0_1261 = arith.constant 0 : index
    %1562 = vector.load %arg3[%c2_1259, %c0_1260, %c0_1261] : memref<9x8x36xf32, #tpu.memory_space<vmem>>, vector<1x8x36xf32>
    %1563 = vector.shape_cast %1562 : vector<1x8x36xf32> to vector<8x36xf32>
    %c2_1262 = arith.constant 2 : index
    %c25_1263 = arith.constant 25 : index
    %1564 = memref.load %arg1[%c2_1262, %c25_1263] : memref<9x32xf32, #tpu.memory_space<smem>>
    %1565 = vector.broadcast %1564 : f32 to vector<8x36xf32>
    %1566 = arith.mulf %1563, %1565 : vector<8x36xf32>
    %1567 = arith.addf %1561, %1566 : vector<8x36xf32>
    %c3_1264 = arith.constant 3 : index
    %c0_1265 = arith.constant 0 : index
    %c0_1266 = arith.constant 0 : index
    %1568 = vector.load %arg3[%c3_1264, %c0_1265, %c0_1266] : memref<9x8x36xf32, #tpu.memory_space<vmem>>, vector<1x8x36xf32>
    %1569 = vector.shape_cast %1568 : vector<1x8x36xf32> to vector<8x36xf32>
    %c3_1267 = arith.constant 3 : index
    %c25_1268 = arith.constant 25 : index
    %1570 = memref.load %arg1[%c3_1267, %c25_1268] : memref<9x32xf32, #tpu.memory_space<smem>>
    %1571 = vector.broadcast %1570 : f32 to vector<8x36xf32>
    %1572 = arith.mulf %1569, %1571 : vector<8x36xf32>
    %1573 = arith.addf %1567, %1572 : vector<8x36xf32>
    %c4_1269 = arith.constant 4 : index
    %c0_1270 = arith.constant 0 : index
    %c0_1271 = arith.constant 0 : index
    %1574 = vector.load %arg3[%c4_1269, %c0_1270, %c0_1271] : memref<9x8x36xf32, #tpu.memory_space<vmem>>, vector<1x8x36xf32>
    %1575 = vector.shape_cast %1574 : vector<1x8x36xf32> to vector<8x36xf32>
    %c4_1272 = arith.constant 4 : index
    %c25_1273 = arith.constant 25 : index
    %1576 = memref.load %arg1[%c4_1272, %c25_1273] : memref<9x32xf32, #tpu.memory_space<smem>>
    %1577 = vector.broadcast %1576 : f32 to vector<8x36xf32>
    %1578 = arith.mulf %1575, %1577 : vector<8x36xf32>
    %1579 = arith.addf %1573, %1578 : vector<8x36xf32>
    %c5_1274 = arith.constant 5 : index
    %c0_1275 = arith.constant 0 : index
    %c0_1276 = arith.constant 0 : index
    %1580 = vector.load %arg3[%c5_1274, %c0_1275, %c0_1276] : memref<9x8x36xf32, #tpu.memory_space<vmem>>, vector<1x8x36xf32>
    %1581 = vector.shape_cast %1580 : vector<1x8x36xf32> to vector<8x36xf32>
    %c5_1277 = arith.constant 5 : index
    %c25_1278 = arith.constant 25 : index
    %1582 = memref.load %arg1[%c5_1277, %c25_1278] : memref<9x32xf32, #tpu.memory_space<smem>>
    %1583 = vector.broadcast %1582 : f32 to vector<8x36xf32>
    %1584 = arith.mulf %1581, %1583 : vector<8x36xf32>
    %1585 = arith.addf %1579, %1584 : vector<8x36xf32>
    %c6_1279 = arith.constant 6 : index
    %c0_1280 = arith.constant 0 : index
    %c0_1281 = arith.constant 0 : index
    %1586 = vector.load %arg3[%c6_1279, %c0_1280, %c0_1281] : memref<9x8x36xf32, #tpu.memory_space<vmem>>, vector<1x8x36xf32>
    %1587 = vector.shape_cast %1586 : vector<1x8x36xf32> to vector<8x36xf32>
    %c6_1282 = arith.constant 6 : index
    %c25_1283 = arith.constant 25 : index
    %1588 = memref.load %arg1[%c6_1282, %c25_1283] : memref<9x32xf32, #tpu.memory_space<smem>>
    %1589 = vector.broadcast %1588 : f32 to vector<8x36xf32>
    %1590 = arith.mulf %1587, %1589 : vector<8x36xf32>
    %1591 = arith.addf %1585, %1590 : vector<8x36xf32>
    %c7_1284 = arith.constant 7 : index
    %c0_1285 = arith.constant 0 : index
    %c0_1286 = arith.constant 0 : index
    %1592 = vector.load %arg3[%c7_1284, %c0_1285, %c0_1286] : memref<9x8x36xf32, #tpu.memory_space<vmem>>, vector<1x8x36xf32>
    %1593 = vector.shape_cast %1592 : vector<1x8x36xf32> to vector<8x36xf32>
    %c7_1287 = arith.constant 7 : index
    %c25_1288 = arith.constant 25 : index
    %1594 = memref.load %arg1[%c7_1287, %c25_1288] : memref<9x32xf32, #tpu.memory_space<smem>>
    %1595 = vector.broadcast %1594 : f32 to vector<8x36xf32>
    %1596 = arith.mulf %1593, %1595 : vector<8x36xf32>
    %1597 = arith.addf %1591, %1596 : vector<8x36xf32>
    %c8_1289 = arith.constant 8 : index
    %c0_1290 = arith.constant 0 : index
    %c0_1291 = arith.constant 0 : index
    %1598 = vector.load %arg3[%c8_1289, %c0_1290, %c0_1291] : memref<9x8x36xf32, #tpu.memory_space<vmem>>, vector<1x8x36xf32>
    %1599 = vector.shape_cast %1598 : vector<1x8x36xf32> to vector<8x36xf32>
    %c8_1292 = arith.constant 8 : index
    %c25_1293 = arith.constant 25 : index
    %1600 = memref.load %arg1[%c8_1292, %c25_1293] : memref<9x32xf32, #tpu.memory_space<smem>>
    %1601 = vector.broadcast %1600 : f32 to vector<8x36xf32>
    %1602 = arith.mulf %1599, %1601 : vector<8x36xf32>
    %1603 = arith.addf %1597, %1602 : vector<8x36xf32>
    %c25_1294 = arith.constant 25 : index
    %1604 = memref.load %arg2[%c25_1294] : memref<32xf32, #tpu.memory_space<smem>>
    %1605 = vector.broadcast %1604 : f32 to vector<8x36xf32>
    %1606 = arith.addf %1603, %1605 : vector<8x36xf32>
    %cst_1295 = arith.constant 0.000000e+00 : f32
    %1607 = vector.broadcast %cst_1295 : f32 to vector<8x36xf32>
    %1608 = arith.maximumf %1606, %1607 : vector<8x36xf32>
    %c25_1296 = arith.constant 25 : index
    %c0_1297 = arith.constant 0 : index
    %c0_1298 = arith.constant 0 : index
    %1609 = vector.load %arg4[%c25_1296, %c0_1297, %c0_1298] : memref<32x36x32xf32, #tpu.memory_space<vmem>>, vector<1x36x32xf32>
    %1610 = vector.shape_cast %1609 : vector<1x36x32xf32> to vector<36x32xf32>
    %cst_1299 = arith.constant dense<0.000000e+00> : vector<8x32xf32>
    %1611 = tpu.matmul %1608, %1610, %cst_1299 {dimension_numbers = #tpu.dot_dimension_numbers<[1], [0], [0], [1], [0, 0, 1, 1], [], []>} : vector<8x36xf32>, vector<36x32xf32>, vector<8x32xf32> -> vector<8x32xf32>
    %1612 = arith.addf %1550, %1611 : vector<8x32xf32>
    %c0_1300 = arith.constant 0 : index
    %c0_1301 = arith.constant 0 : index
    %c0_1302 = arith.constant 0 : index
    %1613 = vector.load %arg3[%c0_1300, %c0_1301, %c0_1302] : memref<9x8x36xf32, #tpu.memory_space<vmem>>, vector<1x8x36xf32>
    %1614 = vector.shape_cast %1613 : vector<1x8x36xf32> to vector<8x36xf32>
    %c0_1303 = arith.constant 0 : index
    %c26 = arith.constant 26 : index
    %1615 = memref.load %arg1[%c0_1303, %c26] : memref<9x32xf32, #tpu.memory_space<smem>>
    %1616 = vector.broadcast %1615 : f32 to vector<8x36xf32>
    %1617 = arith.mulf %1614, %1616 : vector<8x36xf32>
    %c1_1304 = arith.constant 1 : index
    %c0_1305 = arith.constant 0 : index
    %c0_1306 = arith.constant 0 : index
    %1618 = vector.load %arg3[%c1_1304, %c0_1305, %c0_1306] : memref<9x8x36xf32, #tpu.memory_space<vmem>>, vector<1x8x36xf32>
    %1619 = vector.shape_cast %1618 : vector<1x8x36xf32> to vector<8x36xf32>
    %c1_1307 = arith.constant 1 : index
    %c26_1308 = arith.constant 26 : index
    %1620 = memref.load %arg1[%c1_1307, %c26_1308] : memref<9x32xf32, #tpu.memory_space<smem>>
    %1621 = vector.broadcast %1620 : f32 to vector<8x36xf32>
    %1622 = arith.mulf %1619, %1621 : vector<8x36xf32>
    %1623 = arith.addf %1617, %1622 : vector<8x36xf32>
    %c2_1309 = arith.constant 2 : index
    %c0_1310 = arith.constant 0 : index
    %c0_1311 = arith.constant 0 : index
    %1624 = vector.load %arg3[%c2_1309, %c0_1310, %c0_1311] : memref<9x8x36xf32, #tpu.memory_space<vmem>>, vector<1x8x36xf32>
    %1625 = vector.shape_cast %1624 : vector<1x8x36xf32> to vector<8x36xf32>
    %c2_1312 = arith.constant 2 : index
    %c26_1313 = arith.constant 26 : index
    %1626 = memref.load %arg1[%c2_1312, %c26_1313] : memref<9x32xf32, #tpu.memory_space<smem>>
    %1627 = vector.broadcast %1626 : f32 to vector<8x36xf32>
    %1628 = arith.mulf %1625, %1627 : vector<8x36xf32>
    %1629 = arith.addf %1623, %1628 : vector<8x36xf32>
    %c3_1314 = arith.constant 3 : index
    %c0_1315 = arith.constant 0 : index
    %c0_1316 = arith.constant 0 : index
    %1630 = vector.load %arg3[%c3_1314, %c0_1315, %c0_1316] : memref<9x8x36xf32, #tpu.memory_space<vmem>>, vector<1x8x36xf32>
    %1631 = vector.shape_cast %1630 : vector<1x8x36xf32> to vector<8x36xf32>
    %c3_1317 = arith.constant 3 : index
    %c26_1318 = arith.constant 26 : index
    %1632 = memref.load %arg1[%c3_1317, %c26_1318] : memref<9x32xf32, #tpu.memory_space<smem>>
    %1633 = vector.broadcast %1632 : f32 to vector<8x36xf32>
    %1634 = arith.mulf %1631, %1633 : vector<8x36xf32>
    %1635 = arith.addf %1629, %1634 : vector<8x36xf32>
    %c4_1319 = arith.constant 4 : index
    %c0_1320 = arith.constant 0 : index
    %c0_1321 = arith.constant 0 : index
    %1636 = vector.load %arg3[%c4_1319, %c0_1320, %c0_1321] : memref<9x8x36xf32, #tpu.memory_space<vmem>>, vector<1x8x36xf32>
    %1637 = vector.shape_cast %1636 : vector<1x8x36xf32> to vector<8x36xf32>
    %c4_1322 = arith.constant 4 : index
    %c26_1323 = arith.constant 26 : index
    %1638 = memref.load %arg1[%c4_1322, %c26_1323] : memref<9x32xf32, #tpu.memory_space<smem>>
    %1639 = vector.broadcast %1638 : f32 to vector<8x36xf32>
    %1640 = arith.mulf %1637, %1639 : vector<8x36xf32>
    %1641 = arith.addf %1635, %1640 : vector<8x36xf32>
    %c5_1324 = arith.constant 5 : index
    %c0_1325 = arith.constant 0 : index
    %c0_1326 = arith.constant 0 : index
    %1642 = vector.load %arg3[%c5_1324, %c0_1325, %c0_1326] : memref<9x8x36xf32, #tpu.memory_space<vmem>>, vector<1x8x36xf32>
    %1643 = vector.shape_cast %1642 : vector<1x8x36xf32> to vector<8x36xf32>
    %c5_1327 = arith.constant 5 : index
    %c26_1328 = arith.constant 26 : index
    %1644 = memref.load %arg1[%c5_1327, %c26_1328] : memref<9x32xf32, #tpu.memory_space<smem>>
    %1645 = vector.broadcast %1644 : f32 to vector<8x36xf32>
    %1646 = arith.mulf %1643, %1645 : vector<8x36xf32>
    %1647 = arith.addf %1641, %1646 : vector<8x36xf32>
    %c6_1329 = arith.constant 6 : index
    %c0_1330 = arith.constant 0 : index
    %c0_1331 = arith.constant 0 : index
    %1648 = vector.load %arg3[%c6_1329, %c0_1330, %c0_1331] : memref<9x8x36xf32, #tpu.memory_space<vmem>>, vector<1x8x36xf32>
    %1649 = vector.shape_cast %1648 : vector<1x8x36xf32> to vector<8x36xf32>
    %c6_1332 = arith.constant 6 : index
    %c26_1333 = arith.constant 26 : index
    %1650 = memref.load %arg1[%c6_1332, %c26_1333] : memref<9x32xf32, #tpu.memory_space<smem>>
    %1651 = vector.broadcast %1650 : f32 to vector<8x36xf32>
    %1652 = arith.mulf %1649, %1651 : vector<8x36xf32>
    %1653 = arith.addf %1647, %1652 : vector<8x36xf32>
    %c7_1334 = arith.constant 7 : index
    %c0_1335 = arith.constant 0 : index
    %c0_1336 = arith.constant 0 : index
    %1654 = vector.load %arg3[%c7_1334, %c0_1335, %c0_1336] : memref<9x8x36xf32, #tpu.memory_space<vmem>>, vector<1x8x36xf32>
    %1655 = vector.shape_cast %1654 : vector<1x8x36xf32> to vector<8x36xf32>
    %c7_1337 = arith.constant 7 : index
    %c26_1338 = arith.constant 26 : index
    %1656 = memref.load %arg1[%c7_1337, %c26_1338] : memref<9x32xf32, #tpu.memory_space<smem>>
    %1657 = vector.broadcast %1656 : f32 to vector<8x36xf32>
    %1658 = arith.mulf %1655, %1657 : vector<8x36xf32>
    %1659 = arith.addf %1653, %1658 : vector<8x36xf32>
    %c8_1339 = arith.constant 8 : index
    %c0_1340 = arith.constant 0 : index
    %c0_1341 = arith.constant 0 : index
    %1660 = vector.load %arg3[%c8_1339, %c0_1340, %c0_1341] : memref<9x8x36xf32, #tpu.memory_space<vmem>>, vector<1x8x36xf32>
    %1661 = vector.shape_cast %1660 : vector<1x8x36xf32> to vector<8x36xf32>
    %c8_1342 = arith.constant 8 : index
    %c26_1343 = arith.constant 26 : index
    %1662 = memref.load %arg1[%c8_1342, %c26_1343] : memref<9x32xf32, #tpu.memory_space<smem>>
    %1663 = vector.broadcast %1662 : f32 to vector<8x36xf32>
    %1664 = arith.mulf %1661, %1663 : vector<8x36xf32>
    %1665 = arith.addf %1659, %1664 : vector<8x36xf32>
    %c26_1344 = arith.constant 26 : index
    %1666 = memref.load %arg2[%c26_1344] : memref<32xf32, #tpu.memory_space<smem>>
    %1667 = vector.broadcast %1666 : f32 to vector<8x36xf32>
    %1668 = arith.addf %1665, %1667 : vector<8x36xf32>
    %cst_1345 = arith.constant 0.000000e+00 : f32
    %1669 = vector.broadcast %cst_1345 : f32 to vector<8x36xf32>
    %1670 = arith.maximumf %1668, %1669 : vector<8x36xf32>
    %c26_1346 = arith.constant 26 : index
    %c0_1347 = arith.constant 0 : index
    %c0_1348 = arith.constant 0 : index
    %1671 = vector.load %arg4[%c26_1346, %c0_1347, %c0_1348] : memref<32x36x32xf32, #tpu.memory_space<vmem>>, vector<1x36x32xf32>
    %1672 = vector.shape_cast %1671 : vector<1x36x32xf32> to vector<36x32xf32>
    %cst_1349 = arith.constant dense<0.000000e+00> : vector<8x32xf32>
    %1673 = tpu.matmul %1670, %1672, %cst_1349 {dimension_numbers = #tpu.dot_dimension_numbers<[1], [0], [0], [1], [0, 0, 1, 1], [], []>} : vector<8x36xf32>, vector<36x32xf32>, vector<8x32xf32> -> vector<8x32xf32>
    %1674 = arith.addf %1612, %1673 : vector<8x32xf32>
    %c0_1350 = arith.constant 0 : index
    %c0_1351 = arith.constant 0 : index
    %c0_1352 = arith.constant 0 : index
    %1675 = vector.load %arg3[%c0_1350, %c0_1351, %c0_1352] : memref<9x8x36xf32, #tpu.memory_space<vmem>>, vector<1x8x36xf32>
    %1676 = vector.shape_cast %1675 : vector<1x8x36xf32> to vector<8x36xf32>
    %c0_1353 = arith.constant 0 : index
    %c27 = arith.constant 27 : index
    %1677 = memref.load %arg1[%c0_1353, %c27] : memref<9x32xf32, #tpu.memory_space<smem>>
    %1678 = vector.broadcast %1677 : f32 to vector<8x36xf32>
    %1679 = arith.mulf %1676, %1678 : vector<8x36xf32>
    %c1_1354 = arith.constant 1 : index
    %c0_1355 = arith.constant 0 : index
    %c0_1356 = arith.constant 0 : index
    %1680 = vector.load %arg3[%c1_1354, %c0_1355, %c0_1356] : memref<9x8x36xf32, #tpu.memory_space<vmem>>, vector<1x8x36xf32>
    %1681 = vector.shape_cast %1680 : vector<1x8x36xf32> to vector<8x36xf32>
    %c1_1357 = arith.constant 1 : index
    %c27_1358 = arith.constant 27 : index
    %1682 = memref.load %arg1[%c1_1357, %c27_1358] : memref<9x32xf32, #tpu.memory_space<smem>>
    %1683 = vector.broadcast %1682 : f32 to vector<8x36xf32>
    %1684 = arith.mulf %1681, %1683 : vector<8x36xf32>
    %1685 = arith.addf %1679, %1684 : vector<8x36xf32>
    %c2_1359 = arith.constant 2 : index
    %c0_1360 = arith.constant 0 : index
    %c0_1361 = arith.constant 0 : index
    %1686 = vector.load %arg3[%c2_1359, %c0_1360, %c0_1361] : memref<9x8x36xf32, #tpu.memory_space<vmem>>, vector<1x8x36xf32>
    %1687 = vector.shape_cast %1686 : vector<1x8x36xf32> to vector<8x36xf32>
    %c2_1362 = arith.constant 2 : index
    %c27_1363 = arith.constant 27 : index
    %1688 = memref.load %arg1[%c2_1362, %c27_1363] : memref<9x32xf32, #tpu.memory_space<smem>>
    %1689 = vector.broadcast %1688 : f32 to vector<8x36xf32>
    %1690 = arith.mulf %1687, %1689 : vector<8x36xf32>
    %1691 = arith.addf %1685, %1690 : vector<8x36xf32>
    %c3_1364 = arith.constant 3 : index
    %c0_1365 = arith.constant 0 : index
    %c0_1366 = arith.constant 0 : index
    %1692 = vector.load %arg3[%c3_1364, %c0_1365, %c0_1366] : memref<9x8x36xf32, #tpu.memory_space<vmem>>, vector<1x8x36xf32>
    %1693 = vector.shape_cast %1692 : vector<1x8x36xf32> to vector<8x36xf32>
    %c3_1367 = arith.constant 3 : index
    %c27_1368 = arith.constant 27 : index
    %1694 = memref.load %arg1[%c3_1367, %c27_1368] : memref<9x32xf32, #tpu.memory_space<smem>>
    %1695 = vector.broadcast %1694 : f32 to vector<8x36xf32>
    %1696 = arith.mulf %1693, %1695 : vector<8x36xf32>
    %1697 = arith.addf %1691, %1696 : vector<8x36xf32>
    %c4_1369 = arith.constant 4 : index
    %c0_1370 = arith.constant 0 : index
    %c0_1371 = arith.constant 0 : index
    %1698 = vector.load %arg3[%c4_1369, %c0_1370, %c0_1371] : memref<9x8x36xf32, #tpu.memory_space<vmem>>, vector<1x8x36xf32>
    %1699 = vector.shape_cast %1698 : vector<1x8x36xf32> to vector<8x36xf32>
    %c4_1372 = arith.constant 4 : index
    %c27_1373 = arith.constant 27 : index
    %1700 = memref.load %arg1[%c4_1372, %c27_1373] : memref<9x32xf32, #tpu.memory_space<smem>>
    %1701 = vector.broadcast %1700 : f32 to vector<8x36xf32>
    %1702 = arith.mulf %1699, %1701 : vector<8x36xf32>
    %1703 = arith.addf %1697, %1702 : vector<8x36xf32>
    %c5_1374 = arith.constant 5 : index
    %c0_1375 = arith.constant 0 : index
    %c0_1376 = arith.constant 0 : index
    %1704 = vector.load %arg3[%c5_1374, %c0_1375, %c0_1376] : memref<9x8x36xf32, #tpu.memory_space<vmem>>, vector<1x8x36xf32>
    %1705 = vector.shape_cast %1704 : vector<1x8x36xf32> to vector<8x36xf32>
    %c5_1377 = arith.constant 5 : index
    %c27_1378 = arith.constant 27 : index
    %1706 = memref.load %arg1[%c5_1377, %c27_1378] : memref<9x32xf32, #tpu.memory_space<smem>>
    %1707 = vector.broadcast %1706 : f32 to vector<8x36xf32>
    %1708 = arith.mulf %1705, %1707 : vector<8x36xf32>
    %1709 = arith.addf %1703, %1708 : vector<8x36xf32>
    %c6_1379 = arith.constant 6 : index
    %c0_1380 = arith.constant 0 : index
    %c0_1381 = arith.constant 0 : index
    %1710 = vector.load %arg3[%c6_1379, %c0_1380, %c0_1381] : memref<9x8x36xf32, #tpu.memory_space<vmem>>, vector<1x8x36xf32>
    %1711 = vector.shape_cast %1710 : vector<1x8x36xf32> to vector<8x36xf32>
    %c6_1382 = arith.constant 6 : index
    %c27_1383 = arith.constant 27 : index
    %1712 = memref.load %arg1[%c6_1382, %c27_1383] : memref<9x32xf32, #tpu.memory_space<smem>>
    %1713 = vector.broadcast %1712 : f32 to vector<8x36xf32>
    %1714 = arith.mulf %1711, %1713 : vector<8x36xf32>
    %1715 = arith.addf %1709, %1714 : vector<8x36xf32>
    %c7_1384 = arith.constant 7 : index
    %c0_1385 = arith.constant 0 : index
    %c0_1386 = arith.constant 0 : index
    %1716 = vector.load %arg3[%c7_1384, %c0_1385, %c0_1386] : memref<9x8x36xf32, #tpu.memory_space<vmem>>, vector<1x8x36xf32>
    %1717 = vector.shape_cast %1716 : vector<1x8x36xf32> to vector<8x36xf32>
    %c7_1387 = arith.constant 7 : index
    %c27_1388 = arith.constant 27 : index
    %1718 = memref.load %arg1[%c7_1387, %c27_1388] : memref<9x32xf32, #tpu.memory_space<smem>>
    %1719 = vector.broadcast %1718 : f32 to vector<8x36xf32>
    %1720 = arith.mulf %1717, %1719 : vector<8x36xf32>
    %1721 = arith.addf %1715, %1720 : vector<8x36xf32>
    %c8_1389 = arith.constant 8 : index
    %c0_1390 = arith.constant 0 : index
    %c0_1391 = arith.constant 0 : index
    %1722 = vector.load %arg3[%c8_1389, %c0_1390, %c0_1391] : memref<9x8x36xf32, #tpu.memory_space<vmem>>, vector<1x8x36xf32>
    %1723 = vector.shape_cast %1722 : vector<1x8x36xf32> to vector<8x36xf32>
    %c8_1392 = arith.constant 8 : index
    %c27_1393 = arith.constant 27 : index
    %1724 = memref.load %arg1[%c8_1392, %c27_1393] : memref<9x32xf32, #tpu.memory_space<smem>>
    %1725 = vector.broadcast %1724 : f32 to vector<8x36xf32>
    %1726 = arith.mulf %1723, %1725 : vector<8x36xf32>
    %1727 = arith.addf %1721, %1726 : vector<8x36xf32>
    %c27_1394 = arith.constant 27 : index
    %1728 = memref.load %arg2[%c27_1394] : memref<32xf32, #tpu.memory_space<smem>>
    %1729 = vector.broadcast %1728 : f32 to vector<8x36xf32>
    %1730 = arith.addf %1727, %1729 : vector<8x36xf32>
    %cst_1395 = arith.constant 0.000000e+00 : f32
    %1731 = vector.broadcast %cst_1395 : f32 to vector<8x36xf32>
    %1732 = arith.maximumf %1730, %1731 : vector<8x36xf32>
    %c27_1396 = arith.constant 27 : index
    %c0_1397 = arith.constant 0 : index
    %c0_1398 = arith.constant 0 : index
    %1733 = vector.load %arg4[%c27_1396, %c0_1397, %c0_1398] : memref<32x36x32xf32, #tpu.memory_space<vmem>>, vector<1x36x32xf32>
    %1734 = vector.shape_cast %1733 : vector<1x36x32xf32> to vector<36x32xf32>
    %cst_1399 = arith.constant dense<0.000000e+00> : vector<8x32xf32>
    %1735 = tpu.matmul %1732, %1734, %cst_1399 {dimension_numbers = #tpu.dot_dimension_numbers<[1], [0], [0], [1], [0, 0, 1, 1], [], []>} : vector<8x36xf32>, vector<36x32xf32>, vector<8x32xf32> -> vector<8x32xf32>
    %1736 = arith.addf %1674, %1735 : vector<8x32xf32>
    %c0_1400 = arith.constant 0 : index
    %c0_1401 = arith.constant 0 : index
    %c0_1402 = arith.constant 0 : index
    %1737 = vector.load %arg3[%c0_1400, %c0_1401, %c0_1402] : memref<9x8x36xf32, #tpu.memory_space<vmem>>, vector<1x8x36xf32>
    %1738 = vector.shape_cast %1737 : vector<1x8x36xf32> to vector<8x36xf32>
    %c0_1403 = arith.constant 0 : index
    %c28 = arith.constant 28 : index
    %1739 = memref.load %arg1[%c0_1403, %c28] : memref<9x32xf32, #tpu.memory_space<smem>>
    %1740 = vector.broadcast %1739 : f32 to vector<8x36xf32>
    %1741 = arith.mulf %1738, %1740 : vector<8x36xf32>
    %c1_1404 = arith.constant 1 : index
    %c0_1405 = arith.constant 0 : index
    %c0_1406 = arith.constant 0 : index
    %1742 = vector.load %arg3[%c1_1404, %c0_1405, %c0_1406] : memref<9x8x36xf32, #tpu.memory_space<vmem>>, vector<1x8x36xf32>
    %1743 = vector.shape_cast %1742 : vector<1x8x36xf32> to vector<8x36xf32>
    %c1_1407 = arith.constant 1 : index
    %c28_1408 = arith.constant 28 : index
    %1744 = memref.load %arg1[%c1_1407, %c28_1408] : memref<9x32xf32, #tpu.memory_space<smem>>
    %1745 = vector.broadcast %1744 : f32 to vector<8x36xf32>
    %1746 = arith.mulf %1743, %1745 : vector<8x36xf32>
    %1747 = arith.addf %1741, %1746 : vector<8x36xf32>
    %c2_1409 = arith.constant 2 : index
    %c0_1410 = arith.constant 0 : index
    %c0_1411 = arith.constant 0 : index
    %1748 = vector.load %arg3[%c2_1409, %c0_1410, %c0_1411] : memref<9x8x36xf32, #tpu.memory_space<vmem>>, vector<1x8x36xf32>
    %1749 = vector.shape_cast %1748 : vector<1x8x36xf32> to vector<8x36xf32>
    %c2_1412 = arith.constant 2 : index
    %c28_1413 = arith.constant 28 : index
    %1750 = memref.load %arg1[%c2_1412, %c28_1413] : memref<9x32xf32, #tpu.memory_space<smem>>
    %1751 = vector.broadcast %1750 : f32 to vector<8x36xf32>
    %1752 = arith.mulf %1749, %1751 : vector<8x36xf32>
    %1753 = arith.addf %1747, %1752 : vector<8x36xf32>
    %c3_1414 = arith.constant 3 : index
    %c0_1415 = arith.constant 0 : index
    %c0_1416 = arith.constant 0 : index
    %1754 = vector.load %arg3[%c3_1414, %c0_1415, %c0_1416] : memref<9x8x36xf32, #tpu.memory_space<vmem>>, vector<1x8x36xf32>
    %1755 = vector.shape_cast %1754 : vector<1x8x36xf32> to vector<8x36xf32>
    %c3_1417 = arith.constant 3 : index
    %c28_1418 = arith.constant 28 : index
    %1756 = memref.load %arg1[%c3_1417, %c28_1418] : memref<9x32xf32, #tpu.memory_space<smem>>
    %1757 = vector.broadcast %1756 : f32 to vector<8x36xf32>
    %1758 = arith.mulf %1755, %1757 : vector<8x36xf32>
    %1759 = arith.addf %1753, %1758 : vector<8x36xf32>
    %c4_1419 = arith.constant 4 : index
    %c0_1420 = arith.constant 0 : index
    %c0_1421 = arith.constant 0 : index
    %1760 = vector.load %arg3[%c4_1419, %c0_1420, %c0_1421] : memref<9x8x36xf32, #tpu.memory_space<vmem>>, vector<1x8x36xf32>
    %1761 = vector.shape_cast %1760 : vector<1x8x36xf32> to vector<8x36xf32>
    %c4_1422 = arith.constant 4 : index
    %c28_1423 = arith.constant 28 : index
    %1762 = memref.load %arg1[%c4_1422, %c28_1423] : memref<9x32xf32, #tpu.memory_space<smem>>
    %1763 = vector.broadcast %1762 : f32 to vector<8x36xf32>
    %1764 = arith.mulf %1761, %1763 : vector<8x36xf32>
    %1765 = arith.addf %1759, %1764 : vector<8x36xf32>
    %c5_1424 = arith.constant 5 : index
    %c0_1425 = arith.constant 0 : index
    %c0_1426 = arith.constant 0 : index
    %1766 = vector.load %arg3[%c5_1424, %c0_1425, %c0_1426] : memref<9x8x36xf32, #tpu.memory_space<vmem>>, vector<1x8x36xf32>
    %1767 = vector.shape_cast %1766 : vector<1x8x36xf32> to vector<8x36xf32>
    %c5_1427 = arith.constant 5 : index
    %c28_1428 = arith.constant 28 : index
    %1768 = memref.load %arg1[%c5_1427, %c28_1428] : memref<9x32xf32, #tpu.memory_space<smem>>
    %1769 = vector.broadcast %1768 : f32 to vector<8x36xf32>
    %1770 = arith.mulf %1767, %1769 : vector<8x36xf32>
    %1771 = arith.addf %1765, %1770 : vector<8x36xf32>
    %c6_1429 = arith.constant 6 : index
    %c0_1430 = arith.constant 0 : index
    %c0_1431 = arith.constant 0 : index
    %1772 = vector.load %arg3[%c6_1429, %c0_1430, %c0_1431] : memref<9x8x36xf32, #tpu.memory_space<vmem>>, vector<1x8x36xf32>
    %1773 = vector.shape_cast %1772 : vector<1x8x36xf32> to vector<8x36xf32>
    %c6_1432 = arith.constant 6 : index
    %c28_1433 = arith.constant 28 : index
    %1774 = memref.load %arg1[%c6_1432, %c28_1433] : memref<9x32xf32, #tpu.memory_space<smem>>
    %1775 = vector.broadcast %1774 : f32 to vector<8x36xf32>
    %1776 = arith.mulf %1773, %1775 : vector<8x36xf32>
    %1777 = arith.addf %1771, %1776 : vector<8x36xf32>
    %c7_1434 = arith.constant 7 : index
    %c0_1435 = arith.constant 0 : index
    %c0_1436 = arith.constant 0 : index
    %1778 = vector.load %arg3[%c7_1434, %c0_1435, %c0_1436] : memref<9x8x36xf32, #tpu.memory_space<vmem>>, vector<1x8x36xf32>
    %1779 = vector.shape_cast %1778 : vector<1x8x36xf32> to vector<8x36xf32>
    %c7_1437 = arith.constant 7 : index
    %c28_1438 = arith.constant 28 : index
    %1780 = memref.load %arg1[%c7_1437, %c28_1438] : memref<9x32xf32, #tpu.memory_space<smem>>
    %1781 = vector.broadcast %1780 : f32 to vector<8x36xf32>
    %1782 = arith.mulf %1779, %1781 : vector<8x36xf32>
    %1783 = arith.addf %1777, %1782 : vector<8x36xf32>
    %c8_1439 = arith.constant 8 : index
    %c0_1440 = arith.constant 0 : index
    %c0_1441 = arith.constant 0 : index
    %1784 = vector.load %arg3[%c8_1439, %c0_1440, %c0_1441] : memref<9x8x36xf32, #tpu.memory_space<vmem>>, vector<1x8x36xf32>
    %1785 = vector.shape_cast %1784 : vector<1x8x36xf32> to vector<8x36xf32>
    %c8_1442 = arith.constant 8 : index
    %c28_1443 = arith.constant 28 : index
    %1786 = memref.load %arg1[%c8_1442, %c28_1443] : memref<9x32xf32, #tpu.memory_space<smem>>
    %1787 = vector.broadcast %1786 : f32 to vector<8x36xf32>
    %1788 = arith.mulf %1785, %1787 : vector<8x36xf32>
    %1789 = arith.addf %1783, %1788 : vector<8x36xf32>
    %c28_1444 = arith.constant 28 : index
    %1790 = memref.load %arg2[%c28_1444] : memref<32xf32, #tpu.memory_space<smem>>
    %1791 = vector.broadcast %1790 : f32 to vector<8x36xf32>
    %1792 = arith.addf %1789, %1791 : vector<8x36xf32>
    %cst_1445 = arith.constant 0.000000e+00 : f32
    %1793 = vector.broadcast %cst_1445 : f32 to vector<8x36xf32>
    %1794 = arith.maximumf %1792, %1793 : vector<8x36xf32>
    %c28_1446 = arith.constant 28 : index
    %c0_1447 = arith.constant 0 : index
    %c0_1448 = arith.constant 0 : index
    %1795 = vector.load %arg4[%c28_1446, %c0_1447, %c0_1448] : memref<32x36x32xf32, #tpu.memory_space<vmem>>, vector<1x36x32xf32>
    %1796 = vector.shape_cast %1795 : vector<1x36x32xf32> to vector<36x32xf32>
    %cst_1449 = arith.constant dense<0.000000e+00> : vector<8x32xf32>
    %1797 = tpu.matmul %1794, %1796, %cst_1449 {dimension_numbers = #tpu.dot_dimension_numbers<[1], [0], [0], [1], [0, 0, 1, 1], [], []>} : vector<8x36xf32>, vector<36x32xf32>, vector<8x32xf32> -> vector<8x32xf32>
    %1798 = arith.addf %1736, %1797 : vector<8x32xf32>
    %c0_1450 = arith.constant 0 : index
    %c0_1451 = arith.constant 0 : index
    %c0_1452 = arith.constant 0 : index
    %1799 = vector.load %arg3[%c0_1450, %c0_1451, %c0_1452] : memref<9x8x36xf32, #tpu.memory_space<vmem>>, vector<1x8x36xf32>
    %1800 = vector.shape_cast %1799 : vector<1x8x36xf32> to vector<8x36xf32>
    %c0_1453 = arith.constant 0 : index
    %c29 = arith.constant 29 : index
    %1801 = memref.load %arg1[%c0_1453, %c29] : memref<9x32xf32, #tpu.memory_space<smem>>
    %1802 = vector.broadcast %1801 : f32 to vector<8x36xf32>
    %1803 = arith.mulf %1800, %1802 : vector<8x36xf32>
    %c1_1454 = arith.constant 1 : index
    %c0_1455 = arith.constant 0 : index
    %c0_1456 = arith.constant 0 : index
    %1804 = vector.load %arg3[%c1_1454, %c0_1455, %c0_1456] : memref<9x8x36xf32, #tpu.memory_space<vmem>>, vector<1x8x36xf32>
    %1805 = vector.shape_cast %1804 : vector<1x8x36xf32> to vector<8x36xf32>
    %c1_1457 = arith.constant 1 : index
    %c29_1458 = arith.constant 29 : index
    %1806 = memref.load %arg1[%c1_1457, %c29_1458] : memref<9x32xf32, #tpu.memory_space<smem>>
    %1807 = vector.broadcast %1806 : f32 to vector<8x36xf32>
    %1808 = arith.mulf %1805, %1807 : vector<8x36xf32>
    %1809 = arith.addf %1803, %1808 : vector<8x36xf32>
    %c2_1459 = arith.constant 2 : index
    %c0_1460 = arith.constant 0 : index
    %c0_1461 = arith.constant 0 : index
    %1810 = vector.load %arg3[%c2_1459, %c0_1460, %c0_1461] : memref<9x8x36xf32, #tpu.memory_space<vmem>>, vector<1x8x36xf32>
    %1811 = vector.shape_cast %1810 : vector<1x8x36xf32> to vector<8x36xf32>
    %c2_1462 = arith.constant 2 : index
    %c29_1463 = arith.constant 29 : index
    %1812 = memref.load %arg1[%c2_1462, %c29_1463] : memref<9x32xf32, #tpu.memory_space<smem>>
    %1813 = vector.broadcast %1812 : f32 to vector<8x36xf32>
    %1814 = arith.mulf %1811, %1813 : vector<8x36xf32>
    %1815 = arith.addf %1809, %1814 : vector<8x36xf32>
    %c3_1464 = arith.constant 3 : index
    %c0_1465 = arith.constant 0 : index
    %c0_1466 = arith.constant 0 : index
    %1816 = vector.load %arg3[%c3_1464, %c0_1465, %c0_1466] : memref<9x8x36xf32, #tpu.memory_space<vmem>>, vector<1x8x36xf32>
    %1817 = vector.shape_cast %1816 : vector<1x8x36xf32> to vector<8x36xf32>
    %c3_1467 = arith.constant 3 : index
    %c29_1468 = arith.constant 29 : index
    %1818 = memref.load %arg1[%c3_1467, %c29_1468] : memref<9x32xf32, #tpu.memory_space<smem>>
    %1819 = vector.broadcast %1818 : f32 to vector<8x36xf32>
    %1820 = arith.mulf %1817, %1819 : vector<8x36xf32>
    %1821 = arith.addf %1815, %1820 : vector<8x36xf32>
    %c4_1469 = arith.constant 4 : index
    %c0_1470 = arith.constant 0 : index
    %c0_1471 = arith.constant 0 : index
    %1822 = vector.load %arg3[%c4_1469, %c0_1470, %c0_1471] : memref<9x8x36xf32, #tpu.memory_space<vmem>>, vector<1x8x36xf32>
    %1823 = vector.shape_cast %1822 : vector<1x8x36xf32> to vector<8x36xf32>
    %c4_1472 = arith.constant 4 : index
    %c29_1473 = arith.constant 29 : index
    %1824 = memref.load %arg1[%c4_1472, %c29_1473] : memref<9x32xf32, #tpu.memory_space<smem>>
    %1825 = vector.broadcast %1824 : f32 to vector<8x36xf32>
    %1826 = arith.mulf %1823, %1825 : vector<8x36xf32>
    %1827 = arith.addf %1821, %1826 : vector<8x36xf32>
    %c5_1474 = arith.constant 5 : index
    %c0_1475 = arith.constant 0 : index
    %c0_1476 = arith.constant 0 : index
    %1828 = vector.load %arg3[%c5_1474, %c0_1475, %c0_1476] : memref<9x8x36xf32, #tpu.memory_space<vmem>>, vector<1x8x36xf32>
    %1829 = vector.shape_cast %1828 : vector<1x8x36xf32> to vector<8x36xf32>
    %c5_1477 = arith.constant 5 : index
    %c29_1478 = arith.constant 29 : index
    %1830 = memref.load %arg1[%c5_1477, %c29_1478] : memref<9x32xf32, #tpu.memory_space<smem>>
    %1831 = vector.broadcast %1830 : f32 to vector<8x36xf32>
    %1832 = arith.mulf %1829, %1831 : vector<8x36xf32>
    %1833 = arith.addf %1827, %1832 : vector<8x36xf32>
    %c6_1479 = arith.constant 6 : index
    %c0_1480 = arith.constant 0 : index
    %c0_1481 = arith.constant 0 : index
    %1834 = vector.load %arg3[%c6_1479, %c0_1480, %c0_1481] : memref<9x8x36xf32, #tpu.memory_space<vmem>>, vector<1x8x36xf32>
    %1835 = vector.shape_cast %1834 : vector<1x8x36xf32> to vector<8x36xf32>
    %c6_1482 = arith.constant 6 : index
    %c29_1483 = arith.constant 29 : index
    %1836 = memref.load %arg1[%c6_1482, %c29_1483] : memref<9x32xf32, #tpu.memory_space<smem>>
    %1837 = vector.broadcast %1836 : f32 to vector<8x36xf32>
    %1838 = arith.mulf %1835, %1837 : vector<8x36xf32>
    %1839 = arith.addf %1833, %1838 : vector<8x36xf32>
    %c7_1484 = arith.constant 7 : index
    %c0_1485 = arith.constant 0 : index
    %c0_1486 = arith.constant 0 : index
    %1840 = vector.load %arg3[%c7_1484, %c0_1485, %c0_1486] : memref<9x8x36xf32, #tpu.memory_space<vmem>>, vector<1x8x36xf32>
    %1841 = vector.shape_cast %1840 : vector<1x8x36xf32> to vector<8x36xf32>
    %c7_1487 = arith.constant 7 : index
    %c29_1488 = arith.constant 29 : index
    %1842 = memref.load %arg1[%c7_1487, %c29_1488] : memref<9x32xf32, #tpu.memory_space<smem>>
    %1843 = vector.broadcast %1842 : f32 to vector<8x36xf32>
    %1844 = arith.mulf %1841, %1843 : vector<8x36xf32>
    %1845 = arith.addf %1839, %1844 : vector<8x36xf32>
    %c8_1489 = arith.constant 8 : index
    %c0_1490 = arith.constant 0 : index
    %c0_1491 = arith.constant 0 : index
    %1846 = vector.load %arg3[%c8_1489, %c0_1490, %c0_1491] : memref<9x8x36xf32, #tpu.memory_space<vmem>>, vector<1x8x36xf32>
    %1847 = vector.shape_cast %1846 : vector<1x8x36xf32> to vector<8x36xf32>
    %c8_1492 = arith.constant 8 : index
    %c29_1493 = arith.constant 29 : index
    %1848 = memref.load %arg1[%c8_1492, %c29_1493] : memref<9x32xf32, #tpu.memory_space<smem>>
    %1849 = vector.broadcast %1848 : f32 to vector<8x36xf32>
    %1850 = arith.mulf %1847, %1849 : vector<8x36xf32>
    %1851 = arith.addf %1845, %1850 : vector<8x36xf32>
    %c29_1494 = arith.constant 29 : index
    %1852 = memref.load %arg2[%c29_1494] : memref<32xf32, #tpu.memory_space<smem>>
    %1853 = vector.broadcast %1852 : f32 to vector<8x36xf32>
    %1854 = arith.addf %1851, %1853 : vector<8x36xf32>
    %cst_1495 = arith.constant 0.000000e+00 : f32
    %1855 = vector.broadcast %cst_1495 : f32 to vector<8x36xf32>
    %1856 = arith.maximumf %1854, %1855 : vector<8x36xf32>
    %c29_1496 = arith.constant 29 : index
    %c0_1497 = arith.constant 0 : index
    %c0_1498 = arith.constant 0 : index
    %1857 = vector.load %arg4[%c29_1496, %c0_1497, %c0_1498] : memref<32x36x32xf32, #tpu.memory_space<vmem>>, vector<1x36x32xf32>
    %1858 = vector.shape_cast %1857 : vector<1x36x32xf32> to vector<36x32xf32>
    %cst_1499 = arith.constant dense<0.000000e+00> : vector<8x32xf32>
    %1859 = tpu.matmul %1856, %1858, %cst_1499 {dimension_numbers = #tpu.dot_dimension_numbers<[1], [0], [0], [1], [0, 0, 1, 1], [], []>} : vector<8x36xf32>, vector<36x32xf32>, vector<8x32xf32> -> vector<8x32xf32>
    %1860 = arith.addf %1798, %1859 : vector<8x32xf32>
    %c0_1500 = arith.constant 0 : index
    %c0_1501 = arith.constant 0 : index
    %c0_1502 = arith.constant 0 : index
    %1861 = vector.load %arg3[%c0_1500, %c0_1501, %c0_1502] : memref<9x8x36xf32, #tpu.memory_space<vmem>>, vector<1x8x36xf32>
    %1862 = vector.shape_cast %1861 : vector<1x8x36xf32> to vector<8x36xf32>
    %c0_1503 = arith.constant 0 : index
    %c30 = arith.constant 30 : index
    %1863 = memref.load %arg1[%c0_1503, %c30] : memref<9x32xf32, #tpu.memory_space<smem>>
    %1864 = vector.broadcast %1863 : f32 to vector<8x36xf32>
    %1865 = arith.mulf %1862, %1864 : vector<8x36xf32>
    %c1_1504 = arith.constant 1 : index
    %c0_1505 = arith.constant 0 : index
    %c0_1506 = arith.constant 0 : index
    %1866 = vector.load %arg3[%c1_1504, %c0_1505, %c0_1506] : memref<9x8x36xf32, #tpu.memory_space<vmem>>, vector<1x8x36xf32>
    %1867 = vector.shape_cast %1866 : vector<1x8x36xf32> to vector<8x36xf32>
    %c1_1507 = arith.constant 1 : index
    %c30_1508 = arith.constant 30 : index
    %1868 = memref.load %arg1[%c1_1507, %c30_1508] : memref<9x32xf32, #tpu.memory_space<smem>>
    %1869 = vector.broadcast %1868 : f32 to vector<8x36xf32>
    %1870 = arith.mulf %1867, %1869 : vector<8x36xf32>
    %1871 = arith.addf %1865, %1870 : vector<8x36xf32>
    %c2_1509 = arith.constant 2 : index
    %c0_1510 = arith.constant 0 : index
    %c0_1511 = arith.constant 0 : index
    %1872 = vector.load %arg3[%c2_1509, %c0_1510, %c0_1511] : memref<9x8x36xf32, #tpu.memory_space<vmem>>, vector<1x8x36xf32>
    %1873 = vector.shape_cast %1872 : vector<1x8x36xf32> to vector<8x36xf32>
    %c2_1512 = arith.constant 2 : index
    %c30_1513 = arith.constant 30 : index
    %1874 = memref.load %arg1[%c2_1512, %c30_1513] : memref<9x32xf32, #tpu.memory_space<smem>>
    %1875 = vector.broadcast %1874 : f32 to vector<8x36xf32>
    %1876 = arith.mulf %1873, %1875 : vector<8x36xf32>
    %1877 = arith.addf %1871, %1876 : vector<8x36xf32>
    %c3_1514 = arith.constant 3 : index
    %c0_1515 = arith.constant 0 : index
    %c0_1516 = arith.constant 0 : index
    %1878 = vector.load %arg3[%c3_1514, %c0_1515, %c0_1516] : memref<9x8x36xf32, #tpu.memory_space<vmem>>, vector<1x8x36xf32>
    %1879 = vector.shape_cast %1878 : vector<1x8x36xf32> to vector<8x36xf32>
    %c3_1517 = arith.constant 3 : index
    %c30_1518 = arith.constant 30 : index
    %1880 = memref.load %arg1[%c3_1517, %c30_1518] : memref<9x32xf32, #tpu.memory_space<smem>>
    %1881 = vector.broadcast %1880 : f32 to vector<8x36xf32>
    %1882 = arith.mulf %1879, %1881 : vector<8x36xf32>
    %1883 = arith.addf %1877, %1882 : vector<8x36xf32>
    %c4_1519 = arith.constant 4 : index
    %c0_1520 = arith.constant 0 : index
    %c0_1521 = arith.constant 0 : index
    %1884 = vector.load %arg3[%c4_1519, %c0_1520, %c0_1521] : memref<9x8x36xf32, #tpu.memory_space<vmem>>, vector<1x8x36xf32>
    %1885 = vector.shape_cast %1884 : vector<1x8x36xf32> to vector<8x36xf32>
    %c4_1522 = arith.constant 4 : index
    %c30_1523 = arith.constant 30 : index
    %1886 = memref.load %arg1[%c4_1522, %c30_1523] : memref<9x32xf32, #tpu.memory_space<smem>>
    %1887 = vector.broadcast %1886 : f32 to vector<8x36xf32>
    %1888 = arith.mulf %1885, %1887 : vector<8x36xf32>
    %1889 = arith.addf %1883, %1888 : vector<8x36xf32>
    %c5_1524 = arith.constant 5 : index
    %c0_1525 = arith.constant 0 : index
    %c0_1526 = arith.constant 0 : index
    %1890 = vector.load %arg3[%c5_1524, %c0_1525, %c0_1526] : memref<9x8x36xf32, #tpu.memory_space<vmem>>, vector<1x8x36xf32>
    %1891 = vector.shape_cast %1890 : vector<1x8x36xf32> to vector<8x36xf32>
    %c5_1527 = arith.constant 5 : index
    %c30_1528 = arith.constant 30 : index
    %1892 = memref.load %arg1[%c5_1527, %c30_1528] : memref<9x32xf32, #tpu.memory_space<smem>>
    %1893 = vector.broadcast %1892 : f32 to vector<8x36xf32>
    %1894 = arith.mulf %1891, %1893 : vector<8x36xf32>
    %1895 = arith.addf %1889, %1894 : vector<8x36xf32>
    %c6_1529 = arith.constant 6 : index
    %c0_1530 = arith.constant 0 : index
    %c0_1531 = arith.constant 0 : index
    %1896 = vector.load %arg3[%c6_1529, %c0_1530, %c0_1531] : memref<9x8x36xf32, #tpu.memory_space<vmem>>, vector<1x8x36xf32>
    %1897 = vector.shape_cast %1896 : vector<1x8x36xf32> to vector<8x36xf32>
    %c6_1532 = arith.constant 6 : index
    %c30_1533 = arith.constant 30 : index
    %1898 = memref.load %arg1[%c6_1532, %c30_1533] : memref<9x32xf32, #tpu.memory_space<smem>>
    %1899 = vector.broadcast %1898 : f32 to vector<8x36xf32>
    %1900 = arith.mulf %1897, %1899 : vector<8x36xf32>
    %1901 = arith.addf %1895, %1900 : vector<8x36xf32>
    %c7_1534 = arith.constant 7 : index
    %c0_1535 = arith.constant 0 : index
    %c0_1536 = arith.constant 0 : index
    %1902 = vector.load %arg3[%c7_1534, %c0_1535, %c0_1536] : memref<9x8x36xf32, #tpu.memory_space<vmem>>, vector<1x8x36xf32>
    %1903 = vector.shape_cast %1902 : vector<1x8x36xf32> to vector<8x36xf32>
    %c7_1537 = arith.constant 7 : index
    %c30_1538 = arith.constant 30 : index
    %1904 = memref.load %arg1[%c7_1537, %c30_1538] : memref<9x32xf32, #tpu.memory_space<smem>>
    %1905 = vector.broadcast %1904 : f32 to vector<8x36xf32>
    %1906 = arith.mulf %1903, %1905 : vector<8x36xf32>
    %1907 = arith.addf %1901, %1906 : vector<8x36xf32>
    %c8_1539 = arith.constant 8 : index
    %c0_1540 = arith.constant 0 : index
    %c0_1541 = arith.constant 0 : index
    %1908 = vector.load %arg3[%c8_1539, %c0_1540, %c0_1541] : memref<9x8x36xf32, #tpu.memory_space<vmem>>, vector<1x8x36xf32>
    %1909 = vector.shape_cast %1908 : vector<1x8x36xf32> to vector<8x36xf32>
    %c8_1542 = arith.constant 8 : index
    %c30_1543 = arith.constant 30 : index
    %1910 = memref.load %arg1[%c8_1542, %c30_1543] : memref<9x32xf32, #tpu.memory_space<smem>>
    %1911 = vector.broadcast %1910 : f32 to vector<8x36xf32>
    %1912 = arith.mulf %1909, %1911 : vector<8x36xf32>
    %1913 = arith.addf %1907, %1912 : vector<8x36xf32>
    %c30_1544 = arith.constant 30 : index
    %1914 = memref.load %arg2[%c30_1544] : memref<32xf32, #tpu.memory_space<smem>>
    %1915 = vector.broadcast %1914 : f32 to vector<8x36xf32>
    %1916 = arith.addf %1913, %1915 : vector<8x36xf32>
    %cst_1545 = arith.constant 0.000000e+00 : f32
    %1917 = vector.broadcast %cst_1545 : f32 to vector<8x36xf32>
    %1918 = arith.maximumf %1916, %1917 : vector<8x36xf32>
    %c30_1546 = arith.constant 30 : index
    %c0_1547 = arith.constant 0 : index
    %c0_1548 = arith.constant 0 : index
    %1919 = vector.load %arg4[%c30_1546, %c0_1547, %c0_1548] : memref<32x36x32xf32, #tpu.memory_space<vmem>>, vector<1x36x32xf32>
    %1920 = vector.shape_cast %1919 : vector<1x36x32xf32> to vector<36x32xf32>
    %cst_1549 = arith.constant dense<0.000000e+00> : vector<8x32xf32>
    %1921 = tpu.matmul %1918, %1920, %cst_1549 {dimension_numbers = #tpu.dot_dimension_numbers<[1], [0], [0], [1], [0, 0, 1, 1], [], []>} : vector<8x36xf32>, vector<36x32xf32>, vector<8x32xf32> -> vector<8x32xf32>
    %1922 = arith.addf %1860, %1921 : vector<8x32xf32>
    %c0_1550 = arith.constant 0 : index
    %c0_1551 = arith.constant 0 : index
    %c0_1552 = arith.constant 0 : index
    %1923 = vector.load %arg3[%c0_1550, %c0_1551, %c0_1552] : memref<9x8x36xf32, #tpu.memory_space<vmem>>, vector<1x8x36xf32>
    %1924 = vector.shape_cast %1923 : vector<1x8x36xf32> to vector<8x36xf32>
    %c0_1553 = arith.constant 0 : index
    %c31 = arith.constant 31 : index
    %1925 = memref.load %arg1[%c0_1553, %c31] : memref<9x32xf32, #tpu.memory_space<smem>>
    %1926 = vector.broadcast %1925 : f32 to vector<8x36xf32>
    %1927 = arith.mulf %1924, %1926 : vector<8x36xf32>
    %c1_1554 = arith.constant 1 : index
    %c0_1555 = arith.constant 0 : index
    %c0_1556 = arith.constant 0 : index
    %1928 = vector.load %arg3[%c1_1554, %c0_1555, %c0_1556] : memref<9x8x36xf32, #tpu.memory_space<vmem>>, vector<1x8x36xf32>
    %1929 = vector.shape_cast %1928 : vector<1x8x36xf32> to vector<8x36xf32>
    %c1_1557 = arith.constant 1 : index
    %c31_1558 = arith.constant 31 : index
    %1930 = memref.load %arg1[%c1_1557, %c31_1558] : memref<9x32xf32, #tpu.memory_space<smem>>
    %1931 = vector.broadcast %1930 : f32 to vector<8x36xf32>
    %1932 = arith.mulf %1929, %1931 : vector<8x36xf32>
    %1933 = arith.addf %1927, %1932 : vector<8x36xf32>
    %c2_1559 = arith.constant 2 : index
    %c0_1560 = arith.constant 0 : index
    %c0_1561 = arith.constant 0 : index
    %1934 = vector.load %arg3[%c2_1559, %c0_1560, %c0_1561] : memref<9x8x36xf32, #tpu.memory_space<vmem>>, vector<1x8x36xf32>
    %1935 = vector.shape_cast %1934 : vector<1x8x36xf32> to vector<8x36xf32>
    %c2_1562 = arith.constant 2 : index
    %c31_1563 = arith.constant 31 : index
    %1936 = memref.load %arg1[%c2_1562, %c31_1563] : memref<9x32xf32, #tpu.memory_space<smem>>
    %1937 = vector.broadcast %1936 : f32 to vector<8x36xf32>
    %1938 = arith.mulf %1935, %1937 : vector<8x36xf32>
    %1939 = arith.addf %1933, %1938 : vector<8x36xf32>
    %c3_1564 = arith.constant 3 : index
    %c0_1565 = arith.constant 0 : index
    %c0_1566 = arith.constant 0 : index
    %1940 = vector.load %arg3[%c3_1564, %c0_1565, %c0_1566] : memref<9x8x36xf32, #tpu.memory_space<vmem>>, vector<1x8x36xf32>
    %1941 = vector.shape_cast %1940 : vector<1x8x36xf32> to vector<8x36xf32>
    %c3_1567 = arith.constant 3 : index
    %c31_1568 = arith.constant 31 : index
    %1942 = memref.load %arg1[%c3_1567, %c31_1568] : memref<9x32xf32, #tpu.memory_space<smem>>
    %1943 = vector.broadcast %1942 : f32 to vector<8x36xf32>
    %1944 = arith.mulf %1941, %1943 : vector<8x36xf32>
    %1945 = arith.addf %1939, %1944 : vector<8x36xf32>
    %c4_1569 = arith.constant 4 : index
    %c0_1570 = arith.constant 0 : index
    %c0_1571 = arith.constant 0 : index
    %1946 = vector.load %arg3[%c4_1569, %c0_1570, %c0_1571] : memref<9x8x36xf32, #tpu.memory_space<vmem>>, vector<1x8x36xf32>
    %1947 = vector.shape_cast %1946 : vector<1x8x36xf32> to vector<8x36xf32>
    %c4_1572 = arith.constant 4 : index
    %c31_1573 = arith.constant 31 : index
    %1948 = memref.load %arg1[%c4_1572, %c31_1573] : memref<9x32xf32, #tpu.memory_space<smem>>
    %1949 = vector.broadcast %1948 : f32 to vector<8x36xf32>
    %1950 = arith.mulf %1947, %1949 : vector<8x36xf32>
    %1951 = arith.addf %1945, %1950 : vector<8x36xf32>
    %c5_1574 = arith.constant 5 : index
    %c0_1575 = arith.constant 0 : index
    %c0_1576 = arith.constant 0 : index
    %1952 = vector.load %arg3[%c5_1574, %c0_1575, %c0_1576] : memref<9x8x36xf32, #tpu.memory_space<vmem>>, vector<1x8x36xf32>
    %1953 = vector.shape_cast %1952 : vector<1x8x36xf32> to vector<8x36xf32>
    %c5_1577 = arith.constant 5 : index
    %c31_1578 = arith.constant 31 : index
    %1954 = memref.load %arg1[%c5_1577, %c31_1578] : memref<9x32xf32, #tpu.memory_space<smem>>
    %1955 = vector.broadcast %1954 : f32 to vector<8x36xf32>
    %1956 = arith.mulf %1953, %1955 : vector<8x36xf32>
    %1957 = arith.addf %1951, %1956 : vector<8x36xf32>
    %c6_1579 = arith.constant 6 : index
    %c0_1580 = arith.constant 0 : index
    %c0_1581 = arith.constant 0 : index
    %1958 = vector.load %arg3[%c6_1579, %c0_1580, %c0_1581] : memref<9x8x36xf32, #tpu.memory_space<vmem>>, vector<1x8x36xf32>
    %1959 = vector.shape_cast %1958 : vector<1x8x36xf32> to vector<8x36xf32>
    %c6_1582 = arith.constant 6 : index
    %c31_1583 = arith.constant 31 : index
    %1960 = memref.load %arg1[%c6_1582, %c31_1583] : memref<9x32xf32, #tpu.memory_space<smem>>
    %1961 = vector.broadcast %1960 : f32 to vector<8x36xf32>
    %1962 = arith.mulf %1959, %1961 : vector<8x36xf32>
    %1963 = arith.addf %1957, %1962 : vector<8x36xf32>
    %c7_1584 = arith.constant 7 : index
    %c0_1585 = arith.constant 0 : index
    %c0_1586 = arith.constant 0 : index
    %1964 = vector.load %arg3[%c7_1584, %c0_1585, %c0_1586] : memref<9x8x36xf32, #tpu.memory_space<vmem>>, vector<1x8x36xf32>
    %1965 = vector.shape_cast %1964 : vector<1x8x36xf32> to vector<8x36xf32>
    %c7_1587 = arith.constant 7 : index
    %c31_1588 = arith.constant 31 : index
    %1966 = memref.load %arg1[%c7_1587, %c31_1588] : memref<9x32xf32, #tpu.memory_space<smem>>
    %1967 = vector.broadcast %1966 : f32 to vector<8x36xf32>
    %1968 = arith.mulf %1965, %1967 : vector<8x36xf32>
    %1969 = arith.addf %1963, %1968 : vector<8x36xf32>
    %c8_1589 = arith.constant 8 : index
    %c0_1590 = arith.constant 0 : index
    %c0_1591 = arith.constant 0 : index
    %1970 = vector.load %arg3[%c8_1589, %c0_1590, %c0_1591] : memref<9x8x36xf32, #tpu.memory_space<vmem>>, vector<1x8x36xf32>
    %1971 = vector.shape_cast %1970 : vector<1x8x36xf32> to vector<8x36xf32>
    %c8_1592 = arith.constant 8 : index
    %c31_1593 = arith.constant 31 : index
    %1972 = memref.load %arg1[%c8_1592, %c31_1593] : memref<9x32xf32, #tpu.memory_space<smem>>
    %1973 = vector.broadcast %1972 : f32 to vector<8x36xf32>
    %1974 = arith.mulf %1971, %1973 : vector<8x36xf32>
    %1975 = arith.addf %1969, %1974 : vector<8x36xf32>
    %c31_1594 = arith.constant 31 : index
    %1976 = memref.load %arg2[%c31_1594] : memref<32xf32, #tpu.memory_space<smem>>
    %1977 = vector.broadcast %1976 : f32 to vector<8x36xf32>
    %1978 = arith.addf %1975, %1977 : vector<8x36xf32>
    %cst_1595 = arith.constant 0.000000e+00 : f32
    %1979 = vector.broadcast %cst_1595 : f32 to vector<8x36xf32>
    %1980 = arith.maximumf %1978, %1979 : vector<8x36xf32>
    %c31_1596 = arith.constant 31 : index
    %c0_1597 = arith.constant 0 : index
    %c0_1598 = arith.constant 0 : index
    %1981 = vector.load %arg4[%c31_1596, %c0_1597, %c0_1598] : memref<32x36x32xf32, #tpu.memory_space<vmem>>, vector<1x36x32xf32>
    %1982 = vector.shape_cast %1981 : vector<1x36x32xf32> to vector<36x32xf32>
    %cst_1599 = arith.constant dense<0.000000e+00> : vector<8x32xf32>
    %1983 = tpu.matmul %1980, %1982, %cst_1599 {dimension_numbers = #tpu.dot_dimension_numbers<[1], [0], [0], [1], [0, 0, 1, 1], [], []>} : vector<8x36xf32>, vector<36x32xf32>, vector<8x32xf32> -> vector<8x32xf32>
    %1984 = arith.addf %1922, %1983 : vector<8x32xf32>
    %c0_1600 = arith.constant 0 : index
    %c0_1601 = arith.constant 0 : index
    %1985 = vector.load %arg5[%c0_1600, %c0_1601] : memref<1x32xf32, #tpu.memory_space<vmem>>, vector<1x32xf32>
    %1986 = vector.broadcast %1985 : vector<1x32xf32> to vector<8x32xf32>
    %1987 = arith.addf %1984, %1986 : vector<8x32xf32>
    %cst_1602 = arith.constant 0.000000e+00 : f32
    %1988 = vector.broadcast %cst_1602 : f32 to vector<8x32xf32>
    %1989 = arith.maximumf %1987, %1988 : vector<8x32xf32>
    %c0_1603 = arith.constant 0 : index
    %c0_1604 = arith.constant 0 : index
    %1990 = vector.load %arg6[%c0_1603, %c0_1604] : memref<8x32xf32, #tpu.memory_space<vmem>>, vector<8x32xf32>
    tpu.vector_store %arg6[%c0_1603, %c0_1604], %1989 {strides = array<i32>} : memref<8x32xf32, #tpu.memory_space<vmem>>, vector<8x32xf32>,
    return
  }
  func.func @transform_0(%arg0: i32) -> (i32, i32) {
    %c0_i32 = arith.constant 0 : i32
    %c0_i32_0 = arith.constant 0 : i32
    %c0_i32_1 = arith.constant 0 : i32
    return %c0_i32, %c0_i32_0 : i32, i32
  }
  func.func @transform_1(%arg0: i32) -> i32 {
    %c0_i32 = arith.constant 0 : i32
    %c0_i32_0 = arith.constant 0 : i32
    return %c0_i32 : i32
  }
  func.func @transform_2(%arg0: i32) -> (i32, i32, i32) {
    %c0_i32 = arith.constant 0 : i32
    %c0_i32_0 = arith.constant 0 : i32
    %c0_i32_1 = arith.constant 0 : i32
    return %c0_i32, %arg0, %c0_i32_0 : i32, i32, i32
  }
  func.func @transform_3(%arg0: i32) -> (i32, i32, i32) {
    %c0_i32 = arith.constant 0 : i32
    %c0_i32_0 = arith.constant 0 : i32
    %c0_i32_1 = arith.constant 0 : i32
    %c0_i32_2 = arith.constant 0 : i32
    return %c0_i32, %c0_i32_0, %c0_i32_1 : i32, i32, i32
  }
  func.func @transform_4(%arg0: i32) -> (i32, i32) {
    %c0_i32 = arith.constant 0 : i32
    %c0_i32_0 = arith.constant 0 : i32
    %c0_i32_1 = arith.constant 0 : i32
    return %c0_i32, %c0_i32_0 : i32, i32
  }
  func.func @transform_5(%arg0: i32) -> (i32, i32) {
    %c0_i32 = arith.constant 0 : i32
    %c0_i32_0 = arith.constant 0 : i32
    return %arg0, %c0_i32 : i32, i32
  }
}

</mosaic_0001>

<llo_original>
// kernel: conve_forward.3
$region0: #{conve_forward.3}
  #allocation0 [shape = 'u32[]', space=smem, size = 0x4, offset = 0x4, fixed_abs, tag = 'smem constant byte address 0x4 - core index']
  #allocation1 [shape = 'u32[144,128]{1,0:T(1,128)}', space=vmem, size = 0x12000, scoped, tag = 'internal scratch']
  %s0 = inlined_call_operand.vmem [shape: f32[8,32], index: 0, kind: input, shape index: {}]
  %s1 = inlined_call_operand.vmem [shape: f32[32,384], index: 1, kind: input, shape index: {}]
  %s2 = inlined_call_operand.vmem [shape: f32[1,384], index: 2, kind: input, shape index: {}]
  %s3 = inlined_call_operand.vmem [shape: f32[8,384], index: 3, kind: output, shape index: {}]
  %s4 = sld [smem:[#allocation0]]
  $region83: #{conve_forward.3} parent=0
    _
  %s6 = ssub.s32 1, %s4
  %s7 = scalar_select 0, %s6, %s4
  $region1: #{conve_forward.3} parent=0
    #allocation2 [shape = 'u8[32768]{0}', space=vmem, size = 0x8000, scoped, tag = 'input window, operand 1']
    loop: start=0, step=1, limit=5
    $region2: #{conve_forward.3} parent=1 // loop_pre_header
      _
    $region3: #{conve_forward.3} parent=1 // loop_header
      %s9 = sphi 0, %s13
      %p10 = scmp.ge.s32.totalorder %s9, 5
      %s17 = sphi 0, %s17
      %s19 = sphi 0, %s17
      %s20 = sphi 0, %s19
      %s34 = sphi 0, %s20
      %s40 = sphi 0, %s42
      %s43 = sphi 0, %s40
      %s44 = sphi 0, %s43
      %s60 = sphi 0, %s44
      %s66 = sphi 0, %s68
      %s69 = sphi 0, %s66
      %s70 = sphi 0, %s69
      %s86 = sphi 0, %s70
      %s92 = sphi 0, %s94
      %s95 = sphi 0, %s92
      %s96 = sphi 0, %s95
      %s112 = sphi 0, %s96
    $region4: #{conve_forward.3} parent=1 // loop_header_branch
      %12 = sbr.rel (%p10) target = $region8
    $region5: #{conve_forward.3} parent=1 // loop_body
      %s14 = ssub.s32 %s9, 1
      %s15 = ssub.s32 %s9, 2
      %s16 = sadd.s32 %s9, 1
      %s18 = sadd.s32 %s17, 1
      %p21 = scmp.eq.s32.totalorder %s9, 2
      %p22 = scmp.ne.s32.totalorder %s17, %s19
      %p23 = scmp.eq.s32.totalorder %s9, 0
      %p24 = por %p22, %p23
      %p25 = scmp.ne.s32.totalorder %s17, %s19
      %p26 = scmp.eq.s32.totalorder %s14, 2
      %p27 = por %p25, %p26
      %p28 = scmp.ne.s32.totalorder %s19, %s20
      %p29 = scmp.eq.s32.totalorder %s14, 0
      %p30 = por %p28, %p29
      %p31 = scmp.ne.s32.totalorder %s19, %s20
      %p32 = scmp.eq.s32.totalorder %s15, 2
      %p33 = por %p31, %p32
      %p35 = scmp.ne.s32.totalorder %s20, %s34
      %p36 = scmp.eq.s32.totalorder %s15, 0
      %p37 = por %p35, %p36
      %s38 = ssub.s32 %s9, %s16
      %p39 = scmp.eq.s32.totalorder %s38, 0
      %s41 = sadd.s32 %s40, 1
      %s42 = scalar_select %p39, %s40, %s41
      %p45 = pneg %p39
      %p46 = scmp.eq.s32.totalorder %s9, 2
      %p47 = por %p45, %p46
      %p48 = scmp.ne.s32.totalorder %s40, %s43
      %p49 = scmp.eq.s32.totalorder %s9, 0
      %p50 = por %p48, %p49
      %p51 = scmp.ne.s32.totalorder %s40, %s43
      %p52 = scmp.eq.s32.totalorder %s14, 2
      %p53 = por %p51, %p52
      %p54 = scmp.ne.s32.totalorder %s43, %s44
      %p55 = scmp.eq.s32.totalorder %s14, 0
      %p56 = por %p54, %p55
      %p57 = scmp.ne.s32.totalorder %s43, %s44
      %p58 = scmp.eq.s32.totalorder %s15, 2
      %p59 = por %p57, %p58
      %p61 = scmp.ne.s32.totalorder %s44, %s60
      %p62 = scmp.eq.s32.totalorder %s15, 0
      %p63 = por %p61, %p62
      %s64 = ssub.s32 %s9, %s16
      %p65 = scmp.eq.s32.totalorder %s64, 0
      %s67 = sadd.s32 %s66, 1
      %s68 = scalar_select %p65, %s66, %s67
      %p71 = pneg %p65
      %p72 = scmp.eq.s32.totalorder %s9, 2
      %p73 = por %p71, %p72
      %p74 = scmp.ne.s32.totalorder %s66, %s69
      %p75 = scmp.eq.s32.totalorder %s9, 0
      %p76 = por %p74, %p75
      %p77 = scmp.ne.s32.totalorder %s66, %s69
      %p78 = scmp.eq.s32.totalorder %s14, 2
      %p79 = por %p77, %p78
      %p80 = scmp.ne.s32.totalorder %s69, %s70
      %p81 = scmp.eq.s32.totalorder %s14, 0
      %p82 = por %p80, %p81
      %p83 = scmp.ne.s32.totalorder %s69, %s70
      %p84 = scmp.eq.s32.totalorder %s15, 2
      %p85 = por %p83, %p84
      %p87 = scmp.ne.s32.totalorder %s70, %s86
      %p88 = scmp.eq.s32.totalorder %s15, 0
      %p89 = por %p87, %p88
      %s90 = ssub.s32 %s9, %s16
      %p91 = scmp.eq.s32.totalorder %s90, 0
      %s93 = sadd.s32 %s92, 1
      %s94 = scalar_select %p91, %s92, %s93
      %p97 = pneg %p91
      %p98 = scmp.eq.s32.totalorder %s9, 2
      %p99 = por %p97, %p98
      %p100 = scmp.ne.s32.totalorder %s92, %s95
      %p101 = scmp.eq.s32.totalorder %s9, 0
      %p102 = por %p100, %p101
      %p103 = scmp.ne.s32.totalorder %s92, %s95
      %p104 = scmp.eq.s32.totalorder %s14, 2
      %p105 = por %p103, %p104
      %p106 = scmp.ne.s32.totalorder %s95, %s96
      %p107 = scmp.eq.s32.totalorder %s14, 0
      %p108 = por %p106, %p107
      %p109 = scmp.ne.s32.totalorder %s95, %s96
      %p110 = scmp.eq.s32.totalorder %s15, 2
      %p111 = por %p109, %p110
      %p113 = scmp.ne.s32.totalorder %s96, %s112
      %p114 = scmp.eq.s32.totalorder %s15, 0
      %p115 = por %p113, %p114
      %p116 = scmp.le.s32.totalorder 1, %s9
      %p117 = scmp.lt.s32.totalorder %s9, 4
      %p118 = pnand %p116, %p117
      %p119 = pneg %p118
      // Predicated region
      $region9: #{conve_forward.3} parent=5 // pred_check
        _
      $region10: #{conve_forward.3} parent=5 // pred_check_branch
        %121 = sbr.rel (%p118) target = $region12
      $region11: #{conve_forward.3} parent=5 // pred_region
        %s122 = ssub.s32 %s9, 1
        // Predicated region
        $region13: #{conve_forward.3} parent=11 // pred_check
          %p123 = pneg %p30
        $region14: #{conve_forward.3} parent=11 // pred_check_branch
          %125 = sbr.rel (%p123) target = $region16
        $region15: #{conve_forward.3} parent=11 // pred_region
          _
        $region16: #{conve_forward.3} parent=11 // pred_fallthru
          _
      $region12: #{conve_forward.3} parent=5 // pred_fallthru
        _
      %p126 = scmp.lt.s32.totalorder %s9, 3
      // Predicated region
      $region17: #{conve_forward.3} parent=5 // pred_check
        %p127 = pneg %p126
      $region18: #{conve_forward.3} parent=5 // pred_check_branch
        %129 = sbr.rel (%p127) target = $region20
      $region19: #{conve_forward.3} parent=5 // pred_region
        // Predicated region
        $region21: #{conve_forward.3} parent=19 // pred_check
          %p130 = pneg %p50
        $region22: #{conve_forward.3} parent=19 // pred_check_branch
          %132 = sbr.rel (%p130) target = $region24
        $region23: #{conve_forward.3} parent=19 // pred_region
          %s133 = sand.u32 %s40, 1
          %s134 = sand.u32 %s40, 1
          %s135 = smul.addr %s134, 32
          %s136 = scalar_lea.vmem [#allocation2], %s135
          %s137 = smul.addr %s9, 8
          %s138 = scalar_lea.vmem %s1, %s137
          // Predicated region
          $region25: #{conve_forward.3} parent=23 // pred_check
            _
          $region26: #{conve_forward.3} parent=23 // pred_check_branch
            %140 = sbr.rel (0) target = $region28
          $region27: #{conve_forward.3} parent=23 // pred_region
            // Predicated region
            $region29: #{conve_forward.3} parent=27 // pred_check
              _
            $region30: #{conve_forward.3} parent=27 // pred_check_branch
              %142 = sbr.rel (0) target = $region32
            $region31: #{conve_forward.3} parent=27 // pred_region
              // Predicated region
              $region44: #{conve_forward.3} parent=31 // pred_check
                _
              $region45: #{conve_forward.3} parent=31 // pred_check_branch
                %163 = sbr.rel (0) target = $region47
              $region46: #{conve_forward.3} parent=31 // pred_region
                loop: start=0, step=1, limit=1
                $region48: #{conve_forward.3} parent=46 // loop_pre_header
                  _
                $region49: #{conve_forward.3} parent=46 // loop_header
                  %s165 = sphi 0, %s169
                  %p166 = scmp.ge.s32.totalorder %s165, 1
                  %s170 = sphi %s138, %s138
                  %s171 = sphi %s136, %s136
                $region50: #{conve_forward.3} parent=46 // loop_header_branch
                  %168 = sbr.rel (%p166) target = $region54
                $region51: #{conve_forward.3} parent=46 // loop_body
                  %v172 = vld [vmem:[%s170] sm:$0xff]
                  %173 = vst [vmem:[%s171] sm:$0xff] %v172
                  %v174 = vld [vmem:[%s170 + $0x18] sm:$0xff]
                  %175 = vst [vmem:[%s171 + $0x8] sm:$0xff] %v174
                  %v176 = vld [vmem:[%s170 + $0x30] sm:$0xff]
                  %177 = vst [vmem:[%s171 + $0x10] sm:$0xff] %v176
                  %v178 = vld [vmem:[%s170 + $0x48] sm:$0xff]
                  %179 = vst [vmem:[%s171 + $0x18] sm:$0xff] %v178
                $region52: #{conve_forward.3} parent=46 // loop_footer
                  %s169 = sadd.s32 1, %s165
                $region53: #{conve_forward.3} parent=46 // loop_footer_branch
                  %164 = sbr.rel target = $region49
                $region54: #{conve_forward.3} parent=46 // loop_exit
                  _
              $region47: #{conve_forward.3} parent=31 // pred_fallthru
                _
              // Predicated region
              $region55: #{conve_forward.3} parent=31 // pred_check
                _
              $region56: #{conve_forward.3} parent=31 // pred_check_branch
                %181 = sbr.rel target = $region58
              $region57: #{conve_forward.3} parent=31 // pred_region
                _
              $region58: #{conve_forward.3} parent=31 // pred_fallthru
                _
            $region32: #{conve_forward.3} parent=27 // pred_fallthru
              _
            // Predicated region
            $region33: #{conve_forward.3} parent=27 // pred_check
              _
            $region34: #{conve_forward.3} parent=27 // pred_check_branch
              %144 = sbr.rel target = $region36
            $region35: #{conve_forward.3} parent=27 // pred_region
              loop: start=0, step=1, limit=1
              $region37: #{conve_forward.3} parent=35 // loop_pre_header
                _
              $region38: #{conve_forward.3} parent=35 // loop_header
                %s147 = sphi 0, %s151
                %p148 = scmp.ge.s32.totalorder %s147, 1
                %s152 = sphi %s138, %s138
                %s153 = sphi %s136, %s136
              $region39: #{conve_forward.3} parent=35 // loop_header_branch
                %150 = sbr.rel (%p148) target = $region43
              $region40: #{conve_forward.3} parent=35 // loop_body
                %v154 = vld [vmem:[%s152] sm:$0xff]
                %155 = vst [vmem:[%s153] sm:$0xff] %v154
                %v156 = vld [vmem:[%s152 + $0x18] sm:$0xff]
                %157 = vst [vmem:[%s153 + $0x8] sm:$0xff] %v156
                %v158 = vld [vmem:[%s152 + $0x30] sm:$0xff]
                %159 = vst [vmem:[%s153 + $0x10] sm:$0xff] %v158
                %v160 = vld [vmem:[%s152 + $0x48] sm:$0xff]
                %161 = vst [vmem:[%s153 + $0x18] sm:$0xff] %v160
              $region41: #{conve_forward.3} parent=35 // loop_footer
                %s151 = sadd.s32 1, %s147
              $region42: #{conve_forward.3} parent=35 // loop_footer_branch
                %146 = sbr.rel target = $region38
              $region43: #{conve_forward.3} parent=35 // loop_exit
                _
            $region36: #{conve_forward.3} parent=27 // pred_fallthru
              _
          $region28: #{conve_forward.3} parent=23 // pred_fallthru
            _
          %182 = vnop
        $region24: #{conve_forward.3} parent=19 // pred_fallthru
          _
        // Predicated region
        $region59: #{conve_forward.3} parent=19 // pred_check
          %p183 = pneg %p76
        $region60: #{conve_forward.3} parent=19 // pred_check_branch
          %185 = sbr.rel (%p183) target = $region62
        $region61: #{conve_forward.3} parent=19 // pred_region
          %p186 = scmp.lt.s32.totalorder %s9, 2
          %s187 = scalar_select %p186, %s9, 2
          %s188 = scalar_lea.vmem %s2, %s187
        $region62: #{conve_forward.3} parent=19 // pred_fallthru
          _
      $region20: #{conve_forward.3} parent=5 // pred_fallthru
        _
      %p189 = scmp.le.s32.totalorder 1, %s9
      %p190 = scmp.lt.s32.totalorder %s9, 4
      %p191 = pnand %p189, %p190
      %p192 = pneg %p191
      // Predicated region
      $region63: #{conve_forward.3} parent=5 // pred_check
        _
      $region64: #{conve_forward.3} parent=5 // pred_check_branch
        %194 = sbr.rel (%p191) target = $region66
      $region65: #{conve_forward.3} parent=5 // pred_region
        %s195 = ssub.s32 %s9, 1
        %s196 = sand.u32 %s43, 1
        %s197 = sand.u32 %s43, 1
        %s198 = smul.addr %s197, 32
        %s199 = scalar_lea.vmem [#allocation2], %s198
        // Predicated region
        $region67: #{conve_forward.3} parent=65 // pred_check
          %p200 = pneg %p56
        $region68: #{conve_forward.3} parent=65 // pred_check_branch
          %202 = sbr.rel (%p200) target = $region70
        $region69: #{conve_forward.3} parent=65 // pred_region
          _
        $region70: #{conve_forward.3} parent=65 // pred_fallthru
          _
        %p203 = pneg %p30
        %p204 = pneg %p27
        %s205 = sand.u32 %s43, 1
        %s206 = sand.u32 %s43, 1
        %s207 = smul.addr %s206, 32
        %s208 = scalar_lea.vmem [#allocation2], %s207
        %p209 = pneg %p56
        %p210 = pneg %p53
        %p211 = scmp.lt.s32.totalorder %s14, 2
        %s212 = scalar_select %p211, %s14, 2
        %s213 = scalar_lea.vmem %s2, %s212
        %p214 = pneg %p82
        %p215 = pneg %p79
        %p216 = pneg %p108
        %p217 = pneg %p105
        %p218 = scmp.lt.s32.totalorder %s14, 2
        %s219 = scalar_select %p218, %s14, 2
        %s220 = smul.addr %s219, 8
        %s221 = scalar_lea.vmem %s3, %s220
        %p222 = scmp.lt.s32.totalorder %s14, 2
        %s223 = scalar_select %p222, %s14, 2
        %s224 = scalar_lea.vmem %s2, %s223
        %p225 = scmp.lt.s32.totalorder %s14, 2
        %s226 = scalar_select %p225, %s14, 2
        %s227 = smul.addr %s226, 8
        %s228 = scalar_lea.vmem %s3, %s227
        %v229 = vld [vmem:[%s199] sm:$0xff]
        %v230 = vld [vmem:[%s199 + $0x8] sm:$0xff]
        %v231 = vld [vmem:[%s199 + $0x10] sm:$0xff]
        %v232 = vld [vmem:[%s199 + $0x18] sm:$0xff]
        %v233 = vld [vmem:[%s0] sm:$0xff]
        %v234 = vld [vmem:[%s224] sm:$0x1]
        %v236 = vlaneseq
        %v237 = vshrl.u32 %v236, 7
        %v238 = vsub.s32 0, %v237
        %v239 = vrot.slane %v234, %v238
        %vm241 = vcmask 261120
        %v243 = vsel %vm241, %v233, 0
        %245 = vmatprep.subr.mxu0 0.0
        %246 = vmatpush1.msra.mxu0 %v229
        %247 = vmatprep.subr.mxu0 0.0
        %248 = vmatpush1.msra.mxu0 %v230
        %249 = vmatprep.subr.mxu0 0.0
        %250 = vmatpush1.msra.mxu0 %v231
        %251 = vmatprep.subr.mxu0 0.0
        %252 = vmatpush1.msra.mxu0 %v232
        %253 = vmatprep.subr.mxu0 0.0
        %254 = vmatpush1.msra.mxu0 0.0
        %255 = vmatprep.subr.mxu0 0.0
        %256 = vmatpush1.msra.mxu0 0.0
        %257 = vmatprep.subr.mxu0 0.0
        %258 = vmatpush1.msra.mxu0 0.0
        %259 = vmatprep.subr.mxu0 0.0
        %260 = vmatpush1.msra.mxu0 0.0
        %261 = vmatprep.subr.mxu0 0.0
        %262 = vmatpush1.msra.mxu0 0.0
        %263 = vmatprep.subr.mxu0 0.0
        %264 = vmatpush1.msra.mxu0 0.0
        %265 = vmatprep.subr.mxu0 0.0
        %266 = vmatpush1.msra.mxu0 0.0
        %267 = vmatprep.subr.mxu0 0.0
        %268 = vmatpush1.msra.mxu0 0.0
        %269 = vmatprep.subr.mxu0 0.0
        %270 = vmatpush1.msra.mxu0 0.0
        %271 = vmatprep.subr.mxu0 0.0
        %272 = vmatpush1.msra.mxu0 0.0
        %273 = vmatprep.subr.mxu0 0.0
        %274 = vmatpush1.msra.mxu0 0.0
        %275 = vmatprep.subr.mxu0 0.0
        %276 = vmatpush1.msra.mxu0 0.0
        %277 = vmatprep.subr.mxu0 0.0
        %278 = vmatpush1.msra.mxu0 0.0
        %279 = vmatprep.subr.mxu0 0.0
        %280 = vmatpush1.msra.mxu0 0.0
        %281 = vmatprep.subr.mxu0 0.0
        %282 = vmatpush1.msra.mxu0 0.0
        %283 = vmatprep.subr.mxu0 0.0
        %284 = vmatpush1.msra.mxu0 0.0
        %285 = vmatprep.subr.mxu0 0.0
        %286 = vmatpush1.msra.mxu0 0.0
        %287 = vmatprep.subr.mxu0 0.0
        %288 = vmatpush1.msra.mxu0 0.0
        %289 = vmatprep.subr.mxu0 0.0
        %290 = vmatpush1.msra.mxu0 0.0
        %291 = vmatprep.subr.mxu0 0.0
        %292 = vmatpush1.msra.mxu0 0.0
        %293 = vmatprep.subr.mxu0 0.0
        %294 = vmatpush1.msra.mxu0 0.0
        %295 = vmatprep.subr.mxu0 0.0
        %296 = vmatpush1.msra.mxu0 0.0
        %297 = vmatprep.subr.mxu0 0.0
        %298 = vmatpush1.msra.mxu0 0.0
        %299 = vmatprep.subr.mxu0 0.0
        %300 = vmatpush1.msra.mxu0 0.0
        %301 = vmatprep.subr.mxu0 0.0
        %302 = vmatpush1.msra.mxu0 0.0
        %303 = vmatprep.subr.mxu0 0.0
        %304 = vmatpush1.msra.mxu0 0.0
        %305 = vmatprep.subr.mxu0 0.0
        %306 = vmatpush1.msra.mxu0 0.0
        %307 = vmatprep.subr.mxu0 0.0
        %308 = vmatpush1.msra.mxu0 0.0
        %309 = vmatprep.mubr.f32.mxu0 0.0
        %310 = vmatmul.mubr.f32.gmra.mrb[0].mxu0 %v243
        %v311 = vpop.f32.mrb[0].mxu0
        %v312 = vadd.f32 %v239, %v311
        %v313 = vpop.f32.mrb[0].mxu0
        %314 = vdwg.mxu0
        %v315 = vmul.f32 %v312, 0.5
        %v316 = vtanh.pop %v315
        %v317 = vadd.f32 %v316, 1.0
        %v318 = vmul.f32 %v317, 0.5
        %319 = vst [vmem:[%s228] sm:$0xff] %v318
        %p320 = scmp.lt.s32.totalorder %s14, 2
        %s321 = scalar_select %p320, %s14, 2
        %s322 = smul.addr %s321, 8
        %s323 = scalar_lea.vmem %s3, %s322
        // Predicated region
        $region71: #{conve_forward.3} parent=65 // pred_check
          %p324 = pneg %p105
        $region72: #{conve_forward.3} parent=65 // pred_check_branch
          %326 = sbr.rel (%p324) target = $region74
        $region73: #{conve_forward.3} parent=65 // pred_region
          _
        $region74: #{conve_forward.3} parent=65 // pred_fallthru
          _
      $region66: #{conve_forward.3} parent=5 // pred_fallthru
        _
      %p327 = scmp.le.s32.totalorder 2, %s9
      // Predicated region
      $region75: #{conve_forward.3} parent=5 // pred_check
        %p328 = pneg %p327
      $region76: #{conve_forward.3} parent=5 // pred_check_branch
        %330 = sbr.rel (%p328) target = $region78
      $region77: #{conve_forward.3} parent=5 // pred_region
        %s331 = ssub.s32 %s9, 2
        // Predicated region
        $region79: #{conve_forward.3} parent=77 // pred_check
          %p332 = pneg %p111
        $region80: #{conve_forward.3} parent=77 // pred_check_branch
          %334 = sbr.rel (%p332) target = $region82
        $region81: #{conve_forward.3} parent=77 // pred_region
          %p335 = scmp.lt.s32.totalorder %s15, 2
          %s336 = scalar_select %p335, %s15, 2
          %s337 = smul.addr %s336, 8
          %s338 = scalar_lea.vmem %s3, %s337
        $region82: #{conve_forward.3} parent=77 // pred_fallthru
          _
      $region78: #{conve_forward.3} parent=5 // pred_fallthru
        _
    $region6: #{conve_forward.3} parent=1 // loop_footer
      %s13 = sadd.s32 1, %s9
    $region7: #{conve_forward.3} parent=1 // loop_footer_branch
      %8 = sbr.rel target = $region3
    $region8: #{conve_forward.3} parent=1 // loop_exit
      _

// kernel: conve_forward.2
$region0: #{conve_forward.2}
  #allocation0 [shape = 'u32[]', space=smem, size = 0x4, offset = 0x4, fixed_abs, tag = 'smem constant byte address 0x4 - core index']
  #allocation1 [shape = 'u32[144,128]{1,0:T(1,128)}', space=vmem, size = 0x12000, scoped, tag = 'internal scratch']
  %s0 = inlined_call_operand.vmem [shape: f32[9,32], index: 0, kind: input, shape index: {}]
  %s1 = inlined_call_operand.vmem [shape: f32[32], index: 1, kind: input, shape index: {}]
  %s2 = inlined_call_operand.vmem [shape: f32[9,8,36], index: 2, kind: input, shape index: {}]
  %s3 = inlined_call_operand.vmem [shape: f32[32,36,32], index: 3, kind: input, shape index: {}]
  %s4 = inlined_call_operand.vmem [shape: f32[1,32], index: 4, kind: input, shape index: {}]
  %s5 = inlined_call_operand.vmem [shape: f32[8,32], index: 5, kind: output, shape index: {}]
  %s6 = sld [smem:[#allocation0]]
  $region38: #{conve_forward.2} parent=0
    _
  %s8 = ssub.s32 1, %s6
  %s9 = scalar_select 0, %s8, %s6
  $region1: #{conve_forward.2} parent=0
    #allocation2 [shape = 'u8[8192]{0}', space=smem, size = 0x2000, scoped, tag = 'input window, operand 0, single buffered']
    #allocation3 [shape = 's32[1]{0}', space=sflag, size = 0x4, scoped, tag = 'scoped memory for conve_forward.2']
    #allocation4 [shape = 'u8[512]{0}', space=smem, size = 0x200, scoped, tag = 'input window, operand 1, single buffered']
    #allocation5 [shape = 's32[1]{0}', space=sflag, size = 0x4, scoped, tag = 'scoped memory for conve_forward.2']
    %10 = vsyncpa [#allocation3], 0
    %11 = vsyncpa [#allocation5], 0
    // Predicated region
    $region2: #{conve_forward.2} parent=1 // pred_check
      _
    $region3: #{conve_forward.2} parent=1 // pred_check_branch
      %13 = sbr.rel (0) target = $region5
    $region4: #{conve_forward.2} parent=1 // pred_region
      %s15 = ssub.s32 256, 256
      %16 = vsyncadd [#allocation3], %s15
      %s17 = sshll.u32 %s0, 4
      %s18 = int_to_ptr.vmem [resolvable:$true] %s17
      %23 = dma.vmem_to_smem %s18, 256, [#allocation2], [#allocation3], 128, 128, 8
    $region5: #{conve_forward.2} parent=1 // pred_fallthru
      _
    // Predicated region
    $region6: #{conve_forward.2} parent=1 // pred_check
      _
    $region7: #{conve_forward.2} parent=1 // pred_check_branch
      %25 = sbr.rel (0) target = $region9
    $region8: #{conve_forward.2} parent=1 // pred_region
      %s27 = ssub.s32 16, 16
      %28 = vsyncadd [#allocation5], %s27
      %s30 = sshll.u32 %s1, 4
      %s31 = int_to_ptr.vmem [resolvable:$true] %s30
      %33 = dma.vmem_to_smem %s31, 16, [#allocation4], [#allocation5]
    $region9: #{conve_forward.2} parent=1 // pred_fallthru
      _
    // Predicated region
    $region10: #{conve_forward.2} parent=1 // pred_check
      _
    $region11: #{conve_forward.2} parent=1 // pred_check_branch
      %35 = sbr.rel (0) target = $region13
    $region12: #{conve_forward.2} parent=1 // pred_region
      _
    $region13: #{conve_forward.2} parent=1 // pred_fallthru
      _
    // Predicated region
    $region14: #{conve_forward.2} parent=1 // pred_check
      _
    $region15: #{conve_forward.2} parent=1 // pred_check_branch
      %37 = sbr.rel (0) target = $region17
    $region16: #{conve_forward.2} parent=1 // pred_region
      _
    $region17: #{conve_forward.2} parent=1 // pred_fallthru
      _
    // Predicated region
    $region18: #{conve_forward.2} parent=1 // pred_check
      _
    $region19: #{conve_forward.2} parent=1 // pred_check_branch
      %39 = sbr.rel (0) target = $region21
    $region20: #{conve_forward.2} parent=1 // pred_region
      _
    $region21: #{conve_forward.2} parent=1 // pred_fallthru
      _
    // Predicated region
    $region22: #{conve_forward.2} parent=1 // pred_check
      _
    $region23: #{conve_forward.2} parent=1 // pred_check_branch
      %41 = sbr.rel (0) target = $region25
    $region24: #{conve_forward.2} parent=1 // pred_region
      %42 = dma.done [#allocation3], 256
    $region25: #{conve_forward.2} parent=1 // pred_fallthru
      _
    // Predicated region
    $region26: #{conve_forward.2} parent=1 // pred_check
      _
    $region27: #{conve_forward.2} parent=1 // pred_check_branch
      %44 = sbr.rel (0) target = $region29
    $region28: #{conve_forward.2} parent=1 // pred_region
      %45 = dma.done [#allocation5], 16
    $region29: #{conve_forward.2} parent=1 // pred_fallthru
      _
    %46 = sfence
    %v47 = vld [vmem:[%s2] sm:$0xff]
    %s48 = sld [smem:[#allocation2]]
    %v49 = vstv %s48
    %v50 = vmul.f32 %v47, %v49
    %s51 = scalar_lea.vmem %s2, 8
    %v52 = vld [vmem:[%s51] sm:$0xff]
    %s53 = sld [smem:[#allocation2 + $0x80]]
    %v54 = vstv %s53
    %v55 = vmul.f32 %v52, %v54
    %v56 = vadd.f32 %v50, %v55
    %s57 = scalar_lea.vmem %s2, 16
    %v58 = vld [vmem:[%s57] sm:$0xff]
    %s59 = sld [smem:[#allocation2 + $0x100]]
    %v60 = vstv %s59
    %v61 = vmul.f32 %v58, %v60
    %v62 = vadd.f32 %v56, %v61
    %s63 = scalar_lea.vmem %s2, 24
    %v64 = vld [vmem:[%s63] sm:$0xff]
    %s65 = sld [smem:[#allocation2 + $0x180]]
    %v66 = vstv %s65
    %v67 = vmul.f32 %v64, %v66
    %v68 = vadd.f32 %v62, %v67
    %s69 = scalar_lea.vmem %s2, 32
    %v70 = vld [vmem:[%s69] sm:$0xff]
    %s71 = sld [smem:[#allocation2 + $0x200]]
    %v72 = vstv %s71
    %v73 = vmul.f32 %v70, %v72
    %v74 = vadd.f32 %v68, %v73
    %s75 = scalar_lea.vmem %s2, 40
    %v76 = vld [vmem:[%s75] sm:$0xff]
    %s77 = sld [smem:[#allocation2 + $0x280]]
    %v78 = vstv %s77
    %v79 = vmul.f32 %v76, %v78
    %v80 = vadd.f32 %v74, %v79
    %s81 = scalar_lea.vmem %s2, 48
    %v82 = vld [vmem:[%s81] sm:$0xff]
    %s83 = sld [smem:[#allocation2 + $0x300]]
    %v84 = vstv %s83
    %v85 = vmul.f32 %v82, %v84
    %v86 = vadd.f32 %v80, %v85
    %s87 = scalar_lea.vmem %s2, 56
    %v88 = vld [vmem:[%s87] sm:$0xff]
    %s89 = sld [smem:[#allocation2 + $0x380]]
    %v90 = vstv %s89
    %v91 = vmul.f32 %v88, %v90
    %v92 = vadd.f32 %v86, %v91
    %s93 = scalar_lea.vmem %s2, 64
    %v94 = vld [vmem:[%s93] sm:$0xff]
    %s95 = sld [smem:[#allocation2 + $0x400]]
    %v96 = vstv %s95
    %v97 = vmul.f32 %v94, %v96
    %v98 = vadd.f32 %v92, %v97
    %s99 = sld [smem:[#allocation4]]
    %v100 = vstv %s99
    %v101 = vadd.f32 %v98, %v100
    %v102 = vmax.f32 %v101, 0.0
    %v103 = vld [vmem:[%s3] sm:$0xff]
    %v104 = vld [vmem:[%s3 + $0x8] sm:$0xff]
    %v105 = vld [vmem:[%s3 + $0x10] sm:$0xff]
    %v106 = vld [vmem:[%s3 + $0x18] sm:$0xff]
    %v107 = vld [vmem:[%s3 + $0x20] sm:$0xf]
    %s108 = sld [smem:[#allocation2 + $0x1]]
    %v109 = vstv %s108
    %v110 = vmul.f32 %v47, %v109
    %s111 = sld [smem:[#allocation2 + $0x81]]
    %v112 = vstv %s111
    %v113 = vmul.f32 %v52, %v112
    %v114 = vadd.f32 %v110, %v113
    %s115 = sld [smem:[#allocation2 + $0x101]]
    %v116 = vstv %s115
    %v117 = vmul.f32 %v58, %v116
    %v118 = vadd.f32 %v114, %v117
    %s119 = sld [smem:[#allocation2 + $0x181]]
    %v120 = vstv %s119
    %v121 = vmul.f32 %v64, %v120
    %v122 = vadd.f32 %v118, %v121
    %s123 = sld [smem:[#allocation2 + $0x201]]
    %v124 = vstv %s123
    %v125 = vmul.f32 %v70, %v124
    %v126 = vadd.f32 %v122, %v125
    %s127 = sld [smem:[#allocation2 + $0x281]]
    %v128 = vstv %s127
    %v129 = vmul.f32 %v76, %v128
    %v130 = vadd.f32 %v126, %v129
    %s131 = sld [smem:[#allocation2 + $0x301]]
    %v132 = vstv %s131
    %v133 = vmul.f32 %v82, %v132
    %v134 = vadd.f32 %v130, %v133
    %s135 = sld [smem:[#allocation2 + $0x381]]
    %v136 = vstv %s135
    %v137 = vmul.f32 %v88, %v136
    %v138 = vadd.f32 %v134, %v137
    %s139 = sld [smem:[#allocation2 + $0x401]]
    %v140 = vstv %s139
    %v141 = vmul.f32 %v94, %v140
    %v142 = vadd.f32 %v138, %v141
    %s143 = sld [smem:[#allocation4 + $0x1]]
    %v144 = vstv %s143
    %v145 = vadd.f32 %v142, %v144
    %v146 = vmax.f32 %v145, 0.0
    %s147 = scalar_lea.vmem %s3, 40
    %v148 = vld [vmem:[%s147] sm:$0xff]
    %v149 = vld [vmem:[%s147 + $0x8] sm:$0xff]
    %v150 = vld [vmem:[%s147 + $0x10] sm:$0xff]
    %v151 = vld [vmem:[%s147 + $0x18] sm:$0xff]
    %v152 = vld [vmem:[%s147 + $0x20] sm:$0xf]
    %vm153 = vcmask 293888
    %v155 = vsel %vm153, %v146, 0
    %vm157 = vcmask 1043456
    %v159 = vsel %vm157, %v152, 0
    %161 = vmatprep.subr.mxu0 0.0
    %162 = vmatpush1.msra.mxu0 %v148
    %163 = vmatprep.subr.mxu0 0.0
    %164 = vmatpush1.msra.mxu0 %v149
    %165 = vmatprep.subr.mxu0 0.0
    %166 = vmatpush1.msra.mxu0 %v150
    %167 = vmatprep.subr.mxu0 0.0
    %168 = vmatpush1.msra.mxu0 %v151
    %169 = vmatprep.subr.mxu0 0.0
    %170 = vmatpush1.msra.mxu0 %v159
    %171 = vmatprep.subr.mxu0 0.0
    %172 = vmatpush1.msra.mxu0 0.0
    %173 = vmatprep.subr.mxu0 0.0
    %174 = vmatpush1.msra.mxu0 0.0
    %175 = vmatprep.subr.mxu0 0.0
    %176 = vmatpush1.msra.mxu0 0.0
    %177 = vmatprep.subr.mxu0 0.0
    %178 = vmatpush1.msra.mxu0 0.0
    %179 = vmatprep.subr.mxu0 0.0
    %180 = vmatpush1.msra.mxu0 0.0
    %181 = vmatprep.subr.mxu0 0.0
    %182 = vmatpush1.msra.mxu0 0.0
    %183 = vmatprep.subr.mxu0 0.0
    %184 = vmatpush1.msra.mxu0 0.0
    %185 = vmatprep.subr.mxu0 0.0
    %186 = vmatpush1.msra.mxu0 0.0
    %187 = vmatprep.subr.mxu0 0.0
    %188 = vmatpush1.msra.mxu0 0.0
    %189 = vmatprep.subr.mxu0 0.0
    %190 = vmatpush1.msra.mxu0 0.0
    %191 = vmatprep.subr.mxu0 0.0
    %192 = vmatpush1.msra.mxu0 0.0
    %193 = vmatprep.subr.mxu0 0.0
    %194 = vmatpush1.msra.mxu0 0.0
    %195 = vmatprep.subr.mxu0 0.0
    %196 = vmatpush1.msra.mxu0 0.0
    %197 = vmatprep.subr.mxu0 0.0
    %198 = vmatpush1.msra.mxu0 0.0
    %199 = vmatprep.subr.mxu0 0.0
    %200 = vmatpush1.msra.mxu0 0.0
    %201 = vmatprep.subr.mxu0 0.0
    %202 = vmatpush1.msra.mxu0 0.0
    %203 = vmatprep.subr.mxu0 0.0
    %204 = vmatpush1.msra.mxu0 0.0
    %205 = vmatprep.subr.mxu0 0.0
    %206 = vmatpush1.msra.mxu0 0.0
    %207 = vmatprep.subr.mxu0 0.0
    %208 = vmatpush1.msra.mxu0 0.0
    %209 = vmatprep.subr.mxu0 0.0
    %210 = vmatpush1.msra.mxu0 0.0
    %211 = vmatprep.subr.mxu0 0.0
    %212 = vmatpush1.msra.mxu0 0.0
    %213 = vmatprep.subr.mxu0 0.0
    %214 = vmatpush1.msra.mxu0 0.0
    %215 = vmatprep.subr.mxu0 0.0
    %216 = vmatpush1.msra.mxu0 0.0
    %217 = vmatprep.subr.mxu0 0.0
    %218 = vmatpush1.msra.mxu0 0.0
    %219 = vmatprep.subr.mxu0 0.0
    %220 = vmatpush1.msra.mxu0 0.0
    %221 = vmatprep.subr.mxu0 0.0
    %222 = vmatpush1.msra.mxu0 0.0
    %223 = vmatprep.subr.mxu0 0.0
    %224 = vmatpush1.msra.mxu0 0.0
    %225 = vmatprep.mubr.f32.mxu0 0.0
    %226 = vmatmul.mubr.f32.gmra.mrb[0].mxu0 %v155
    %v227 = vpop.f32.mrb[0].mxu0
    %v228 = vadd.f32 0.0, %v227
    %v229 = vpop.f32.mrb[0].mxu0
    %230 = vdwg.mxu0
    %v232 = vsel %vm153, %v102, 0
    %v235 = vsel %vm157, %v107, 0
    %237 = vmatprep.subr.mxu0 0.0
    %238 = vmatpush1.msra.mxu0 %v103
    %239 = vmatprep.subr.mxu0 0.0
    %240 = vmatpush1.msra.mxu0 %v104
    %241 = vmatprep.subr.mxu0 0.0
    %242 = vmatpush1.msra.mxu0 %v105
    %243 = vmatprep.subr.mxu0 0.0
    %244 = vmatpush1.msra.mxu0 %v106
    %245 = vmatprep.subr.mxu0 0.0
    %246 = vmatpush1.msra.mxu0 %v235
    %247 = vmatprep.subr.mxu0 0.0
    %248 = vmatpush1.msra.mxu0 0.0
    %249 = vmatprep.subr.mxu0 0.0
    %250 = vmatpush1.msra.mxu0 0.0
    %251 = vmatprep.subr.mxu0 0.0
    %252 = vmatpush1.msra.mxu0 0.0
    %253 = vmatprep.subr.mxu0 0.0
    %254 = vmatpush1.msra.mxu0 0.0
    %255 = vmatprep.subr.mxu0 0.0
    %256 = vmatpush1.msra.mxu0 0.0
    %257 = vmatprep.subr.mxu0 0.0
    %258 = vmatpush1.msra.mxu0 0.0
    %259 = vmatprep.subr.mxu0 0.0
    %260 = vmatpush1.msra.mxu0 0.0
    %261 = vmatprep.subr.mxu0 0.0
    %262 = vmatpush1.msra.mxu0 0.0
    %263 = vmatprep.subr.mxu0 0.0
    %264 = vmatpush1.msra.mxu0 0.0
    %265 = vmatprep.subr.mxu0 0.0
    %266 = vmatpush1.msra.mxu0 0.0
    %267 = vmatprep.subr.mxu0 0.0
    %268 = vmatpush1.msra.mxu0 0.0
    %269 = vmatprep.subr.mxu0 0.0
    %270 = vmatpush1.msra.mxu0 0.0
    %271 = vmatprep.subr.mxu0 0.0
    %272 = vmatpush1.msra.mxu0 0.0
    %273 = vmatprep.subr.mxu0 0.0
    %274 = vmatpush1.msra.mxu0 0.0
    %275 = vmatprep.subr.mxu0 0.0
    %276 = vmatpush1.msra.mxu0 0.0
    %277 = vmatprep.subr.mxu0 0.0
    %278 = vmatpush1.msra.mxu0 0.0
    %279 = vmatprep.subr.mxu0 0.0
    %280 = vmatpush1.msra.mxu0 0.0
    %281 = vmatprep.subr.mxu0 0.0
    %282 = vmatpush1.msra.mxu0 0.0
    %283 = vmatprep.subr.mxu0 0.0
    %284 = vmatpush1.msra.mxu0 0.0
    %285 = vmatprep.subr.mxu0 0.0
    %286 = vmatpush1.msra.mxu0 0.0
    %287 = vmatprep.subr.mxu0 0.0
    %288 = vmatpush1.msra.mxu0 0.0
    %289 = vmatprep.subr.mxu0 0.0
    %290 = vmatpush1.msra.mxu0 0.0
    %291 = vmatprep.subr.mxu0 0.0
    %292 = vmatpush1.msra.mxu0 0.0
    %293 = vmatprep.subr.mxu0 0.0
    %294 = vmatpush1.msra.mxu0 0.0
    %295 = vmatprep.subr.mxu0 0.0
    %296 = vmatpush1.msra.mxu0 0.0
    %297 = vmatprep.subr.mxu0 0.0
    %298 = vmatpush1.msra.mxu0 0.0
    %299 = vmatprep.subr.mxu0 0.0
    %300 = vmatpush1.msra.mxu0 0.0
    %301 = vmatprep.mubr.f32.mxu0 0.0
    %302 = vmatmul.mubr.f32.gmra.mrb[0].mxu0 %v232
    %v303 = vpop.f32.mrb[0].mxu0
    %v304 = vadd.f32 %v228, %v303
    %v305 = vpop.f32.mrb[0].mxu0
    %306 = vdwg.mxu0
    %s307 = sld [smem:[#allocation2 + $0x2]]
    %v308 = vstv %s307
    %v309 = vmul.f32 %v47, %v308
    %s310 = sld [smem:[#allocation2 + $0x82]]
    %v311 = vstv %s310
    %v312 = vmul.f32 %v52, %v311
    %v313 = vadd.f32 %v309, %v312
    %s314 = sld [smem:[#allocation2 + $0x102]]
    %v315 = vstv %s314
    %v316 = vmul.f32 %v58, %v315
    %v317 = vadd.f32 %v313, %v316
    %s318 = sld [smem:[#allocation2 + $0x182]]
    %v319 = vstv %s318
    %v320 = vmul.f32 %v64, %v319
    %v321 = vadd.f32 %v317, %v320
    %s322 = sld [smem:[#allocation2 + $0x202]]
    %v323 = vstv %s322
    %v324 = vmul.f32 %v70, %v323
    %v325 = vadd.f32 %v321, %v324
    %s326 = sld [smem:[#allocation2 + $0x282]]
    %v327 = vstv %s326
    %v328 = vmul.f32 %v76, %v327
    %v329 = vadd.f32 %v325, %v328
    %s330 = sld [smem:[#allocation2 + $0x302]]
    %v331 = vstv %s330
    %v332 = vmul.f32 %v82, %v331
    %v333 = vadd.f32 %v329, %v332
    %s334 = sld [smem:[#allocation2 + $0x382]]
    %v335 = vstv %s334
    %v336 = vmul.f32 %v88, %v335
    %v337 = vadd.f32 %v333, %v336
    %s338 = sld [smem:[#allocation2 + $0x402]]
    %v339 = vstv %s338
    %v340 = vmul.f32 %v94, %v339
    %v341 = vadd.f32 %v337, %v340
    %s342 = sld [smem:[#allocation4 + $0x2]]
    %v343 = vstv %s342
    %v344 = vadd.f32 %v341, %v343
    %v345 = vmax.f32 %v344, 0.0
    %s346 = scalar_lea.vmem %s3, 80
    %v347 = vld [vmem:[%s346] sm:$0xff]
    %v348 = vld [vmem:[%s346 + $0x8] sm:$0xff]
    %v349 = vld [vmem:[%s346 + $0x10] sm:$0xff]
    %v350 = vld [vmem:[%s346 + $0x18] sm:$0xff]
    %v351 = vld [vmem:[%s346 + $0x20] sm:$0xf]
    %v353 = vsel %vm153, %v345, 0
    %v356 = vsel %vm157, %v351, 0
    %358 = vmatprep.subr.mxu0 0.0
    %359 = vmatpush1.msra.mxu0 %v347
    %360 = vmatprep.subr.mxu0 0.0
    %361 = vmatpush1.msra.mxu0 %v348
    %362 = vmatprep.subr.mxu0 0.0
    %363 = vmatpush1.msra.mxu0 %v349
    %364 = vmatprep.subr.mxu0 0.0
    %365 = vmatpush1.msra.mxu0 %v350
    %366 = vmatprep.subr.mxu0 0.0
    %367 = vmatpush1.msra.mxu0 %v356
    %368 = vmatprep.subr.mxu0 0.0
    %369 = vmatpush1.msra.mxu0 0.0
    %370 = vmatprep.subr.mxu0 0.0
    %371 = vmatpush1.msra.mxu0 0.0
    %372 = vmatprep.subr.mxu0 0.0
    %373 = vmatpush1.msra.mxu0 0.0
    %374 = vmatprep.subr.mxu0 0.0
    %375 = vmatpush1.msra.mxu0 0.0
    %376 = vmatprep.subr.mxu0 0.0
    %377 = vmatpush1.msra.mxu0 0.0
    %378 = vmatprep.subr.mxu0 0.0
    %379 = vmatpush1.msra.mxu0 0.0
    %380 = vmatprep.subr.mxu0 0.0
    %381 = vmatpush1.msra.mxu0 0.0
    %382 = vmatprep.subr.mxu0 0.0
    %383 = vmatpush1.msra.mxu0 0.0
    %384 = vmatprep.subr.mxu0 0.0
    %385 = vmatpush1.msra.mxu0 0.0
    %386 = vmatprep.subr.mxu0 0.0
    %387 = vmatpush1.msra.mxu0 0.0
    %388 = vmatprep.subr.mxu0 0.0
    %389 = vmatpush1.msra.mxu0 0.0
    %390 = vmatprep.subr.mxu0 0.0
    %391 = vmatpush1.msra.mxu0 0.0
    %392 = vmatprep.subr.mxu0 0.0
    %393 = vmatpush1.msra.mxu0 0.0
    %394 = vmatprep.subr.mxu0 0.0
    %395 = vmatpush1.msra.mxu0 0.0
    %396 = vmatprep.subr.mxu0 0.0
    %397 = vmatpush1.msra.mxu0 0.0
    %398 = vmatprep.subr.mxu0 0.0
    %399 = vmatpush1.msra.mxu0 0.0
    %400 = vmatprep.subr.mxu0 0.0
    %401 = vmatpush1.msra.mxu0 0.0
    %402 = vmatprep.subr.mxu0 0.0
    %403 = vmatpush1.msra.mxu0 0.0
    %404 = vmatprep.subr.mxu0 0.0
    %405 = vmatpush1.msra.mxu0 0.0
    %406 = vmatprep.subr.mxu0 0.0
    %407 = vmatpush1.msra.mxu0 0.0
    %408 = vmatprep.subr.mxu0 0.0
    %409 = vmatpush1.msra.mxu0 0.0
    %410 = vmatprep.subr.mxu0 0.0
    %411 = vmatpush1.msra.mxu0 0.0
    %412 = vmatprep.subr.mxu0 0.0
    %413 = vmatpush1.msra.mxu0 0.0
    %414 = vmatprep.subr.mxu0 0.0
    %415 = vmatpush1.msra.mxu0 0.0
    %416 = vmatprep.subr.mxu0 0.0
    %417 = vmatpush1.msra.mxu0 0.0
    %418 = vmatprep.subr.mxu0 0.0
    %419 = vmatpush1.msra.mxu0 0.0
    %420 = vmatprep.subr.mxu0 0.0
    %421 = vmatpush1.msra.mxu0 0.0
    %422 = vmatprep.mubr.f32.mxu0 0.0
    %423 = vmatmul.mubr.f32.gmra.mrb[0].mxu0 %v353
    %v424 = vpop.f32.mrb[0].mxu0
    %v425 = vadd.f32 0.0, %v424
    %v426 = vpop.f32.mrb[0].mxu0
    %427 = vdwg.mxu0
    %v428 = vadd.f32 %v304, %v425
    %s429 = sld [smem:[#allocation2 + $0x3]]
    %v430 = vstv %s429
    %v431 = vmul.f32 %v47, %v430
    %s432 = sld [smem:[#allocation2 + $0x83]]
    %v433 = vstv %s432
    %v434 = vmul.f32 %v52, %v433
    %v435 = vadd.f32 %v431, %v434
    %s436 = sld [smem:[#allocation2 + $0x103]]
    %v437 = vstv %s436
    %v438 = vmul.f32 %v58, %v437
    %v439 = vadd.f32 %v435, %v438
    %s440 = sld [smem:[#allocation2 + $0x183]]
    %v441 = vstv %s440
    %v442 = vmul.f32 %v64, %v441
    %v443 = vadd.f32 %v439, %v442
    %s444 = sld [smem:[#allocation2 + $0x203]]
    %v445 = vstv %s444
    %v446 = vmul.f32 %v70, %v445
    %v447 = vadd.f32 %v443, %v446
    %s448 = sld [smem:[#allocation2 + $0x283]]
    %v449 = vstv %s448
    %v450 = vmul.f32 %v76, %v449
    %v451 = vadd.f32 %v447, %v450
    %s452 = sld [smem:[#allocation2 + $0x303]]
    %v453 = vstv %s452
    %v454 = vmul.f32 %v82, %v453
    %v455 = vadd.f32 %v451, %v454
    %s456 = sld [smem:[#allocation2 + $0x383]]
    %v457 = vstv %s456
    %v458 = vmul.f32 %v88, %v457
    %v459 = vadd.f32 %v455, %v458
    %s460 = sld [smem:[#allocation2 + $0x403]]
    %v461 = vstv %s460
    %v462 = vmul.f32 %v94, %v461
    %v463 = vadd.f32 %v459, %v462
    %s464 = sld [smem:[#allocation4 + $0x3]]
    %v465 = vstv %s464
    %v466 = vadd.f32 %v463, %v465
    %v467 = vmax.f32 %v466, 0.0
    %s468 = scalar_lea.vmem %s3, 120
    %v469 = vld [vmem:[%s468] sm:$0xff]
    %v470 = vld [vmem:[%s468 + $0x8] sm:$0xff]
    %v471 = vld [vmem:[%s468 + $0x10] sm:$0xff]
    %v472 = vld [vmem:[%s468 + $0x18] sm:$0xff]
    %v473 = vld [vmem:[%s468 + $0x20] sm:$0xf]
    %v475 = vsel %vm153, %v467, 0
    %v478 = vsel %vm157, %v473, 0
    %480 = vmatprep.subr.mxu0 0.0
    %481 = vmatpush1.msra.mxu0 %v469
    %482 = vmatprep.subr.mxu0 0.0
    %483 = vmatpush1.msra.mxu0 %v470
    %484 = vmatprep.subr.mxu0 0.0
    %485 = vmatpush1.msra.mxu0 %v471
    %486 = vmatprep.subr.mxu0 0.0
    %487 = vmatpush1.msra.mxu0 %v472
    %488 = vmatprep.subr.mxu0 0.0
    %489 = vmatpush1.msra.mxu0 %v478
    %490 = vmatprep.subr.mxu0 0.0
    %491 = vmatpush1.msra.mxu0 0.0
    %492 = vmatprep.subr.mxu0 0.0
    %493 = vmatpush1.msra.mxu0 0.0
    %494 = vmatprep.subr.mxu0 0.0
    %495 = vmatpush1.msra.mxu0 0.0
    %496 = vmatprep.subr.mxu0 0.0
    %497 = vmatpush1.msra.mxu0 0.0
    %498 = vmatprep.subr.mxu0 0.0
    %499 = vmatpush1.msra.mxu0 0.0
    %500 = vmatprep.subr.mxu0 0.0
    %501 = vmatpush1.msra.mxu0 0.0
    %502 = vmatprep.subr.mxu0 0.0
    %503 = vmatpush1.msra.mxu0 0.0
    %504 = vmatprep.subr.mxu0 0.0
    %505 = vmatpush1.msra.mxu0 0.0
    %506 = vmatprep.subr.mxu0 0.0
    %507 = vmatpush1.msra.mxu0 0.0
    %508 = vmatprep.subr.mxu0 0.0
    %509 = vmatpush1.msra.mxu0 0.0
    %510 = vmatprep.subr.mxu0 0.0
    %511 = vmatpush1.msra.mxu0 0.0
    %512 = vmatprep.subr.mxu0 0.0
    %513 = vmatpush1.msra.mxu0 0.0
    %514 = vmatprep.subr.mxu0 0.0
    %515 = vmatpush1.msra.mxu0 0.0
    %516 = vmatprep.subr.mxu0 0.0
    %517 = vmatpush1.msra.mxu0 0.0
    %518 = vmatprep.subr.mxu0 0.0
    %519 = vmatpush1.msra.mxu0 0.0
    %520 = vmatprep.subr.mxu0 0.0
    %521 = vmatpush1.msra.mxu0 0.0
    %522 = vmatprep.subr.mxu0 0.0
    %523 = vmatpush1.msra.mxu0 0.0
    %524 = vmatprep.subr.mxu0 0.0
    %525 = vmatpush1.msra.mxu0 0.0
    %526 = vmatprep.subr.mxu0 0.0
    %527 = vmatpush1.msra.mxu0 0.0
    %528 = vmatprep.subr.mxu0 0.0
    %529 = vmatpush1.msra.mxu0 0.0
    %530 = vmatprep.subr.mxu0 0.0
    %531 = vmatpush1.msra.mxu0 0.0
    %532 = vmatprep.subr.mxu0 0.0
    %533 = vmatpush1.msra.mxu0 0.0
    %534 = vmatprep.subr.mxu0 0.0
    %535 = vmatpush1.msra.mxu0 0.0
    %536 = vmatprep.subr.mxu0 0.0
    %537 = vmatpush1.msra.mxu0 0.0
    %538 = vmatprep.subr.mxu0 0.0
    %539 = vmatpush1.msra.mxu0 0.0
    %540 = vmatprep.subr.mxu0 0.0
    %541 = vmatpush1.msra.mxu0 0.0
    %542 = vmatprep.subr.mxu0 0.0
    %543 = vmatpush1.msra.mxu0 0.0
    %544 = vmatprep.mubr.f32.mxu0 0.0
    %545 = vmatmul.mubr.f32.gmra.mrb[0].mxu0 %v475
    %v546 = vpop.f32.mrb[0].mxu0
    %v547 = vadd.f32 0.0, %v546
    %v548 = vpop.f32.mrb[0].mxu0
    %549 = vdwg.mxu0
    %v550 = vadd.f32 %v428, %v547
    %s551 = sld [smem:[#allocation2 + $0x4]]
    %v552 = vstv %s551
    %v553 = vmul.f32 %v47, %v552
    %s554 = sld [smem:[#allocation2 + $0x84]]
    %v555 = vstv %s554
    %v556 = vmul.f32 %v52, %v555
    %v557 = vadd.f32 %v553, %v556
    %s558 = sld [smem:[#allocation2 + $0x104]]
    %v559 = vstv %s558
    %v560 = vmul.f32 %v58, %v559
    %v561 = vadd.f32 %v557, %v560
    %s562 = sld [smem:[#allocation2 + $0x184]]
    %v563 = vstv %s562
    %v564 = vmul.f32 %v64, %v563
    %v565 = vadd.f32 %v561, %v564
    %s566 = sld [smem:[#allocation2 + $0x204]]
    %v567 = vstv %s566
    %v568 = vmul.f32 %v70, %v567
    %v569 = vadd.f32 %v565, %v568
    %s570 = sld [smem:[#allocation2 + $0x284]]
    %v571 = vstv %s570
    %v572 = vmul.f32 %v76, %v571
    %v573 = vadd.f32 %v569, %v572
    %s574 = sld [smem:[#allocation2 + $0x304]]
    %v575 = vstv %s574
    %v576 = vmul.f32 %v82, %v575
    %v577 = vadd.f32 %v573, %v576
    %s578 = sld [smem:[#allocation2 + $0x384]]
    %v579 = vstv %s578
    %v580 = vmul.f32 %v88, %v579
    %v581 = vadd.f32 %v577, %v580
    %s582 = sld [smem:[#allocation2 + $0x404]]
    %v583 = vstv %s582
    %v584 = vmul.f32 %v94, %v583
    %v585 = vadd.f32 %v581, %v584
    %s586 = sld [smem:[#allocation4 + $0x4]]
    %v587 = vstv %s586
    %v588 = vadd.f32 %v585, %v587
    %v589 = vmax.f32 %v588, 0.0
    %s590 = scalar_lea.vmem %s3, 160
    %v591 = vld [vmem:[%s590] sm:$0xff]
    %v592 = vld [vmem:[%s590 + $0x8] sm:$0xff]
    %v593 = vld [vmem:[%s590 + $0x10] sm:$0xff]
    %v594 = vld [vmem:[%s590 + $0x18] sm:$0xff]
    %v595 = vld [vmem:[%s590 + $0x20] sm:$0xf]
    %v597 = vsel %vm153, %v589, 0
    %v600 = vsel %vm157, %v595, 0
    %602 = vmatprep.subr.mxu0 0.0
    %603 = vmatpush1.msra.mxu0 %v591
    %604 = vmatprep.subr.mxu0 0.0
    %605 = vmatpush1.msra.mxu0 %v592
    %606 = vmatprep.subr.mxu0 0.0
    %607 = vmatpush1.msra.mxu0 %v593
    %608 = vmatprep.subr.mxu0 0.0
    %609 = vmatpush1.msra.mxu0 %v594
    %610 = vmatprep.subr.mxu0 0.0
    %611 = vmatpush1.msra.mxu0 %v600
    %612 = vmatprep.subr.mxu0 0.0
    %613 = vmatpush1.msra.mxu0 0.0
    %614 = vmatprep.subr.mxu0 0.0
    %615 = vmatpush1.msra.mxu0 0.0
    %616 = vmatprep.subr.mxu0 0.0
    %617 = vmatpush1.msra.mxu0 0.0
    %618 = vmatprep.subr.mxu0 0.0
    %619 = vmatpush1.msra.mxu0 0.0
    %620 = vmatprep.subr.mxu0 0.0
    %621 = vmatpush1.msra.mxu0 0.0
    %622 = vmatprep.subr.mxu0 0.0
    %623 = vmatpush1.msra.mxu0 0.0
    %624 = vmatprep.subr.mxu0 0.0
    %625 = vmatpush1.msra.mxu0 0.0
    %626 = vmatprep.subr.mxu0 0.0
    %627 = vmatpush1.msra.mxu0 0.0
    %628 = vmatprep.subr.mxu0 0.0
    %629 = vmatpush1.msra.mxu0 0.0
    %630 = vmatprep.subr.mxu0 0.0
    %631 = vmatpush1.msra.mxu0 0.0
    %632 = vmatprep.subr.mxu0 0.0
    %633 = vmatpush1.msra.mxu0 0.0
    %634 = vmatprep.subr.mxu0 0.0
    %635 = vmatpush1.msra.mxu0 0.0
    %636 = vmatprep.subr.mxu0 0.0
    %637 = vmatpush1.msra.mxu0 0.0
    %638 = vmatprep.subr.mxu0 0.0
    %639 = vmatpush1.msra.mxu0 0.0
    %640 = vmatprep.subr.mxu0 0.0
    %641 = vmatpush1.msra.mxu0 0.0
    %642 = vmatprep.subr.mxu0 0.0
    %643 = vmatpush1.msra.mxu0 0.0
    %644 = vmatprep.subr.mxu0 0.0
    %645 = vmatpush1.msra.mxu0 0.0
    %646 = vmatprep.subr.mxu0 0.0
    %647 = vmatpush1.msra.mxu0 0.0
    %648 = vmatprep.subr.mxu0 0.0
    %649 = vmatpush1.msra.mxu0 0.0
    %650 = vmatprep.subr.mxu0 0.0
    %651 = vmatpush1.msra.mxu0 0.0
    %652 = vmatprep.subr.mxu0 0.0
    %653 = vmatpush1.msra.mxu0 0.0
    %654 = vmatprep.subr.mxu0 0.0
    %655 = vmatpush1.msra.mxu0 0.0
    %656 = vmatprep.subr.mxu0 0.0
    %657 = vmatpush1.msra.mxu0 0.0
    %658 = vmatprep.subr.mxu0 0.0
    %659 = vmatpush1.msra.mxu0 0.0
    %660 = vmatprep.subr.mxu0 0.0
    %661 = vmatpush1.msra.mxu0 0.0
    %662 = vmatprep.subr.mxu0 0.0
    %663 = vmatpush1.msra.mxu0 0.0
    %664 = vmatprep.subr.mxu0 0.0
    %665 = vmatpush1.msra.mxu0 0.0
    %666 = vmatprep.mubr.f32.mxu0 0.0
    %667 = vmatmul.mubr.f32.gmra.mrb[0].mxu0 %v597
    %v668 = vpop.f32.mrb[0].mxu0
    %v669 = vadd.f32 0.0, %v668
    %v670 = vpop.f32.mrb[0].mxu0
    %671 = vdwg.mxu0
    %v672 = vadd.f32 %v550, %v669
    %s673 = sld [smem:[#allocation2 + $0x5]]
    %v674 = vstv %s673
    %v675 = vmul.f32 %v47, %v674
    %s676 = sld [smem:[#allocation2 + $0x85]]
    %v677 = vstv %s676
    %v678 = vmul.f32 %v52, %v677
    %v679 = vadd.f32 %v675, %v678
    %s680 = sld [smem:[#allocation2 + $0x105]]
    %v681 = vstv %s680
    %v682 = vmul.f32 %v58, %v681
    %v683 = vadd.f32 %v679, %v682
    %s684 = sld [smem:[#allocation2 + $0x185]]
    %v685 = vstv %s684
    %v686 = vmul.f32 %v64, %v685
    %v687 = vadd.f32 %v683, %v686
    %s688 = sld [smem:[#allocation2 + $0x205]]
    %v689 = vstv %s688
    %v690 = vmul.f32 %v70, %v689
    %v691 = vadd.f32 %v687, %v690
    %s692 = sld [smem:[#allocation2 + $0x285]]
    %v693 = vstv %s692
    %v694 = vmul.f32 %v76, %v693
    %v695 = vadd.f32 %v691, %v694
    %s696 = sld [smem:[#allocation2 + $0x305]]
    %v697 = vstv %s696
    %v698 = vmul.f32 %v82, %v697
    %v699 = vadd.f32 %v695, %v698
    %s700 = sld [smem:[#allocation2 + $0x385]]
    %v701 = vstv %s700
    %v702 = vmul.f32 %v88, %v701
    %v703 = vadd.f32 %v699, %v702
    %s704 = sld [smem:[#allocation2 + $0x405]]
    %v705 = vstv %s704
    %v706 = vmul.f32 %v94, %v705
    %v707 = vadd.f32 %v703, %v706
    %s708 = sld [smem:[#allocation4 + $0x5]]
    %v709 = vstv %s708
    %v710 = vadd.f32 %v707, %v709
    %v711 = vmax.f32 %v710, 0.0
    %s712 = scalar_lea.vmem %s3, 200
    %v713 = vld [vmem:[%s712] sm:$0xff]
    %v714 = vld [vmem:[%s712 + $0x8] sm:$0xff]
    %v715 = vld [vmem:[%s712 + $0x10] sm:$0xff]
    %v716 = vld [vmem:[%s712 + $0x18] sm:$0xff]
    %v717 = vld [vmem:[%s712 + $0x20] sm:$0xf]
    %v719 = vsel %vm153, %v711, 0
    %v722 = vsel %vm157, %v717, 0
    %724 = vmatprep.subr.mxu0 0.0
    %725 = vmatpush1.msra.mxu0 %v713
    %726 = vmatprep.subr.mxu0 0.0
    %727 = vmatpush1.msra.mxu0 %v714
    %728 = vmatprep.subr.mxu0 0.0
    %729 = vmatpush1.msra.mxu0 %v715
    %730 = vmatprep.subr.mxu0 0.0
    %731 = vmatpush1.msra.mxu0 %v716
    %732 = vmatprep.subr.mxu0 0.0
    %733 = vmatpush1.msra.mxu0 %v722
    %734 = vmatprep.subr.mxu0 0.0
    %735 = vmatpush1.msra.mxu0 0.0
    %736 = vmatprep.subr.mxu0 0.0
    %737 = vmatpush1.msra.mxu0 0.0
    %738 = vmatprep.subr.mxu0 0.0
    %739 = vmatpush1.msra.mxu0 0.0
    %740 = vmatprep.subr.mxu0 0.0
    %741 = vmatpush1.msra.mxu0 0.0
    %742 = vmatprep.subr.mxu0 0.0
    %743 = vmatpush1.msra.mxu0 0.0
    %744 = vmatprep.subr.mxu0 0.0
    %745 = vmatpush1.msra.mxu0 0.0
    %746 = vmatprep.subr.mxu0 0.0
    %747 = vmatpush1.msra.mxu0 0.0
    %748 = vmatprep.subr.mxu0 0.0
    %749 = vmatpush1.msra.mxu0 0.0
    %750 = vmatprep.subr.mxu0 0.0
    %751 = vmatpush1.msra.mxu0 0.0
    %752 = vmatprep.subr.mxu0 0.0
    %753 = vmatpush1.msra.mxu0 0.0
    %754 = vmatprep.subr.mxu0 0.0
    %755 = vmatpush1.msra.mxu0 0.0
    %756 = vmatprep.subr.mxu0 0.0
    %757 = vmatpush1.msra.mxu0 0.0
    %758 = vmatprep.subr.mxu0 0.0
    %759 = vmatpush1.msra.mxu0 0.0
    %760 = vmatprep.subr.mxu0 0.0
    %761 = vmatpush1.msra.mxu0 0.0
    %762 = vmatprep.subr.mxu0 0.0
    %763 = vmatpush1.msra.mxu0 0.0
    %764 = vmatprep.subr.mxu0 0.0
    %765 = vmatpush1.msra.mxu0 0.0
    %766 = vmatprep.subr.mxu0 0.0
    %767 = vmatpush1.msra.mxu0 0.0
    %768 = vmatprep.subr.mxu0 0.0
    %769 = vmatpush1.msra.mxu0 0.0
    %770 = vmatprep.subr.mxu0 0.0
    %771 = vmatpush1.msra.mxu0 0.0
    %772 = vmatprep.subr.mxu0 0.0
    %773 = vmatpush1.msra.mxu0 0.0
    %774 = vmatprep.subr.mxu0 0.0
    %775 = vmatpush1.msra.mxu0 0.0
    %776 = vmatprep.subr.mxu0 0.0
    %777 = vmatpush1.msra.mxu0 0.0
    %778 = vmatprep.subr.mxu0 0.0
    %779 = vmatpush1.msra.mxu0 0.0
    %780 = vmatprep.subr.mxu0 0.0
    %781 = vmatpush1.msra.mxu0 0.0
    %782 = vmatprep.subr.mxu0 0.0
    %783 = vmatpush1.msra.mxu0 0.0
    %784 = vmatprep.subr.mxu0 0.0
    %785 = vmatpush1.msra.mxu0 0.0
    %786 = vmatprep.subr.mxu0 0.0
    %787 = vmatpush1.msra.mxu0 0.0
    %788 = vmatprep.mubr.f32.mxu0 0.0
    %789 = vmatmul.mubr.f32.gmra.mrb[0].mxu0 %v719
    %v790 = vpop.f32.mrb[0].mxu0
    %v791 = vadd.f32 0.0, %v790
    %v792 = vpop.f32.mrb[0].mxu0
    %793 = vdwg.mxu0
    %v794 = vadd.f32 %v672, %v791
    %s795 = sld [smem:[#allocation2 + $0x6]]
    %v796 = vstv %s795
    %v797 = vmul.f32 %v47, %v796
    %s798 = sld [smem:[#allocation2 + $0x86]]
    %v799 = vstv %s798
    %v800 = vmul.f32 %v52, %v799
    %v801 = vadd.f32 %v797, %v800
    %s802 = sld [smem:[#allocation2 + $0x106]]
    %v803 = vstv %s802
    %v804 = vmul.f32 %v58, %v803
    %v805 = vadd.f32 %v801, %v804
    %s806 = sld [smem:[#allocation2 + $0x186]]
    %v807 = vstv %s806
    %v808 = vmul.f32 %v64, %v807
    %v809 = vadd.f32 %v805, %v808
    %s810 = sld [smem:[#allocation2 + $0x206]]
    %v811 = vstv %s810
    %v812 = vmul.f32 %v70, %v811
    %v813 = vadd.f32 %v809, %v812
    %s814 = sld [smem:[#allocation2 + $0x286]]
    %v815 = vstv %s814
    %v816 = vmul.f32 %v76, %v815
    %v817 = vadd.f32 %v813, %v816
    %s818 = sld [smem:[#allocation2 + $0x306]]
    %v819 = vstv %s818
    %v820 = vmul.f32 %v82, %v819
    %v821 = vadd.f32 %v817, %v820
    %s822 = sld [smem:[#allocation2 + $0x386]]
    %v823 = vstv %s822
    %v824 = vmul.f32 %v88, %v823
    %v825 = vadd.f32 %v821, %v824
    %s826 = sld [smem:[#allocation2 + $0x406]]
    %v827 = vstv %s826
    %v828 = vmul.f32 %v94, %v827
    %v829 = vadd.f32 %v825, %v828
    %s830 = sld [smem:[#allocation4 + $0x6]]
    %v831 = vstv %s830
    %v832 = vadd.f32 %v829, %v831
    %v833 = vmax.f32 %v832, 0.0
    %s834 = scalar_lea.vmem %s3, 240
    %v835 = vld [vmem:[%s834] sm:$0xff]
    %v836 = vld [vmem:[%s834 + $0x8] sm:$0xff]
    %v837 = vld [vmem:[%s834 + $0x10] sm:$0xff]
    %v838 = vld [vmem:[%s834 + $0x18] sm:$0xff]
    %v839 = vld [vmem:[%s834 + $0x20] sm:$0xf]
    %v841 = vsel %vm153, %v833, 0
    %v844 = vsel %vm157, %v839, 0
    %846 = vmatprep.subr.mxu0 0.0
    %847 = vmatpush1.msra.mxu0 %v835
    %848 = vmatprep.subr.mxu0 0.0
    %849 = vmatpush1.msra.mxu0 %v836
    %850 = vmatprep.subr.mxu0 0.0
    %851 = vmatpush1.msra.mxu0 %v837
    %852 = vmatprep.subr.mxu0 0.0
    %853 = vmatpush1.msra.mxu0 %v838
    %854 = vmatprep.subr.mxu0 0.0
    %855 = vmatpush1.msra.mxu0 %v844
    %856 = vmatprep.subr.mxu0 0.0
    %857 = vmatpush1.msra.mxu0 0.0
    %858 = vmatprep.subr.mxu0 0.0
    %859 = vmatpush1.msra.mxu0 0.0
    %860 = vmatprep.subr.mxu0 0.0
    %861 = vmatpush1.msra.mxu0 0.0
    %862 = vmatprep.subr.mxu0 0.0
    %863 = vmatpush1.msra.mxu0 0.0
    %864 = vmatprep.subr.mxu0 0.0
    %865 = vmatpush1.msra.mxu0 0.0
    %866 = vmatprep.subr.mxu0 0.0
    %867 = vmatpush1.msra.mxu0 0.0
    %868 = vmatprep.subr.mxu0 0.0
    %869 = vmatpush1.msra.mxu0 0.0
    %870 = vmatprep.subr.mxu0 0.0
    %871 = vmatpush1.msra.mxu0 0.0
    %872 = vmatprep.subr.mxu0 0.0
    %873 = vmatpush1.msra.mxu0 0.0
    %874 = vmatprep.subr.mxu0 0.0
    %875 = vmatpush1.msra.mxu0 0.0
    %876 = vmatprep.subr.mxu0 0.0
    %877 = vmatpush1.msra.mxu0 0.0
    %878 = vmatprep.subr.mxu0 0.0
    %879 = vmatpush1.msra.mxu0 0.0
    %880 = vmatprep.subr.mxu0 0.0
    %881 = vmatpush1.msra.mxu0 0.0
    %882 = vmatprep.subr.mxu0 0.0
    %883 = vmatpush1.msra.mxu0 0.0
    %884 = vmatprep.subr.mxu0 0.0
    %885 = vmatpush1.msra.mxu0 0.0
    %886 = vmatprep.subr.mxu0 0.0
    %887 = vmatpush1.msra.mxu0 0.0
    %888 = vmatprep.subr.mxu0 0.0
    %889 = vmatpush1.msra.mxu0 0.0
    %890 = vmatprep.subr.mxu0 0.0
    %891 = vmatpush1.msra.mxu0 0.0
    %892 = vmatprep.subr.mxu0 0.0
    %893 = vmatpush1.msra.mxu0 0.0
    %894 = vmatprep.subr.mxu0 0.0
    %895 = vmatpush1.msra.mxu0 0.0
    %896 = vmatprep.subr.mxu0 0.0
    %897 = vmatpush1.msra.mxu0 0.0
    %898 = vmatprep.subr.mxu0 0.0
    %899 = vmatpush1.msra.mxu0 0.0
    %900 = vmatprep.subr.mxu0 0.0
    %901 = vmatpush1.msra.mxu0 0.0
    %902 = vmatprep.subr.mxu0 0.0
    %903 = vmatpush1.msra.mxu0 0.0
    %904 = vmatprep.subr.mxu0 0.0
    %905 = vmatpush1.msra.mxu0 0.0
    %906 = vmatprep.subr.mxu0 0.0
    %907 = vmatpush1.msra.mxu0 0.0
    %908 = vmatprep.subr.mxu0 0.0
    %909 = vmatpush1.msra.mxu0 0.0
    %910 = vmatprep.mubr.f32.mxu0 0.0
    %911 = vmatmul.mubr.f32.gmra.mrb[0].mxu0 %v841
    %v912 = vpop.f32.mrb[0].mxu0
    %v913 = vadd.f32 0.0, %v912
    %v914 = vpop.f32.mrb[0].mxu0
    %915 = vdwg.mxu0
    %v916 = vadd.f32 %v794, %v913
    %s917 = sld [smem:[#allocation2 + $0x7]]
    %v918 = vstv %s917
    %v919 = vmul.f32 %v47, %v918
    %s920 = sld [smem:[#allocation2 + $0x87]]
    %v921 = vstv %s920
    %v922 = vmul.f32 %v52, %v921
    %v923 = vadd.f32 %v919, %v922
    %s924 = sld [smem:[#allocation2 + $0x107]]
    %v925 = vstv %s924
    %v926 = vmul.f32 %v58, %v925
    %v927 = vadd.f32 %v923, %v926
    %s928 = sld [smem:[#allocation2 + $0x187]]
    %v929 = vstv %s928
    %v930 = vmul.f32 %v64, %v929
    %v931 = vadd.f32 %v927, %v930
    %s932 = sld [smem:[#allocation2 + $0x207]]
    %v933 = vstv %s932
    %v934 = vmul.f32 %v70, %v933
    %v935 = vadd.f32 %v931, %v934
    %s936 = sld [smem:[#allocation2 + $0x287]]
    %v937 = vstv %s936
    %v938 = vmul.f32 %v76, %v937
    %v939 = vadd.f32 %v935, %v938
    %s940 = sld [smem:[#allocation2 + $0x307]]
    %v941 = vstv %s940
    %v942 = vmul.f32 %v82, %v941
    %v943 = vadd.f32 %v939, %v942
    %s944 = sld [smem:[#allocation2 + $0x387]]
    %v945 = vstv %s944
    %v946 = vmul.f32 %v88, %v945
    %v947 = vadd.f32 %v943, %v946
    %s948 = sld [smem:[#allocation2 + $0x407]]
    %v949 = vstv %s948
    %v950 = vmul.f32 %v94, %v949
    %v951 = vadd.f32 %v947, %v950
    %s952 = sld [smem:[#allocation4 + $0x7]]
    %v953 = vstv %s952
    %v954 = vadd.f32 %v951, %v953
    %v955 = vmax.f32 %v954, 0.0
    %s956 = scalar_lea.vmem %s3, 280
    %v957 = vld [vmem:[%s956] sm:$0xff]
    %v958 = vld [vmem:[%s956 + $0x8] sm:$0xff]
    %v959 = vld [vmem:[%s956 + $0x10] sm:$0xff]
    %v960 = vld [vmem:[%s956 + $0x18] sm:$0xff]
    %v961 = vld [vmem:[%s956 + $0x20] sm:$0xf]
    %v963 = vsel %vm153, %v955, 0
    %v966 = vsel %vm157, %v961, 0
    %968 = vmatprep.subr.mxu0 0.0
    %969 = vmatpush1.msra.mxu0 %v957
    %970 = vmatprep.subr.mxu0 0.0
    %971 = vmatpush1.msra.mxu0 %v958
    %972 = vmatprep.subr.mxu0 0.0
    %973 = vmatpush1.msra.mxu0 %v959
    %974 = vmatprep.subr.mxu0 0.0
    %975 = vmatpush1.msra.mxu0 %v960
    %976 = vmatprep.subr.mxu0 0.0
    %977 = vmatpush1.msra.mxu0 %v966
    %978 = vmatprep.subr.mxu0 0.0
    %979 = vmatpush1.msra.mxu0 0.0
    %980 = vmatprep.subr.mxu0 0.0
    %981 = vmatpush1.msra.mxu0 0.0
    %982 = vmatprep.subr.mxu0 0.0
    %983 = vmatpush1.msra.mxu0 0.0
    %984 = vmatprep.subr.mxu0 0.0
    %985 = vmatpush1.msra.mxu0 0.0
    %986 = vmatprep.subr.mxu0 0.0
    %987 = vmatpush1.msra.mxu0 0.0
    %988 = vmatprep.subr.mxu0 0.0
    %989 = vmatpush1.msra.mxu0 0.0
    %990 = vmatprep.subr.mxu0 0.0
    %991 = vmatpush1.msra.mxu0 0.0
    %992 = vmatprep.subr.mxu0 0.0
    %993 = vmatpush1.msra.mxu0 0.0
    %994 = vmatprep.subr.mxu0 0.0
    %995 = vmatpush1.msra.mxu0 0.0
    %996 = vmatprep.subr.mxu0 0.0
    %997 = vmatpush1.msra.mxu0 0.0
    %998 = vmatprep.subr.mxu0 0.0
    %999 = vmatpush1.msra.mxu0 0.0
    %1000 = vmatprep.subr.mxu0 0.0
    %1001 = vmatpush1.msra.mxu0 0.0
    %1002 = vmatprep.subr.mxu0 0.0
    %1003 = vmatpush1.msra.mxu0 0.0
    %1004 = vmatprep.subr.mxu0 0.0
    %1005 = vmatpush1.msra.mxu0 0.0
    %1006 = vmatprep.subr.mxu0 0.0
    %1007 = vmatpush1.msra.mxu0 0.0
    %1008 = vmatprep.subr.mxu0 0.0
    %1009 = vmatpush1.msra.mxu0 0.0
    %1010 = vmatprep.subr.mxu0 0.0
    %1011 = vmatpush1.msra.mxu0 0.0
    %1012 = vmatprep.subr.mxu0 0.0
    %1013 = vmatpush1.msra.mxu0 0.0
    %1014 = vmatprep.subr.mxu0 0.0
    %1015 = vmatpush1.msra.mxu0 0.0
    %1016 = vmatprep.subr.mxu0 0.0
    %1017 = vmatpush1.msra.mxu0 0.0
    %1018 = vmatprep.subr.mxu0 0.0
    %1019 = vmatpush1.msra.mxu0 0.0
    %1020 = vmatprep.subr.mxu0 0.0
    %1021 = vmatpush1.msra.mxu0 0.0
    %1022 = vmatprep.subr.mxu0 0.0
    %1023 = vmatpush1.msra.mxu0 0.0
    %1024 = vmatprep.subr.mxu0 0.0
    %1025 = vmatpush1.msra.mxu0 0.0
    %1026 = vmatprep.subr.mxu0 0.0
    %1027 = vmatpush1.msra.mxu0 0.0
    %1028 = vmatprep.subr.mxu0 0.0
    %1029 = vmatpush1.msra.mxu0 0.0
    %1030 = vmatprep.subr.mxu0 0.0
    %1031 = vmatpush1.msra.mxu0 0.0
    %1032 = vmatprep.mubr.f32.mxu0 0.0
    %1033 = vmatmul.mubr.f32.gmra.mrb[0].mxu0 %v963
    %v1034 = vpop.f32.mrb[0].mxu0
    %v1035 = vadd.f32 0.0, %v1034
    %v1036 = vpop.f32.mrb[0].mxu0
    %1037 = vdwg.mxu0
    %v1038 = vadd.f32 %v916, %v1035
    %s1039 = sld [smem:[#allocation2 + $0x8]]
    %v1040 = vstv %s1039
    %v1041 = vmul.f32 %v47, %v1040
    %s1042 = sld [smem:[#allocation2 + $0x88]]
    %v1043 = vstv %s1042
    %v1044 = vmul.f32 %v52, %v1043
    %v1045 = vadd.f32 %v1041, %v1044
    %s1046 = sld [smem:[#allocation2 + $0x108]]
    %v1047 = vstv %s1046
    %v1048 = vmul.f32 %v58, %v1047
    %v1049 = vadd.f32 %v1045, %v1048
    %s1050 = sld [smem:[#allocation2 + $0x188]]
    %v1051 = vstv %s1050
    %v1052 = vmul.f32 %v64, %v1051
    %v1053 = vadd.f32 %v1049, %v1052
    %s1054 = sld [smem:[#allocation2 + $0x208]]
    %v1055 = vstv %s1054
    %v1056 = vmul.f32 %v70, %v1055
    %v1057 = vadd.f32 %v1053, %v1056
    %s1058 = sld [smem:[#allocation2 + $0x288]]
    %v1059 = vstv %s1058
    %v1060 = vmul.f32 %v76, %v1059
    %v1061 = vadd.f32 %v1057, %v1060
    %s1062 = sld [smem:[#allocation2 + $0x308]]
    %v1063 = vstv %s1062
    %v1064 = vmul.f32 %v82, %v1063
    %v1065 = vadd.f32 %v1061, %v1064
    %s1066 = sld [smem:[#allocation2 + $0x388]]
    %v1067 = vstv %s1066
    %v1068 = vmul.f32 %v88, %v1067
    %v1069 = vadd.f32 %v1065, %v1068
    %s1070 = sld [smem:[#allocation2 + $0x408]]
    %v1071 = vstv %s1070
    %v1072 = vmul.f32 %v94, %v1071
    %v1073 = vadd.f32 %v1069, %v1072
    %s1074 = sld [smem:[#allocation4 + $0x8]]
    %v1075 = vstv %s1074
    %v1076 = vadd.f32 %v1073, %v1075
    %v1077 = vmax.f32 %v1076, 0.0
    %s1078 = scalar_lea.vmem %s3, 320
    %v1079 = vld [vmem:[%s1078] sm:$0xff]
    %v1080 = vld [vmem:[%s1078 + $0x8] sm:$0xff]
    %v1081 = vld [vmem:[%s1078 + $0x10] sm:$0xff]
    %v1082 = vld [vmem:[%s1078 + $0x18] sm:$0xff]
    %v1083 = vld [vmem:[%s1078 + $0x20] sm:$0xf]
    %v1085 = vsel %vm153, %v1077, 0
    %v1088 = vsel %vm157, %v1083, 0
    %1090 = vmatprep.subr.mxu0 0.0
    %1091 = vmatpush1.msra.mxu0 %v1079
    %1092 = vmatprep.subr.mxu0 0.0
    %1093 = vmatpush1.msra.mxu0 %v1080
    %1094 = vmatprep.subr.mxu0 0.0
    %1095 = vmatpush1.msra.mxu0 %v1081
    %1096 = vmatprep.subr.mxu0 0.0
    %1097 = vmatpush1.msra.mxu0 %v1082
    %1098 = vmatprep.subr.mxu0 0.0
    %1099 = vmatpush1.msra.mxu0 %v1088
    %1100 = vmatprep.subr.mxu0 0.0
    %1101 = vmatpush1.msra.mxu0 0.0
    %1102 = vmatprep.subr.mxu0 0.0
    %1103 = vmatpush1.msra.mxu0 0.0
    %1104 = vmatprep.subr.mxu0 0.0
    %1105 = vmatpush1.msra.mxu0 0.0
    %1106 = vmatprep.subr.mxu0 0.0
    %1107 = vmatpush1.msra.mxu0 0.0
    %1108 = vmatprep.subr.mxu0 0.0
    %1109 = vmatpush1.msra.mxu0 0.0
    %1110 = vmatprep.subr.mxu0 0.0
    %1111 = vmatpush1.msra.mxu0 0.0
    %1112 = vmatprep.subr.mxu0 0.0
    %1113 = vmatpush1.msra.mxu0 0.0
    %1114 = vmatprep.subr.mxu0 0.0
    %1115 = vmatpush1.msra.mxu0 0.0
    %1116 = vmatprep.subr.mxu0 0.0
    %1117 = vmatpush1.msra.mxu0 0.0
    %1118 = vmatprep.subr.mxu0 0.0
    %1119 = vmatpush1.msra.mxu0 0.0
    %1120 = vmatprep.subr.mxu0 0.0
    %1121 = vmatpush1.msra.mxu0 0.0
    %1122 = vmatprep.subr.mxu0 0.0
    %1123 = vmatpush1.msra.mxu0 0.0
    %1124 = vmatprep.subr.mxu0 0.0
    %1125 = vmatpush1.msra.mxu0 0.0
    %1126 = vmatprep.subr.mxu0 0.0
    %1127 = vmatpush1.msra.mxu0 0.0
    %1128 = vmatprep.subr.mxu0 0.0
    %1129 = vmatpush1.msra.mxu0 0.0
    %1130 = vmatprep.subr.mxu0 0.0
    %1131 = vmatpush1.msra.mxu0 0.0
    %1132 = vmatprep.subr.mxu0 0.0
    %1133 = vmatpush1.msra.mxu0 0.0
    %1134 = vmatprep.subr.mxu0 0.0
    %1135 = vmatpush1.msra.mxu0 0.0
    %1136 = vmatprep.subr.mxu0 0.0
    %1137 = vmatpush1.msra.mxu0 0.0
    %1138 = vmatprep.subr.mxu0 0.0
    %1139 = vmatpush1.msra.mxu0 0.0
    %1140 = vmatprep.subr.mxu0 0.0
    %1141 = vmatpush1.msra.mxu0 0.0
    %1142 = vmatprep.subr.mxu0 0.0
    %1143 = vmatpush1.msra.mxu0 0.0
    %1144 = vmatprep.subr.mxu0 0.0
    %1145 = vmatpush1.msra.mxu0 0.0
    %1146 = vmatprep.subr.mxu0 0.0
    %1147 = vmatpush1.msra.mxu0 0.0
    %1148 = vmatprep.subr.mxu0 0.0
    %1149 = vmatpush1.msra.mxu0 0.0
    %1150 = vmatprep.subr.mxu0 0.0
    %1151 = vmatpush1.msra.mxu0 0.0
    %1152 = vmatprep.subr.mxu0 0.0
    %1153 = vmatpush1.msra.mxu0 0.0
    %1154 = vmatprep.mubr.f32.mxu0 0.0
    %1155 = vmatmul.mubr.f32.gmra.mrb[0].mxu0 %v1085
    %v1156 = vpop.f32.mrb[0].mxu0
    %v1157 = vadd.f32 0.0, %v1156
    %v1158 = vpop.f32.mrb[0].mxu0
    %1159 = vdwg.mxu0
    %v1160 = vadd.f32 %v1038, %v1157
    %s1161 = sld [smem:[#allocation2 + $0x9]]
    %v1162 = vstv %s1161
    %v1163 = vmul.f32 %v47, %v1162
    %s1164 = sld [smem:[#allocation2 + $0x89]]
    %v1165 = vstv %s1164
    %v1166 = vmul.f32 %v52, %v1165
    %v1167 = vadd.f32 %v1163, %v1166
    %s1168 = sld [smem:[#allocation2 + $0x109]]
    %v1169 = vstv %s1168
    %v1170 = vmul.f32 %v58, %v1169
    %v1171 = vadd.f32 %v1167, %v1170
    %s1172 = sld [smem:[#allocation2 + $0x189]]
    %v1173 = vstv %s1172
    %v1174 = vmul.f32 %v64, %v1173
    %v1175 = vadd.f32 %v1171, %v1174
    %s1176 = sld [smem:[#allocation2 + $0x209]]
    %v1177 = vstv %s1176
    %v1178 = vmul.f32 %v70, %v1177
    %v1179 = vadd.f32 %v1175, %v1178
    %s1180 = sld [smem:[#allocation2 + $0x289]]
    %v1181 = vstv %s1180
    %v1182 = vmul.f32 %v76, %v1181
    %v1183 = vadd.f32 %v1179, %v1182
    %s1184 = sld [smem:[#allocation2 + $0x309]]
    %v1185 = vstv %s1184
    %v1186 = vmul.f32 %v82, %v1185
    %v1187 = vadd.f32 %v1183, %v1186
    %s1188 = sld [smem:[#allocation2 + $0x389]]
    %v1189 = vstv %s1188
    %v1190 = vmul.f32 %v88, %v1189
    %v1191 = vadd.f32 %v1187, %v1190
    %s1192 = sld [smem:[#allocation2 + $0x409]]
    %v1193 = vstv %s1192
    %v1194 = vmul.f32 %v94, %v1193
    %v1195 = vadd.f32 %v1191, %v1194
    %s1196 = sld [smem:[#allocation4 + $0x9]]
    %v1197 = vstv %s1196
    %v1198 = vadd.f32 %v1195, %v1197
    %v1199 = vmax.f32 %v1198, 0.0
    %s1200 = scalar_lea.vmem %s3, 360
    %v1201 = vld [vmem:[%s1200] sm:$0xff]
    %v1202 = vld [vmem:[%s1200 + $0x8] sm:$0xff]
    %v1203 = vld [vmem:[%s1200 + $0x10] sm:$0xff]
    %v1204 = vld [vmem:[%s1200 + $0x18] sm:$0xff]
    %v1205 = vld [vmem:[%s1200 + $0x20] sm:$0xf]
    %v1207 = vsel %vm153, %v1199, 0
    %v1210 = vsel %vm157, %v1205, 0
    %1212 = vmatprep.subr.mxu0 0.0
    %1213 = vmatpush1.msra.mxu0 %v1201
    %1214 = vmatprep.subr.mxu0 0.0
    %1215 = vmatpush1.msra.mxu0 %v1202
    %1216 = vmatprep.subr.mxu0 0.0
    %1217 = vmatpush1.msra.mxu0 %v1203
    %1218 = vmatprep.subr.mxu0 0.0
    %1219 = vmatpush1.msra.mxu0 %v1204
    %1220 = vmatprep.subr.mxu0 0.0
    %1221 = vmatpush1.msra.mxu0 %v1210
    %1222 = vmatprep.subr.mxu0 0.0
    %1223 = vmatpush1.msra.mxu0 0.0
    %1224 = vmatprep.subr.mxu0 0.0
    %1225 = vmatpush1.msra.mxu0 0.0
    %1226 = vmatprep.subr.mxu0 0.0
    %1227 = vmatpush1.msra.mxu0 0.0
    %1228 = vmatprep.subr.mxu0 0.0
    %1229 = vmatpush1.msra.mxu0 0.0
    %1230 = vmatprep.subr.mxu0 0.0
    %1231 = vmatpush1.msra.mxu0 0.0
    %1232 = vmatprep.subr.mxu0 0.0
    %1233 = vmatpush1.msra.mxu0 0.0
    %1234 = vmatprep.subr.mxu0 0.0
    %1235 = vmatpush1.msra.mxu0 0.0
    %1236 = vmatprep.subr.mxu0 0.0
    %1237 = vmatpush1.msra.mxu0 0.0
    %1238 = vmatprep.subr.mxu0 0.0
    %1239 = vmatpush1.msra.mxu0 0.0
    %1240 = vmatprep.subr.mxu0 0.0
    %1241 = vmatpush1.msra.mxu0 0.0
    %1242 = vmatprep.subr.mxu0 0.0
    %1243 = vmatpush1.msra.mxu0 0.0
    %1244 = vmatprep.subr.mxu0 0.0
    %1245 = vmatpush1.msra.mxu0 0.0
    %1246 = vmatprep.subr.mxu0 0.0
    %1247 = vmatpush1.msra.mxu0 0.0
    %1248 = vmatprep.subr.mxu0 0.0
    %1249 = vmatpush1.msra.mxu0 0.0
    %1250 = vmatprep.subr.mxu0 0.0
    %1251 = vmatpush1.msra.mxu0 0.0
    %1252 = vmatprep.subr.mxu0 0.0
    %1253 = vmatpush1.msra.mxu0 0.0
    %1254 = vmatprep.subr.mxu0 0.0
    %1255 = vmatpush1.msra.mxu0 0.0
    %1256 = vmatprep.subr.mxu0 0.0
    %1257 = vmatpush1.msra.mxu0 0.0
    %1258 = vmatprep.subr.mxu0 0.0
    %1259 = vmatpush1.msra.mxu0 0.0
    %1260 = vmatprep.subr.mxu0 0.0
    %1261 = vmatpush1.msra.mxu0 0.0
    %1262 = vmatprep.subr.mxu0 0.0
    %1263 = vmatpush1.msra.mxu0 0.0
    %1264 = vmatprep.subr.mxu0 0.0
    %1265 = vmatpush1.msra.mxu0 0.0
    %1266 = vmatprep.subr.mxu0 0.0
    %1267 = vmatpush1.msra.mxu0 0.0
    %1268 = vmatprep.subr.mxu0 0.0
    %1269 = vmatpush1.msra.mxu0 0.0
    %1270 = vmatprep.subr.mxu0 0.0
    %1271 = vmatpush1.msra.mxu0 0.0
    %1272 = vmatprep.subr.mxu0 0.0
    %1273 = vmatpush1.msra.mxu0 0.0
    %1274 = vmatprep.subr.mxu0 0.0
    %1275 = vmatpush1.msra.mxu0 0.0
    %1276 = vmatprep.mubr.f32.mxu0 0.0
    %1277 = vmatmul.mubr.f32.gmra.mrb[0].mxu0 %v1207
    %v1278 = vpop.f32.mrb[0].mxu0
    %v1279 = vadd.f32 0.0, %v1278
    %v1280 = vpop.f32.mrb[0].mxu0
    %1281 = vdwg.mxu0
    %v1282 = vadd.f32 %v1160, %v1279
    %s1283 = sld [smem:[#allocation2 + $0xa]]
    %v1284 = vstv %s1283
    %v1285 = vmul.f32 %v47, %v1284
    %s1286 = sld [smem:[#allocation2 + $0x8a]]
    %v1287 = vstv %s1286
    %v1288 = vmul.f32 %v52, %v1287
    %v1289 = vadd.f32 %v1285, %v1288
    %s1290 = sld [smem:[#allocation2 + $0x10a]]
    %v1291 = vstv %s1290
    %v1292 = vmul.f32 %v58, %v1291
    %v1293 = vadd.f32 %v1289, %v1292
    %s1294 = sld [smem:[#allocation2 + $0x18a]]
    %v1295 = vstv %s1294
    %v1296 = vmul.f32 %v64, %v1295
    %v1297 = vadd.f32 %v1293, %v1296
    %s1298 = sld [smem:[#allocation2 + $0x20a]]
    %v1299 = vstv %s1298
    %v1300 = vmul.f32 %v70, %v1299
    %v1301 = vadd.f32 %v1297, %v1300
    %s1302 = sld [smem:[#allocation2 + $0x28a]]
    %v1303 = vstv %s1302
    %v1304 = vmul.f32 %v76, %v1303
    %v1305 = vadd.f32 %v1301, %v1304
    %s1306 = sld [smem:[#allocation2 + $0x30a]]
    %v1307 = vstv %s1306
    %v1308 = vmul.f32 %v82, %v1307
    %v1309 = vadd.f32 %v1305, %v1308
    %s1310 = sld [smem:[#allocation2 + $0x38a]]
    %v1311 = vstv %s1310
    %v1312 = vmul.f32 %v88, %v1311
    %v1313 = vadd.f32 %v1309, %v1312
    %s1314 = sld [smem:[#allocation2 + $0x40a]]
    %v1315 = vstv %s1314
    %v1316 = vmul.f32 %v94, %v1315
    %v1317 = vadd.f32 %v1313, %v1316
    %s1318 = sld [smem:[#allocation4 + $0xa]]
    %v1319 = vstv %s1318
    %v1320 = vadd.f32 %v1317, %v1319
    %v1321 = vmax.f32 %v1320, 0.0
    %s1322 = scalar_lea.vmem %s3, 400
    %v1323 = vld [vmem:[%s1322] sm:$0xff]
    %v1324 = vld [vmem:[%s1322 + $0x8] sm:$0xff]
    %v1325 = vld [vmem:[%s1322 + $0x10] sm:$0xff]
    %v1326 = vld [vmem:[%s1322 + $0x18] sm:$0xff]
    %v1327 = vld [vmem:[%s1322 + $0x20] sm:$0xf]
    %v1329 = vsel %vm153, %v1321, 0
    %v1332 = vsel %vm157, %v1327, 0
    %1334 = vmatprep.subr.mxu0 0.0
    %1335 = vmatpush1.msra.mxu0 %v1323
    %1336 = vmatprep.subr.mxu0 0.0
    %1337 = vmatpush1.msra.mxu0 %v1324
    %1338 = vmatprep.subr.mxu0 0.0
    %1339 = vmatpush1.msra.mxu0 %v1325
    %1340 = vmatprep.subr.mxu0 0.0
    %1341 = vmatpush1.msra.mxu0 %v1326
    %1342 = vmatprep.subr.mxu0 0.0
    %1343 = vmatpush1.msra.mxu0 %v1332
    %1344 = vmatprep.subr.mxu0 0.0
    %1345 = vmatpush1.msra.mxu0 0.0
    %1346 = vmatprep.subr.mxu0 0.0
    %1347 = vmatpush1.msra.mxu0 0.0
    %1348 = vmatprep.subr.mxu0 0.0
    %1349 = vmatpush1.msra.mxu0 0.0
    %1350 = vmatprep.subr.mxu0 0.0
    %1351 = vmatpush1.msra.mxu0 0.0
    %1352 = vmatprep.subr.mxu0 0.0
    %1353 = vmatpush1.msra.mxu0 0.0
    %1354 = vmatprep.subr.mxu0 0.0
    %1355 = vmatpush1.msra.mxu0 0.0
    %1356 = vmatprep.subr.mxu0 0.0
    %1357 = vmatpush1.msra.mxu0 0.0
    %1358 = vmatprep.subr.mxu0 0.0
    %1359 = vmatpush1.msra.mxu0 0.0
    %1360 = vmatprep.subr.mxu0 0.0
    %1361 = vmatpush1.msra.mxu0 0.0
    %1362 = vmatprep.subr.mxu0 0.0
    %1363 = vmatpush1.msra.mxu0 0.0
    %1364 = vmatprep.subr.mxu0 0.0
    %1365 = vmatpush1.msra.mxu0 0.0
    %1366 = vmatprep.subr.mxu0 0.0
    %1367 = vmatpush1.msra.mxu0 0.0
    %1368 = vmatprep.subr.mxu0 0.0
    %1369 = vmatpush1.msra.mxu0 0.0
    %1370 = vmatprep.subr.mxu0 0.0
    %1371 = vmatpush1.msra.mxu0 0.0
    %1372 = vmatprep.subr.mxu0 0.0
    %1373 = vmatpush1.msra.mxu0 0.0
    %1374 = vmatprep.subr.mxu0 0.0
    %1375 = vmatpush1.msra.mxu0 0.0
    %1376 = vmatprep.subr.mxu0 0.0
    %1377 = vmatpush1.msra.mxu0 0.0
    %1378 = vmatprep.subr.mxu0 0.0
    %1379 = vmatpush1.msra.mxu0 0.0
    %1380 = vmatprep.subr.mxu0 0.0
    %1381 = vmatpush1.msra.mxu0 0.0
    %1382 = vmatprep.subr.mxu0 0.0
    %1383 = vmatpush1.msra.mxu0 0.0
    %1384 = vmatprep.subr.mxu0 0.0
    %1385 = vmatpush1.msra.mxu0 0.0
    %1386 = vmatprep.subr.mxu0 0.0
    %1387 = vmatpush1.msra.mxu0 0.0
    %1388 = vmatprep.subr.mxu0 0.0
    %1389 = vmatpush1.msra.mxu0 0.0
    %1390 = vmatprep.subr.mxu0 0.0
    %1391 = vmatpush1.msra.mxu0 0.0
    %1392 = vmatprep.subr.mxu0 0.0
    %1393 = vmatpush1.msra.mxu0 0.0
    %1394 = vmatprep.subr.mxu0 0.0
    %1395 = vmatpush1.msra.mxu0 0.0
    %1396 = vmatprep.subr.mxu0 0.0
    %1397 = vmatpush1.msra.mxu0 0.0
    %1398 = vmatprep.mubr.f32.mxu0 0.0
    %1399 = vmatmul.mubr.f32.gmra.mrb[0].mxu0 %v1329
    %v1400 = vpop.f32.mrb[0].mxu0
    %v1401 = vadd.f32 0.0, %v1400
    %v1402 = vpop.f32.mrb[0].mxu0
    %1403 = vdwg.mxu0
    %v1404 = vadd.f32 %v1282, %v1401
    %s1405 = sld [smem:[#allocation2 + $0xb]]
    %v1406 = vstv %s1405
    %v1407 = vmul.f32 %v47, %v1406
    %s1408 = sld [smem:[#allocation2 + $0x8b]]
    %v1409 = vstv %s1408
    %v1410 = vmul.f32 %v52, %v1409
    %v1411 = vadd.f32 %v1407, %v1410
    %s1412 = sld [smem:[#allocation2 + $0x10b]]
    %v1413 = vstv %s1412
    %v1414 = vmul.f32 %v58, %v1413
    %v1415 = vadd.f32 %v1411, %v1414
    %s1416 = sld [smem:[#allocation2 + $0x18b]]
    %v1417 = vstv %s1416
    %v1418 = vmul.f32 %v64, %v1417
    %v1419 = vadd.f32 %v1415, %v1418
    %s1420 = sld [smem:[#allocation2 + $0x20b]]
    %v1421 = vstv %s1420
    %v1422 = vmul.f32 %v70, %v1421
    %v1423 = vadd.f32 %v1419, %v1422
    %s1424 = sld [smem:[#allocation2 + $0x28b]]
    %v1425 = vstv %s1424
    %v1426 = vmul.f32 %v76, %v1425
    %v1427 = vadd.f32 %v1423, %v1426
    %s1428 = sld [smem:[#allocation2 + $0x30b]]
    %v1429 = vstv %s1428
    %v1430 = vmul.f32 %v82, %v1429
    %v1431 = vadd.f32 %v1427, %v1430
    %s1432 = sld [smem:[#allocation2 + $0x38b]]
    %v1433 = vstv %s1432
    %v1434 = vmul.f32 %v88, %v1433
    %v1435 = vadd.f32 %v1431, %v1434
    %s1436 = sld [smem:[#allocation2 + $0x40b]]
    %v1437 = vstv %s1436
    %v1438 = vmul.f32 %v94, %v1437
    %v1439 = vadd.f32 %v1435, %v1438
    %s1440 = sld [smem:[#allocation4 + $0xb]]
    %v1441 = vstv %s1440
    %v1442 = vadd.f32 %v1439, %v1441
    %v1443 = vmax.f32 %v1442, 0.0
    %s1444 = scalar_lea.vmem %s3, 440
    %v1445 = vld [vmem:[%s1444] sm:$0xff]
    %v1446 = vld [vmem:[%s1444 + $0x8] sm:$0xff]
    %v1447 = vld [vmem:[%s1444 + $0x10] sm:$0xff]
    %v1448 = vld [vmem:[%s1444 + $0x18] sm:$0xff]
    %v1449 = vld [vmem:[%s1444 + $0x20] sm:$0xf]
    %v1451 = vsel %vm153, %v1443, 0
    %v1454 = vsel %vm157, %v1449, 0
    %1456 = vmatprep.subr.mxu0 0.0
    %1457 = vmatpush1.msra.mxu0 %v1445
    %1458 = vmatprep.subr.mxu0 0.0
    %1459 = vmatpush1.msra.mxu0 %v1446
    %1460 = vmatprep.subr.mxu0 0.0
    %1461 = vmatpush1.msra.mxu0 %v1447
    %1462 = vmatprep.subr.mxu0 0.0
    %1463 = vmatpush1.msra.mxu0 %v1448
    %1464 = vmatprep.subr.mxu0 0.0
    %1465 = vmatpush1.msra.mxu0 %v1454
    %1466 = vmatprep.subr.mxu0 0.0
    %1467 = vmatpush1.msra.mxu0 0.0
    %1468 = vmatprep.subr.mxu0 0.0
    %1469 = vmatpush1.msra.mxu0 0.0
    %1470 = vmatprep.subr.mxu0 0.0
    %1471 = vmatpush1.msra.mxu0 0.0
    %1472 = vmatprep.subr.mxu0 0.0
    %1473 = vmatpush1.msra.mxu0 0.0
    %1474 = vmatprep.subr.mxu0 0.0
    %1475 = vmatpush1.msra.mxu0 0.0
    %1476 = vmatprep.subr.mxu0 0.0
    %1477 = vmatpush1.msra.mxu0 0.0
    %1478 = vmatprep.subr.mxu0 0.0
    %1479 = vmatpush1.msra.mxu0 0.0
    %1480 = vmatprep.subr.mxu0 0.0
    %1481 = vmatpush1.msra.mxu0 0.0
    %1482 = vmatprep.subr.mxu0 0.0
    %1483 = vmatpush1.msra.mxu0 0.0
    %1484 = vmatprep.subr.mxu0 0.0
    %1485 = vmatpush1.msra.mxu0 0.0
    %1486 = vmatprep.subr.mxu0 0.0
    %1487 = vmatpush1.msra.mxu0 0.0
    %1488 = vmatprep.subr.mxu0 0.0
    %1489 = vmatpush1.msra.mxu0 0.0
    %1490 = vmatprep.subr.mxu0 0.0
    %1491 = vmatpush1.msra.mxu0 0.0
    %1492 = vmatprep.subr.mxu0 0.0
    %1493 = vmatpush1.msra.mxu0 0.0
    %1494 = vmatprep.subr.mxu0 0.0
    %1495 = vmatpush1.msra.mxu0 0.0
    %1496 = vmatprep.subr.mxu0 0.0
    %1497 = vmatpush1.msra.mxu0 0.0
    %1498 = vmatprep.subr.mxu0 0.0
    %1499 = vmatpush1.msra.mxu0 0.0
    %1500 = vmatprep.subr.mxu0 0.0
    %1501 = vmatpush1.msra.mxu0 0.0
    %1502 = vmatprep.subr.mxu0 0.0
    %1503 = vmatpush1.msra.mxu0 0.0
    %1504 = vmatprep.subr.mxu0 0.0
    %1505 = vmatpush1.msra.mxu0 0.0
    %1506 = vmatprep.subr.mxu0 0.0
    %1507 = vmatpush1.msra.mxu0 0.0
    %1508 = vmatprep.subr.mxu0 0.0
    %1509 = vmatpush1.msra.mxu0 0.0
    %1510 = vmatprep.subr.mxu0 0.0
    %1511 = vmatpush1.msra.mxu0 0.0
    %1512 = vmatprep.subr.mxu0 0.0
    %1513 = vmatpush1.msra.mxu0 0.0
    %1514 = vmatprep.subr.mxu0 0.0
    %1515 = vmatpush1.msra.mxu0 0.0
    %1516 = vmatprep.subr.mxu0 0.0
    %1517 = vmatpush1.msra.mxu0 0.0
    %1518 = vmatprep.subr.mxu0 0.0
    %1519 = vmatpush1.msra.mxu0 0.0
    %1520 = vmatprep.mubr.f32.mxu0 0.0
    %1521 = vmatmul.mubr.f32.gmra.mrb[0].mxu0 %v1451
    %v1522 = vpop.f32.mrb[0].mxu0
    %v1523 = vadd.f32 0.0, %v1522
    %v1524 = vpop.f32.mrb[0].mxu0
    %1525 = vdwg.mxu0
    %v1526 = vadd.f32 %v1404, %v1523
    %s1527 = sld [smem:[#allocation2 + $0xc]]
    %v1528 = vstv %s1527
    %v1529 = vmul.f32 %v47, %v1528
    %s1530 = sld [smem:[#allocation2 + $0x8c]]
    %v1531 = vstv %s1530
    %v1532 = vmul.f32 %v52, %v1531
    %v1533 = vadd.f32 %v1529, %v1532
    %s1534 = sld [smem:[#allocation2 + $0x10c]]
    %v1535 = vstv %s1534
    %v1536 = vmul.f32 %v58, %v1535
    %v1537 = vadd.f32 %v1533, %v1536
    %s1538 = sld [smem:[#allocation2 + $0x18c]]
    %v1539 = vstv %s1538
    %v1540 = vmul.f32 %v64, %v1539
    %v1541 = vadd.f32 %v1537, %v1540
    %s1542 = sld [smem:[#allocation2 + $0x20c]]
    %v1543 = vstv %s1542
    %v1544 = vmul.f32 %v70, %v1543
    %v1545 = vadd.f32 %v1541, %v1544
    %s1546 = sld [smem:[#allocation2 + $0x28c]]
    %v1547 = vstv %s1546
    %v1548 = vmul.f32 %v76, %v1547
    %v1549 = vadd.f32 %v1545, %v1548
    %s1550 = sld [smem:[#allocation2 + $0x30c]]
    %v1551 = vstv %s1550
    %v1552 = vmul.f32 %v82, %v1551
    %v1553 = vadd.f32 %v1549, %v1552
    %s1554 = sld [smem:[#allocation2 + $0x38c]]
    %v1555 = vstv %s1554
    %v1556 = vmul.f32 %v88, %v1555
    %v1557 = vadd.f32 %v1553, %v1556
    %s1558 = sld [smem:[#allocation2 + $0x40c]]
    %v1559 = vstv %s1558
    %v1560 = vmul.f32 %v94, %v1559
    %v1561 = vadd.f32 %v1557, %v1560
    %s1562 = sld [smem:[#allocation4 + $0xc]]
    %v1563 = vstv %s1562
    %v1564 = vadd.f32 %v1561, %v1563
    %v1565 = vmax.f32 %v1564, 0.0
    %s1566 = scalar_lea.vmem %s3, 480
    %v1567 = vld [vmem:[%s1566] sm:$0xff]
    %v1568 = vld [vmem:[%s1566 + $0x8] sm:$0xff]
    %v1569 = vld [vmem:[%s1566 + $0x10] sm:$0xff]
    %v1570 = vld [vmem:[%s1566 + $0x18] sm:$0xff]
    %v1571 = vld [vmem:[%s1566 + $0x20] sm:$0xf]
    %v1573 = vsel %vm153, %v1565, 0
    %v1576 = vsel %vm157, %v1571, 0
    %1578 = vmatprep.subr.mxu0 0.0
    %1579 = vmatpush1.msra.mxu0 %v1567
    %1580 = vmatprep.subr.mxu0 0.0
    %1581 = vmatpush1.msra.mxu0 %v1568
    %1582 = vmatprep.subr.mxu0 0.0
    %1583 = vmatpush1.msra.mxu0 %v1569
    %1584 = vmatprep.subr.mxu0 0.0
    %1585 = vmatpush1.msra.mxu0 %v1570
    %1586 = vmatprep.subr.mxu0 0.0
    %1587 = vmatpush1.msra.mxu0 %v1576
    %1588 = vmatprep.subr.mxu0 0.0
    %1589 = vmatpush1.msra.mxu0 0.0
    %1590 = vmatprep.subr.mxu0 0.0
    %1591 = vmatpush1.msra.mxu0 0.0
    %1592 = vmatprep.subr.mxu0 0.0
    %1593 = vmatpush1.msra.mxu0 0.0
    %1594 = vmatprep.subr.mxu0 0.0
    %1595 = vmatpush1.msra.mxu0 0.0
    %1596 = vmatprep.subr.mxu0 0.0
    %1597 = vmatpush1.msra.mxu0 0.0
    %1598 = vmatprep.subr.mxu0 0.0
    %1599 = vmatpush1.msra.mxu0 0.0
    %1600 = vmatprep.subr.mxu0 0.0
    %1601 = vmatpush1.msra.mxu0 0.0
    %1602 = vmatprep.subr.mxu0 0.0
    %1603 = vmatpush1.msra.mxu0 0.0
    %1604 = vmatprep.subr.mxu0 0.0
    %1605 = vmatpush1.msra.mxu0 0.0
    %1606 = vmatprep.subr.mxu0 0.0
    %1607 = vmatpush1.msra.mxu0 0.0
    %1608 = vmatprep.subr.mxu0 0.0
    %1609 = vmatpush1.msra.mxu0 0.0
    %1610 = vmatprep.subr.mxu0 0.0
    %1611 = vmatpush1.msra.mxu0 0.0
    %1612 = vmatprep.subr.mxu0 0.0
    %1613 = vmatpush1.msra.mxu0 0.0
    %1614 = vmatprep.subr.mxu0 0.0
    %1615 = vmatpush1.msra.mxu0 0.0
    %1616 = vmatprep.subr.mxu0 0.0
    %1617 = vmatpush1.msra.mxu0 0.0
    %1618 = vmatprep.subr.mxu0 0.0
    %1619 = vmatpush1.msra.mxu0 0.0
    %1620 = vmatprep.subr.mxu0 0.0
    %1621 = vmatpush1.msra.mxu0 0.0
    %1622 = vmatprep.subr.mxu0 0.0
    %1623 = vmatpush1.msra.mxu0 0.0
    %1624 = vmatprep.subr.mxu0 0.0
    %1625 = vmatpush1.msra.mxu0 0.0
    %1626 = vmatprep.subr.mxu0 0.0
    %1627 = vmatpush1.msra.mxu0 0.0
    %1628 = vmatprep.subr.mxu0 0.0
    %1629 = vmatpush1.msra.mxu0 0.0
    %1630 = vmatprep.subr.mxu0 0.0
    %1631 = vmatpush1.msra.mxu0 0.0
    %1632 = vmatprep.subr.mxu0 0.0
    %1633 = vmatpush1.msra.mxu0 0.0
    %1634 = vmatprep.subr.mxu0 0.0
    %1635 = vmatpush1.msra.mxu0 0.0
    %1636 = vmatprep.subr.mxu0 0.0
    %1637 = vmatpush1.msra.mxu0 0.0
    %1638 = vmatprep.subr.mxu0 0.0
    %1639 = vmatpush1.msra.mxu0 0.0
    %1640 = vmatprep.subr.mxu0 0.0
    %1641 = vmatpush1.msra.mxu0 0.0
    %1642 = vmatprep.mubr.f32.mxu0 0.0
    %1643 = vmatmul.mubr.f32.gmra.mrb[0].mxu0 %v1573
    %v1644 = vpop.f32.mrb[0].mxu0
    %v1645 = vadd.f32 0.0, %v1644
    %v1646 = vpop.f32.mrb[0].mxu0
    %1647 = vdwg.mxu0
    %v1648 = vadd.f32 %v1526, %v1645
    %s1649 = sld [smem:[#allocation2 + $0xd]]
    %v1650 = vstv %s1649
    %v1651 = vmul.f32 %v47, %v1650
    %s1652 = sld [smem:[#allocation2 + $0x8d]]
    %v1653 = vstv %s1652
    %v1654 = vmul.f32 %v52, %v1653
    %v1655 = vadd.f32 %v1651, %v1654
    %s1656 = sld [smem:[#allocation2 + $0x10d]]
    %v1657 = vstv %s1656
    %v1658 = vmul.f32 %v58, %v1657
    %v1659 = vadd.f32 %v1655, %v1658
    %s1660 = sld [smem:[#allocation2 + $0x18d]]
    %v1661 = vstv %s1660
    %v1662 = vmul.f32 %v64, %v1661
    %v1663 = vadd.f32 %v1659, %v1662
    %s1664 = sld [smem:[#allocation2 + $0x20d]]
    %v1665 = vstv %s1664
    %v1666 = vmul.f32 %v70, %v1665
    %v1667 = vadd.f32 %v1663, %v1666
    %s1668 = sld [smem:[#allocation2 + $0x28d]]
    %v1669 = vstv %s1668
    %v1670 = vmul.f32 %v76, %v1669
    %v1671 = vadd.f32 %v1667, %v1670
    %s1672 = sld [smem:[#allocation2 + $0x30d]]
    %v1673 = vstv %s1672
    %v1674 = vmul.f32 %v82, %v1673
    %v1675 = vadd.f32 %v1671, %v1674
    %s1676 = sld [smem:[#allocation2 + $0x38d]]
    %v1677 = vstv %s1676
    %v1678 = vmul.f32 %v88, %v1677
    %v1679 = vadd.f32 %v1675, %v1678
    %s1680 = sld [smem:[#allocation2 + $0x40d]]
    %v1681 = vstv %s1680
    %v1682 = vmul.f32 %v94, %v1681
    %v1683 = vadd.f32 %v1679, %v1682
    %s1684 = sld [smem:[#allocation4 + $0xd]]
    %v1685 = vstv %s1684
    %v1686 = vadd.f32 %v1683, %v1685
    %v1687 = vmax.f32 %v1686, 0.0
    %s1688 = scalar_lea.vmem %s3, 520
    %v1689 = vld [vmem:[%s1688] sm:$0xff]
    %v1690 = vld [vmem:[%s1688 + $0x8] sm:$0xff]
    %v1691 = vld [vmem:[%s1688 + $0x10] sm:$0xff]
    %v1692 = vld [vmem:[%s1688 + $0x18] sm:$0xff]
    %v1693 = vld [vmem:[%s1688 + $0x20] sm:$0xf]
    %v1695 = vsel %vm153, %v1687, 0
    %v1698 = vsel %vm157, %v1693, 0
    %1700 = vmatprep.subr.mxu0 0.0
    %1701 = vmatpush1.msra.mxu0 %v1689
    %1702 = vmatprep.subr.mxu0 0.0
    %1703 = vmatpush1.msra.mxu0 %v1690
    %1704 = vmatprep.subr.mxu0 0.0
    %1705 = vmatpush1.msra.mxu0 %v1691
    %1706 = vmatprep.subr.mxu0 0.0
    %1707 = vmatpush1.msra.mxu0 %v1692
    %1708 = vmatprep.subr.mxu0 0.0
    %1709 = vmatpush1.msra.mxu0 %v1698
    %1710 = vmatprep.subr.mxu0 0.0
    %1711 = vmatpush1.msra.mxu0 0.0
    %1712 = vmatprep.subr.mxu0 0.0
    %1713 = vmatpush1.msra.mxu0 0.0
    %1714 = vmatprep.subr.mxu0 0.0
    %1715 = vmatpush1.msra.mxu0 0.0
    %1716 = vmatprep.subr.mxu0 0.0
    %1717 = vmatpush1.msra.mxu0 0.0
    %1718 = vmatprep.subr.mxu0 0.0
    %1719 = vmatpush1.msra.mxu0 0.0
    %1720 = vmatprep.subr.mxu0 0.0
    %1721 = vmatpush1.msra.mxu0 0.0
    %1722 = vmatprep.subr.mxu0 0.0
    %1723 = vmatpush1.msra.mxu0 0.0
    %1724 = vmatprep.subr.mxu0 0.0
    %1725 = vmatpush1.msra.mxu0 0.0
    %1726 = vmatprep.subr.mxu0 0.0
    %1727 = vmatpush1.msra.mxu0 0.0
    %1728 = vmatprep.subr.mxu0 0.0
    %1729 = vmatpush1.msra.mxu0 0.0
    %1730 = vmatprep.subr.mxu0 0.0
    %1731 = vmatpush1.msra.mxu0 0.0
    %1732 = vmatprep.subr.mxu0 0.0
    %1733 = vmatpush1.msra.mxu0 0.0
    %1734 = vmatprep.subr.mxu0 0.0
    %1735 = vmatpush1.msra.mxu0 0.0
    %1736 = vmatprep.subr.mxu0 0.0
    %1737 = vmatpush1.msra.mxu0 0.0
    %1738 = vmatprep.subr.mxu0 0.0
    %1739 = vmatpush1.msra.mxu0 0.0
    %1740 = vmatprep.subr.mxu0 0.0
    %1741 = vmatpush1.msra.mxu0 0.0
    %1742 = vmatprep.subr.mxu0 0.0
    %1743 = vmatpush1.msra.mxu0 0.0
    %1744 = vmatprep.subr.mxu0 0.0
    %1745 = vmatpush1.msra.mxu0 0.0
    %1746 = vmatprep.subr.mxu0 0.0
    %1747 = vmatpush1.msra.mxu0 0.0
    %1748 = vmatprep.subr.mxu0 0.0
    %1749 = vmatpush1.msra.mxu0 0.0
    %1750 = vmatprep.subr.mxu0 0.0
    %1751 = vmatpush1.msra.mxu0 0.0
    %1752 = vmatprep.subr.mxu0 0.0
    %1753 = vmatpush1.msra.mxu0 0.0
    %1754 = vmatprep.subr.mxu0 0.0
    %1755 = vmatpush1.msra.mxu0 0.0
    %1756 = vmatprep.subr.mxu0 0.0
    %1757 = vmatpush1.msra.mxu0 0.0
    %1758 = vmatprep.subr.mxu0 0.0
    %1759 = vmatpush1.msra.mxu0 0.0
    %1760 = vmatprep.subr.mxu0 0.0
    %1761 = vmatpush1.msra.mxu0 0.0
    %1762 = vmatprep.subr.mxu0 0.0
    %1763 = vmatpush1.msra.mxu0 0.0
    %1764 = vmatprep.mubr.f32.mxu0 0.0
    %1765 = vmatmul.mubr.f32.gmra.mrb[0].mxu0 %v1695
    %v1766 = vpop.f32.mrb[0].mxu0
    %v1767 = vadd.f32 0.0, %v1766
    %v1768 = vpop.f32.mrb[0].mxu0
    %1769 = vdwg.mxu0
    %v1770 = vadd.f32 %v1648, %v1767
    %s1771 = sld [smem:[#allocation2 + $0xe]]
    %v1772 = vstv %s1771
    %v1773 = vmul.f32 %v47, %v1772
    %s1774 = sld [smem:[#allocation2 + $0x8e]]
    %v1775 = vstv %s1774
    %v1776 = vmul.f32 %v52, %v1775
    %v1777 = vadd.f32 %v1773, %v1776
    %s1778 = sld [smem:[#allocation2 + $0x10e]]
    %v1779 = vstv %s1778
    %v1780 = vmul.f32 %v58, %v1779
    %v1781 = vadd.f32 %v1777, %v1780
    %s1782 = sld [smem:[#allocation2 + $0x18e]]
    %v1783 = vstv %s1782
    %v1784 = vmul.f32 %v64, %v1783
    %v1785 = vadd.f32 %v1781, %v1784
    %s1786 = sld [smem:[#allocation2 + $0x20e]]
    %v1787 = vstv %s1786
    %v1788 = vmul.f32 %v70, %v1787
    %v1789 = vadd.f32 %v1785, %v1788
    %s1790 = sld [smem:[#allocation2 + $0x28e]]
    %v1791 = vstv %s1790
    %v1792 = vmul.f32 %v76, %v1791
    %v1793 = vadd.f32 %v1789, %v1792
    %s1794 = sld [smem:[#allocation2 + $0x30e]]
    %v1795 = vstv %s1794
    %v1796 = vmul.f32 %v82, %v1795
    %v1797 = vadd.f32 %v1793, %v1796
    %s1798 = sld [smem:[#allocation2 + $0x38e]]
    %v1799 = vstv %s1798
    %v1800 = vmul.f32 %v88, %v1799
    %v1801 = vadd.f32 %v1797, %v1800
    %s1802 = sld [smem:[#allocation2 + $0x40e]]
    %v1803 = vstv %s1802
    %v1804 = vmul.f32 %v94, %v1803
    %v1805 = vadd.f32 %v1801, %v1804
    %s1806 = sld [smem:[#allocation4 + $0xe]]
    %v1807 = vstv %s1806
    %v1808 = vadd.f32 %v1805, %v1807
    %v1809 = vmax.f32 %v1808, 0.0
    %s1810 = scalar_lea.vmem %s3, 560
    %v1811 = vld [vmem:[%s1810] sm:$0xff]
    %v1812 = vld [vmem:[%s1810 + $0x8] sm:$0xff]
    %v1813 = vld [vmem:[%s1810 + $0x10] sm:$0xff]
    %v1814 = vld [vmem:[%s1810 + $0x18] sm:$0xff]
    %v1815 = vld [vmem:[%s1810 + $0x20] sm:$0xf]
    %v1817 = vsel %vm153, %v1809, 0
    %v1820 = vsel %vm157, %v1815, 0
    %1822 = vmatprep.subr.mxu0 0.0
    %1823 = vmatpush1.msra.mxu0 %v1811
    %1824 = vmatprep.subr.mxu0 0.0
    %1825 = vmatpush1.msra.mxu0 %v1812
    %1826 = vmatprep.subr.mxu0 0.0
    %1827 = vmatpush1.msra.mxu0 %v1813
    %1828 = vmatprep.subr.mxu0 0.0
    %1829 = vmatpush1.msra.mxu0 %v1814
    %1830 = vmatprep.subr.mxu0 0.0
    %1831 = vmatpush1.msra.mxu0 %v1820
    %1832 = vmatprep.subr.mxu0 0.0
    %1833 = vmatpush1.msra.mxu0 0.0
    %1834 = vmatprep.subr.mxu0 0.0
    %1835 = vmatpush1.msra.mxu0 0.0
    %1836 = vmatprep.subr.mxu0 0.0
    %1837 = vmatpush1.msra.mxu0 0.0
    %1838 = vmatprep.subr.mxu0 0.0
    %1839 = vmatpush1.msra.mxu0 0.0
    %1840 = vmatprep.subr.mxu0 0.0
    %1841 = vmatpush1.msra.mxu0 0.0
    %1842 = vmatprep.subr.mxu0 0.0
    %1843 = vmatpush1.msra.mxu0 0.0
    %1844 = vmatprep.subr.mxu0 0.0
    %1845 = vmatpush1.msra.mxu0 0.0
    %1846 = vmatprep.subr.mxu0 0.0
    %1847 = vmatpush1.msra.mxu0 0.0
    %1848 = vmatprep.subr.mxu0 0.0
    %1849 = vmatpush1.msra.mxu0 0.0
    %1850 = vmatprep.subr.mxu0 0.0
    %1851 = vmatpush1.msra.mxu0 0.0
    %1852 = vmatprep.subr.mxu0 0.0
    %1853 = vmatpush1.msra.mxu0 0.0
    %1854 = vmatprep.subr.mxu0 0.0
    %1855 = vmatpush1.msra.mxu0 0.0
    %1856 = vmatprep.subr.mxu0 0.0
    %1857 = vmatpush1.msra.mxu0 0.0
    %1858 = vmatprep.subr.mxu0 0.0
    %1859 = vmatpush1.msra.mxu0 0.0
    %1860 = vmatprep.subr.mxu0 0.0
    %1861 = vmatpush1.msra.mxu0 0.0
    %1862 = vmatprep.subr.mxu0 0.0
    %1863 = vmatpush1.msra.mxu0 0.0
    %1864 = vmatprep.subr.mxu0 0.0
    %1865 = vmatpush1.msra.mxu0 0.0
    %1866 = vmatprep.subr.mxu0 0.0
    %1867 = vmatpush1.msra.mxu0 0.0
    %1868 = vmatprep.subr.mxu0 0.0
    %1869 = vmatpush1.msra.mxu0 0.0
    %1870 = vmatprep.subr.mxu0 0.0
    %1871 = vmatpush1.msra.mxu0 0.0
    %1872 = vmatprep.subr.mxu0 0.0
    %1873 = vmatpush1.msra.mxu0 0.0
    %1874 = vmatprep.subr.mxu0 0.0
    %1875 = vmatpush1.msra.mxu0 0.0
    %1876 = vmatprep.subr.mxu0 0.0
    %1877 = vmatpush1.msra.mxu0 0.0
    %1878 = vmatprep.subr.mxu0 0.0
    %1879 = vmatpush1.msra.mxu0 0.0
    %1880 = vmatprep.subr.mxu0 0.0
    %1881 = vmatpush1.msra.mxu0 0.0
    %1882 = vmatprep.subr.mxu0 0.0
    %1883 = vmatpush1.msra.mxu0 0.0
    %1884 = vmatprep.subr.mxu0 0.0
    %1885 = vmatpush1.msra.mxu0 0.0
    %1886 = vmatprep.mubr.f32.mxu0 0.0
    %1887 = vmatmul.mubr.f32.gmra.mrb[0].mxu0 %v1817
    %v1888 = vpop.f32.mrb[0].mxu0
    %v1889 = vadd.f32 0.0, %v1888
    %v1890 = vpop.f32.mrb[0].mxu0
    %1891 = vdwg.mxu0
    %v1892 = vadd.f32 %v1770, %v1889
    %s1893 = sld [smem:[#allocation2 + $0xf]]
    %v1894 = vstv %s1893
    %v1895 = vmul.f32 %v47, %v1894
    %s1896 = sld [smem:[#allocation2 + $0x8f]]
    %v1897 = vstv %s1896
    %v1898 = vmul.f32 %v52, %v1897
    %v1899 = vadd.f32 %v1895, %v1898
    %s1900 = sld [smem:[#allocation2 + $0x10f]]
    %v1901 = vstv %s1900
    %v1902 = vmul.f32 %v58, %v1901
    %v1903 = vadd.f32 %v1899, %v1902
    %s1904 = sld [smem:[#allocation2 + $0x18f]]
    %v1905 = vstv %s1904
    %v1906 = vmul.f32 %v64, %v1905
    %v1907 = vadd.f32 %v1903, %v1906
    %s1908 = sld [smem:[#allocation2 + $0x20f]]
    %v1909 = vstv %s1908
    %v1910 = vmul.f32 %v70, %v1909
    %v1911 = vadd.f32 %v1907, %v1910
    %s1912 = sld [smem:[#allocation2 + $0x28f]]
    %v1913 = vstv %s1912
    %v1914 = vmul.f32 %v76, %v1913
    %v1915 = vadd.f32 %v1911, %v1914
    %s1916 = sld [smem:[#allocation2 + $0x30f]]
    %v1917 = vstv %s1916
    %v1918 = vmul.f32 %v82, %v1917
    %v1919 = vadd.f32 %v1915, %v1918
    %s1920 = sld [smem:[#allocation2 + $0x38f]]
    %v1921 = vstv %s1920
    %v1922 = vmul.f32 %v88, %v1921
    %v1923 = vadd.f32 %v1919, %v1922
    %s1924 = sld [smem:[#allocation2 + $0x40f]]
    %v1925 = vstv %s1924
    %v1926 = vmul.f32 %v94, %v1925
    %v1927 = vadd.f32 %v1923, %v1926
    %s1928 = sld [smem:[#allocation4 + $0xf]]
    %v1929 = vstv %s1928
    %v1930 = vadd.f32 %v1927, %v1929
    %v1931 = vmax.f32 %v1930, 0.0
    %s1932 = scalar_lea.vmem %s3, 600
    %v1933 = vld [vmem:[%s1932] sm:$0xff]
    %v1934 = vld [vmem:[%s1932 + $0x8] sm:$0xff]
    %v1935 = vld [vmem:[%s1932 + $0x10] sm:$0xff]
    %v1936 = vld [vmem:[%s1932 + $0x18] sm:$0xff]
    %v1937 = vld [vmem:[%s1932 + $0x20] sm:$0xf]
    %v1939 = vsel %vm153, %v1931, 0
    %v1942 = vsel %vm157, %v1937, 0
    %1944 = vmatprep.subr.mxu0 0.0
    %1945 = vmatpush1.msra.mxu0 %v1933
    %1946 = vmatprep.subr.mxu0 0.0
    %1947 = vmatpush1.msra.mxu0 %v1934
    %1948 = vmatprep.subr.mxu0 0.0
    %1949 = vmatpush1.msra.mxu0 %v1935
    %1950 = vmatprep.subr.mxu0 0.0
    %1951 = vmatpush1.msra.mxu0 %v1936
    %1952 = vmatprep.subr.mxu0 0.0
    %1953 = vmatpush1.msra.mxu0 %v1942
    %1954 = vmatprep.subr.mxu0 0.0
    %1955 = vmatpush1.msra.mxu0 0.0
    %1956 = vmatprep.subr.mxu0 0.0
    %1957 = vmatpush1.msra.mxu0 0.0
    %1958 = vmatprep.subr.mxu0 0.0
    %1959 = vmatpush1.msra.mxu0 0.0
    %1960 = vmatprep.subr.mxu0 0.0
    %1961 = vmatpush1.msra.mxu0 0.0
    %1962 = vmatprep.subr.mxu0 0.0
    %1963 = vmatpush1.msra.mxu0 0.0
    %1964 = vmatprep.subr.mxu0 0.0
    %1965 = vmatpush1.msra.mxu0 0.0
    %1966 = vmatprep.subr.mxu0 0.0
    %1967 = vmatpush1.msra.mxu0 0.0
    %1968 = vmatprep.subr.mxu0 0.0
    %1969 = vmatpush1.msra.mxu0 0.0
    %1970 = vmatprep.subr.mxu0 0.0
    %1971 = vmatpush1.msra.mxu0 0.0
    %1972 = vmatprep.subr.mxu0 0.0
    %1973 = vmatpush1.msra.mxu0 0.0
    %1974 = vmatprep.subr.mxu0 0.0
    %1975 = vmatpush1.msra.mxu0 0.0
    %1976 = vmatprep.subr.mxu0 0.0
    %1977 = vmatpush1.msra.mxu0 0.0
    %1978 = vmatprep.subr.mxu0 0.0
    %1979 = vmatpush1.msra.mxu0 0.0
    %1980 = vmatprep.subr.mxu0 0.0
    %1981 = vmatpush1.msra.mxu0 0.0
    %1982 = vmatprep.subr.mxu0 0.0
    %1983 = vmatpush1.msra.mxu0 0.0
    %1984 = vmatprep.subr.mxu0 0.0
    %1985 = vmatpush1.msra.mxu0 0.0
    %1986 = vmatprep.subr.mxu0 0.0
    %1987 = vmatpush1.msra.mxu0 0.0
    %1988 = vmatprep.subr.mxu0 0.0
    %1989 = vmatpush1.msra.mxu0 0.0
    %1990 = vmatprep.subr.mxu0 0.0
    %1991 = vmatpush1.msra.mxu0 0.0
    %1992 = vmatprep.subr.mxu0 0.0
    %1993 = vmatpush1.msra.mxu0 0.0
    %1994 = vmatprep.subr.mxu0 0.0
    %1995 = vmatpush1.msra.mxu0 0.0
    %1996 = vmatprep.subr.mxu0 0.0
    %1997 = vmatpush1.msra.mxu0 0.0
    %1998 = vmatprep.subr.mxu0 0.0
    %1999 = vmatpush1.msra.mxu0 0.0
    %2000 = vmatprep.subr.mxu0 0.0
    %2001 = vmatpush1.msra.mxu0 0.0
    %2002 = vmatprep.subr.mxu0 0.0
    %2003 = vmatpush1.msra.mxu0 0.0
    %2004 = vmatprep.subr.mxu0 0.0
    %2005 = vmatpush1.msra.mxu0 0.0
    %2006 = vmatprep.subr.mxu0 0.0
    %2007 = vmatpush1.msra.mxu0 0.0
    %2008 = vmatprep.mubr.f32.mxu0 0.0
    %2009 = vmatmul.mubr.f32.gmra.mrb[0].mxu0 %v1939
    %v2010 = vpop.f32.mrb[0].mxu0
    %v2011 = vadd.f32 0.0, %v2010
    %v2012 = vpop.f32.mrb[0].mxu0
    %2013 = vdwg.mxu0
    %v2014 = vadd.f32 %v1892, %v2011
    %s2015 = sld [smem:[#allocation2 + $0x10]]
    %v2016 = vstv %s2015
    %v2017 = vmul.f32 %v47, %v2016
    %s2018 = sld [smem:[#allocation2 + $0x90]]
    %v2019 = vstv %s2018
    %v2020 = vmul.f32 %v52, %v2019
    %v2021 = vadd.f32 %v2017, %v2020
    %s2022 = sld [smem:[#allocation2 + $0x110]]
    %v2023 = vstv %s2022
    %v2024 = vmul.f32 %v58, %v2023
    %v2025 = vadd.f32 %v2021, %v2024
    %s2026 = sld [smem:[#allocation2 + $0x190]]
    %v2027 = vstv %s2026
    %v2028 = vmul.f32 %v64, %v2027
    %v2029 = vadd.f32 %v2025, %v2028
    %s2030 = sld [smem:[#allocation2 + $0x210]]
    %v2031 = vstv %s2030
    %v2032 = vmul.f32 %v70, %v2031
    %v2033 = vadd.f32 %v2029, %v2032
    %s2034 = sld [smem:[#allocation2 + $0x290]]
    %v2035 = vstv %s2034
    %v2036 = vmul.f32 %v76, %v2035
    %v2037 = vadd.f32 %v2033, %v2036
    %s2038 = sld [smem:[#allocation2 + $0x310]]
    %v2039 = vstv %s2038
    %v2040 = vmul.f32 %v82, %v2039
    %v2041 = vadd.f32 %v2037, %v2040
    %s2042 = sld [smem:[#allocation2 + $0x390]]
    %v2043 = vstv %s2042
    %v2044 = vmul.f32 %v88, %v2043
    %v2045 = vadd.f32 %v2041, %v2044
    %s2046 = sld [smem:[#allocation2 + $0x410]]
    %v2047 = vstv %s2046
    %v2048 = vmul.f32 %v94, %v2047
    %v2049 = vadd.f32 %v2045, %v2048
    %s2050 = sld [smem:[#allocation4 + $0x10]]
    %v2051 = vstv %s2050
    %v2052 = vadd.f32 %v2049, %v2051
    %v2053 = vmax.f32 %v2052, 0.0
    %s2054 = scalar_lea.vmem %s3, 640
    %v2055 = vld [vmem:[%s2054] sm:$0xff]
    %v2056 = vld [vmem:[%s2054 + $0x8] sm:$0xff]
    %v2057 = vld [vmem:[%s2054 + $0x10] sm:$0xff]
    %v2058 = vld [vmem:[%s2054 + $0x18] sm:$0xff]
    %v2059 = vld [vmem:[%s2054 + $0x20] sm:$0xf]
    %v2061 = vsel %vm153, %v2053, 0
    %v2064 = vsel %vm157, %v2059, 0
    %2066 = vmatprep.subr.mxu0 0.0
    %2067 = vmatpush1.msra.mxu0 %v2055
    %2068 = vmatprep.subr.mxu0 0.0
    %2069 = vmatpush1.msra.mxu0 %v2056
    %2070 = vmatprep.subr.mxu0 0.0
    %2071 = vmatpush1.msra.mxu0 %v2057
    %2072 = vmatprep.subr.mxu0 0.0
    %2073 = vmatpush1.msra.mxu0 %v2058
    %2074 = vmatprep.subr.mxu0 0.0
    %2075 = vmatpush1.msra.mxu0 %v2064
    %2076 = vmatprep.subr.mxu0 0.0
    %2077 = vmatpush1.msra.mxu0 0.0
    %2078 = vmatprep.subr.mxu0 0.0
    %2079 = vmatpush1.msra.mxu0 0.0
    %2080 = vmatprep.subr.mxu0 0.0
    %2081 = vmatpush1.msra.mxu0 0.0
    %2082 = vmatprep.subr.mxu0 0.0
    %2083 = vmatpush1.msra.mxu0 0.0
    %2084 = vmatprep.subr.mxu0 0.0
    %2085 = vmatpush1.msra.mxu0 0.0
    %2086 = vmatprep.subr.mxu0 0.0
    %2087 = vmatpush1.msra.mxu0 0.0
    %2088 = vmatprep.subr.mxu0 0.0
    %2089 = vmatpush1.msra.mxu0 0.0
    %2090 = vmatprep.subr.mxu0 0.0
    %2091 = vmatpush1.msra.mxu0 0.0
    %2092 = vmatprep.subr.mxu0 0.0
    %2093 = vmatpush1.msra.mxu0 0.0
    %2094 = vmatprep.subr.mxu0 0.0
    %2095 = vmatpush1.msra.mxu0 0.0
    %2096 = vmatprep.subr.mxu0 0.0
    %2097 = vmatpush1.msra.mxu0 0.0
    %2098 = vmatprep.subr.mxu0 0.0
    %2099 = vmatpush1.msra.mxu0 0.0
    %2100 = vmatprep.subr.mxu0 0.0
    %2101 = vmatpush1.msra.mxu0 0.0
    %2102 = vmatprep.subr.mxu0 0.0
    %2103 = vmatpush1.msra.mxu0 0.0
    %2104 = vmatprep.subr.mxu0 0.0
    %2105 = vmatpush1.msra.mxu0 0.0
    %2106 = vmatprep.subr.mxu0 0.0
    %2107 = vmatpush1.msra.mxu0 0.0
    %2108 = vmatprep.subr.mxu0 0.0
    %2109 = vmatpush1.msra.mxu0 0.0
    %2110 = vmatprep.subr.mxu0 0.0
    %2111 = vmatpush1.msra.mxu0 0.0
    %2112 = vmatprep.subr.mxu0 0.0
    %2113 = vmatpush1.msra.mxu0 0.0
    %2114 = vmatprep.subr.mxu0 0.0
    %2115 = vmatpush1.msra.mxu0 0.0
    %2116 = vmatprep.subr.mxu0 0.0
    %2117 = vmatpush1.msra.mxu0 0.0
    %2118 = vmatprep.subr.mxu0 0.0
    %2119 = vmatpush1.msra.mxu0 0.0
    %2120 = vmatprep.subr.mxu0 0.0
    %2121 = vmatpush1.msra.mxu0 0.0
    %2122 = vmatprep.subr.mxu0 0.0
    %2123 = vmatpush1.msra.mxu0 0.0
    %2124 = vmatprep.subr.mxu0 0.0
    %2125 = vmatpush1.msra.mxu0 0.0
    %2126 = vmatprep.subr.mxu0 0.0
    %2127 = vmatpush1.msra.mxu0 0.0
    %2128 = vmatprep.subr.mxu0 0.0
    %2129 = vmatpush1.msra.mxu0 0.0
    %2130 = vmatprep.mubr.f32.mxu0 0.0
    %2131 = vmatmul.mubr.f32.gmra.mrb[0].mxu0 %v2061
    %v2132 = vpop.f32.mrb[0].mxu0
    %v2133 = vadd.f32 0.0, %v2132
    %v2134 = vpop.f32.mrb[0].mxu0
    %2135 = vdwg.mxu0
    %v2136 = vadd.f32 %v2014, %v2133
    %s2137 = sld [smem:[#allocation2 + $0x11]]
    %v2138 = vstv %s2137
    %v2139 = vmul.f32 %v47, %v2138
    %s2140 = sld [smem:[#allocation2 + $0x91]]
    %v2141 = vstv %s2140
    %v2142 = vmul.f32 %v52, %v2141
    %v2143 = vadd.f32 %v2139, %v2142
    %s2144 = sld [smem:[#allocation2 + $0x111]]
    %v2145 = vstv %s2144
    %v2146 = vmul.f32 %v58, %v2145
    %v2147 = vadd.f32 %v2143, %v2146
    %s2148 = sld [smem:[#allocation2 + $0x191]]
    %v2149 = vstv %s2148
    %v2150 = vmul.f32 %v64, %v2149
    %v2151 = vadd.f32 %v2147, %v2150
    %s2152 = sld [smem:[#allocation2 + $0x211]]
    %v2153 = vstv %s2152
    %v2154 = vmul.f32 %v70, %v2153
    %v2155 = vadd.f32 %v2151, %v2154
    %s2156 = sld [smem:[#allocation2 + $0x291]]
    %v2157 = vstv %s2156
    %v2158 = vmul.f32 %v76, %v2157
    %v2159 = vadd.f32 %v2155, %v2158
    %s2160 = sld [smem:[#allocation2 + $0x311]]
    %v2161 = vstv %s2160
    %v2162 = vmul.f32 %v82, %v2161
    %v2163 = vadd.f32 %v2159, %v2162
    %s2164 = sld [smem:[#allocation2 + $0x391]]
    %v2165 = vstv %s2164
    %v2166 = vmul.f32 %v88, %v2165
    %v2167 = vadd.f32 %v2163, %v2166
    %s2168 = sld [smem:[#allocation2 + $0x411]]
    %v2169 = vstv %s2168
    %v2170 = vmul.f32 %v94, %v2169
    %v2171 = vadd.f32 %v2167, %v2170
    %s2172 = sld [smem:[#allocation4 + $0x11]]
    %v2173 = vstv %s2172
    %v2174 = vadd.f32 %v2171, %v2173
    %v2175 = vmax.f32 %v2174, 0.0
    %s2176 = scalar_lea.vmem %s3, 680
    %v2177 = vld [vmem:[%s2176] sm:$0xff]
    %v2178 = vld [vmem:[%s2176 + $0x8] sm:$0xff]
    %v2179 = vld [vmem:[%s2176 + $0x10] sm:$0xff]
    %v2180 = vld [vmem:[%s2176 + $0x18] sm:$0xff]
    %v2181 = vld [vmem:[%s2176 + $0x20] sm:$0xf]
    %v2183 = vsel %vm153, %v2175, 0
    %v2186 = vsel %vm157, %v2181, 0
    %2188 = vmatprep.subr.mxu0 0.0
    %2189 = vmatpush1.msra.mxu0 %v2177
    %2190 = vmatprep.subr.mxu0 0.0
    %2191 = vmatpush1.msra.mxu0 %v2178
    %2192 = vmatprep.subr.mxu0 0.0
    %2193 = vmatpush1.msra.mxu0 %v2179
    %2194 = vmatprep.subr.mxu0 0.0
    %2195 = vmatpush1.msra.mxu0 %v2180
    %2196 = vmatprep.subr.mxu0 0.0
    %2197 = vmatpush1.msra.mxu0 %v2186
    %2198 = vmatprep.subr.mxu0 0.0
    %2199 = vmatpush1.msra.mxu0 0.0
    %2200 = vmatprep.subr.mxu0 0.0
    %2201 = vmatpush1.msra.mxu0 0.0
    %2202 = vmatprep.subr.mxu0 0.0
    %2203 = vmatpush1.msra.mxu0 0.0
    %2204 = vmatprep.subr.mxu0 0.0
    %2205 = vmatpush1.msra.mxu0 0.0
    %2206 = vmatprep.subr.mxu0 0.0
    %2207 = vmatpush1.msra.mxu0 0.0
    %2208 = vmatprep.subr.mxu0 0.0
    %2209 = vmatpush1.msra.mxu0 0.0
    %2210 = vmatprep.subr.mxu0 0.0
    %2211 = vmatpush1.msra.mxu0 0.0
    %2212 = vmatprep.subr.mxu0 0.0
    %2213 = vmatpush1.msra.mxu0 0.0
    %2214 = vmatprep.subr.mxu0 0.0
    %2215 = vmatpush1.msra.mxu0 0.0
    %2216 = vmatprep.subr.mxu0 0.0
    %2217 = vmatpush1.msra.mxu0 0.0
    %2218 = vmatprep.subr.mxu0 0.0
    %2219 = vmatpush1.msra.mxu0 0.0
    %2220 = vmatprep.subr.mxu0 0.0
    %2221 = vmatpush1.msra.mxu0 0.0
    %2222 = vmatprep.subr.mxu0 0.0
    %2223 = vmatpush1.msra.mxu0 0.0
    %2224 = vmatprep.subr.mxu0 0.0
    %2225 = vmatpush1.msra.mxu0 0.0
    %2226 = vmatprep.subr.mxu0 0.0
    %2227 = vmatpush1.msra.mxu0 0.0
    %2228 = vmatprep.subr.mxu0 0.0
    %2229 = vmatpush1.msra.mxu0 0.0
    %2230 = vmatprep.subr.mxu0 0.0
    %2231 = vmatpush1.msra.mxu0 0.0
    %2232 = vmatprep.subr.mxu0 0.0
    %2233 = vmatpush1.msra.mxu0 0.0
    %2234 = vmatprep.subr.mxu0 0.0
    %2235 = vmatpush1.msra.mxu0 0.0
    %2236 = vmatprep.subr.mxu0 0.0
    %2237 = vmatpush1.msra.mxu0 0.0
    %2238 = vmatprep.subr.mxu0 0.0
    %2239 = vmatpush1.msra.mxu0 0.0
    %2240 = vmatprep.subr.mxu0 0.0
    %2241 = vmatpush1.msra.mxu0 0.0
    %2242 = vmatprep.subr.mxu0 0.0
    %2243 = vmatpush1.msra.mxu0 0.0
    %2244 = vmatprep.subr.mxu0 0.0
    %2245 = vmatpush1.msra.mxu0 0.0
    %2246 = vmatprep.subr.mxu0 0.0
    %2247 = vmatpush1.msra.mxu0 0.0
    %2248 = vmatprep.subr.mxu0 0.0
    %2249 = vmatpush1.msra.mxu0 0.0
    %2250 = vmatprep.subr.mxu0 0.0
    %2251 = vmatpush1.msra.mxu0 0.0
    %2252 = vmatprep.mubr.f32.mxu0 0.0
    %2253 = vmatmul.mubr.f32.gmra.mrb[0].mxu0 %v2183
    %v2254 = vpop.f32.mrb[0].mxu0
    %v2255 = vadd.f32 0.0, %v2254
    %v2256 = vpop.f32.mrb[0].mxu0
    %2257 = vdwg.mxu0
    %v2258 = vadd.f32 %v2136, %v2255
    %s2259 = sld [smem:[#allocation2 + $0x12]]
    %v2260 = vstv %s2259
    %v2261 = vmul.f32 %v47, %v2260
    %s2262 = sld [smem:[#allocation2 + $0x92]]
    %v2263 = vstv %s2262
    %v2264 = vmul.f32 %v52, %v2263
    %v2265 = vadd.f32 %v2261, %v2264
    %s2266 = sld [smem:[#allocation2 + $0x112]]
    %v2267 = vstv %s2266
    %v2268 = vmul.f32 %v58, %v2267
    %v2269 = vadd.f32 %v2265, %v2268
    %s2270 = sld [smem:[#allocation2 + $0x192]]
    %v2271 = vstv %s2270
    %v2272 = vmul.f32 %v64, %v2271
    %v2273 = vadd.f32 %v2269, %v2272
    %s2274 = sld [smem:[#allocation2 + $0x212]]
    %v2275 = vstv %s2274
    %v2276 = vmul.f32 %v70, %v2275
    %v2277 = vadd.f32 %v2273, %v2276
    %s2278 = sld [smem:[#allocation2 + $0x292]]
    %v2279 = vstv %s2278
    %v2280 = vmul.f32 %v76, %v2279
    %v2281 = vadd.f32 %v2277, %v2280
    %s2282 = sld [smem:[#allocation2 + $0x312]]
    %v2283 = vstv %s2282
    %v2284 = vmul.f32 %v82, %v2283
    %v2285 = vadd.f32 %v2281, %v2284
    %s2286 = sld [smem:[#allocation2 + $0x392]]
    %v2287 = vstv %s2286
    %v2288 = vmul.f32 %v88, %v2287
    %v2289 = vadd.f32 %v2285, %v2288
    %s2290 = sld [smem:[#allocation2 + $0x412]]
    %v2291 = vstv %s2290
    %v2292 = vmul.f32 %v94, %v2291
    %v2293 = vadd.f32 %v2289, %v2292
    %s2294 = sld [smem:[#allocation4 + $0x12]]
    %v2295 = vstv %s2294
    %v2296 = vadd.f32 %v2293, %v2295
    %v2297 = vmax.f32 %v2296, 0.0
    %s2298 = scalar_lea.vmem %s3, 720
    %v2299 = vld [vmem:[%s2298] sm:$0xff]
    %v2300 = vld [vmem:[%s2298 + $0x8] sm:$0xff]
    %v2301 = vld [vmem:[%s2298 + $0x10] sm:$0xff]
    %v2302 = vld [vmem:[%s2298 + $0x18] sm:$0xff]
    %v2303 = vld [vmem:[%s2298 + $0x20] sm:$0xf]
    %v2305 = vsel %vm153, %v2297, 0
    %v2308 = vsel %vm157, %v2303, 0
    %2310 = vmatprep.subr.mxu0 0.0
    %2311 = vmatpush1.msra.mxu0 %v2299
    %2312 = vmatprep.subr.mxu0 0.0
    %2313 = vmatpush1.msra.mxu0 %v2300
    %2314 = vmatprep.subr.mxu0 0.0
    %2315 = vmatpush1.msra.mxu0 %v2301
    %2316 = vmatprep.subr.mxu0 0.0
    %2317 = vmatpush1.msra.mxu0 %v2302
    %2318 = vmatprep.subr.mxu0 0.0
    %2319 = vmatpush1.msra.mxu0 %v2308
    %2320 = vmatprep.subr.mxu0 0.0
    %2321 = vmatpush1.msra.mxu0 0.0
    %2322 = vmatprep.subr.mxu0 0.0
    %2323 = vmatpush1.msra.mxu0 0.0
    %2324 = vmatprep.subr.mxu0 0.0
    %2325 = vmatpush1.msra.mxu0 0.0
    %2326 = vmatprep.subr.mxu0 0.0
    %2327 = vmatpush1.msra.mxu0 0.0
    %2328 = vmatprep.subr.mxu0 0.0
    %2329 = vmatpush1.msra.mxu0 0.0
    %2330 = vmatprep.subr.mxu0 0.0
    %2331 = vmatpush1.msra.mxu0 0.0
    %2332 = vmatprep.subr.mxu0 0.0
    %2333 = vmatpush1.msra.mxu0 0.0
    %2334 = vmatprep.subr.mxu0 0.0
    %2335 = vmatpush1.msra.mxu0 0.0
    %2336 = vmatprep.subr.mxu0 0.0
    %2337 = vmatpush1.msra.mxu0 0.0
    %2338 = vmatprep.subr.mxu0 0.0
    %2339 = vmatpush1.msra.mxu0 0.0
    %2340 = vmatprep.subr.mxu0 0.0
    %2341 = vmatpush1.msra.mxu0 0.0
    %2342 = vmatprep.subr.mxu0 0.0
    %2343 = vmatpush1.msra.mxu0 0.0
    %2344 = vmatprep.subr.mxu0 0.0
    %2345 = vmatpush1.msra.mxu0 0.0
    %2346 = vmatprep.subr.mxu0 0.0
    %2347 = vmatpush1.msra.mxu0 0.0
    %2348 = vmatprep.subr.mxu0 0.0
    %2349 = vmatpush1.msra.mxu0 0.0
    %2350 = vmatprep.subr.mxu0 0.0
    %2351 = vmatpush1.msra.mxu0 0.0
    %2352 = vmatprep.subr.mxu0 0.0
    %2353 = vmatpush1.msra.mxu0 0.0
    %2354 = vmatprep.subr.mxu0 0.0
    %2355 = vmatpush1.msra.mxu0 0.0
    %2356 = vmatprep.subr.mxu0 0.0
    %2357 = vmatpush1.msra.mxu0 0.0
    %2358 = vmatprep.subr.mxu0 0.0
    %2359 = vmatpush1.msra.mxu0 0.0
    %2360 = vmatprep.subr.mxu0 0.0
    %2361 = vmatpush1.msra.mxu0 0.0
    %2362 = vmatprep.subr.mxu0 0.0
    %2363 = vmatpush1.msra.mxu0 0.0
    %2364 = vmatprep.subr.mxu0 0.0
    %2365 = vmatpush1.msra.mxu0 0.0
    %2366 = vmatprep.subr.mxu0 0.0
    %2367 = vmatpush1.msra.mxu0 0.0
    %2368 = vmatprep.subr.mxu0 0.0
    %2369 = vmatpush1.msra.mxu0 0.0
    %2370 = vmatprep.subr.mxu0 0.0
    %2371 = vmatpush1.msra.mxu0 0.0
    %2372 = vmatprep.subr.mxu0 0.0
    %2373 = vmatpush1.msra.mxu0 0.0
    %2374 = vmatprep.mubr.f32.mxu0 0.0
    %2375 = vmatmul.mubr.f32.gmra.mrb[0].mxu0 %v2305
    %v2376 = vpop.f32.mrb[0].mxu0
    %v2377 = vadd.f32 0.0, %v2376
    %v2378 = vpop.f32.mrb[0].mxu0
    %2379 = vdwg.mxu0
    %v2380 = vadd.f32 %v2258, %v2377
    %s2381 = sld [smem:[#allocation2 + $0x13]]
    %v2382 = vstv %s2381
    %v2383 = vmul.f32 %v47, %v2382
    %s2384 = sld [smem:[#allocation2 + $0x93]]
    %v2385 = vstv %s2384
    %v2386 = vmul.f32 %v52, %v2385
    %v2387 = vadd.f32 %v2383, %v2386
    %s2388 = sld [smem:[#allocation2 + $0x113]]
    %v2389 = vstv %s2388
    %v2390 = vmul.f32 %v58, %v2389
    %v2391 = vadd.f32 %v2387, %v2390
    %s2392 = sld [smem:[#allocation2 + $0x193]]
    %v2393 = vstv %s2392
    %v2394 = vmul.f32 %v64, %v2393
    %v2395 = vadd.f32 %v2391, %v2394
    %s2396 = sld [smem:[#allocation2 + $0x213]]
    %v2397 = vstv %s2396
    %v2398 = vmul.f32 %v70, %v2397
    %v2399 = vadd.f32 %v2395, %v2398
    %s2400 = sld [smem:[#allocation2 + $0x293]]
    %v2401 = vstv %s2400
    %v2402 = vmul.f32 %v76, %v2401
    %v2403 = vadd.f32 %v2399, %v2402
    %s2404 = sld [smem:[#allocation2 + $0x313]]
    %v2405 = vstv %s2404
    %v2406 = vmul.f32 %v82, %v2405
    %v2407 = vadd.f32 %v2403, %v2406
    %s2408 = sld [smem:[#allocation2 + $0x393]]
    %v2409 = vstv %s2408
    %v2410 = vmul.f32 %v88, %v2409
    %v2411 = vadd.f32 %v2407, %v2410
    %s2412 = sld [smem:[#allocation2 + $0x413]]
    %v2413 = vstv %s2412
    %v2414 = vmul.f32 %v94, %v2413
    %v2415 = vadd.f32 %v2411, %v2414
    %s2416 = sld [smem:[#allocation4 + $0x13]]
    %v2417 = vstv %s2416
    %v2418 = vadd.f32 %v2415, %v2417
    %v2419 = vmax.f32 %v2418, 0.0
    %s2420 = scalar_lea.vmem %s3, 760
    %v2421 = vld [vmem:[%s2420] sm:$0xff]
    %v2422 = vld [vmem:[%s2420 + $0x8] sm:$0xff]
    %v2423 = vld [vmem:[%s2420 + $0x10] sm:$0xff]
    %v2424 = vld [vmem:[%s2420 + $0x18] sm:$0xff]
    %v2425 = vld [vmem:[%s2420 + $0x20] sm:$0xf]
    %v2427 = vsel %vm153, %v2419, 0
    %v2430 = vsel %vm157, %v2425, 0
    %2432 = vmatprep.subr.mxu0 0.0
    %2433 = vmatpush1.msra.mxu0 %v2421
    %2434 = vmatprep.subr.mxu0 0.0
    %2435 = vmatpush1.msra.mxu0 %v2422
    %2436 = vmatprep.subr.mxu0 0.0
    %2437 = vmatpush1.msra.mxu0 %v2423
    %2438 = vmatprep.subr.mxu0 0.0
    %2439 = vmatpush1.msra.mxu0 %v2424
    %2440 = vmatprep.subr.mxu0 0.0
    %2441 = vmatpush1.msra.mxu0 %v2430
    %2442 = vmatprep.subr.mxu0 0.0
    %2443 = vmatpush1.msra.mxu0 0.0
    %2444 = vmatprep.subr.mxu0 0.0
    %2445 = vmatpush1.msra.mxu0 0.0
    %2446 = vmatprep.subr.mxu0 0.0
    %2447 = vmatpush1.msra.mxu0 0.0
    %2448 = vmatprep.subr.mxu0 0.0
    %2449 = vmatpush1.msra.mxu0 0.0
    %2450 = vmatprep.subr.mxu0 0.0
    %2451 = vmatpush1.msra.mxu0 0.0
    %2452 = vmatprep.subr.mxu0 0.0
    %2453 = vmatpush1.msra.mxu0 0.0
    %2454 = vmatprep.subr.mxu0 0.0
    %2455 = vmatpush1.msra.mxu0 0.0
    %2456 = vmatprep.subr.mxu0 0.0
    %2457 = vmatpush1.msra.mxu0 0.0
    %2458 = vmatprep.subr.mxu0 0.0
    %2459 = vmatpush1.msra.mxu0 0.0
    %2460 = vmatprep.subr.mxu0 0.0
    %2461 = vmatpush1.msra.mxu0 0.0
    %2462 = vmatprep.subr.mxu0 0.0
    %2463 = vmatpush1.msra.mxu0 0.0
    %2464 = vmatprep.subr.mxu0 0.0
    %2465 = vmatpush1.msra.mxu0 0.0
    %2466 = vmatprep.subr.mxu0 0.0
    %2467 = vmatpush1.msra.mxu0 0.0
    %2468 = vmatprep.subr.mxu0 0.0
    %2469 = vmatpush1.msra.mxu0 0.0
    %2470 = vmatprep.subr.mxu0 0.0
    %2471 = vmatpush1.msra.mxu0 0.0
    %2472 = vmatprep.subr.mxu0 0.0
    %2473 = vmatpush1.msra.mxu0 0.0
    %2474 = vmatprep.subr.mxu0 0.0
    %2475 = vmatpush1.msra.mxu0 0.0
    %2476 = vmatprep.subr.mxu0 0.0
    %2477 = vmatpush1.msra.mxu0 0.0
    %2478 = vmatprep.subr.mxu0 0.0
    %2479 = vmatpush1.msra.mxu0 0.0
    %2480 = vmatprep.subr.mxu0 0.0
    %2481 = vmatpush1.msra.mxu0 0.0
    %2482 = vmatprep.subr.mxu0 0.0
    %2483 = vmatpush1.msra.mxu0 0.0
    %2484 = vmatprep.subr.mxu0 0.0
    %2485 = vmatpush1.msra.mxu0 0.0
    %2486 = vmatprep.subr.mxu0 0.0
    %2487 = vmatpush1.msra.mxu0 0.0
    %2488 = vmatprep.subr.mxu0 0.0
    %2489 = vmatpush1.msra.mxu0 0.0
    %2490 = vmatprep.subr.mxu0 0.0
    %2491 = vmatpush1.msra.mxu0 0.0
    %2492 = vmatprep.subr.mxu0 0.0
    %2493 = vmatpush1.msra.mxu0 0.0
    %2494 = vmatprep.subr.mxu0 0.0
    %2495 = vmatpush1.msra.mxu0 0.0
    %2496 = vmatprep.mubr.f32.mxu0 0.0
    %2497 = vmatmul.mubr.f32.gmra.mrb[0].mxu0 %v2427
    %v2498 = vpop.f32.mrb[0].mxu0
    %v2499 = vadd.f32 0.0, %v2498
    %v2500 = vpop.f32.mrb[0].mxu0
    %2501 = vdwg.mxu0
    %v2502 = vadd.f32 %v2380, %v2499
    %s2503 = sld [smem:[#allocation2 + $0x14]]
    %v2504 = vstv %s2503
    %v2505 = vmul.f32 %v47, %v2504
    %s2506 = sld [smem:[#allocation2 + $0x94]]
    %v2507 = vstv %s2506
    %v2508 = vmul.f32 %v52, %v2507
    %v2509 = vadd.f32 %v2505, %v2508
    %s2510 = sld [smem:[#allocation2 + $0x114]]
    %v2511 = vstv %s2510
    %v2512 = vmul.f32 %v58, %v2511
    %v2513 = vadd.f32 %v2509, %v2512
    %s2514 = sld [smem:[#allocation2 + $0x194]]
    %v2515 = vstv %s2514
    %v2516 = vmul.f32 %v64, %v2515
    %v2517 = vadd.f32 %v2513, %v2516
    %s2518 = sld [smem:[#allocation2 + $0x214]]
    %v2519 = vstv %s2518
    %v2520 = vmul.f32 %v70, %v2519
    %v2521 = vadd.f32 %v2517, %v2520
    %s2522 = sld [smem:[#allocation2 + $0x294]]
    %v2523 = vstv %s2522
    %v2524 = vmul.f32 %v76, %v2523
    %v2525 = vadd.f32 %v2521, %v2524
    %s2526 = sld [smem:[#allocation2 + $0x314]]
    %v2527 = vstv %s2526
    %v2528 = vmul.f32 %v82, %v2527
    %v2529 = vadd.f32 %v2525, %v2528
    %s2530 = sld [smem:[#allocation2 + $0x394]]
    %v2531 = vstv %s2530
    %v2532 = vmul.f32 %v88, %v2531
    %v2533 = vadd.f32 %v2529, %v2532
    %s2534 = sld [smem:[#allocation2 + $0x414]]
    %v2535 = vstv %s2534
    %v2536 = vmul.f32 %v94, %v2535
    %v2537 = vadd.f32 %v2533, %v2536
    %s2538 = sld [smem:[#allocation4 + $0x14]]
    %v2539 = vstv %s2538
    %v2540 = vadd.f32 %v2537, %v2539
    %v2541 = vmax.f32 %v2540, 0.0
    %s2542 = scalar_lea.vmem %s3, 800
    %v2543 = vld [vmem:[%s2542] sm:$0xff]
    %v2544 = vld [vmem:[%s2542 + $0x8] sm:$0xff]
    %v2545 = vld [vmem:[%s2542 + $0x10] sm:$0xff]
    %v2546 = vld [vmem:[%s2542 + $0x18] sm:$0xff]
    %v2547 = vld [vmem:[%s2542 + $0x20] sm:$0xf]
    %v2549 = vsel %vm153, %v2541, 0
    %v2552 = vsel %vm157, %v2547, 0
    %2554 = vmatprep.subr.mxu0 0.0
    %2555 = vmatpush1.msra.mxu0 %v2543
    %2556 = vmatprep.subr.mxu0 0.0
    %2557 = vmatpush1.msra.mxu0 %v2544
    %2558 = vmatprep.subr.mxu0 0.0
    %2559 = vmatpush1.msra.mxu0 %v2545
    %2560 = vmatprep.subr.mxu0 0.0
    %2561 = vmatpush1.msra.mxu0 %v2546
    %2562 = vmatprep.subr.mxu0 0.0
    %2563 = vmatpush1.msra.mxu0 %v2552
    %2564 = vmatprep.subr.mxu0 0.0
    %2565 = vmatpush1.msra.mxu0 0.0
    %2566 = vmatprep.subr.mxu0 0.0
    %2567 = vmatpush1.msra.mxu0 0.0
    %2568 = vmatprep.subr.mxu0 0.0
    %2569 = vmatpush1.msra.mxu0 0.0
    %2570 = vmatprep.subr.mxu0 0.0
    %2571 = vmatpush1.msra.mxu0 0.0
    %2572 = vmatprep.subr.mxu0 0.0
    %2573 = vmatpush1.msra.mxu0 0.0
    %2574 = vmatprep.subr.mxu0 0.0
    %2575 = vmatpush1.msra.mxu0 0.0
    %2576 = vmatprep.subr.mxu0 0.0
    %2577 = vmatpush1.msra.mxu0 0.0
    %2578 = vmatprep.subr.mxu0 0.0
    %2579 = vmatpush1.msra.mxu0 0.0
    %2580 = vmatprep.subr.mxu0 0.0
    %2581 = vmatpush1.msra.mxu0 0.0
    %2582 = vmatprep.subr.mxu0 0.0
    %2583 = vmatpush1.msra.mxu0 0.0
    %2584 = vmatprep.subr.mxu0 0.0
    %2585 = vmatpush1.msra.mxu0 0.0
    %2586 = vmatprep.subr.mxu0 0.0
    %2587 = vmatpush1.msra.mxu0 0.0
    %2588 = vmatprep.subr.mxu0 0.0
    %2589 = vmatpush1.msra.mxu0 0.0
    %2590 = vmatprep.subr.mxu0 0.0
    %2591 = vmatpush1.msra.mxu0 0.0
    %2592 = vmatprep.subr.mxu0 0.0
    %2593 = vmatpush1.msra.mxu0 0.0
    %2594 = vmatprep.subr.mxu0 0.0
    %2595 = vmatpush1.msra.mxu0 0.0
    %2596 = vmatprep.subr.mxu0 0.0
    %2597 = vmatpush1.msra.mxu0 0.0
    %2598 = vmatprep.subr.mxu0 0.0
    %2599 = vmatpush1.msra.mxu0 0.0
    %2600 = vmatprep.subr.mxu0 0.0
    %2601 = vmatpush1.msra.mxu0 0.0
    %2602 = vmatprep.subr.mxu0 0.0
    %2603 = vmatpush1.msra.mxu0 0.0
    %2604 = vmatprep.subr.mxu0 0.0
    %2605 = vmatpush1.msra.mxu0 0.0
    %2606 = vmatprep.subr.mxu0 0.0
    %2607 = vmatpush1.msra.mxu0 0.0
    %2608 = vmatprep.subr.mxu0 0.0
    %2609 = vmatpush1.msra.mxu0 0.0
    %2610 = vmatprep.subr.mxu0 0.0
    %2611 = vmatpush1.msra.mxu0 0.0
    %2612 = vmatprep.subr.mxu0 0.0
    %2613 = vmatpush1.msra.mxu0 0.0
    %2614 = vmatprep.subr.mxu0 0.0
    %2615 = vmatpush1.msra.mxu0 0.0
    %2616 = vmatprep.subr.mxu0 0.0
    %2617 = vmatpush1.msra.mxu0 0.0
    %2618 = vmatprep.mubr.f32.mxu0 0.0
    %2619 = vmatmul.mubr.f32.gmra.mrb[0].mxu0 %v2549
    %v2620 = vpop.f32.mrb[0].mxu0
    %v2621 = vadd.f32 0.0, %v2620
    %v2622 = vpop.f32.mrb[0].mxu0
    %2623 = vdwg.mxu0
    %v2624 = vadd.f32 %v2502, %v2621
    %s2625 = sld [smem:[#allocation2 + $0x15]]
    %v2626 = vstv %s2625
    %v2627 = vmul.f32 %v47, %v2626
    %s2628 = sld [smem:[#allocation2 + $0x95]]
    %v2629 = vstv %s2628
    %v2630 = vmul.f32 %v52, %v2629
    %v2631 = vadd.f32 %v2627, %v2630
    %s2632 = sld [smem:[#allocation2 + $0x115]]
    %v2633 = vstv %s2632
    %v2634 = vmul.f32 %v58, %v2633
    %v2635 = vadd.f32 %v2631, %v2634
    %s2636 = sld [smem:[#allocation2 + $0x195]]
    %v2637 = vstv %s2636
    %v2638 = vmul.f32 %v64, %v2637
    %v2639 = vadd.f32 %v2635, %v2638
    %s2640 = sld [smem:[#allocation2 + $0x215]]
    %v2641 = vstv %s2640
    %v2642 = vmul.f32 %v70, %v2641
    %v2643 = vadd.f32 %v2639, %v2642
    %s2644 = sld [smem:[#allocation2 + $0x295]]
    %v2645 = vstv %s2644
    %v2646 = vmul.f32 %v76, %v2645
    %v2647 = vadd.f32 %v2643, %v2646
    %s2648 = sld [smem:[#allocation2 + $0x315]]
    %v2649 = vstv %s2648
    %v2650 = vmul.f32 %v82, %v2649
    %v2651 = vadd.f32 %v2647, %v2650
    %s2652 = sld [smem:[#allocation2 + $0x395]]
    %v2653 = vstv %s2652
    %v2654 = vmul.f32 %v88, %v2653
    %v2655 = vadd.f32 %v2651, %v2654
    %s2656 = sld [smem:[#allocation2 + $0x415]]
    %v2657 = vstv %s2656
    %v2658 = vmul.f32 %v94, %v2657
    %v2659 = vadd.f32 %v2655, %v2658
    %s2660 = sld [smem:[#allocation4 + $0x15]]
    %v2661 = vstv %s2660
    %v2662 = vadd.f32 %v2659, %v2661
    %v2663 = vmax.f32 %v2662, 0.0
    %s2664 = scalar_lea.vmem %s3, 840
    %v2665 = vld [vmem:[%s2664] sm:$0xff]
    %v2666 = vld [vmem:[%s2664 + $0x8] sm:$0xff]
    %v2667 = vld [vmem:[%s2664 + $0x10] sm:$0xff]
    %v2668 = vld [vmem:[%s2664 + $0x18] sm:$0xff]
    %v2669 = vld [vmem:[%s2664 + $0x20] sm:$0xf]
    %v2671 = vsel %vm153, %v2663, 0
    %v2674 = vsel %vm157, %v2669, 0
    %2676 = vmatprep.subr.mxu0 0.0
    %2677 = vmatpush1.msra.mxu0 %v2665
    %2678 = vmatprep.subr.mxu0 0.0
    %2679 = vmatpush1.msra.mxu0 %v2666
    %2680 = vmatprep.subr.mxu0 0.0
    %2681 = vmatpush1.msra.mxu0 %v2667
    %2682 = vmatprep.subr.mxu0 0.0
    %2683 = vmatpush1.msra.mxu0 %v2668
    %2684 = vmatprep.subr.mxu0 0.0
    %2685 = vmatpush1.msra.mxu0 %v2674
    %2686 = vmatprep.subr.mxu0 0.0
    %2687 = vmatpush1.msra.mxu0 0.0
    %2688 = vmatprep.subr.mxu0 0.0
    %2689 = vmatpush1.msra.mxu0 0.0
    %2690 = vmatprep.subr.mxu0 0.0
    %2691 = vmatpush1.msra.mxu0 0.0
    %2692 = vmatprep.subr.mxu0 0.0
    %2693 = vmatpush1.msra.mxu0 0.0
    %2694 = vmatprep.subr.mxu0 0.0
    %2695 = vmatpush1.msra.mxu0 0.0
    %2696 = vmatprep.subr.mxu0 0.0
    %2697 = vmatpush1.msra.mxu0 0.0
    %2698 = vmatprep.subr.mxu0 0.0
    %2699 = vmatpush1.msra.mxu0 0.0
    %2700 = vmatprep.subr.mxu0 0.0
    %2701 = vmatpush1.msra.mxu0 0.0
    %2702 = vmatprep.subr.mxu0 0.0
    %2703 = vmatpush1.msra.mxu0 0.0
    %2704 = vmatprep.subr.mxu0 0.0
    %2705 = vmatpush1.msra.mxu0 0.0
    %2706 = vmatprep.subr.mxu0 0.0
    %2707 = vmatpush1.msra.mxu0 0.0
    %2708 = vmatprep.subr.mxu0 0.0
    %2709 = vmatpush1.msra.mxu0 0.0
    %2710 = vmatprep.subr.mxu0 0.0
    %2711 = vmatpush1.msra.mxu0 0.0
    %2712 = vmatprep.subr.mxu0 0.0
    %2713 = vmatpush1.msra.mxu0 0.0
    %2714 = vmatprep.subr.mxu0 0.0
    %2715 = vmatpush1.msra.mxu0 0.0
    %2716 = vmatprep.subr.mxu0 0.0
    %2717 = vmatpush1.msra.mxu0 0.0
    %2718 = vmatprep.subr.mxu0 0.0
    %2719 = vmatpush1.msra.mxu0 0.0
    %2720 = vmatprep.subr.mxu0 0.0
    %2721 = vmatpush1.msra.mxu0 0.0
    %2722 = vmatprep.subr.mxu0 0.0
    %2723 = vmatpush1.msra.mxu0 0.0
    %2724 = vmatprep.subr.mxu0 0.0
    %2725 = vmatpush1.msra.mxu0 0.0
    %2726 = vmatprep.subr.mxu0 0.0
    %2727 = vmatpush1.msra.mxu0 0.0
    %2728 = vmatprep.subr.mxu0 0.0
    %2729 = vmatpush1.msra.mxu0 0.0
    %2730 = vmatprep.subr.mxu0 0.0
    %2731 = vmatpush1.msra.mxu0 0.0
    %2732 = vmatprep.subr.mxu0 0.0
    %2733 = vmatpush1.msra.mxu0 0.0
    %2734 = vmatprep.subr.mxu0 0.0
    %2735 = vmatpush1.msra.mxu0 0.0
    %2736 = vmatprep.subr.mxu0 0.0
    %2737 = vmatpush1.msra.mxu0 0.0
    %2738 = vmatprep.subr.mxu0 0.0
    %2739 = vmatpush1.msra.mxu0 0.0
    %2740 = vmatprep.mubr.f32.mxu0 0.0
    %2741 = vmatmul.mubr.f32.gmra.mrb[0].mxu0 %v2671
    %v2742 = vpop.f32.mrb[0].mxu0
    %v2743 = vadd.f32 0.0, %v2742
    %v2744 = vpop.f32.mrb[0].mxu0
    %2745 = vdwg.mxu0
    %v2746 = vadd.f32 %v2624, %v2743
    %s2747 = sld [smem:[#allocation2 + $0x16]]
    %v2748 = vstv %s2747
    %v2749 = vmul.f32 %v47, %v2748
    %s2750 = sld [smem:[#allocation2 + $0x96]]
    %v2751 = vstv %s2750
    %v2752 = vmul.f32 %v52, %v2751
    %v2753 = vadd.f32 %v2749, %v2752
    %s2754 = sld [smem:[#allocation2 + $0x116]]
    %v2755 = vstv %s2754
    %v2756 = vmul.f32 %v58, %v2755
    %v2757 = vadd.f32 %v2753, %v2756
    %s2758 = sld [smem:[#allocation2 + $0x196]]
    %v2759 = vstv %s2758
    %v2760 = vmul.f32 %v64, %v2759
    %v2761 = vadd.f32 %v2757, %v2760
    %s2762 = sld [smem:[#allocation2 + $0x216]]
    %v2763 = vstv %s2762
    %v2764 = vmul.f32 %v70, %v2763
    %v2765 = vadd.f32 %v2761, %v2764
    %s2766 = sld [smem:[#allocation2 + $0x296]]
    %v2767 = vstv %s2766
    %v2768 = vmul.f32 %v76, %v2767
    %v2769 = vadd.f32 %v2765, %v2768
    %s2770 = sld [smem:[#allocation2 + $0x316]]
    %v2771 = vstv %s2770
    %v2772 = vmul.f32 %v82, %v2771
    %v2773 = vadd.f32 %v2769, %v2772
    %s2774 = sld [smem:[#allocation2 + $0x396]]
    %v2775 = vstv %s2774
    %v2776 = vmul.f32 %v88, %v2775
    %v2777 = vadd.f32 %v2773, %v2776
    %s2778 = sld [smem:[#allocation2 + $0x416]]
    %v2779 = vstv %s2778
    %v2780 = vmul.f32 %v94, %v2779
    %v2781 = vadd.f32 %v2777, %v2780
    %s2782 = sld [smem:[#allocation4 + $0x16]]
    %v2783 = vstv %s2782
    %v2784 = vadd.f32 %v2781, %v2783
    %v2785 = vmax.f32 %v2784, 0.0
    %s2786 = scalar_lea.vmem %s3, 880
    %v2787 = vld [vmem:[%s2786] sm:$0xff]
    %v2788 = vld [vmem:[%s2786 + $0x8] sm:$0xff]
    %v2789 = vld [vmem:[%s2786 + $0x10] sm:$0xff]
    %v2790 = vld [vmem:[%s2786 + $0x18] sm:$0xff]
    %v2791 = vld [vmem:[%s2786 + $0x20] sm:$0xf]
    %v2793 = vsel %vm153, %v2785, 0
    %v2796 = vsel %vm157, %v2791, 0
    %2798 = vmatprep.subr.mxu0 0.0
    %2799 = vmatpush1.msra.mxu0 %v2787
    %2800 = vmatprep.subr.mxu0 0.0
    %2801 = vmatpush1.msra.mxu0 %v2788
    %2802 = vmatprep.subr.mxu0 0.0
    %2803 = vmatpush1.msra.mxu0 %v2789
    %2804 = vmatprep.subr.mxu0 0.0
    %2805 = vmatpush1.msra.mxu0 %v2790
    %2806 = vmatprep.subr.mxu0 0.0
    %2807 = vmatpush1.msra.mxu0 %v2796
    %2808 = vmatprep.subr.mxu0 0.0
    %2809 = vmatpush1.msra.mxu0 0.0
    %2810 = vmatprep.subr.mxu0 0.0
    %2811 = vmatpush1.msra.mxu0 0.0
    %2812 = vmatprep.subr.mxu0 0.0
    %2813 = vmatpush1.msra.mxu0 0.0
    %2814 = vmatprep.subr.mxu0 0.0
    %2815 = vmatpush1.msra.mxu0 0.0
    %2816 = vmatprep.subr.mxu0 0.0
    %2817 = vmatpush1.msra.mxu0 0.0
    %2818 = vmatprep.subr.mxu0 0.0
    %2819 = vmatpush1.msra.mxu0 0.0
    %2820 = vmatprep.subr.mxu0 0.0
    %2821 = vmatpush1.msra.mxu0 0.0
    %2822 = vmatprep.subr.mxu0 0.0
    %2823 = vmatpush1.msra.mxu0 0.0
    %2824 = vmatprep.subr.mxu0 0.0
    %2825 = vmatpush1.msra.mxu0 0.0
    %2826 = vmatprep.subr.mxu0 0.0
    %2827 = vmatpush1.msra.mxu0 0.0
    %2828 = vmatprep.subr.mxu0 0.0
    %2829 = vmatpush1.msra.mxu0 0.0
    %2830 = vmatprep.subr.mxu0 0.0
    %2831 = vmatpush1.msra.mxu0 0.0
    %2832 = vmatprep.subr.mxu0 0.0
    %2833 = vmatpush1.msra.mxu0 0.0
    %2834 = vmatprep.subr.mxu0 0.0
    %2835 = vmatpush1.msra.mxu0 0.0
    %2836 = vmatprep.subr.mxu0 0.0
    %2837 = vmatpush1.msra.mxu0 0.0
    %2838 = vmatprep.subr.mxu0 0.0
    %2839 = vmatpush1.msra.mxu0 0.0
    %2840 = vmatprep.subr.mxu0 0.0
    %2841 = vmatpush1.msra.mxu0 0.0
    %2842 = vmatprep.subr.mxu0 0.0
    %2843 = vmatpush1.msra.mxu0 0.0
    %2844 = vmatprep.subr.mxu0 0.0
    %2845 = vmatpush1.msra.mxu0 0.0
    %2846 = vmatprep.subr.mxu0 0.0
    %2847 = vmatpush1.msra.mxu0 0.0
    %2848 = vmatprep.subr.mxu0 0.0
    %2849 = vmatpush1.msra.mxu0 0.0
    %2850 = vmatprep.subr.mxu0 0.0
    %2851 = vmatpush1.msra.mxu0 0.0
    %2852 = vmatprep.subr.mxu0 0.0
    %2853 = vmatpush1.msra.mxu0 0.0
    %2854 = vmatprep.subr.mxu0 0.0
    %2855 = vmatpush1.msra.mxu0 0.0
    %2856 = vmatprep.subr.mxu0 0.0
    %2857 = vmatpush1.msra.mxu0 0.0
    %2858 = vmatprep.subr.mxu0 0.0
    %2859 = vmatpush1.msra.mxu0 0.0
    %2860 = vmatprep.subr.mxu0 0.0
    %2861 = vmatpush1.msra.mxu0 0.0
    %2862 = vmatprep.mubr.f32.mxu0 0.0
    %2863 = vmatmul.mubr.f32.gmra.mrb[0].mxu0 %v2793
    %v2864 = vpop.f32.mrb[0].mxu0
    %v2865 = vadd.f32 0.0, %v2864
    %v2866 = vpop.f32.mrb[0].mxu0
    %2867 = vdwg.mxu0
    %v2868 = vadd.f32 %v2746, %v2865
    %s2869 = sld [smem:[#allocation2 + $0x17]]
    %v2870 = vstv %s2869
    %v2871 = vmul.f32 %v47, %v2870
    %s2872 = sld [smem:[#allocation2 + $0x97]]
    %v2873 = vstv %s2872
    %v2874 = vmul.f32 %v52, %v2873
    %v2875 = vadd.f32 %v2871, %v2874
    %s2876 = sld [smem:[#allocation2 + $0x117]]
    %v2877 = vstv %s2876
    %v2878 = vmul.f32 %v58, %v2877
    %v2879 = vadd.f32 %v2875, %v2878
    %s2880 = sld [smem:[#allocation2 + $0x197]]
    %v2881 = vstv %s2880
    %v2882 = vmul.f32 %v64, %v2881
    %v2883 = vadd.f32 %v2879, %v2882
    %s2884 = sld [smem:[#allocation2 + $0x217]]
    %v2885 = vstv %s2884
    %v2886 = vmul.f32 %v70, %v2885
    %v2887 = vadd.f32 %v2883, %v2886
    %s2888 = sld [smem:[#allocation2 + $0x297]]
    %v2889 = vstv %s2888
    %v2890 = vmul.f32 %v76, %v2889
    %v2891 = vadd.f32 %v2887, %v2890
    %s2892 = sld [smem:[#allocation2 + $0x317]]
    %v2893 = vstv %s2892
    %v2894 = vmul.f32 %v82, %v2893
    %v2895 = vadd.f32 %v2891, %v2894
    %s2896 = sld [smem:[#allocation2 + $0x397]]
    %v2897 = vstv %s2896
    %v2898 = vmul.f32 %v88, %v2897
    %v2899 = vadd.f32 %v2895, %v2898
    %s2900 = sld [smem:[#allocation2 + $0x417]]
    %v2901 = vstv %s2900
    %v2902 = vmul.f32 %v94, %v2901
    %v2903 = vadd.f32 %v2899, %v2902
    %s2904 = sld [smem:[#allocation4 + $0x17]]
    %v2905 = vstv %s2904
    %v2906 = vadd.f32 %v2903, %v2905
    %v2907 = vmax.f32 %v2906, 0.0
    %s2908 = scalar_lea.vmem %s3, 920
    %v2909 = vld [vmem:[%s2908] sm:$0xff]
    %v2910 = vld [vmem:[%s2908 + $0x8] sm:$0xff]
    %v2911 = vld [vmem:[%s2908 + $0x10] sm:$0xff]
    %v2912 = vld [vmem:[%s2908 + $0x18] sm:$0xff]
    %v2913 = vld [vmem:[%s2908 + $0x20] sm:$0xf]
    %v2915 = vsel %vm153, %v2907, 0
    %v2918 = vsel %vm157, %v2913, 0
    %2920 = vmatprep.subr.mxu0 0.0
    %2921 = vmatpush1.msra.mxu0 %v2909
    %2922 = vmatprep.subr.mxu0 0.0
    %2923 = vmatpush1.msra.mxu0 %v2910
    %2924 = vmatprep.subr.mxu0 0.0
    %2925 = vmatpush1.msra.mxu0 %v2911
    %2926 = vmatprep.subr.mxu0 0.0
    %2927 = vmatpush1.msra.mxu0 %v2912
    %2928 = vmatprep.subr.mxu0 0.0
    %2929 = vmatpush1.msra.mxu0 %v2918
    %2930 = vmatprep.subr.mxu0 0.0
    %2931 = vmatpush1.msra.mxu0 0.0
    %2932 = vmatprep.subr.mxu0 0.0
    %2933 = vmatpush1.msra.mxu0 0.0
    %2934 = vmatprep.subr.mxu0 0.0
    %2935 = vmatpush1.msra.mxu0 0.0
    %2936 = vmatprep.subr.mxu0 0.0
    %2937 = vmatpush1.msra.mxu0 0.0
    %2938 = vmatprep.subr.mxu0 0.0
    %2939 = vmatpush1.msra.mxu0 0.0
    %2940 = vmatprep.subr.mxu0 0.0
    %2941 = vmatpush1.msra.mxu0 0.0
    %2942 = vmatprep.subr.mxu0 0.0
    %2943 = vmatpush1.msra.mxu0 0.0
    %2944 = vmatprep.subr.mxu0 0.0
    %2945 = vmatpush1.msra.mxu0 0.0
    %2946 = vmatprep.subr.mxu0 0.0
    %2947 = vmatpush1.msra.mxu0 0.0
    %2948 = vmatprep.subr.mxu0 0.0
    %2949 = vmatpush1.msra.mxu0 0.0
    %2950 = vmatprep.subr.mxu0 0.0
    %2951 = vmatpush1.msra.mxu0 0.0
    %2952 = vmatprep.subr.mxu0 0.0
    %2953 = vmatpush1.msra.mxu0 0.0
    %2954 = vmatprep.subr.mxu0 0.0
    %2955 = vmatpush1.msra.mxu0 0.0
    %2956 = vmatprep.subr.mxu0 0.0
    %2957 = vmatpush1.msra.mxu0 0.0
    %2958 = vmatprep.subr.mxu0 0.0
    %2959 = vmatpush1.msra.mxu0 0.0
    %2960 = vmatprep.subr.mxu0 0.0
    %2961 = vmatpush1.msra.mxu0 0.0
    %2962 = vmatprep.subr.mxu0 0.0
    %2963 = vmatpush1.msra.mxu0 0.0
    %2964 = vmatprep.subr.mxu0 0.0
    %2965 = vmatpush1.msra.mxu0 0.0
    %2966 = vmatprep.subr.mxu0 0.0
    %2967 = vmatpush1.msra.mxu0 0.0
    %2968 = vmatprep.subr.mxu0 0.0
    %2969 = vmatpush1.msra.mxu0 0.0
    %2970 = vmatprep.subr.mxu0 0.0
    %2971 = vmatpush1.msra.mxu0 0.0
    %2972 = vmatprep.subr.mxu0 0.0
    %2973 = vmatpush1.msra.mxu0 0.0
    %2974 = vmatprep.subr.mxu0 0.0
    %2975 = vmatpush1.msra.mxu0 0.0
    %2976 = vmatprep.subr.mxu0 0.0
    %2977 = vmatpush1.msra.mxu0 0.0
    %2978 = vmatprep.subr.mxu0 0.0
    %2979 = vmatpush1.msra.mxu0 0.0
    %2980 = vmatprep.subr.mxu0 0.0
    %2981 = vmatpush1.msra.mxu0 0.0
    %2982 = vmatprep.subr.mxu0 0.0
    %2983 = vmatpush1.msra.mxu0 0.0
    %2984 = vmatprep.mubr.f32.mxu0 0.0
    %2985 = vmatmul.mubr.f32.gmra.mrb[0].mxu0 %v2915
    %v2986 = vpop.f32.mrb[0].mxu0
    %v2987 = vadd.f32 0.0, %v2986
    %v2988 = vpop.f32.mrb[0].mxu0
    %2989 = vdwg.mxu0
    %v2990 = vadd.f32 %v2868, %v2987
    %s2991 = sld [smem:[#allocation2 + $0x18]]
    %v2992 = vstv %s2991
    %v2993 = vmul.f32 %v47, %v2992
    %s2994 = sld [smem:[#allocation2 + $0x98]]
    %v2995 = vstv %s2994
    %v2996 = vmul.f32 %v52, %v2995
    %v2997 = vadd.f32 %v2993, %v2996
    %s2998 = sld [smem:[#allocation2 + $0x118]]
    %v2999 = vstv %s2998
    %v3000 = vmul.f32 %v58, %v2999
    %v3001 = vadd.f32 %v2997, %v3000
    %s3002 = sld [smem:[#allocation2 + $0x198]]
    %v3003 = vstv %s3002
    %v3004 = vmul.f32 %v64, %v3003
    %v3005 = vadd.f32 %v3001, %v3004
    %s3006 = sld [smem:[#allocation2 + $0x218]]
    %v3007 = vstv %s3006
    %v3008 = vmul.f32 %v70, %v3007
    %v3009 = vadd.f32 %v3005, %v3008
    %s3010 = sld [smem:[#allocation2 + $0x298]]
    %v3011 = vstv %s3010
    %v3012 = vmul.f32 %v76, %v3011
    %v3013 = vadd.f32 %v3009, %v3012
    %s3014 = sld [smem:[#allocation2 + $0x318]]
    %v3015 = vstv %s3014
    %v3016 = vmul.f32 %v82, %v3015
    %v3017 = vadd.f32 %v3013, %v3016
    %s3018 = sld [smem:[#allocation2 + $0x398]]
    %v3019 = vstv %s3018
    %v3020 = vmul.f32 %v88, %v3019
    %v3021 = vadd.f32 %v3017, %v3020
    %s3022 = sld [smem:[#allocation2 + $0x418]]
    %v3023 = vstv %s3022
    %v3024 = vmul.f32 %v94, %v3023
    %v3025 = vadd.f32 %v3021, %v3024
    %s3026 = sld [smem:[#allocation4 + $0x18]]
    %v3027 = vstv %s3026
    %v3028 = vadd.f32 %v3025, %v3027
    %v3029 = vmax.f32 %v3028, 0.0
    %s3030 = scalar_lea.vmem %s3, 960
    %v3031 = vld [vmem:[%s3030] sm:$0xff]
    %v3032 = vld [vmem:[%s3030 + $0x8] sm:$0xff]
    %v3033 = vld [vmem:[%s3030 + $0x10] sm:$0xff]
    %v3034 = vld [vmem:[%s3030 + $0x18] sm:$0xff]
    %v3035 = vld [vmem:[%s3030 + $0x20] sm:$0xf]
    %v3037 = vsel %vm153, %v3029, 0
    %v3040 = vsel %vm157, %v3035, 0
    %3042 = vmatprep.subr.mxu0 0.0
    %3043 = vmatpush1.msra.mxu0 %v3031
    %3044 = vmatprep.subr.mxu0 0.0
    %3045 = vmatpush1.msra.mxu0 %v3032
    %3046 = vmatprep.subr.mxu0 0.0
    %3047 = vmatpush1.msra.mxu0 %v3033
    %3048 = vmatprep.subr.mxu0 0.0
    %3049 = vmatpush1.msra.mxu0 %v3034
    %3050 = vmatprep.subr.mxu0 0.0
    %3051 = vmatpush1.msra.mxu0 %v3040
    %3052 = vmatprep.subr.mxu0 0.0
    %3053 = vmatpush1.msra.mxu0 0.0
    %3054 = vmatprep.subr.mxu0 0.0
    %3055 = vmatpush1.msra.mxu0 0.0
    %3056 = vmatprep.subr.mxu0 0.0
    %3057 = vmatpush1.msra.mxu0 0.0
    %3058 = vmatprep.subr.mxu0 0.0
    %3059 = vmatpush1.msra.mxu0 0.0
    %3060 = vmatprep.subr.mxu0 0.0
    %3061 = vmatpush1.msra.mxu0 0.0
    %3062 = vmatprep.subr.mxu0 0.0
    %3063 = vmatpush1.msra.mxu0 0.0
    %3064 = vmatprep.subr.mxu0 0.0
    %3065 = vmatpush1.msra.mxu0 0.0
    %3066 = vmatprep.subr.mxu0 0.0
    %3067 = vmatpush1.msra.mxu0 0.0
    %3068 = vmatprep.subr.mxu0 0.0
    %3069 = vmatpush1.msra.mxu0 0.0
    %3070 = vmatprep.subr.mxu0 0.0
    %3071 = vmatpush1.msra.mxu0 0.0
    %3072 = vmatprep.subr.mxu0 0.0
    %3073 = vmatpush1.msra.mxu0 0.0
    %3074 = vmatprep.subr.mxu0 0.0
    %3075 = vmatpush1.msra.mxu0 0.0
    %3076 = vmatprep.subr.mxu0 0.0
    %3077 = vmatpush1.msra.mxu0 0.0
    %3078 = vmatprep.subr.mxu0 0.0
    %3079 = vmatpush1.msra.mxu0 0.0
    %3080 = vmatprep.subr.mxu0 0.0
    %3081 = vmatpush1.msra.mxu0 0.0
    %3082 = vmatprep.subr.mxu0 0.0
    %3083 = vmatpush1.msra.mxu0 0.0
    %3084 = vmatprep.subr.mxu0 0.0
    %3085 = vmatpush1.msra.mxu0 0.0
    %3086 = vmatprep.subr.mxu0 0.0
    %3087 = vmatpush1.msra.mxu0 0.0
    %3088 = vmatprep.subr.mxu0 0.0
    %3089 = vmatpush1.msra.mxu0 0.0
    %3090 = vmatprep.subr.mxu0 0.0
    %3091 = vmatpush1.msra.mxu0 0.0
    %3092 = vmatprep.subr.mxu0 0.0
    %3093 = vmatpush1.msra.mxu0 0.0
    %3094 = vmatprep.subr.mxu0 0.0
    %3095 = vmatpush1.msra.mxu0 0.0
    %3096 = vmatprep.subr.mxu0 0.0
    %3097 = vmatpush1.msra.mxu0 0.0
    %3098 = vmatprep.subr.mxu0 0.0
    %3099 = vmatpush1.msra.mxu0 0.0
    %3100 = vmatprep.subr.mxu0 0.0
    %3101 = vmatpush1.msra.mxu0 0.0
    %3102 = vmatprep.subr.mxu0 0.0
    %3103 = vmatpush1.msra.mxu0 0.0
    %3104 = vmatprep.subr.mxu0 0.0
    %3105 = vmatpush1.msra.mxu0 0.0
    %3106 = vmatprep.mubr.f32.mxu0 0.0
    %3107 = vmatmul.mubr.f32.gmra.mrb[0].mxu0 %v3037
    %v3108 = vpop.f32.mrb[0].mxu0
    %v3109 = vadd.f32 0.0, %v3108
    %v3110 = vpop.f32.mrb[0].mxu0
    %3111 = vdwg.mxu0
    %v3112 = vadd.f32 %v2990, %v3109
    %s3113 = sld [smem:[#allocation2 + $0x19]]
    %v3114 = vstv %s3113
    %v3115 = vmul.f32 %v47, %v3114
    %s3116 = sld [smem:[#allocation2 + $0x99]]
    %v3117 = vstv %s3116
    %v3118 = vmul.f32 %v52, %v3117
    %v3119 = vadd.f32 %v3115, %v3118
    %s3120 = sld [smem:[#allocation2 + $0x119]]
    %v3121 = vstv %s3120
    %v3122 = vmul.f32 %v58, %v3121
    %v3123 = vadd.f32 %v3119, %v3122
    %s3124 = sld [smem:[#allocation2 + $0x199]]
    %v3125 = vstv %s3124
    %v3126 = vmul.f32 %v64, %v3125
    %v3127 = vadd.f32 %v3123, %v3126
    %s3128 = sld [smem:[#allocation2 + $0x219]]
    %v3129 = vstv %s3128
    %v3130 = vmul.f32 %v70, %v3129
    %v3131 = vadd.f32 %v3127, %v3130
    %s3132 = sld [smem:[#allocation2 + $0x299]]
    %v3133 = vstv %s3132
    %v3134 = vmul.f32 %v76, %v3133
    %v3135 = vadd.f32 %v3131, %v3134
    %s3136 = sld [smem:[#allocation2 + $0x319]]
    %v3137 = vstv %s3136
    %v3138 = vmul.f32 %v82, %v3137
    %v3139 = vadd.f32 %v3135, %v3138
    %s3140 = sld [smem:[#allocation2 + $0x399]]
    %v3141 = vstv %s3140
    %v3142 = vmul.f32 %v88, %v3141
    %v3143 = vadd.f32 %v3139, %v3142
    %s3144 = sld [smem:[#allocation2 + $0x419]]
    %v3145 = vstv %s3144
    %v3146 = vmul.f32 %v94, %v3145
    %v3147 = vadd.f32 %v3143, %v3146
    %s3148 = sld [smem:[#allocation4 + $0x19]]
    %v3149 = vstv %s3148
    %v3150 = vadd.f32 %v3147, %v3149
    %v3151 = vmax.f32 %v3150, 0.0
    %s3152 = scalar_lea.vmem %s3, 1000
    %v3153 = vld [vmem:[%s3152] sm:$0xff]
    %v3154 = vld [vmem:[%s3152 + $0x8] sm:$0xff]
    %v3155 = vld [vmem:[%s3152 + $0x10] sm:$0xff]
    %v3156 = vld [vmem:[%s3152 + $0x18] sm:$0xff]
    %v3157 = vld [vmem:[%s3152 + $0x20] sm:$0xf]
    %v3159 = vsel %vm153, %v3151, 0
    %v3162 = vsel %vm157, %v3157, 0
    %3164 = vmatprep.subr.mxu0 0.0
    %3165 = vmatpush1.msra.mxu0 %v3153
    %3166 = vmatprep.subr.mxu0 0.0
    %3167 = vmatpush1.msra.mxu0 %v3154
    %3168 = vmatprep.subr.mxu0 0.0
    %3169 = vmatpush1.msra.mxu0 %v3155
    %3170 = vmatprep.subr.mxu0 0.0
    %3171 = vmatpush1.msra.mxu0 %v3156
    %3172 = vmatprep.subr.mxu0 0.0
    %3173 = vmatpush1.msra.mxu0 %v3162
    %3174 = vmatprep.subr.mxu0 0.0
    %3175 = vmatpush1.msra.mxu0 0.0
    %3176 = vmatprep.subr.mxu0 0.0
    %3177 = vmatpush1.msra.mxu0 0.0
    %3178 = vmatprep.subr.mxu0 0.0
    %3179 = vmatpush1.msra.mxu0 0.0
    %3180 = vmatprep.subr.mxu0 0.0
    %3181 = vmatpush1.msra.mxu0 0.0
    %3182 = vmatprep.subr.mxu0 0.0
    %3183 = vmatpush1.msra.mxu0 0.0
    %3184 = vmatprep.subr.mxu0 0.0
    %3185 = vmatpush1.msra.mxu0 0.0
    %3186 = vmatprep.subr.mxu0 0.0
    %3187 = vmatpush1.msra.mxu0 0.0
    %3188 = vmatprep.subr.mxu0 0.0
    %3189 = vmatpush1.msra.mxu0 0.0
    %3190 = vmatprep.subr.mxu0 0.0
    %3191 = vmatpush1.msra.mxu0 0.0
    %3192 = vmatprep.subr.mxu0 0.0
    %3193 = vmatpush1.msra.mxu0 0.0
    %3194 = vmatprep.subr.mxu0 0.0
    %3195 = vmatpush1.msra.mxu0 0.0
    %3196 = vmatprep.subr.mxu0 0.0
    %3197 = vmatpush1.msra.mxu0 0.0
    %3198 = vmatprep.subr.mxu0 0.0
    %3199 = vmatpush1.msra.mxu0 0.0
    %3200 = vmatprep.subr.mxu0 0.0
    %3201 = vmatpush1.msra.mxu0 0.0
    %3202 = vmatprep.subr.mxu0 0.0
    %3203 = vmatpush1.msra.mxu0 0.0
    %3204 = vmatprep.subr.mxu0 0.0
    %3205 = vmatpush1.msra.mxu0 0.0
    %3206 = vmatprep.subr.mxu0 0.0
    %3207 = vmatpush1.msra.mxu0 0.0
    %3208 = vmatprep.subr.mxu0 0.0
    %3209 = vmatpush1.msra.mxu0 0.0
    %3210 = vmatprep.subr.mxu0 0.0
    %3211 = vmatpush1.msra.mxu0 0.0
    %3212 = vmatprep.subr.mxu0 0.0
    %3213 = vmatpush1.msra.mxu0 0.0
    %3214 = vmatprep.subr.mxu0 0.0
    %3215 = vmatpush1.msra.mxu0 0.0
    %3216 = vmatprep.subr.mxu0 0.0
    %3217 = vmatpush1.msra.mxu0 0.0
    %3218 = vmatprep.subr.mxu0 0.0
    %3219 = vmatpush1.msra.mxu0 0.0
    %3220 = vmatprep.subr.mxu0 0.0
    %3221 = vmatpush1.msra.mxu0 0.0
    %3222 = vmatprep.subr.mxu0 0.0
    %3223 = vmatpush1.msra.mxu0 0.0
    %3224 = vmatprep.subr.mxu0 0.0
    %3225 = vmatpush1.msra.mxu0 0.0
    %3226 = vmatprep.subr.mxu0 0.0
    %3227 = vmatpush1.msra.mxu0 0.0
    %3228 = vmatprep.mubr.f32.mxu0 0.0
    %3229 = vmatmul.mubr.f32.gmra.mrb[0].mxu0 %v3159
    %v3230 = vpop.f32.mrb[0].mxu0
    %v3231 = vadd.f32 0.0, %v3230
    %v3232 = vpop.f32.mrb[0].mxu0
    %3233 = vdwg.mxu0
    %v3234 = vadd.f32 %v3112, %v3231
    %s3235 = sld [smem:[#allocation2 + $0x1a]]
    %v3236 = vstv %s3235
    %v3237 = vmul.f32 %v47, %v3236
    %s3238 = sld [smem:[#allocation2 + $0x9a]]
    %v3239 = vstv %s3238
    %v3240 = vmul.f32 %v52, %v3239
    %v3241 = vadd.f32 %v3237, %v3240
    %s3242 = sld [smem:[#allocation2 + $0x11a]]
    %v3243 = vstv %s3242
    %v3244 = vmul.f32 %v58, %v3243
    %v3245 = vadd.f32 %v3241, %v3244
    %s3246 = sld [smem:[#allocation2 + $0x19a]]
    %v3247 = vstv %s3246
    %v3248 = vmul.f32 %v64, %v3247
    %v3249 = vadd.f32 %v3245, %v3248
    %s3250 = sld [smem:[#allocation2 + $0x21a]]
    %v3251 = vstv %s3250
    %v3252 = vmul.f32 %v70, %v3251
    %v3253 = vadd.f32 %v3249, %v3252
    %s3254 = sld [smem:[#allocation2 + $0x29a]]
    %v3255 = vstv %s3254
    %v3256 = vmul.f32 %v76, %v3255
    %v3257 = vadd.f32 %v3253, %v3256
    %s3258 = sld [smem:[#allocation2 + $0x31a]]
    %v3259 = vstv %s3258
    %v3260 = vmul.f32 %v82, %v3259
    %v3261 = vadd.f32 %v3257, %v3260
    %s3262 = sld [smem:[#allocation2 + $0x39a]]
    %v3263 = vstv %s3262
    %v3264 = vmul.f32 %v88, %v3263
    %v3265 = vadd.f32 %v3261, %v3264
    %s3266 = sld [smem:[#allocation2 + $0x41a]]
    %v3267 = vstv %s3266
    %v3268 = vmul.f32 %v94, %v3267
    %v3269 = vadd.f32 %v3265, %v3268
    %s3270 = sld [smem:[#allocation4 + $0x1a]]
    %v3271 = vstv %s3270
    %v3272 = vadd.f32 %v3269, %v3271
    %v3273 = vmax.f32 %v3272, 0.0
    %s3274 = scalar_lea.vmem %s3, 1040
    %v3275 = vld [vmem:[%s3274] sm:$0xff]
    %v3276 = vld [vmem:[%s3274 + $0x8] sm:$0xff]
    %v3277 = vld [vmem:[%s3274 + $0x10] sm:$0xff]
    %v3278 = vld [vmem:[%s3274 + $0x18] sm:$0xff]
    %v3279 = vld [vmem:[%s3274 + $0x20] sm:$0xf]
    %v3281 = vsel %vm153, %v3273, 0
    %v3284 = vsel %vm157, %v3279, 0
    %3286 = vmatprep.subr.mxu0 0.0
    %3287 = vmatpush1.msra.mxu0 %v3275
    %3288 = vmatprep.subr.mxu0 0.0
    %3289 = vmatpush1.msra.mxu0 %v3276
    %3290 = vmatprep.subr.mxu0 0.0
    %3291 = vmatpush1.msra.mxu0 %v3277
    %3292 = vmatprep.subr.mxu0 0.0
    %3293 = vmatpush1.msra.mxu0 %v3278
    %3294 = vmatprep.subr.mxu0 0.0
    %3295 = vmatpush1.msra.mxu0 %v3284
    %3296 = vmatprep.subr.mxu0 0.0
    %3297 = vmatpush1.msra.mxu0 0.0
    %3298 = vmatprep.subr.mxu0 0.0
    %3299 = vmatpush1.msra.mxu0 0.0
    %3300 = vmatprep.subr.mxu0 0.0
    %3301 = vmatpush1.msra.mxu0 0.0
    %3302 = vmatprep.subr.mxu0 0.0
    %3303 = vmatpush1.msra.mxu0 0.0
    %3304 = vmatprep.subr.mxu0 0.0
    %3305 = vmatpush1.msra.mxu0 0.0
    %3306 = vmatprep.subr.mxu0 0.0
    %3307 = vmatpush1.msra.mxu0 0.0
    %3308 = vmatprep.subr.mxu0 0.0
    %3309 = vmatpush1.msra.mxu0 0.0
    %3310 = vmatprep.subr.mxu0 0.0
    %3311 = vmatpush1.msra.mxu0 0.0
    %3312 = vmatprep.subr.mxu0 0.0
    %3313 = vmatpush1.msra.mxu0 0.0
    %3314 = vmatprep.subr.mxu0 0.0
    %3315 = vmatpush1.msra.mxu0 0.0
    %3316 = vmatprep.subr.mxu0 0.0
    %3317 = vmatpush1.msra.mxu0 0.0
    %3318 = vmatprep.subr.mxu0 0.0
    %3319 = vmatpush1.msra.mxu0 0.0
    %3320 = vmatprep.subr.mxu0 0.0
    %3321 = vmatpush1.msra.mxu0 0.0
    %3322 = vmatprep.subr.mxu0 0.0
    %3323 = vmatpush1.msra.mxu0 0.0
    %3324 = vmatprep.subr.mxu0 0.0
    %3325 = vmatpush1.msra.mxu0 0.0
    %3326 = vmatprep.subr.mxu0 0.0
    %3327 = vmatpush1.msra.mxu0 0.0
    %3328 = vmatprep.subr.mxu0 0.0
    %3329 = vmatpush1.msra.mxu0 0.0
    %3330 = vmatprep.subr.mxu0 0.0
    %3331 = vmatpush1.msra.mxu0 0.0
    %3332 = vmatprep.subr.mxu0 0.0
    %3333 = vmatpush1.msra.mxu0 0.0
    %3334 = vmatprep.subr.mxu0 0.0
    %3335 = vmatpush1.msra.mxu0 0.0
    %3336 = vmatprep.subr.mxu0 0.0
    %3337 = vmatpush1.msra.mxu0 0.0
    %3338 = vmatprep.subr.mxu0 0.0
    %3339 = vmatpush1.msra.mxu0 0.0
    %3340 = vmatprep.subr.mxu0 0.0
    %3341 = vmatpush1.msra.mxu0 0.0
    %3342 = vmatprep.subr.mxu0 0.0
    %3343 = vmatpush1.msra.mxu0 0.0
    %3344 = vmatprep.subr.mxu0 0.0
    %3345 = vmatpush1.msra.mxu0 0.0
    %3346 = vmatprep.subr.mxu0 0.0
    %3347 = vmatpush1.msra.mxu0 0.0
    %3348 = vmatprep.subr.mxu0 0.0
    %3349 = vmatpush1.msra.mxu0 0.0
    %3350 = vmatprep.mubr.f32.mxu0 0.0
    %3351 = vmatmul.mubr.f32.gmra.mrb[0].mxu0 %v3281
    %v3352 = vpop.f32.mrb[0].mxu0
    %v3353 = vadd.f32 0.0, %v3352
    %v3354 = vpop.f32.mrb[0].mxu0
    %3355 = vdwg.mxu0
    %v3356 = vadd.f32 %v3234, %v3353
    %s3357 = sld [smem:[#allocation2 + $0x1b]]
    %v3358 = vstv %s3357
    %v3359 = vmul.f32 %v47, %v3358
    %s3360 = sld [smem:[#allocation2 + $0x9b]]
    %v3361 = vstv %s3360
    %v3362 = vmul.f32 %v52, %v3361
    %v3363 = vadd.f32 %v3359, %v3362
    %s3364 = sld [smem:[#allocation2 + $0x11b]]
    %v3365 = vstv %s3364
    %v3366 = vmul.f32 %v58, %v3365
    %v3367 = vadd.f32 %v3363, %v3366
    %s3368 = sld [smem:[#allocation2 + $0x19b]]
    %v3369 = vstv %s3368
    %v3370 = vmul.f32 %v64, %v3369
    %v3371 = vadd.f32 %v3367, %v3370
    %s3372 = sld [smem:[#allocation2 + $0x21b]]
    %v3373 = vstv %s3372
    %v3374 = vmul.f32 %v70, %v3373
    %v3375 = vadd.f32 %v3371, %v3374
    %s3376 = sld [smem:[#allocation2 + $0x29b]]
    %v3377 = vstv %s3376
    %v3378 = vmul.f32 %v76, %v3377
    %v3379 = vadd.f32 %v3375, %v3378
    %s3380 = sld [smem:[#allocation2 + $0x31b]]
    %v3381 = vstv %s3380
    %v3382 = vmul.f32 %v82, %v3381
    %v3383 = vadd.f32 %v3379, %v3382
    %s3384 = sld [smem:[#allocation2 + $0x39b]]
    %v3385 = vstv %s3384
    %v3386 = vmul.f32 %v88, %v3385
    %v3387 = vadd.f32 %v3383, %v3386
    %s3388 = sld [smem:[#allocation2 + $0x41b]]
    %v3389 = vstv %s3388
    %v3390 = vmul.f32 %v94, %v3389
    %v3391 = vadd.f32 %v3387, %v3390
    %s3392 = sld [smem:[#allocation4 + $0x1b]]
    %v3393 = vstv %s3392
    %v3394 = vadd.f32 %v3391, %v3393
    %v3395 = vmax.f32 %v3394, 0.0
    %s3396 = scalar_lea.vmem %s3, 1080
    %v3397 = vld [vmem:[%s3396] sm:$0xff]
    %v3398 = vld [vmem:[%s3396 + $0x8] sm:$0xff]
    %v3399 = vld [vmem:[%s3396 + $0x10] sm:$0xff]
    %v3400 = vld [vmem:[%s3396 + $0x18] sm:$0xff]
    %v3401 = vld [vmem:[%s3396 + $0x20] sm:$0xf]
    %v3403 = vsel %vm153, %v3395, 0
    %v3406 = vsel %vm157, %v3401, 0
    %3408 = vmatprep.subr.mxu0 0.0
    %3409 = vmatpush1.msra.mxu0 %v3397
    %3410 = vmatprep.subr.mxu0 0.0
    %3411 = vmatpush1.msra.mxu0 %v3398
    %3412 = vmatprep.subr.mxu0 0.0
    %3413 = vmatpush1.msra.mxu0 %v3399
    %3414 = vmatprep.subr.mxu0 0.0
    %3415 = vmatpush1.msra.mxu0 %v3400
    %3416 = vmatprep.subr.mxu0 0.0
    %3417 = vmatpush1.msra.mxu0 %v3406
    %3418 = vmatprep.subr.mxu0 0.0
    %3419 = vmatpush1.msra.mxu0 0.0
    %3420 = vmatprep.subr.mxu0 0.0
    %3421 = vmatpush1.msra.mxu0 0.0
    %3422 = vmatprep.subr.mxu0 0.0
    %3423 = vmatpush1.msra.mxu0 0.0
    %3424 = vmatprep.subr.mxu0 0.0
    %3425 = vmatpush1.msra.mxu0 0.0
    %3426 = vmatprep.subr.mxu0 0.0
    %3427 = vmatpush1.msra.mxu0 0.0
    %3428 = vmatprep.subr.mxu0 0.0
    %3429 = vmatpush1.msra.mxu0 0.0
    %3430 = vmatprep.subr.mxu0 0.0
    %3431 = vmatpush1.msra.mxu0 0.0
    %3432 = vmatprep.subr.mxu0 0.0
    %3433 = vmatpush1.msra.mxu0 0.0
    %3434 = vmatprep.subr.mxu0 0.0
    %3435 = vmatpush1.msra.mxu0 0.0
    %3436 = vmatprep.subr.mxu0 0.0
    %3437 = vmatpush1.msra.mxu0 0.0
    %3438 = vmatprep.subr.mxu0 0.0
    %3439 = vmatpush1.msra.mxu0 0.0
    %3440 = vmatprep.subr.mxu0 0.0
    %3441 = vmatpush1.msra.mxu0 0.0
    %3442 = vmatprep.subr.mxu0 0.0
    %3443 = vmatpush1.msra.mxu0 0.0
    %3444 = vmatprep.subr.mxu0 0.0
    %3445 = vmatpush1.msra.mxu0 0.0
    %3446 = vmatprep.subr.mxu0 0.0
    %3447 = vmatpush1.msra.mxu0 0.0
    %3448 = vmatprep.subr.mxu0 0.0
    %3449 = vmatpush1.msra.mxu0 0.0
    %3450 = vmatprep.subr.mxu0 0.0
    %3451 = vmatpush1.msra.mxu0 0.0
    %3452 = vmatprep.subr.mxu0 0.0
    %3453 = vmatpush1.msra.mxu0 0.0
    %3454 = vmatprep.subr.mxu0 0.0
    %3455 = vmatpush1.msra.mxu0 0.0
    %3456 = vmatprep.subr.mxu0 0.0
    %3457 = vmatpush1.msra.mxu0 0.0
    %3458 = vmatprep.subr.mxu0 0.0
    %3459 = vmatpush1.msra.mxu0 0.0
    %3460 = vmatprep.subr.mxu0 0.0
    %3461 = vmatpush1.msra.mxu0 0.0
    %3462 = vmatprep.subr.mxu0 0.0
    %3463 = vmatpush1.msra.mxu0 0.0
    %3464 = vmatprep.subr.mxu0 0.0
    %3465 = vmatpush1.msra.mxu0 0.0
    %3466 = vmatprep.subr.mxu0 0.0
    %3467 = vmatpush1.msra.mxu0 0.0
    %3468 = vmatprep.subr.mxu0 0.0
    %3469 = vmatpush1.msra.mxu0 0.0
    %3470 = vmatprep.subr.mxu0 0.0
    %3471 = vmatpush1.msra.mxu0 0.0
    %3472 = vmatprep.mubr.f32.mxu0 0.0
    %3473 = vmatmul.mubr.f32.gmra.mrb[0].mxu0 %v3403
    %v3474 = vpop.f32.mrb[0].mxu0
    %v3475 = vadd.f32 0.0, %v3474
    %v3476 = vpop.f32.mrb[0].mxu0
    %3477 = vdwg.mxu0
    %v3478 = vadd.f32 %v3356, %v3475
    %s3479 = sld [smem:[#allocation2 + $0x1c]]
    %v3480 = vstv %s3479
    %v3481 = vmul.f32 %v47, %v3480
    %s3482 = sld [smem:[#allocation2 + $0x9c]]
    %v3483 = vstv %s3482
    %v3484 = vmul.f32 %v52, %v3483
    %v3485 = vadd.f32 %v3481, %v3484
    %s3486 = sld [smem:[#allocation2 + $0x11c]]
    %v3487 = vstv %s3486
    %v3488 = vmul.f32 %v58, %v3487
    %v3489 = vadd.f32 %v3485, %v3488
    %s3490 = sld [smem:[#allocation2 + $0x19c]]
    %v3491 = vstv %s3490
    %v3492 = vmul.f32 %v64, %v3491
    %v3493 = vadd.f32 %v3489, %v3492
    %s3494 = sld [smem:[#allocation2 + $0x21c]]
    %v3495 = vstv %s3494
    %v3496 = vmul.f32 %v70, %v3495
    %v3497 = vadd.f32 %v3493, %v3496
    %s3498 = sld [smem:[#allocation2 + $0x29c]]
    %v3499 = vstv %s3498
    %v3500 = vmul.f32 %v76, %v3499
    %v3501 = vadd.f32 %v3497, %v3500
    %s3502 = sld [smem:[#allocation2 + $0x31c]]
    %v3503 = vstv %s3502
    %v3504 = vmul.f32 %v82, %v3503
    %v3505 = vadd.f32 %v3501, %v3504
    %s3506 = sld [smem:[#allocation2 + $0x39c]]
    %v3507 = vstv %s3506
    %v3508 = vmul.f32 %v88, %v3507
    %v3509 = vadd.f32 %v3505, %v3508
    %s3510 = sld [smem:[#allocation2 + $0x41c]]
    %v3511 = vstv %s3510
    %v3512 = vmul.f32 %v94, %v3511
    %v3513 = vadd.f32 %v3509, %v3512
    %s3514 = sld [smem:[#allocation4 + $0x1c]]
    %v3515 = vstv %s3514
    %v3516 = vadd.f32 %v3513, %v3515
    %v3517 = vmax.f32 %v3516, 0.0
    %s3518 = scalar_lea.vmem %s3, 1120
    %v3519 = vld [vmem:[%s3518] sm:$0xff]
    %v3520 = vld [vmem:[%s3518 + $0x8] sm:$0xff]
    %v3521 = vld [vmem:[%s3518 + $0x10] sm:$0xff]
    %v3522 = vld [vmem:[%s3518 + $0x18] sm:$0xff]
    %v3523 = vld [vmem:[%s3518 + $0x20] sm:$0xf]
    %v3525 = vsel %vm153, %v3517, 0
    %v3528 = vsel %vm157, %v3523, 0
    %3530 = vmatprep.subr.mxu0 0.0
    %3531 = vmatpush1.msra.mxu0 %v3519
    %3532 = vmatprep.subr.mxu0 0.0
    %3533 = vmatpush1.msra.mxu0 %v3520
    %3534 = vmatprep.subr.mxu0 0.0
    %3535 = vmatpush1.msra.mxu0 %v3521
    %3536 = vmatprep.subr.mxu0 0.0
    %3537 = vmatpush1.msra.mxu0 %v3522
    %3538 = vmatprep.subr.mxu0 0.0
    %3539 = vmatpush1.msra.mxu0 %v3528
    %3540 = vmatprep.subr.mxu0 0.0
    %3541 = vmatpush1.msra.mxu0 0.0
    %3542 = vmatprep.subr.mxu0 0.0
    %3543 = vmatpush1.msra.mxu0 0.0
    %3544 = vmatprep.subr.mxu0 0.0
    %3545 = vmatpush1.msra.mxu0 0.0
    %3546 = vmatprep.subr.mxu0 0.0
    %3547 = vmatpush1.msra.mxu0 0.0
    %3548 = vmatprep.subr.mxu0 0.0
    %3549 = vmatpush1.msra.mxu0 0.0
    %3550 = vmatprep.subr.mxu0 0.0
    %3551 = vmatpush1.msra.mxu0 0.0
    %3552 = vmatprep.subr.mxu0 0.0
    %3553 = vmatpush1.msra.mxu0 0.0
    %3554 = vmatprep.subr.mxu0 0.0
    %3555 = vmatpush1.msra.mxu0 0.0
    %3556 = vmatprep.subr.mxu0 0.0
    %3557 = vmatpush1.msra.mxu0 0.0
    %3558 = vmatprep.subr.mxu0 0.0
    %3559 = vmatpush1.msra.mxu0 0.0
    %3560 = vmatprep.subr.mxu0 0.0
    %3561 = vmatpush1.msra.mxu0 0.0
    %3562 = vmatprep.subr.mxu0 0.0
    %3563 = vmatpush1.msra.mxu0 0.0
    %3564 = vmatprep.subr.mxu0 0.0
    %3565 = vmatpush1.msra.mxu0 0.0
    %3566 = vmatprep.subr.mxu0 0.0
    %3567 = vmatpush1.msra.mxu0 0.0
    %3568 = vmatprep.subr.mxu0 0.0
    %3569 = vmatpush1.msra.mxu0 0.0
    %3570 = vmatprep.subr.mxu0 0.0
    %3571 = vmatpush1.msra.mxu0 0.0
    %3572 = vmatprep.subr.mxu0 0.0
    %3573 = vmatpush1.msra.mxu0 0.0
    %3574 = vmatprep.subr.mxu0 0.0
    %3575 = vmatpush1.msra.mxu0 0.0
    %3576 = vmatprep.subr.mxu0 0.0
    %3577 = vmatpush1.msra.mxu0 0.0
    %3578 = vmatprep.subr.mxu0 0.0
    %3579 = vmatpush1.msra.mxu0 0.0
    %3580 = vmatprep.subr.mxu0 0.0
    %3581 = vmatpush1.msra.mxu0 0.0
    %3582 = vmatprep.subr.mxu0 0.0
    %3583 = vmatpush1.msra.mxu0 0.0
    %3584 = vmatprep.subr.mxu0 0.0
    %3585 = vmatpush1.msra.mxu0 0.0
    %3586 = vmatprep.subr.mxu0 0.0
    %3587 = vmatpush1.msra.mxu0 0.0
    %3588 = vmatprep.subr.mxu0 0.0
    %3589 = vmatpush1.msra.mxu0 0.0
    %3590 = vmatprep.subr.mxu0 0.0
    %3591 = vmatpush1.msra.mxu0 0.0
    %3592 = vmatprep.subr.mxu0 0.0
    %3593 = vmatpush1.msra.mxu0 0.0
    %3594 = vmatprep.mubr.f32.mxu0 0.0
    %3595 = vmatmul.mubr.f32.gmra.mrb[0].mxu0 %v3525
    %v3596 = vpop.f32.mrb[0].mxu0
    %v3597 = vadd.f32 0.0, %v3596
    %v3598 = vpop.f32.mrb[0].mxu0
    %3599 = vdwg.mxu0
    %v3600 = vadd.f32 %v3478, %v3597
    %s3601 = sld [smem:[#allocation2 + $0x1d]]
    %v3602 = vstv %s3601
    %v3603 = vmul.f32 %v47, %v3602
    %s3604 = sld [smem:[#allocation2 + $0x9d]]
    %v3605 = vstv %s3604
    %v3606 = vmul.f32 %v52, %v3605
    %v3607 = vadd.f32 %v3603, %v3606
    %s3608 = sld [smem:[#allocation2 + $0x11d]]
    %v3609 = vstv %s3608
    %v3610 = vmul.f32 %v58, %v3609
    %v3611 = vadd.f32 %v3607, %v3610
    %s3612 = sld [smem:[#allocation2 + $0x19d]]
    %v3613 = vstv %s3612
    %v3614 = vmul.f32 %v64, %v3613
    %v3615 = vadd.f32 %v3611, %v3614
    %s3616 = sld [smem:[#allocation2 + $0x21d]]
    %v3617 = vstv %s3616
    %v3618 = vmul.f32 %v70, %v3617
    %v3619 = vadd.f32 %v3615, %v3618
    %s3620 = sld [smem:[#allocation2 + $0x29d]]
    %v3621 = vstv %s3620
    %v3622 = vmul.f32 %v76, %v3621
    %v3623 = vadd.f32 %v3619, %v3622
    %s3624 = sld [smem:[#allocation2 + $0x31d]]
    %v3625 = vstv %s3624
    %v3626 = vmul.f32 %v82, %v3625
    %v3627 = vadd.f32 %v3623, %v3626
    %s3628 = sld [smem:[#allocation2 + $0x39d]]
    %v3629 = vstv %s3628
    %v3630 = vmul.f32 %v88, %v3629
    %v3631 = vadd.f32 %v3627, %v3630
    %s3632 = sld [smem:[#allocation2 + $0x41d]]
    %v3633 = vstv %s3632
    %v3634 = vmul.f32 %v94, %v3633
    %v3635 = vadd.f32 %v3631, %v3634
    %s3636 = sld [smem:[#allocation4 + $0x1d]]
    %v3637 = vstv %s3636
    %v3638 = vadd.f32 %v3635, %v3637
    %v3639 = vmax.f32 %v3638, 0.0
    %s3640 = scalar_lea.vmem %s3, 1160
    %v3641 = vld [vmem:[%s3640] sm:$0xff]
    %v3642 = vld [vmem:[%s3640 + $0x8] sm:$0xff]
    %v3643 = vld [vmem:[%s3640 + $0x10] sm:$0xff]
    %v3644 = vld [vmem:[%s3640 + $0x18] sm:$0xff]
    %v3645 = vld [vmem:[%s3640 + $0x20] sm:$0xf]
    %v3647 = vsel %vm153, %v3639, 0
    %v3650 = vsel %vm157, %v3645, 0
    %3652 = vmatprep.subr.mxu0 0.0
    %3653 = vmatpush1.msra.mxu0 %v3641
    %3654 = vmatprep.subr.mxu0 0.0
    %3655 = vmatpush1.msra.mxu0 %v3642
    %3656 = vmatprep.subr.mxu0 0.0
    %3657 = vmatpush1.msra.mxu0 %v3643
    %3658 = vmatprep.subr.mxu0 0.0
    %3659 = vmatpush1.msra.mxu0 %v3644
    %3660 = vmatprep.subr.mxu0 0.0
    %3661 = vmatpush1.msra.mxu0 %v3650
    %3662 = vmatprep.subr.mxu0 0.0
    %3663 = vmatpush1.msra.mxu0 0.0
    %3664 = vmatprep.subr.mxu0 0.0
    %3665 = vmatpush1.msra.mxu0 0.0
    %3666 = vmatprep.subr.mxu0 0.0
    %3667 = vmatpush1.msra.mxu0 0.0
    %3668 = vmatprep.subr.mxu0 0.0
    %3669 = vmatpush1.msra.mxu0 0.0
    %3670 = vmatprep.subr.mxu0 0.0
    %3671 = vmatpush1.msra.mxu0 0.0
    %3672 = vmatprep.subr.mxu0 0.0
    %3673 = vmatpush1.msra.mxu0 0.0
    %3674 = vmatprep.subr.mxu0 0.0
    %3675 = vmatpush1.msra.mxu0 0.0
    %3676 = vmatprep.subr.mxu0 0.0
    %3677 = vmatpush1.msra.mxu0 0.0
    %3678 = vmatprep.subr.mxu0 0.0
    %3679 = vmatpush1.msra.mxu0 0.0
    %3680 = vmatprep.subr.mxu0 0.0
    %3681 = vmatpush1.msra.mxu0 0.0
    %3682 = vmatprep.subr.mxu0 0.0
    %3683 = vmatpush1.msra.mxu0 0.0
    %3684 = vmatprep.subr.mxu0 0.0
    %3685 = vmatpush1.msra.mxu0 0.0
    %3686 = vmatprep.subr.mxu0 0.0
    %3687 = vmatpush1.msra.mxu0 0.0
    %3688 = vmatprep.subr.mxu0 0.0
    %3689 = vmatpush1.msra.mxu0 0.0
    %3690 = vmatprep.subr.mxu0 0.0
    %3691 = vmatpush1.msra.mxu0 0.0
    %3692 = vmatprep.subr.mxu0 0.0
    %3693 = vmatpush1.msra.mxu0 0.0
    %3694 = vmatprep.subr.mxu0 0.0
    %3695 = vmatpush1.msra.mxu0 0.0
    %3696 = vmatprep.subr.mxu0 0.0
    %3697 = vmatpush1.msra.mxu0 0.0
    %3698 = vmatprep.subr.mxu0 0.0
    %3699 = vmatpush1.msra.mxu0 0.0
    %3700 = vmatprep.subr.mxu0 0.0
    %3701 = vmatpush1.msra.mxu0 0.0
    %3702 = vmatprep.subr.mxu0 0.0
    %3703 = vmatpush1.msra.mxu0 0.0
    %3704 = vmatprep.subr.mxu0 0.0
    %3705 = vmatpush1.msra.mxu0 0.0
    %3706 = vmatprep.subr.mxu0 0.0
    %3707 = vmatpush1.msra.mxu0 0.0
    %3708 = vmatprep.subr.mxu0 0.0
    %3709 = vmatpush1.msra.mxu0 0.0
    %3710 = vmatprep.subr.mxu0 0.0
    %3711 = vmatpush1.msra.mxu0 0.0
    %3712 = vmatprep.subr.mxu0 0.0
    %3713 = vmatpush1.msra.mxu0 0.0
    %3714 = vmatprep.subr.mxu0 0.0
    %3715 = vmatpush1.msra.mxu0 0.0
    %3716 = vmatprep.mubr.f32.mxu0 0.0
    %3717 = vmatmul.mubr.f32.gmra.mrb[0].mxu0 %v3647
    %v3718 = vpop.f32.mrb[0].mxu0
    %v3719 = vadd.f32 0.0, %v3718
    %v3720 = vpop.f32.mrb[0].mxu0
    %3721 = vdwg.mxu0
    %v3722 = vadd.f32 %v3600, %v3719
    %s3723 = sld [smem:[#allocation2 + $0x1e]]
    %v3724 = vstv %s3723
    %v3725 = vmul.f32 %v47, %v3724
    %s3726 = sld [smem:[#allocation2 + $0x9e]]
    %v3727 = vstv %s3726
    %v3728 = vmul.f32 %v52, %v3727
    %v3729 = vadd.f32 %v3725, %v3728
    %s3730 = sld [smem:[#allocation2 + $0x11e]]
    %v3731 = vstv %s3730
    %v3732 = vmul.f32 %v58, %v3731
    %v3733 = vadd.f32 %v3729, %v3732
    %s3734 = sld [smem:[#allocation2 + $0x19e]]
    %v3735 = vstv %s3734
    %v3736 = vmul.f32 %v64, %v3735
    %v3737 = vadd.f32 %v3733, %v3736
    %s3738 = sld [smem:[#allocation2 + $0x21e]]
    %v3739 = vstv %s3738
    %v3740 = vmul.f32 %v70, %v3739
    %v3741 = vadd.f32 %v3737, %v3740
    %s3742 = sld [smem:[#allocation2 + $0x29e]]
    %v3743 = vstv %s3742
    %v3744 = vmul.f32 %v76, %v3743
    %v3745 = vadd.f32 %v3741, %v3744
    %s3746 = sld [smem:[#allocation2 + $0x31e]]
    %v3747 = vstv %s3746
    %v3748 = vmul.f32 %v82, %v3747
    %v3749 = vadd.f32 %v3745, %v3748
    %s3750 = sld [smem:[#allocation2 + $0x39e]]
    %v3751 = vstv %s3750
    %v3752 = vmul.f32 %v88, %v3751
    %v3753 = vadd.f32 %v3749, %v3752
    %s3754 = sld [smem:[#allocation2 + $0x41e]]
    %v3755 = vstv %s3754
    %v3756 = vmul.f32 %v94, %v3755
    %v3757 = vadd.f32 %v3753, %v3756
    %s3758 = sld [smem:[#allocation4 + $0x1e]]
    %v3759 = vstv %s3758
    %v3760 = vadd.f32 %v3757, %v3759
    %v3761 = vmax.f32 %v3760, 0.0
    %s3762 = scalar_lea.vmem %s3, 1200
    %v3763 = vld [vmem:[%s3762] sm:$0xff]
    %v3764 = vld [vmem:[%s3762 + $0x8] sm:$0xff]
    %v3765 = vld [vmem:[%s3762 + $0x10] sm:$0xff]
    %v3766 = vld [vmem:[%s3762 + $0x18] sm:$0xff]
    %v3767 = vld [vmem:[%s3762 + $0x20] sm:$0xf]
    %v3769 = vsel %vm153, %v3761, 0
    %v3772 = vsel %vm157, %v3767, 0
    %3774 = vmatprep.subr.mxu0 0.0
    %3775 = vmatpush1.msra.mxu0 %v3763
    %3776 = vmatprep.subr.mxu0 0.0
    %3777 = vmatpush1.msra.mxu0 %v3764
    %3778 = vmatprep.subr.mxu0 0.0
    %3779 = vmatpush1.msra.mxu0 %v3765
    %3780 = vmatprep.subr.mxu0 0.0
    %3781 = vmatpush1.msra.mxu0 %v3766
    %3782 = vmatprep.subr.mxu0 0.0
    %3783 = vmatpush1.msra.mxu0 %v3772
    %3784 = vmatprep.subr.mxu0 0.0
    %3785 = vmatpush1.msra.mxu0 0.0
    %3786 = vmatprep.subr.mxu0 0.0
    %3787 = vmatpush1.msra.mxu0 0.0
    %3788 = vmatprep.subr.mxu0 0.0
    %3789 = vmatpush1.msra.mxu0 0.0
    %3790 = vmatprep.subr.mxu0 0.0
    %3791 = vmatpush1.msra.mxu0 0.0
    %3792 = vmatprep.subr.mxu0 0.0
    %3793 = vmatpush1.msra.mxu0 0.0
    %3794 = vmatprep.subr.mxu0 0.0
    %3795 = vmatpush1.msra.mxu0 0.0
    %3796 = vmatprep.subr.mxu0 0.0
    %3797 = vmatpush1.msra.mxu0 0.0
    %3798 = vmatprep.subr.mxu0 0.0
    %3799 = vmatpush1.msra.mxu0 0.0
    %3800 = vmatprep.subr.mxu0 0.0
    %3801 = vmatpush1.msra.mxu0 0.0
    %3802 = vmatprep.subr.mxu0 0.0
    %3803 = vmatpush1.msra.mxu0 0.0
    %3804 = vmatprep.subr.mxu0 0.0
    %3805 = vmatpush1.msra.mxu0 0.0
    %3806 = vmatprep.subr.mxu0 0.0
    %3807 = vmatpush1.msra.mxu0 0.0
    %3808 = vmatprep.subr.mxu0 0.0
    %3809 = vmatpush1.msra.mxu0 0.0
    %3810 = vmatprep.subr.mxu0 0.0
    %3811 = vmatpush1.msra.mxu0 0.0
    %3812 = vmatprep.subr.mxu0 0.0
    %3813 = vmatpush1.msra.mxu0 0.0
    %3814 = vmatprep.subr.mxu0 0.0
    %3815 = vmatpush1.msra.mxu0 0.0
    %3816 = vmatprep.subr.mxu0 0.0
    %3817 = vmatpush1.msra.mxu0 0.0
    %3818 = vmatprep.subr.mxu0 0.0
    %3819 = vmatpush1.msra.mxu0 0.0
    %3820 = vmatprep.subr.mxu0 0.0
    %3821 = vmatpush1.msra.mxu0 0.0
    %3822 = vmatprep.subr.mxu0 0.0
    %3823 = vmatpush1.msra.mxu0 0.0
    %3824 = vmatprep.subr.mxu0 0.0
    %3825 = vmatpush1.msra.mxu0 0.0
    %3826 = vmatprep.subr.mxu0 0.0
    %3827 = vmatpush1.msra.mxu0 0.0
    %3828 = vmatprep.subr.mxu0 0.0
    %3829 = vmatpush1.msra.mxu0 0.0
    %3830 = vmatprep.subr.mxu0 0.0
    %3831 = vmatpush1.msra.mxu0 0.0
    %3832 = vmatprep.subr.mxu0 0.0
    %3833 = vmatpush1.msra.mxu0 0.0
    %3834 = vmatprep.subr.mxu0 0.0
    %3835 = vmatpush1.msra.mxu0 0.0
    %3836 = vmatprep.subr.mxu0 0.0
    %3837 = vmatpush1.msra.mxu0 0.0
    %3838 = vmatprep.mubr.f32.mxu0 0.0
    %3839 = vmatmul.mubr.f32.gmra.mrb[0].mxu0 %v3769
    %v3840 = vpop.f32.mrb[0].mxu0
    %v3841 = vadd.f32 0.0, %v3840
    %v3842 = vpop.f32.mrb[0].mxu0
    %3843 = vdwg.mxu0
    %v3844 = vadd.f32 %v3722, %v3841
    %s3845 = sld [smem:[#allocation2 + $0x1f]]
    %v3846 = vstv %s3845
    %v3847 = vmul.f32 %v47, %v3846
    %s3848 = sld [smem:[#allocation2 + $0x9f]]
    %v3849 = vstv %s3848
    %v3850 = vmul.f32 %v52, %v3849
    %v3851 = vadd.f32 %v3847, %v3850
    %s3852 = sld [smem:[#allocation2 + $0x11f]]
    %v3853 = vstv %s3852
    %v3854 = vmul.f32 %v58, %v3853
    %v3855 = vadd.f32 %v3851, %v3854
    %s3856 = sld [smem:[#allocation2 + $0x19f]]
    %v3857 = vstv %s3856
    %v3858 = vmul.f32 %v64, %v3857
    %v3859 = vadd.f32 %v3855, %v3858
    %s3860 = sld [smem:[#allocation2 + $0x21f]]
    %v3861 = vstv %s3860
    %v3862 = vmul.f32 %v70, %v3861
    %v3863 = vadd.f32 %v3859, %v3862
    %s3864 = sld [smem:[#allocation2 + $0x29f]]
    %v3865 = vstv %s3864
    %v3866 = vmul.f32 %v76, %v3865
    %v3867 = vadd.f32 %v3863, %v3866
    %s3868 = sld [smem:[#allocation2 + $0x31f]]
    %v3869 = vstv %s3868
    %v3870 = vmul.f32 %v82, %v3869
    %v3871 = vadd.f32 %v3867, %v3870
    %s3872 = sld [smem:[#allocation2 + $0x39f]]
    %v3873 = vstv %s3872
    %v3874 = vmul.f32 %v88, %v3873
    %v3875 = vadd.f32 %v3871, %v3874
    %s3876 = sld [smem:[#allocation2 + $0x41f]]
    %v3877 = vstv %s3876
    %v3878 = vmul.f32 %v94, %v3877
    %v3879 = vadd.f32 %v3875, %v3878
    %s3880 = sld [smem:[#allocation4 + $0x1f]]
    %v3881 = vstv %s3880
    %v3882 = vadd.f32 %v3879, %v3881
    %v3883 = vmax.f32 %v3882, 0.0
    %s3884 = scalar_lea.vmem %s3, 1240
    %v3885 = vld [vmem:[%s3884] sm:$0xff]
    %v3886 = vld [vmem:[%s3884 + $0x8] sm:$0xff]
    %v3887 = vld [vmem:[%s3884 + $0x10] sm:$0xff]
    %v3888 = vld [vmem:[%s3884 + $0x18] sm:$0xff]
    %v3889 = vld [vmem:[%s3884 + $0x20] sm:$0xf]
    %v3891 = vsel %vm153, %v3883, 0
    %v3894 = vsel %vm157, %v3889, 0
    %3896 = vmatprep.subr.mxu0 0.0
    %3897 = vmatpush1.msra.mxu0 %v3885
    %3898 = vmatprep.subr.mxu0 0.0
    %3899 = vmatpush1.msra.mxu0 %v3886
    %3900 = vmatprep.subr.mxu0 0.0
    %3901 = vmatpush1.msra.mxu0 %v3887
    %3902 = vmatprep.subr.mxu0 0.0
    %3903 = vmatpush1.msra.mxu0 %v3888
    %3904 = vmatprep.subr.mxu0 0.0
    %3905 = vmatpush1.msra.mxu0 %v3894
    %3906 = vmatprep.subr.mxu0 0.0
    %3907 = vmatpush1.msra.mxu0 0.0
    %3908 = vmatprep.subr.mxu0 0.0
    %3909 = vmatpush1.msra.mxu0 0.0
    %3910 = vmatprep.subr.mxu0 0.0
    %3911 = vmatpush1.msra.mxu0 0.0
    %3912 = vmatprep.subr.mxu0 0.0
    %3913 = vmatpush1.msra.mxu0 0.0
    %3914 = vmatprep.subr.mxu0 0.0
    %3915 = vmatpush1.msra.mxu0 0.0
    %3916 = vmatprep.subr.mxu0 0.0
    %3917 = vmatpush1.msra.mxu0 0.0
    %3918 = vmatprep.subr.mxu0 0.0
    %3919 = vmatpush1.msra.mxu0 0.0
    %3920 = vmatprep.subr.mxu0 0.0
    %3921 = vmatpush1.msra.mxu0 0.0
    %3922 = vmatprep.subr.mxu0 0.0
    %3923 = vmatpush1.msra.mxu0 0.0
    %3924 = vmatprep.subr.mxu0 0.0
    %3925 = vmatpush1.msra.mxu0 0.0
    %3926 = vmatprep.subr.mxu0 0.0
    %3927 = vmatpush1.msra.mxu0 0.0
    %3928 = vmatprep.subr.mxu0 0.0
    %3929 = vmatpush1.msra.mxu0 0.0
    %3930 = vmatprep.subr.mxu0 0.0
    %3931 = vmatpush1.msra.mxu0 0.0
    %3932 = vmatprep.subr.mxu0 0.0
    %3933 = vmatpush1.msra.mxu0 0.0
    %3934 = vmatprep.subr.mxu0 0.0
    %3935 = vmatpush1.msra.mxu0 0.0
    %3936 = vmatprep.subr.mxu0 0.0
    %3937 = vmatpush1.msra.mxu0 0.0
    %3938 = vmatprep.subr.mxu0 0.0
    %3939 = vmatpush1.msra.mxu0 0.0
    %3940 = vmatprep.subr.mxu0 0.0
    %3941 = vmatpush1.msra.mxu0 0.0
    %3942 = vmatprep.subr.mxu0 0.0
    %3943 = vmatpush1.msra.mxu0 0.0
    %3944 = vmatprep.subr.mxu0 0.0
    %3945 = vmatpush1.msra.mxu0 0.0
    %3946 = vmatprep.subr.mxu0 0.0
    %3947 = vmatpush1.msra.mxu0 0.0
    %3948 = vmatprep.subr.mxu0 0.0
    %3949 = vmatpush1.msra.mxu0 0.0
    %3950 = vmatprep.subr.mxu0 0.0
    %3951 = vmatpush1.msra.mxu0 0.0
    %3952 = vmatprep.subr.mxu0 0.0
    %3953 = vmatpush1.msra.mxu0 0.0
    %3954 = vmatprep.subr.mxu0 0.0
    %3955 = vmatpush1.msra.mxu0 0.0
    %3956 = vmatprep.subr.mxu0 0.0
    %3957 = vmatpush1.msra.mxu0 0.0
    %3958 = vmatprep.subr.mxu0 0.0
    %3959 = vmatpush1.msra.mxu0 0.0
    %3960 = vmatprep.mubr.f32.mxu0 0.0
    %3961 = vmatmul.mubr.f32.gmra.mrb[0].mxu0 %v3891
    %v3962 = vpop.f32.mrb[0].mxu0
    %v3963 = vadd.f32 0.0, %v3962
    %v3964 = vpop.f32.mrb[0].mxu0
    %3965 = vdwg.mxu0
    %v3966 = vadd.f32 %v3844, %v3963
    %v3967 = vld [vmem:[%s4] sm:$0x1]
    %v3969 = vlaneseq
    %v3970 = vshrl.u32 %v3969, 7
    %v3971 = vsub.s32 0, %v3970
    %v3972 = vrot.slane %v3967, %v3971
    %v3974 = vadd.f32 %v3966, %v3972
    %v3975 = vmax.f32 %v3974, 0.0
    %vm3976 = vcmask 261120
    %3977 = vst.msk [vmem:[%s5] sm:$0xff] %vm3976, %v3975
    // Predicated region
    $region30: #{conve_forward.2} parent=1 // pred_check
      _
    $region31: #{conve_forward.2} parent=1 // pred_check_branch
      %3979 = sbr.rel (0) target = $region33
    $region32: #{conve_forward.2} parent=1 // pred_region
      _
    $region33: #{conve_forward.2} parent=1 // pred_fallthru
      _
    // Predicated region
    $region34: #{conve_forward.2} parent=1 // pred_check
      _
    $region35: #{conve_forward.2} parent=1 // pred_check_branch
      %3981 = sbr.rel (0) target = $region37
    $region36: #{conve_forward.2} parent=1 // pred_region
      _
    $region37: #{conve_forward.2} parent=1 // pred_fallthru
      _
    %3982 = vsyncpa [#allocation3], 1
    %3983 = vsyncpa [#allocation5], 1

</llo_original>
